<compile_context>
chip_gen: v6e
topology: v6e:2x2x1
jax: 0.10.0
libtpu: 0.0.40
codegen_flags: <defaults>
</compile_context>

<pallas_src>
import functools

import jax
import jax.numpy as jnp
from jax.experimental import pallas as pl
from jax.experimental.pallas import tpu as pltpu


# ----------------------------- module constants ---------------------------

IN_CH, L_IN = 3, 1000
C1, K1, S1 = 8, 10, 5          # Conv1d(3 -> 8, kernel 10, stride 5)
C2, K2 = 16, 4                 # Conv1d(8 -> 16, kernel 4, stride 1)
L1 = (L_IN - K1) // S1 + 1     # 199
L2 = L1 - K2 + 1               # 196
FLAT = C2 * L2                 # 3136
FC1_OUT, FC2_OUT, FC3_OUT = 512, 256, 128


# ------------------------------ fused kernel ------------------------------

def _encoder_kernel(xp_ref, w1_ref, b1_ref, w2_ref, b2_ref,
                    f1w_ref, f1b_ref, f2w_ref, f2b_ref, f3w_ref, f3b_ref,
                    o_ref, y1_s, y2_s, *, batch):
    f32, bf16 = jnp.float32, jnp.bfloat16
    bc_in = batch * IN_CH

    # ---- Conv1d(3->8, k=10, s=5) + ReLU -------------------------------------
    # One (B*8, B*3)@(B*3, 199) GEMM per tap on the phase-split input, with
    # batch-block-diagonal weights.  Rows of y1_s are (b, c1), b-major.
    acc1 = jnp.zeros((batch * C1, L1), f32)
    for k in range(K1):
        q, p = divmod(k, S1)
        xk = xp_ref[pl.ds(p * bc_in, bc_in), pl.ds(q, L1)]       # (B*3, 199)
        acc1 = acc1 + jnp.dot(w1_ref[k], xk, preferred_element_type=f32)
    y1_s[...] = jnp.maximum(acc1 + b1_ref[...], 0.0)             # (B*8, 199)

    # ---- Conv1d(8->16, k=4) + ReLU ------------------------------------------
    # One (16*B, B*8)@(B*8, 196) GEMM per tap on shifted windows of the
    # VMEM-resident conv1 activation.  Rows of y2_s are (c2, b), c-major, so
    # fc1 can consume a contiguous (B, 196) slab per channel.
    acc2 = jnp.zeros((C2 * batch, L2), f32)
    for k in range(K2):
        acc2 = acc2 + jnp.dot(w2_ref[k], y1_s[:, pl.ds(k, L2)],
                              preferred_element_type=f32)
    y2_s[...] = jnp.maximum(acc2 + b2_ref[...], 0.0)             # (16*B, 196)

    # ---- Flatten(start_dim=-2) + Linear(3136 -> 512) + ReLU -----------------
    # Channel-major flatten folded into a per-channel sum of GEMMs: each
    # (196, 512) bf16 weight slab streams through the MXU exactly once.
    acc = jnp.zeros((batch, FC1_OUT), f32)
    for c in range(C2):
        rows = y2_s[pl.ds(c * batch, batch), :]                  # (B, 196)
        acc = acc + jnp.dot(rows.astype(bf16), f1w_ref[c],
                            preferred_element_type=f32)
    e = jnp.maximum(acc + f1b_ref[...], 0.0)                     # (B, 512)

    # ---- Linear(512 -> 256) + ReLU, Linear(256 -> 128) ----------------------
    e = jnp.dot(e.astype(bf16), f2w_ref[...], preferred_element_type=f32)
    e = jnp.maximum(e + f2b_ref[...], 0.0)                       # (B, 256)
    e = jnp.dot(e.astype(bf16), f3w_ref[...], preferred_element_type=f32)
    o_ref[...] = (e + f3b_ref[...]).astype(o_ref.dtype)          # (B, 128)


def _full_spec(shape):
    nd = len(shape)
    return pl.BlockSpec(shape, lambda *_, nd=nd: (0,) * nd)


def cnn_encoder_forward(x, prep):
    """x: (B, 3, 1000) f32, prep: kernel-ready params -> (B, 128) f32."""
    B = x.shape[0]
    assert x.shape[1:] == (IN_CH, L_IN)
    lp = L_IN // S1                                   # 200
    assert L_IN % S1 == 0 and (L1 - 1) + (K1 - 1) // S1 < lp

    # Phase-split the (tiny) input so in-kernel im2col is plain contiguous
    # slices:  xp[p*B*C + b*C + c, t] = x[b, c, S1*t + p].
    xp = x.reshape(B, IN_CH, lp, S1).transpose(3, 0, 1, 2).reshape(
        S1 * B * IN_CH, lp)

    args = (xp, prep["w1bd"], prep["b1"], prep["w2bd"], prep["b2"],
            prep["fc1_wt"], prep["fc1_b"], prep["fc2_wt"], prep["fc2_b"],
            prep["fc3_wt"], prep["fc3_b"])

    return pl.pallas_call(
        functools.partial(_encoder_kernel, batch=B),
        out_shape=jax.ShapeDtypeStruct((B, FC3_OUT), jnp.float32),
        in_specs=[_full_spec(a.shape) for a in args],
        out_specs=_full_spec((B, FC3_OUT)),
        scratch_shapes=[pltpu.VMEM((B * C1, L1), jnp.float32),
                        pltpu.VMEM((C2 * B, L2), jnp.float32)],
        compiler_params=pltpu.CompilerParams(
            vmem_limit_bytes=32 * 1024 * 1024),
    )(*args)


# ------------------- parameter init (PyTorch layout) ----------------------

def init_params(key):
    def uniform(key, shape, fan_in):
        bound = 1.0 / jnp.sqrt(jnp.asarray(fan_in, jnp.float32))
        return jax.random.uniform(key, shape, jnp.float32, -bound, bound)

    ks = jax.random.split(key, 10)
    return {
        "conv1_w": uniform(ks[0], (C1, IN_CH, K1), IN_CH * K1),
        "conv1_b": uniform(ks[1], (C1,), IN_CH * K1),
        "conv2_w": uniform(ks[2], (C2, C1, K2), C1 * K2),
        "conv2_b": uniform(ks[3], (C2,), C1 * K2),
        "fc1_w": uniform(ks[4], (FC1_OUT, FLAT), FLAT),
        "fc1_b": uniform(ks[5], (FC1_OUT,), FLAT),
        "fc2_w": uniform(ks[6], (FC2_OUT, FC1_OUT), FC1_OUT),
        "fc2_b": uniform(ks[7], (FC2_OUT,), FC1_OUT),
        "fc3_w": uniform(ks[8], (FC3_OUT, FC2_OUT), FC2_OUT),
        "fc3_b": uniform(ks[9], (FC3_OUT,), FC2_OUT),
    }


def prepare_params(params, batch):
    """One-time (outside jit) repack: per-tap batch-block-diagonal conv
    weights, pre-transposed bf16 FC weights, (rows, 1) / (1, N) biases."""
    f32, bf16 = jnp.float32, jnp.bfloat16
    eye = jnp.eye(batch, dtype=f32)
    w1t = jnp.transpose(params["conv1_w"], (2, 0, 1))            # (K1, C1, 3)
    w2t = jnp.transpose(params["conv2_w"], (2, 0, 1))            # (K2, C2, 8)
    # conv1: output rows (b, c1) b-major, input rows (b, cin) b-major.
    w1bd = jnp.einsum("koi,bd->kbodi", w1t, eye).reshape(
        K1, batch * C1, batch * IN_CH)
    # conv2: output rows (c2, b) c-major, input rows (b, c1) b-major.
    w2bd = jnp.einsum("koi,bd->kobdi", w2t, eye).reshape(
        K2, C2 * batch, batch * C1)
    b1 = jnp.tile(params["conv1_b"].reshape(1, C1), (batch, 1)).reshape(
        batch * C1, 1)
    b2 = jnp.tile(params["conv2_b"].reshape(C2, 1), (1, batch)).reshape(
        C2 * batch, 1)
    return {
        "w1bd": w1bd.astype(f32),
        "b1": b1.astype(f32),
        "w2bd": w2bd.astype(f32),
        "b2": b2.astype(f32),
        "fc1_wt": jnp.transpose(params["fc1_w"].reshape(FC1_OUT, C2, L2),
                                (1, 2, 0)).astype(bf16),         # (16,196,512)
        "fc1_b": params["fc1_b"].reshape(1, FC1_OUT).astype(f32),
        "fc2_wt": params["fc2_w"].T.astype(bf16),                # (512,256)
        "fc2_b": params["fc2_b"].reshape(1, FC2_OUT).astype(f32),
        "fc3_wt": params["fc3_w"].T.astype(bf16),                # (256,128)
        "fc3_b": params["fc3_b"].reshape(1, FC3_OUT).astype(f32),
    }


# ---------------------------- pure-JAX reference --------------------------

def reference_forward(x, params):
    def conv1d(x, w, b, stride):
        y = jax.lax.conv_general_dilated(
            x, w, (stride,), "VALID",
            dimension_numbers=("NCH", "OIH", "NCH"),
            precision=jax.lax.Precision.HIGHEST)
        return y + b[None, :, None]

    h = jax.nn.relu(conv1d(x, params["conv1_w"], params["conv1_b"], S1))
    h = jax.nn.relu(conv1d(h, params["conv2_w"], params["conv2_b"], 1))
    c = h.reshape(h.shape[0], -1)
    mm = functools.partial(jnp.matmul, precision=jax.lax.Precision.HIGHEST)
    e = jax.nn.relu(mm(c, params["fc1_w"].T) + params["fc1_b"])
    e = jax.nn.relu(mm(e, params["fc2_w"].T) + params["fc2_b"])
    e = mm(e, params["fc3_w"].T) + params["fc3_b"]
    return e


# ---------------------------------- main -----------------------------------

if __name__ == "__main__":
    key = jax.random.PRNGKey(0)
    k_x, k_p = jax.random.split(key)

    # Input length 1000 is implied by Linear(3136): 16 * ((1000-10)//5+1 - 3).
    x = jax.random.normal(k_x, (2, IN_CH, L_IN), jnp.float32)
    params = init_params(k_p)
    prep = prepare_params(params, batch=x.shape[0])   # one-time repack

    fwd = jax.jit(cnn_encoder_forward)
    out = jax.block_until_ready(fwd(x, prep))
    assert out.shape == (2, FC3_OUT), out.shape

    ref = jax.block_until_ready(reference_forward(x, params))
    max_err = float(jnp.max(jnp.abs(out - ref)))
    assert jnp.allclose(out, ref, rtol=2e-2, atol=2e-2), max_err

    print("KERNEL_OK")
</pallas_src>

<mosaic_0001>
module attributes {stable_mosaic.version = 11 : i64} {
  func.func @_encoder_kernel(%arg0: memref<30x200xf32, #tpu.memory_space<vmem>>, %arg1: memref<10x16x6xf32, #tpu.memory_space<vmem>>, %arg2: memref<16x1xf32, #tpu.memory_space<vmem>>, %arg3: memref<4x32x16xf32, #tpu.memory_space<vmem>>, %arg4: memref<32x1xf32, #tpu.memory_space<vmem>>, %arg5: memref<16x196x512xbf16, #tpu.memory_space<vmem>>, %arg6: memref<1x512xf32, #tpu.memory_space<vmem>>, %arg7: memref<512x256xbf16, #tpu.memory_space<vmem>>, %arg8: memref<1x256xf32, #tpu.memory_space<vmem>>, %arg9: memref<256x128xbf16, #tpu.memory_space<vmem>>, %arg10: memref<1x128xf32, #tpu.memory_space<vmem>>, %arg11: memref<2x128xf32, #tpu.memory_space<vmem>>, %arg12: memref<16x199xf32, #tpu.memory_space<vmem>>, %arg13: memref<32x196xf32, #tpu.memory_space<vmem>>) attributes {dimension_semantics = [], scalar_prefetch = 0 : i64, scratch_operands = 2 : i64, tpu.core_type = #tpu.core_type<tc>} {
    %cst = arith.constant 0.000000e+00 : f32
    %0 = vector.broadcast %cst : f32 to vector<16x199xf32>
    %c0 = arith.constant 0 : index
    %c0_0 = arith.constant 0 : index
    %1 = vector.load %arg0[%c0, %c0_0] : memref<30x200xf32, #tpu.memory_space<vmem>>, vector<6x199xf32>
    %c0_1 = arith.constant 0 : index
    %c0_2 = arith.constant 0 : index
    %c0_3 = arith.constant 0 : index
    %2 = vector.load %arg1[%c0_1, %c0_2, %c0_3] : memref<10x16x6xf32, #tpu.memory_space<vmem>>, vector<1x16x6xf32>
    %3 = vector.shape_cast %2 : vector<1x16x6xf32> to vector<16x6xf32>
    %cst_4 = arith.constant dense<0.000000e+00> : vector<16x199xf32>
    %4 = tpu.matmul %3, %1, %cst_4 {dimension_numbers = #tpu.dot_dimension_numbers<[1], [0], [0], [1], [0, 0, 1, 1], [], []>} : vector<16x6xf32>, vector<6x199xf32>, vector<16x199xf32> -> vector<16x199xf32>
    %5 = arith.addf %0, %4 : vector<16x199xf32>
    %c6 = arith.constant 6 : index
    %c0_5 = arith.constant 0 : index
    %6 = vector.load %arg0[%c6, %c0_5] : memref<30x200xf32, #tpu.memory_space<vmem>>, vector<6x199xf32>
    %c1 = arith.constant 1 : index
    %c0_6 = arith.constant 0 : index
    %c0_7 = arith.constant 0 : index
    %7 = vector.load %arg1[%c1, %c0_6, %c0_7] : memref<10x16x6xf32, #tpu.memory_space<vmem>>, vector<1x16x6xf32>
    %8 = vector.shape_cast %7 : vector<1x16x6xf32> to vector<16x6xf32>
    %cst_8 = arith.constant dense<0.000000e+00> : vector<16x199xf32>
    %9 = tpu.matmul %8, %6, %cst_8 {dimension_numbers = #tpu.dot_dimension_numbers<[1], [0], [0], [1], [0, 0, 1, 1], [], []>} : vector<16x6xf32>, vector<6x199xf32>, vector<16x199xf32> -> vector<16x199xf32>
    %10 = arith.addf %5, %9 : vector<16x199xf32>
    %c12 = arith.constant 12 : index
    %c0_9 = arith.constant 0 : index
    %11 = vector.load %arg0[%c12, %c0_9] : memref<30x200xf32, #tpu.memory_space<vmem>>, vector<6x199xf32>
    %c2 = arith.constant 2 : index
    %c0_10 = arith.constant 0 : index
    %c0_11 = arith.constant 0 : index
    %12 = vector.load %arg1[%c2, %c0_10, %c0_11] : memref<10x16x6xf32, #tpu.memory_space<vmem>>, vector<1x16x6xf32>
    %13 = vector.shape_cast %12 : vector<1x16x6xf32> to vector<16x6xf32>
    %cst_12 = arith.constant dense<0.000000e+00> : vector<16x199xf32>
    %14 = tpu.matmul %13, %11, %cst_12 {dimension_numbers = #tpu.dot_dimension_numbers<[1], [0], [0], [1], [0, 0, 1, 1], [], []>} : vector<16x6xf32>, vector<6x199xf32>, vector<16x199xf32> -> vector<16x199xf32>
    %15 = arith.addf %10, %14 : vector<16x199xf32>
    %c18 = arith.constant 18 : index
    %c0_13 = arith.constant 0 : index
    %16 = vector.load %arg0[%c18, %c0_13] : memref<30x200xf32, #tpu.memory_space<vmem>>, vector<6x199xf32>
    %c3 = arith.constant 3 : index
    %c0_14 = arith.constant 0 : index
    %c0_15 = arith.constant 0 : index
    %17 = vector.load %arg1[%c3, %c0_14, %c0_15] : memref<10x16x6xf32, #tpu.memory_space<vmem>>, vector<1x16x6xf32>
    %18 = vector.shape_cast %17 : vector<1x16x6xf32> to vector<16x6xf32>
    %cst_16 = arith.constant dense<0.000000e+00> : vector<16x199xf32>
    %19 = tpu.matmul %18, %16, %cst_16 {dimension_numbers = #tpu.dot_dimension_numbers<[1], [0], [0], [1], [0, 0, 1, 1], [], []>} : vector<16x6xf32>, vector<6x199xf32>, vector<16x199xf32> -> vector<16x199xf32>
    %20 = arith.addf %15, %19 : vector<16x199xf32>
    %c24 = arith.constant 24 : index
    %c0_17 = arith.constant 0 : index
    %21 = vector.load %arg0[%c24, %c0_17] : memref<30x200xf32, #tpu.memory_space<vmem>>, vector<6x199xf32>
    %c4 = arith.constant 4 : index
    %c0_18 = arith.constant 0 : index
    %c0_19 = arith.constant 0 : index
    %22 = vector.load %arg1[%c4, %c0_18, %c0_19] : memref<10x16x6xf32, #tpu.memory_space<vmem>>, vector<1x16x6xf32>
    %23 = vector.shape_cast %22 : vector<1x16x6xf32> to vector<16x6xf32>
    %cst_20 = arith.constant dense<0.000000e+00> : vector<16x199xf32>
    %24 = tpu.matmul %23, %21, %cst_20 {dimension_numbers = #tpu.dot_dimension_numbers<[1], [0], [0], [1], [0, 0, 1, 1], [], []>} : vector<16x6xf32>, vector<6x199xf32>, vector<16x199xf32> -> vector<16x199xf32>
    %25 = arith.addf %20, %24 : vector<16x199xf32>
    %c0_21 = arith.constant 0 : index
    %c1_22 = arith.constant 1 : index
    %26 = vector.load %arg0[%c0_21, %c1_22] : memref<30x200xf32, #tpu.memory_space<vmem>>, vector<6x199xf32>
    %c5 = arith.constant 5 : index
    %c0_23 = arith.constant 0 : index
    %c0_24 = arith.constant 0 : index
    %27 = vector.load %arg1[%c5, %c0_23, %c0_24] : memref<10x16x6xf32, #tpu.memory_space<vmem>>, vector<1x16x6xf32>
    %28 = vector.shape_cast %27 : vector<1x16x6xf32> to vector<16x6xf32>
    %cst_25 = arith.constant dense<0.000000e+00> : vector<16x199xf32>
    %29 = tpu.matmul %28, %26, %cst_25 {dimension_numbers = #tpu.dot_dimension_numbers<[1], [0], [0], [1], [0, 0, 1, 1], [], []>} : vector<16x6xf32>, vector<6x199xf32>, vector<16x199xf32> -> vector<16x199xf32>
    %30 = arith.addf %25, %29 : vector<16x199xf32>
    %c6_26 = arith.constant 6 : index
    %c1_27 = arith.constant 1 : index
    %31 = vector.load %arg0[%c6_26, %c1_27] : memref<30x200xf32, #tpu.memory_space<vmem>>, vector<6x199xf32>
    %c6_28 = arith.constant 6 : index
    %c0_29 = arith.constant 0 : index
    %c0_30 = arith.constant 0 : index
    %32 = vector.load %arg1[%c6_28, %c0_29, %c0_30] : memref<10x16x6xf32, #tpu.memory_space<vmem>>, vector<1x16x6xf32>
    %33 = vector.shape_cast %32 : vector<1x16x6xf32> to vector<16x6xf32>
    %cst_31 = arith.constant dense<0.000000e+00> : vector<16x199xf32>
    %34 = tpu.matmul %33, %31, %cst_31 {dimension_numbers = #tpu.dot_dimension_numbers<[1], [0], [0], [1], [0, 0, 1, 1], [], []>} : vector<16x6xf32>, vector<6x199xf32>, vector<16x199xf32> -> vector<16x199xf32>
    %35 = arith.addf %30, %34 : vector<16x199xf32>
    %c12_32 = arith.constant 12 : index
    %c1_33 = arith.constant 1 : index
    %36 = vector.load %arg0[%c12_32, %c1_33] : memref<30x200xf32, #tpu.memory_space<vmem>>, vector<6x199xf32>
    %c7 = arith.constant 7 : index
    %c0_34 = arith.constant 0 : index
    %c0_35 = arith.constant 0 : index
    %37 = vector.load %arg1[%c7, %c0_34, %c0_35] : memref<10x16x6xf32, #tpu.memory_space<vmem>>, vector<1x16x6xf32>
    %38 = vector.shape_cast %37 : vector<1x16x6xf32> to vector<16x6xf32>
    %cst_36 = arith.constant dense<0.000000e+00> : vector<16x199xf32>
    %39 = tpu.matmul %38, %36, %cst_36 {dimension_numbers = #tpu.dot_dimension_numbers<[1], [0], [0], [1], [0, 0, 1, 1], [], []>} : vector<16x6xf32>, vector<6x199xf32>, vector<16x199xf32> -> vector<16x199xf32>
    %40 = arith.addf %35, %39 : vector<16x199xf32>
    %c18_37 = arith.constant 18 : index
    %c1_38 = arith.constant 1 : index
    %41 = vector.load %arg0[%c18_37, %c1_38] : memref<30x200xf32, #tpu.memory_space<vmem>>, vector<6x199xf32>
    %c8 = arith.constant 8 : index
    %c0_39 = arith.constant 0 : index
    %c0_40 = arith.constant 0 : index
    %42 = vector.load %arg1[%c8, %c0_39, %c0_40] : memref<10x16x6xf32, #tpu.memory_space<vmem>>, vector<1x16x6xf32>
    %43 = vector.shape_cast %42 : vector<1x16x6xf32> to vector<16x6xf32>
    %cst_41 = arith.constant dense<0.000000e+00> : vector<16x199xf32>
    %44 = tpu.matmul %43, %41, %cst_41 {dimension_numbers = #tpu.dot_dimension_numbers<[1], [0], [0], [1], [0, 0, 1, 1], [], []>} : vector<16x6xf32>, vector<6x199xf32>, vector<16x199xf32> -> vector<16x199xf32>
    %45 = arith.addf %40, %44 : vector<16x199xf32>
    %c24_42 = arith.constant 24 : index
    %c1_43 = arith.constant 1 : index
    %46 = vector.load %arg0[%c24_42, %c1_43] : memref<30x200xf32, #tpu.memory_space<vmem>>, vector<6x199xf32>
    %c9 = arith.constant 9 : index
    %c0_44 = arith.constant 0 : index
    %c0_45 = arith.constant 0 : index
    %47 = vector.load %arg1[%c9, %c0_44, %c0_45] : memref<10x16x6xf32, #tpu.memory_space<vmem>>, vector<1x16x6xf32>
    %48 = vector.shape_cast %47 : vector<1x16x6xf32> to vector<16x6xf32>
    %cst_46 = arith.constant dense<0.000000e+00> : vector<16x199xf32>
    %49 = tpu.matmul %48, %46, %cst_46 {dimension_numbers = #tpu.dot_dimension_numbers<[1], [0], [0], [1], [0, 0, 1, 1], [], []>} : vector<16x6xf32>, vector<6x199xf32>, vector<16x199xf32> -> vector<16x199xf32>
    %50 = arith.addf %45, %49 : vector<16x199xf32>
    %c0_47 = arith.constant 0 : index
    %c0_48 = arith.constant 0 : index
    %51 = vector.load %arg2[%c0_47, %c0_48] : memref<16x1xf32, #tpu.memory_space<vmem>>, vector<16x1xf32>
    %52 = vector.broadcast %51 : vector<16x1xf32> to vector<16x199xf32>
    %53 = arith.addf %50, %52 : vector<16x199xf32>
    %cst_49 = arith.constant 0.000000e+00 : f32
    %54 = vector.broadcast %cst_49 : f32 to vector<16x199xf32>
    %55 = arith.maximumf %53, %54 : vector<16x199xf32>
    %c0_50 = arith.constant 0 : index
    %c0_51 = arith.constant 0 : index
    %56 = vector.load %arg12[%c0_50, %c0_51] : memref<16x199xf32, #tpu.memory_space<vmem>>, vector<16x199xf32>
    tpu.vector_store %arg12[%c0_50, %c0_51], %55 {strides = array<i32>} : memref<16x199xf32, #tpu.memory_space<vmem>>, vector<16x199xf32>,
    %cst_52 = arith.constant 0.000000e+00 : f32
    %57 = vector.broadcast %cst_52 : f32 to vector<32x196xf32>
    %c0_53 = arith.constant 0 : index
    %c0_54 = arith.constant 0 : index
    %c0_55 = arith.constant 0 : index
    %58 = vector.load %arg3[%c0_53, %c0_54, %c0_55] : memref<4x32x16xf32, #tpu.memory_space<vmem>>, vector<1x32x16xf32>
    %59 = vector.shape_cast %58 : vector<1x32x16xf32> to vector<32x16xf32>
    %c0_56 = arith.constant 0 : index
    %c0_57 = arith.constant 0 : index
    %60 = vector.load %arg12[%c0_56, %c0_57] : memref<16x199xf32, #tpu.memory_space<vmem>>, vector<16x196xf32>
    %cst_58 = arith.constant dense<0.000000e+00> : vector<32x196xf32>
    %61 = tpu.matmul %59, %60, %cst_58 {dimension_numbers = #tpu.dot_dimension_numbers<[1], [0], [0], [1], [0, 0, 1, 1], [], []>} : vector<32x16xf32>, vector<16x196xf32>, vector<32x196xf32> -> vector<32x196xf32>
    %62 = arith.addf %57, %61 : vector<32x196xf32>
    %c1_59 = arith.constant 1 : index
    %c0_60 = arith.constant 0 : index
    %c0_61 = arith.constant 0 : index
    %63 = vector.load %arg3[%c1_59, %c0_60, %c0_61] : memref<4x32x16xf32, #tpu.memory_space<vmem>>, vector<1x32x16xf32>
    %64 = vector.shape_cast %63 : vector<1x32x16xf32> to vector<32x16xf32>
    %c0_62 = arith.constant 0 : index
    %c1_63 = arith.constant 1 : index
    %65 = vector.load %arg12[%c0_62, %c1_63] : memref<16x199xf32, #tpu.memory_space<vmem>>, vector<16x196xf32>
    %cst_64 = arith.constant dense<0.000000e+00> : vector<32x196xf32>
    %66 = tpu.matmul %64, %65, %cst_64 {dimension_numbers = #tpu.dot_dimension_numbers<[1], [0], [0], [1], [0, 0, 1, 1], [], []>} : vector<32x16xf32>, vector<16x196xf32>, vector<32x196xf32> -> vector<32x196xf32>
    %67 = arith.addf %62, %66 : vector<32x196xf32>
    %c2_65 = arith.constant 2 : index
    %c0_66 = arith.constant 0 : index
    %c0_67 = arith.constant 0 : index
    %68 = vector.load %arg3[%c2_65, %c0_66, %c0_67] : memref<4x32x16xf32, #tpu.memory_space<vmem>>, vector<1x32x16xf32>
    %69 = vector.shape_cast %68 : vector<1x32x16xf32> to vector<32x16xf32>
    %c0_68 = arith.constant 0 : index
    %c2_69 = arith.constant 2 : index
    %70 = vector.load %arg12[%c0_68, %c2_69] : memref<16x199xf32, #tpu.memory_space<vmem>>, vector<16x196xf32>
    %cst_70 = arith.constant dense<0.000000e+00> : vector<32x196xf32>
    %71 = tpu.matmul %69, %70, %cst_70 {dimension_numbers = #tpu.dot_dimension_numbers<[1], [0], [0], [1], [0, 0, 1, 1], [], []>} : vector<32x16xf32>, vector<16x196xf32>, vector<32x196xf32> -> vector<32x196xf32>
    %72 = arith.addf %67, %71 : vector<32x196xf32>
    %c3_71 = arith.constant 3 : index
    %c0_72 = arith.constant 0 : index
    %c0_73 = arith.constant 0 : index
    %73 = vector.load %arg3[%c3_71, %c0_72, %c0_73] : memref<4x32x16xf32, #tpu.memory_space<vmem>>, vector<1x32x16xf32>
    %74 = vector.shape_cast %73 : vector<1x32x16xf32> to vector<32x16xf32>
    %c0_74 = arith.constant 0 : index
    %c3_75 = arith.constant 3 : index
    %75 = vector.load %arg12[%c0_74, %c3_75] : memref<16x199xf32, #tpu.memory_space<vmem>>, vector<16x196xf32>
    %cst_76 = arith.constant dense<0.000000e+00> : vector<32x196xf32>
    %76 = tpu.matmul %74, %75, %cst_76 {dimension_numbers = #tpu.dot_dimension_numbers<[1], [0], [0], [1], [0, 0, 1, 1], [], []>} : vector<32x16xf32>, vector<16x196xf32>, vector<32x196xf32> -> vector<32x196xf32>
    %77 = arith.addf %72, %76 : vector<32x196xf32>
    %c0_77 = arith.constant 0 : index
    %c0_78 = arith.constant 0 : index
    %78 = vector.load %arg4[%c0_77, %c0_78] : memref<32x1xf32, #tpu.memory_space<vmem>>, vector<32x1xf32>
    %79 = vector.broadcast %78 : vector<32x1xf32> to vector<32x196xf32>
    %80 = arith.addf %77, %79 : vector<32x196xf32>
    %cst_79 = arith.constant 0.000000e+00 : f32
    %81 = vector.broadcast %cst_79 : f32 to vector<32x196xf32>
    %82 = arith.maximumf %80, %81 : vector<32x196xf32>
    %c0_80 = arith.constant 0 : index
    %c0_81 = arith.constant 0 : index
    %83 = vector.load %arg13[%c0_80, %c0_81] : memref<32x196xf32, #tpu.memory_space<vmem>>, vector<32x196xf32>
    tpu.vector_store %arg13[%c0_80, %c0_81], %82 {strides = array<i32>} : memref<32x196xf32, #tpu.memory_space<vmem>>, vector<32x196xf32>,
    %cst_82 = arith.constant 0.000000e+00 : f32
    %84 = vector.broadcast %cst_82 : f32 to vector<2x512xf32>
    %c0_83 = arith.constant 0 : index
    %c0_84 = arith.constant 0 : index
    %85 = vector.load %arg13[%c0_83, %c0_84] : memref<32x196xf32, #tpu.memory_space<vmem>>, vector<2x196xf32>
    %86 = arith.truncf %85 : vector<2x196xf32> to vector<2x196xbf16>
    %c0_85 = arith.constant 0 : index
    %c0_86 = arith.constant 0 : index
    %c0_87 = arith.constant 0 : index
    %87 = vector.load %arg5[%c0_85, %c0_86, %c0_87] : memref<16x196x512xbf16, #tpu.memory_space<vmem>>, vector<1x196x512xbf16>
    %88 = vector.shape_cast %87 : vector<1x196x512xbf16> to vector<196x512xbf16>
    %cst_88 = arith.constant dense<0.000000e+00> : vector<2x512xf32>
    %89 = tpu.matmul %86, %88, %cst_88 {dimension_numbers = #tpu.dot_dimension_numbers<[1], [0], [0], [1], [0, 0, 1, 1], [], []>} : vector<2x196xbf16>, vector<196x512xbf16>, vector<2x512xf32> -> vector<2x512xf32>
    %90 = arith.addf %84, %89 : vector<2x512xf32>
    %c2_89 = arith.constant 2 : index
    %c0_90 = arith.constant 0 : index
    %91 = vector.load %arg13[%c2_89, %c0_90] : memref<32x196xf32, #tpu.memory_space<vmem>>, vector<2x196xf32>
    %92 = arith.truncf %91 : vector<2x196xf32> to vector<2x196xbf16>
    %c1_91 = arith.constant 1 : index
    %c0_92 = arith.constant 0 : index
    %c0_93 = arith.constant 0 : index
    %93 = vector.load %arg5[%c1_91, %c0_92, %c0_93] : memref<16x196x512xbf16, #tpu.memory_space<vmem>>, vector<1x196x512xbf16>
    %94 = vector.shape_cast %93 : vector<1x196x512xbf16> to vector<196x512xbf16>
    %cst_94 = arith.constant dense<0.000000e+00> : vector<2x512xf32>
    %95 = tpu.matmul %92, %94, %cst_94 {dimension_numbers = #tpu.dot_dimension_numbers<[1], [0], [0], [1], [0, 0, 1, 1], [], []>} : vector<2x196xbf16>, vector<196x512xbf16>, vector<2x512xf32> -> vector<2x512xf32>
    %96 = arith.addf %90, %95 : vector<2x512xf32>
    %c4_95 = arith.constant 4 : index
    %c0_96 = arith.constant 0 : index
    %97 = vector.load %arg13[%c4_95, %c0_96] : memref<32x196xf32, #tpu.memory_space<vmem>>, vector<2x196xf32>
    %98 = arith.truncf %97 : vector<2x196xf32> to vector<2x196xbf16>
    %c2_97 = arith.constant 2 : index
    %c0_98 = arith.constant 0 : index
    %c0_99 = arith.constant 0 : index
    %99 = vector.load %arg5[%c2_97, %c0_98, %c0_99] : memref<16x196x512xbf16, #tpu.memory_space<vmem>>, vector<1x196x512xbf16>
    %100 = vector.shape_cast %99 : vector<1x196x512xbf16> to vector<196x512xbf16>
    %cst_100 = arith.constant dense<0.000000e+00> : vector<2x512xf32>
    %101 = tpu.matmul %98, %100, %cst_100 {dimension_numbers = #tpu.dot_dimension_numbers<[1], [0], [0], [1], [0, 0, 1, 1], [], []>} : vector<2x196xbf16>, vector<196x512xbf16>, vector<2x512xf32> -> vector<2x512xf32>
    %102 = arith.addf %96, %101 : vector<2x512xf32>
    %c6_101 = arith.constant 6 : index
    %c0_102 = arith.constant 0 : index
    %103 = vector.load %arg13[%c6_101, %c0_102] : memref<32x196xf32, #tpu.memory_space<vmem>>, vector<2x196xf32>
    %104 = arith.truncf %103 : vector<2x196xf32> to vector<2x196xbf16>
    %c3_103 = arith.constant 3 : index
    %c0_104 = arith.constant 0 : index
    %c0_105 = arith.constant 0 : index
    %105 = vector.load %arg5[%c3_103, %c0_104, %c0_105] : memref<16x196x512xbf16, #tpu.memory_space<vmem>>, vector<1x196x512xbf16>
    %106 = vector.shape_cast %105 : vector<1x196x512xbf16> to vector<196x512xbf16>
    %cst_106 = arith.constant dense<0.000000e+00> : vector<2x512xf32>
    %107 = tpu.matmul %104, %106, %cst_106 {dimension_numbers = #tpu.dot_dimension_numbers<[1], [0], [0], [1], [0, 0, 1, 1], [], []>} : vector<2x196xbf16>, vector<196x512xbf16>, vector<2x512xf32> -> vector<2x512xf32>
    %108 = arith.addf %102, %107 : vector<2x512xf32>
    %c8_107 = arith.constant 8 : index
    %c0_108 = arith.constant 0 : index
    %109 = vector.load %arg13[%c8_107, %c0_108] : memref<32x196xf32, #tpu.memory_space<vmem>>, vector<2x196xf32>
    %110 = arith.truncf %109 : vector<2x196xf32> to vector<2x196xbf16>
    %c4_109 = arith.constant 4 : index
    %c0_110 = arith.constant 0 : index
    %c0_111 = arith.constant 0 : index
    %111 = vector.load %arg5[%c4_109, %c0_110, %c0_111] : memref<16x196x512xbf16, #tpu.memory_space<vmem>>, vector<1x196x512xbf16>
    %112 = vector.shape_cast %111 : vector<1x196x512xbf16> to vector<196x512xbf16>
    %cst_112 = arith.constant dense<0.000000e+00> : vector<2x512xf32>
    %113 = tpu.matmul %110, %112, %cst_112 {dimension_numbers = #tpu.dot_dimension_numbers<[1], [0], [0], [1], [0, 0, 1, 1], [], []>} : vector<2x196xbf16>, vector<196x512xbf16>, vector<2x512xf32> -> vector<2x512xf32>
    %114 = arith.addf %108, %113 : vector<2x512xf32>
    %c10 = arith.constant 10 : index
    %c0_113 = arith.constant 0 : index
    %115 = vector.load %arg13[%c10, %c0_113] : memref<32x196xf32, #tpu.memory_space<vmem>>, vector<2x196xf32>
    %116 = arith.truncf %115 : vector<2x196xf32> to vector<2x196xbf16>
    %c5_114 = arith.constant 5 : index
    %c0_115 = arith.constant 0 : index
    %c0_116 = arith.constant 0 : index
    %117 = vector.load %arg5[%c5_114, %c0_115, %c0_116] : memref<16x196x512xbf16, #tpu.memory_space<vmem>>, vector<1x196x512xbf16>
    %118 = vector.shape_cast %117 : vector<1x196x512xbf16> to vector<196x512xbf16>
    %cst_117 = arith.constant dense<0.000000e+00> : vector<2x512xf32>
    %119 = tpu.matmul %116, %118, %cst_117 {dimension_numbers = #tpu.dot_dimension_numbers<[1], [0], [0], [1], [0, 0, 1, 1], [], []>} : vector<2x196xbf16>, vector<196x512xbf16>, vector<2x512xf32> -> vector<2x512xf32>
    %120 = arith.addf %114, %119 : vector<2x512xf32>
    %c12_118 = arith.constant 12 : index
    %c0_119 = arith.constant 0 : index
    %121 = vector.load %arg13[%c12_118, %c0_119] : memref<32x196xf32, #tpu.memory_space<vmem>>, vector<2x196xf32>
    %122 = arith.truncf %121 : vector<2x196xf32> to vector<2x196xbf16>
    %c6_120 = arith.constant 6 : index
    %c0_121 = arith.constant 0 : index
    %c0_122 = arith.constant 0 : index
    %123 = vector.load %arg5[%c6_120, %c0_121, %c0_122] : memref<16x196x512xbf16, #tpu.memory_space<vmem>>, vector<1x196x512xbf16>
    %124 = vector.shape_cast %123 : vector<1x196x512xbf16> to vector<196x512xbf16>
    %cst_123 = arith.constant dense<0.000000e+00> : vector<2x512xf32>
    %125 = tpu.matmul %122, %124, %cst_123 {dimension_numbers = #tpu.dot_dimension_numbers<[1], [0], [0], [1], [0, 0, 1, 1], [], []>} : vector<2x196xbf16>, vector<196x512xbf16>, vector<2x512xf32> -> vector<2x512xf32>
    %126 = arith.addf %120, %125 : vector<2x512xf32>
    %c14 = arith.constant 14 : index
    %c0_124 = arith.constant 0 : index
    %127 = vector.load %arg13[%c14, %c0_124] : memref<32x196xf32, #tpu.memory_space<vmem>>, vector<2x196xf32>
    %128 = arith.truncf %127 : vector<2x196xf32> to vector<2x196xbf16>
    %c7_125 = arith.constant 7 : index
    %c0_126 = arith.constant 0 : index
    %c0_127 = arith.constant 0 : index
    %129 = vector.load %arg5[%c7_125, %c0_126, %c0_127] : memref<16x196x512xbf16, #tpu.memory_space<vmem>>, vector<1x196x512xbf16>
    %130 = vector.shape_cast %129 : vector<1x196x512xbf16> to vector<196x512xbf16>
    %cst_128 = arith.constant dense<0.000000e+00> : vector<2x512xf32>
    %131 = tpu.matmul %128, %130, %cst_128 {dimension_numbers = #tpu.dot_dimension_numbers<[1], [0], [0], [1], [0, 0, 1, 1], [], []>} : vector<2x196xbf16>, vector<196x512xbf16>, vector<2x512xf32> -> vector<2x512xf32>
    %132 = arith.addf %126, %131 : vector<2x512xf32>
    %c16 = arith.constant 16 : index
    %c0_129 = arith.constant 0 : index
    %133 = vector.load %arg13[%c16, %c0_129] : memref<32x196xf32, #tpu.memory_space<vmem>>, vector<2x196xf32>
    %134 = arith.truncf %133 : vector<2x196xf32> to vector<2x196xbf16>
    %c8_130 = arith.constant 8 : index
    %c0_131 = arith.constant 0 : index
    %c0_132 = arith.constant 0 : index
    %135 = vector.load %arg5[%c8_130, %c0_131, %c0_132] : memref<16x196x512xbf16, #tpu.memory_space<vmem>>, vector<1x196x512xbf16>
    %136 = vector.shape_cast %135 : vector<1x196x512xbf16> to vector<196x512xbf16>
    %cst_133 = arith.constant dense<0.000000e+00> : vector<2x512xf32>
    %137 = tpu.matmul %134, %136, %cst_133 {dimension_numbers = #tpu.dot_dimension_numbers<[1], [0], [0], [1], [0, 0, 1, 1], [], []>} : vector<2x196xbf16>, vector<196x512xbf16>, vector<2x512xf32> -> vector<2x512xf32>
    %138 = arith.addf %132, %137 : vector<2x512xf32>
    %c18_134 = arith.constant 18 : index
    %c0_135 = arith.constant 0 : index
    %139 = vector.load %arg13[%c18_134, %c0_135] : memref<32x196xf32, #tpu.memory_space<vmem>>, vector<2x196xf32>
    %140 = arith.truncf %139 : vector<2x196xf32> to vector<2x196xbf16>
    %c9_136 = arith.constant 9 : index
    %c0_137 = arith.constant 0 : index
    %c0_138 = arith.constant 0 : index
    %141 = vector.load %arg5[%c9_136, %c0_137, %c0_138] : memref<16x196x512xbf16, #tpu.memory_space<vmem>>, vector<1x196x512xbf16>
    %142 = vector.shape_cast %141 : vector<1x196x512xbf16> to vector<196x512xbf16>
    %cst_139 = arith.constant dense<0.000000e+00> : vector<2x512xf32>
    %143 = tpu.matmul %140, %142, %cst_139 {dimension_numbers = #tpu.dot_dimension_numbers<[1], [0], [0], [1], [0, 0, 1, 1], [], []>} : vector<2x196xbf16>, vector<196x512xbf16>, vector<2x512xf32> -> vector<2x512xf32>
    %144 = arith.addf %138, %143 : vector<2x512xf32>
    %c20 = arith.constant 20 : index
    %c0_140 = arith.constant 0 : index
    %145 = vector.load %arg13[%c20, %c0_140] : memref<32x196xf32, #tpu.memory_space<vmem>>, vector<2x196xf32>
    %146 = arith.truncf %145 : vector<2x196xf32> to vector<2x196xbf16>
    %c10_141 = arith.constant 10 : index
    %c0_142 = arith.constant 0 : index
    %c0_143 = arith.constant 0 : index
    %147 = vector.load %arg5[%c10_141, %c0_142, %c0_143] : memref<16x196x512xbf16, #tpu.memory_space<vmem>>, vector<1x196x512xbf16>
    %148 = vector.shape_cast %147 : vector<1x196x512xbf16> to vector<196x512xbf16>
    %cst_144 = arith.constant dense<0.000000e+00> : vector<2x512xf32>
    %149 = tpu.matmul %146, %148, %cst_144 {dimension_numbers = #tpu.dot_dimension_numbers<[1], [0], [0], [1], [0, 0, 1, 1], [], []>} : vector<2x196xbf16>, vector<196x512xbf16>, vector<2x512xf32> -> vector<2x512xf32>
    %150 = arith.addf %144, %149 : vector<2x512xf32>
    %c22 = arith.constant 22 : index
    %c0_145 = arith.constant 0 : index
    %151 = vector.load %arg13[%c22, %c0_145] : memref<32x196xf32, #tpu.memory_space<vmem>>, vector<2x196xf32>
    %152 = arith.truncf %151 : vector<2x196xf32> to vector<2x196xbf16>
    %c11 = arith.constant 11 : index
    %c0_146 = arith.constant 0 : index
    %c0_147 = arith.constant 0 : index
    %153 = vector.load %arg5[%c11, %c0_146, %c0_147] : memref<16x196x512xbf16, #tpu.memory_space<vmem>>, vector<1x196x512xbf16>
    %154 = vector.shape_cast %153 : vector<1x196x512xbf16> to vector<196x512xbf16>
    %cst_148 = arith.constant dense<0.000000e+00> : vector<2x512xf32>
    %155 = tpu.matmul %152, %154, %cst_148 {dimension_numbers = #tpu.dot_dimension_numbers<[1], [0], [0], [1], [0, 0, 1, 1], [], []>} : vector<2x196xbf16>, vector<196x512xbf16>, vector<2x512xf32> -> vector<2x512xf32>
    %156 = arith.addf %150, %155 : vector<2x512xf32>
    %c24_149 = arith.constant 24 : index
    %c0_150 = arith.constant 0 : index
    %157 = vector.load %arg13[%c24_149, %c0_150] : memref<32x196xf32, #tpu.memory_space<vmem>>, vector<2x196xf32>
    %158 = arith.truncf %157 : vector<2x196xf32> to vector<2x196xbf16>
    %c12_151 = arith.constant 12 : index
    %c0_152 = arith.constant 0 : index
    %c0_153 = arith.constant 0 : index
    %159 = vector.load %arg5[%c12_151, %c0_152, %c0_153] : memref<16x196x512xbf16, #tpu.memory_space<vmem>>, vector<1x196x512xbf16>
    %160 = vector.shape_cast %159 : vector<1x196x512xbf16> to vector<196x512xbf16>
    %cst_154 = arith.constant dense<0.000000e+00> : vector<2x512xf32>
    %161 = tpu.matmul %158, %160, %cst_154 {dimension_numbers = #tpu.dot_dimension_numbers<[1], [0], [0], [1], [0, 0, 1, 1], [], []>} : vector<2x196xbf16>, vector<196x512xbf16>, vector<2x512xf32> -> vector<2x512xf32>
    %162 = arith.addf %156, %161 : vector<2x512xf32>
    %c26 = arith.constant 26 : index
    %c0_155 = arith.constant 0 : index
    %163 = vector.load %arg13[%c26, %c0_155] : memref<32x196xf32, #tpu.memory_space<vmem>>, vector<2x196xf32>
    %164 = arith.truncf %163 : vector<2x196xf32> to vector<2x196xbf16>
    %c13 = arith.constant 13 : index
    %c0_156 = arith.constant 0 : index
    %c0_157 = arith.constant 0 : index
    %165 = vector.load %arg5[%c13, %c0_156, %c0_157] : memref<16x196x512xbf16, #tpu.memory_space<vmem>>, vector<1x196x512xbf16>
    %166 = vector.shape_cast %165 : vector<1x196x512xbf16> to vector<196x512xbf16>
    %cst_158 = arith.constant dense<0.000000e+00> : vector<2x512xf32>
    %167 = tpu.matmul %164, %166, %cst_158 {dimension_numbers = #tpu.dot_dimension_numbers<[1], [0], [0], [1], [0, 0, 1, 1], [], []>} : vector<2x196xbf16>, vector<196x512xbf16>, vector<2x512xf32> -> vector<2x512xf32>
    %168 = arith.addf %162, %167 : vector<2x512xf32>
    %c28 = arith.constant 28 : index
    %c0_159 = arith.constant 0 : index
    %169 = vector.load %arg13[%c28, %c0_159] : memref<32x196xf32, #tpu.memory_space<vmem>>, vector<2x196xf32>
    %170 = arith.truncf %169 : vector<2x196xf32> to vector<2x196xbf16>
    %c14_160 = arith.constant 14 : index
    %c0_161 = arith.constant 0 : index
    %c0_162 = arith.constant 0 : index
    %171 = vector.load %arg5[%c14_160, %c0_161, %c0_162] : memref<16x196x512xbf16, #tpu.memory_space<vmem>>, vector<1x196x512xbf16>
    %172 = vector.shape_cast %171 : vector<1x196x512xbf16> to vector<196x512xbf16>
    %cst_163 = arith.constant dense<0.000000e+00> : vector<2x512xf32>
    %173 = tpu.matmul %170, %172, %cst_163 {dimension_numbers = #tpu.dot_dimension_numbers<[1], [0], [0], [1], [0, 0, 1, 1], [], []>} : vector<2x196xbf16>, vector<196x512xbf16>, vector<2x512xf32> -> vector<2x512xf32>
    %174 = arith.addf %168, %173 : vector<2x512xf32>
    %c30 = arith.constant 30 : index
    %c0_164 = arith.constant 0 : index
    %175 = vector.load %arg13[%c30, %c0_164] : memref<32x196xf32, #tpu.memory_space<vmem>>, vector<2x196xf32>
    %176 = arith.truncf %175 : vector<2x196xf32> to vector<2x196xbf16>
    %c15 = arith.constant 15 : index
    %c0_165 = arith.constant 0 : index
    %c0_166 = arith.constant 0 : index
    %177 = vector.load %arg5[%c15, %c0_165, %c0_166] : memref<16x196x512xbf16, #tpu.memory_space<vmem>>, vector<1x196x512xbf16>
    %178 = vector.shape_cast %177 : vector<1x196x512xbf16> to vector<196x512xbf16>
    %cst_167 = arith.constant dense<0.000000e+00> : vector<2x512xf32>
    %179 = tpu.matmul %176, %178, %cst_167 {dimension_numbers = #tpu.dot_dimension_numbers<[1], [0], [0], [1], [0, 0, 1, 1], [], []>} : vector<2x196xbf16>, vector<196x512xbf16>, vector<2x512xf32> -> vector<2x512xf32>
    %180 = arith.addf %174, %179 : vector<2x512xf32>
    %c0_168 = arith.constant 0 : index
    %c0_169 = arith.constant 0 : index
    %181 = vector.load %arg6[%c0_168, %c0_169] : memref<1x512xf32, #tpu.memory_space<vmem>>, vector<1x512xf32>
    %182 = vector.broadcast %181 : vector<1x512xf32> to vector<2x512xf32>
    %183 = arith.addf %180, %182 : vector<2x512xf32>
    %cst_170 = arith.constant 0.000000e+00 : f32
    %184 = vector.broadcast %cst_170 : f32 to vector<2x512xf32>
    %185 = arith.maximumf %183, %184 : vector<2x512xf32>
    %186 = arith.truncf %185 : vector<2x512xf32> to vector<2x512xbf16>
    %c0_171 = arith.constant 0 : index
    %c0_172 = arith.constant 0 : index
    %187 = vector.load %arg7[%c0_171, %c0_172] : memref<512x256xbf16, #tpu.memory_space<vmem>>, vector<512x256xbf16>
    %cst_173 = arith.constant dense<0.000000e+00> : vector<2x256xf32>
    %188 = tpu.matmul %186, %187, %cst_173 {dimension_numbers = #tpu.dot_dimension_numbers<[1], [0], [0], [1], [0, 0, 1, 1], [], []>} : vector<2x512xbf16>, vector<512x256xbf16>, vector<2x256xf32> -> vector<2x256xf32>
    %c0_174 = arith.constant 0 : index
    %c0_175 = arith.constant 0 : index
    %189 = vector.load %arg8[%c0_174, %c0_175] : memref<1x256xf32, #tpu.memory_space<vmem>>, vector<1x256xf32>
    %190 = vector.broadcast %189 : vector<1x256xf32> to vector<2x256xf32>
    %191 = arith.addf %188, %190 : vector<2x256xf32>
    %cst_176 = arith.constant 0.000000e+00 : f32
    %192 = vector.broadcast %cst_176 : f32 to vector<2x256xf32>
    %193 = arith.maximumf %191, %192 : vector<2x256xf32>
    %194 = arith.truncf %193 : vector<2x256xf32> to vector<2x256xbf16>
    %c0_177 = arith.constant 0 : index
    %c0_178 = arith.constant 0 : index
    %195 = vector.load %arg9[%c0_177, %c0_178] : memref<256x128xbf16, #tpu.memory_space<vmem>>, vector<256x128xbf16>
    %cst_179 = arith.constant dense<0.000000e+00> : vector<2x128xf32>
    %196 = tpu.matmul %194, %195, %cst_179 {dimension_numbers = #tpu.dot_dimension_numbers<[1], [0], [0], [1], [0, 0, 1, 1], [], []>} : vector<2x256xbf16>, vector<256x128xbf16>, vector<2x128xf32> -> vector<2x128xf32>
    %c0_180 = arith.constant 0 : index
    %c0_181 = arith.constant 0 : index
    %197 = vector.load %arg10[%c0_180, %c0_181] : memref<1x128xf32, #tpu.memory_space<vmem>>, vector<1x128xf32>
    %198 = vector.broadcast %197 : vector<1x128xf32> to vector<2x128xf32>
    %199 = arith.addf %196, %198 : vector<2x128xf32>
    %c0_182 = arith.constant 0 : index
    %c0_183 = arith.constant 0 : index
    %200 = vector.load %arg11[%c0_182, %c0_183] : memref<2x128xf32, #tpu.memory_space<vmem>>, vector<2x128xf32>
    tpu.vector_store %arg11[%c0_182, %c0_183], %199 {strides = array<i32>} : memref<2x128xf32, #tpu.memory_space<vmem>>, vector<2x128xf32>,
    return
  }
}

</mosaic_0001>

<llo_original>
// kernel: cnn_encoder_forward.1
$region0: #{cnn_encoder_forward.1}
  #allocation0 [shape = 'u32[]', space=smem, size = 0x4, offset = 0x4, fixed_abs, tag = 'smem constant byte address 0x4 - core index']
  #allocation1 [shape = 'u32[144,128]{1,0:T(1,128)}', space=vmem, size = 0x12000, scoped, tag = 'internal scratch']
  #allocation2 [shape = 'f32[16,199]{1,0:T(8,128)}', space=vmem, size = 0x4000, scoped, tag = 'scratch operand']
  #allocation3 [shape = 'f32[32,196]{1,0:T(8,128)}', space=vmem, size = 0x8000, scoped, tag = 'scratch operand']
  %s0 = inlined_call_operand.vmem [shape: f32[30,200], index: 0, kind: input, shape index: {}]
  %s1 = inlined_call_operand.vmem [shape: f32[10,16,6], index: 1, kind: input, shape index: {}]
  %s2 = inlined_call_operand.vmem [shape: f32[16,1], index: 2, kind: input, shape index: {}]
  %s3 = inlined_call_operand.vmem [shape: f32[4,32,16], index: 3, kind: input, shape index: {}]
  %s4 = inlined_call_operand.vmem [shape: f32[32,1], index: 4, kind: input, shape index: {}]
  %s5 = inlined_call_operand.vmem [shape: bf16[16,196,512], index: 5, kind: input, shape index: {}]
  %s6 = inlined_call_operand.vmem [shape: f32[1,512], index: 6, kind: input, shape index: {}]
  %s7 = inlined_call_operand.vmem [shape: bf16[512,256], index: 7, kind: input, shape index: {}]
  %s8 = inlined_call_operand.vmem [shape: f32[1,256], index: 8, kind: input, shape index: {}]
  %s9 = inlined_call_operand.vmem [shape: bf16[256,128], index: 9, kind: input, shape index: {}]
  %s10 = inlined_call_operand.vmem [shape: f32[1,128], index: 10, kind: input, shape index: {}]
  %s11 = inlined_call_operand.hbm [shape: f32[2,128], index: 11, kind: output, shape index: {}]
  %s12 = sld [smem:[#allocation0]]
  $region54: #{cnn_encoder_forward.1} parent=0
    _
  %s14 = ssub.s32 1, %s12
  %s15 = scalar_select 0, %s14, %s12
  $region1: #{cnn_encoder_forward.1} parent=0
    #allocation4 [shape = 'u8[1024]{0}', space=vmem, size = 0x400, scoped, tag = 'output window, operand 0, single buffered']
    #allocation5 [shape = 's32[1]{0}', space=sflag, size = 0x4, scoped, tag = 'scoped memory for cnn_encoder_forward.1']
    %16 = vsyncpa [#allocation5], 0
    // Predicated region
    $region2: #{cnn_encoder_forward.1} parent=1 // pred_check
      _
    $region3: #{cnn_encoder_forward.1} parent=1 // pred_check_branch
      %18 = sbr.rel (0) target = $region5
    $region4: #{cnn_encoder_forward.1} parent=1 // pred_region
      _
    $region5: #{cnn_encoder_forward.1} parent=1 // pred_fallthru
      _
    // Predicated region
    $region6: #{cnn_encoder_forward.1} parent=1 // pred_check
      _
    $region7: #{cnn_encoder_forward.1} parent=1 // pred_check_branch
      %20 = sbr.rel (0) target = $region9
    $region8: #{cnn_encoder_forward.1} parent=1 // pred_region
      _
    $region9: #{cnn_encoder_forward.1} parent=1 // pred_fallthru
      _
    // Predicated region
    $region10: #{cnn_encoder_forward.1} parent=1 // pred_check
      _
    $region11: #{cnn_encoder_forward.1} parent=1 // pred_check_branch
      %22 = sbr.rel (0) target = $region13
    $region12: #{cnn_encoder_forward.1} parent=1 // pred_region
      _
    $region13: #{cnn_encoder_forward.1} parent=1 // pred_fallthru
      _
    // Predicated region
    $region14: #{cnn_encoder_forward.1} parent=1 // pred_check
      _
    $region15: #{cnn_encoder_forward.1} parent=1 // pred_check_branch
      %24 = sbr.rel (0) target = $region17
    $region16: #{cnn_encoder_forward.1} parent=1 // pred_region
      _
    $region17: #{cnn_encoder_forward.1} parent=1 // pred_fallthru
      _
    // Predicated region
    $region18: #{cnn_encoder_forward.1} parent=1 // pred_check
      _
    $region19: #{cnn_encoder_forward.1} parent=1 // pred_check_branch
      %26 = sbr.rel (0) target = $region21
    $region20: #{cnn_encoder_forward.1} parent=1 // pred_region
      _
    $region21: #{cnn_encoder_forward.1} parent=1 // pred_fallthru
      _
    // Predicated region
    $region22: #{cnn_encoder_forward.1} parent=1 // pred_check
      _
    $region23: #{cnn_encoder_forward.1} parent=1 // pred_check_branch
      %28 = sbr.rel (0) target = $region25
    $region24: #{cnn_encoder_forward.1} parent=1 // pred_region
      _
    $region25: #{cnn_encoder_forward.1} parent=1 // pred_fallthru
      _
    // Predicated region
    $region26: #{cnn_encoder_forward.1} parent=1 // pred_check
      _
    $region27: #{cnn_encoder_forward.1} parent=1 // pred_check_branch
      %30 = sbr.rel (0) target = $region29
    $region28: #{cnn_encoder_forward.1} parent=1 // pred_region
      _
    $region29: #{cnn_encoder_forward.1} parent=1 // pred_fallthru
      _
    // Predicated region
    $region30: #{cnn_encoder_forward.1} parent=1 // pred_check
      _
    $region31: #{cnn_encoder_forward.1} parent=1 // pred_check_branch
      %32 = sbr.rel (0) target = $region33
    $region32: #{cnn_encoder_forward.1} parent=1 // pred_region
      _
    $region33: #{cnn_encoder_forward.1} parent=1 // pred_fallthru
      _
    // Predicated region
    $region34: #{cnn_encoder_forward.1} parent=1 // pred_check
      _
    $region35: #{cnn_encoder_forward.1} parent=1 // pred_check_branch
      %34 = sbr.rel (0) target = $region37
    $region36: #{cnn_encoder_forward.1} parent=1 // pred_region
      _
    $region37: #{cnn_encoder_forward.1} parent=1 // pred_fallthru
      _
    // Predicated region
    $region38: #{cnn_encoder_forward.1} parent=1 // pred_check
      _
    $region39: #{cnn_encoder_forward.1} parent=1 // pred_check_branch
      %36 = sbr.rel (0) target = $region41
    $region40: #{cnn_encoder_forward.1} parent=1 // pred_region
      _
    $region41: #{cnn_encoder_forward.1} parent=1 // pred_fallthru
      _
    // Predicated region
    $region42: #{cnn_encoder_forward.1} parent=1 // pred_check
      _
    $region43: #{cnn_encoder_forward.1} parent=1 // pred_check_branch
      %38 = sbr.rel (0) target = $region45
    $region44: #{cnn_encoder_forward.1} parent=1 // pred_region
      _
    $region45: #{cnn_encoder_forward.1} parent=1 // pred_fallthru
      _
    %v40 = vld [vmem:[%s0] sm:$0x3f]
    %v41 = vld [vmem:[%s0 + $0x8] sm:$0x3f]
    %v42 = vld [vmem:[%s1] sm:$0xff]
    %v43 = vld [vmem:[%s1 + $0x8] sm:$0xff]
    %v44 = vld [vmem:[%s0] sm:$0xc0]
    %v45 = vld [vmem:[%s0 + $0x8] sm:$0xc0]
    %v46 = vld [vmem:[%s0 + $0x10] sm:$0xf]
    %v47 = vld [vmem:[%s0 + $0x18] sm:$0xf]
    %s48 = scalar_lea.vmem %s1, 16
    %v49 = vld [vmem:[%s48] sm:$0xff]
    %v50 = vld [vmem:[%s48 + $0x8] sm:$0xff]
    %vm55 = vcmask 1041408
    %v56 = vrot.slane %v44, 6
    %v57 = vrot.slane %v46, 6
    %v58 = vsel %vm55, %v56, %v57
    %v59 = vrot.slane %v45, 6
    %v60 = vrot.slane %v47, 6
    %v61 = vsel %vm55, %v59, %v60
    %vm62 = vcmask 48128
    %v64 = vsel %vm62, %v49, 0
    %v67 = vsel %vm62, %v50, 0
    %vm69 = vcmask 1045504
    %v70 = vsel %vm69, %v58, 0
    %v72 = vsel %vm69, %v61, 0
    %74 = vmatprep.subr.mxu0 0.0
    %75 = vmatpush1.msra.mxu0 0.0
    %76 = vmatprep.subr.mxu0 0.0
    %77 = vmatpush1.msra.mxu0 0.0
    %78 = vmatprep.subr.mxu0 0.0
    %79 = vmatpush1.msra.mxu0 0.0
    %80 = vmatprep.subr.mxu0 0.0
    %81 = vmatpush1.msra.mxu0 0.0
    %82 = vmatprep.subr.mxu0 0.0
    %83 = vmatpush1.msra.mxu0 0.0
    %84 = vmatprep.subr.mxu0 0.0
    %85 = vmatpush1.msra.mxu0 0.0
    %86 = vmatprep.subr.mxu0 0.0
    %87 = vmatpush1.msra.mxu0 0.0
    %88 = vmatprep.subr.mxu0 0.0
    %89 = vmatpush1.msra.mxu0 0.0
    %90 = vmatprep.subr.mxu0 0.0
    %91 = vmatpush1.msra.mxu0 0.0
    %92 = vmatprep.subr.mxu0 0.0
    %93 = vmatpush1.msra.mxu0 0.0
    %94 = vmatprep.subr.mxu0 0.0
    %95 = vmatpush1.msra.mxu0 0.0
    %96 = vmatprep.subr.mxu0 0.0
    %97 = vmatpush1.msra.mxu0 0.0
    %98 = vmatprep.subr.mxu0 0.0
    %99 = vmatpush1.msra.mxu0 0.0
    %100 = vmatprep.subr.mxu0 0.0
    %101 = vmatpush1.msra.mxu0 0.0
    %102 = vmatprep.subr.mxu0 0.0
    %103 = vmatpush1.msra.mxu0 0.0
    %104 = vmatprep.subr.mxu0 %v72
    %105 = vmatpush1.msra.mxu0 %v70
    %106 = vmatprep.subr.mxu0 0.0
    %107 = vmatpush2.msra.mxu0 0.0
    %108 = vmatprep.subr.mxu0 0.0
    %109 = vmatpush2.msra.mxu0 0.0
    %110 = vmatprep.subr.mxu0 0.0
    %111 = vmatpush2.msra.mxu0 0.0
    %112 = vmatprep.subr.mxu0 0.0
    %113 = vmatpush2.msra.mxu0 0.0
    %114 = vmatprep.subr.mxu0 0.0
    %115 = vmatpush2.msra.mxu0 0.0
    %116 = vmatprep.subr.mxu0 0.0
    %117 = vmatpush2.msra.mxu0 0.0
    %118 = vmatprep.subr.mxu0 0.0
    %119 = vmatpush2.msra.mxu0 0.0
    %120 = vmatprep.subr.mxu0 0.0
    %121 = vmatpush2.msra.mxu0 0.0
    %122 = vmatprep.subr.mxu0 0.0
    %123 = vmatpush2.msra.mxu0 0.0
    %124 = vmatprep.subr.mxu0 0.0
    %125 = vmatpush2.msra.mxu0 0.0
    %126 = vmatprep.subr.mxu0 0.0
    %127 = vmatpush2.msra.mxu0 0.0
    %128 = vmatprep.subr.mxu0 0.0
    %129 = vmatpush2.msra.mxu0 0.0
    %130 = vmatprep.subr.mxu0 0.0
    %131 = vmatpush2.msra.mxu0 0.0
    %132 = vmatprep.subr.mxu0 0.0
    %133 = vmatpush2.msra.mxu0 0.0
    %134 = vmatprep.subr.mxu0 0.0
    %135 = vmatpush2.msra.mxu0 0.0
    %136 = vmatprep.subr.mxu0 0.0
    %137 = vmatpush2.msra.mxu0 0.0
    %138 = vmatprep.mubr.f32.mxu0 0.0
    %139 = vmatmul.mubr.f32.gmra.mxu0 %v64
    %v140 = vpop.f32.mrf.mxu0
    %v141 = vadd.f32 0.0, %v140
    %v142 = vpop.f32.mrf.mxu0
    %v143 = vadd.f32 0.0, %v142
    %144 = vmatprep.mubr.f32.mxu0 0.0
    %145 = vmatmul.mubr.f32.gmra.mxu0 %v67
    %v146 = vpop.f32.mrf.mxu0
    %v147 = vadd.f32 0.0, %v146
    %v148 = vpop.f32.mrf.mxu0
    %v149 = vadd.f32 0.0, %v148
    %150 = vdwg.mxu0
    %v152 = vsel %vm62, %v42, 0
    %v155 = vsel %vm62, %v43, 0
    %v158 = vsel %vm69, %v40, 0
    %v161 = vsel %vm69, %v41, 0
    %163 = vmatprep.subr.mxu0 0.0
    %164 = vmatpush1.msra.mxu0 0.0
    %165 = vmatprep.subr.mxu0 0.0
    %166 = vmatpush1.msra.mxu0 0.0
    %167 = vmatprep.subr.mxu0 0.0
    %168 = vmatpush1.msra.mxu0 0.0
    %169 = vmatprep.subr.mxu0 0.0
    %170 = vmatpush1.msra.mxu0 0.0
    %171 = vmatprep.subr.mxu0 0.0
    %172 = vmatpush1.msra.mxu0 0.0
    %173 = vmatprep.subr.mxu0 0.0
    %174 = vmatpush1.msra.mxu0 0.0
    %175 = vmatprep.subr.mxu0 0.0
    %176 = vmatpush1.msra.mxu0 0.0
    %177 = vmatprep.subr.mxu0 0.0
    %178 = vmatpush1.msra.mxu0 0.0
    %179 = vmatprep.subr.mxu0 0.0
    %180 = vmatpush1.msra.mxu0 0.0
    %181 = vmatprep.subr.mxu0 0.0
    %182 = vmatpush1.msra.mxu0 0.0
    %183 = vmatprep.subr.mxu0 0.0
    %184 = vmatpush1.msra.mxu0 0.0
    %185 = vmatprep.subr.mxu0 0.0
    %186 = vmatpush1.msra.mxu0 0.0
    %187 = vmatprep.subr.mxu0 0.0
    %188 = vmatpush1.msra.mxu0 0.0
    %189 = vmatprep.subr.mxu0 0.0
    %190 = vmatpush1.msra.mxu0 0.0
    %191 = vmatprep.subr.mxu0 0.0
    %192 = vmatpush1.msra.mxu0 0.0
    %193 = vmatprep.subr.mxu0 %v161
    %194 = vmatpush1.msra.mxu0 %v158
    %195 = vmatprep.subr.mxu0 0.0
    %196 = vmatpush2.msra.mxu0 0.0
    %197 = vmatprep.subr.mxu0 0.0
    %198 = vmatpush2.msra.mxu0 0.0
    %199 = vmatprep.subr.mxu0 0.0
    %200 = vmatpush2.msra.mxu0 0.0
    %201 = vmatprep.subr.mxu0 0.0
    %202 = vmatpush2.msra.mxu0 0.0
    %203 = vmatprep.subr.mxu0 0.0
    %204 = vmatpush2.msra.mxu0 0.0
    %205 = vmatprep.subr.mxu0 0.0
    %206 = vmatpush2.msra.mxu0 0.0
    %207 = vmatprep.subr.mxu0 0.0
    %208 = vmatpush2.msra.mxu0 0.0
    %209 = vmatprep.subr.mxu0 0.0
    %210 = vmatpush2.msra.mxu0 0.0
    %211 = vmatprep.subr.mxu0 0.0
    %212 = vmatpush2.msra.mxu0 0.0
    %213 = vmatprep.subr.mxu0 0.0
    %214 = vmatpush2.msra.mxu0 0.0
    %215 = vmatprep.subr.mxu0 0.0
    %216 = vmatpush2.msra.mxu0 0.0
    %217 = vmatprep.subr.mxu0 0.0
    %218 = vmatpush2.msra.mxu0 0.0
    %219 = vmatprep.subr.mxu0 0.0
    %220 = vmatpush2.msra.mxu0 0.0
    %221 = vmatprep.subr.mxu0 0.0
    %222 = vmatpush2.msra.mxu0 0.0
    %223 = vmatprep.subr.mxu0 0.0
    %224 = vmatpush2.msra.mxu0 0.0
    %225 = vmatprep.subr.mxu0 0.0
    %226 = vmatpush2.msra.mxu0 0.0
    %227 = vmatprep.mubr.f32.mxu0 0.0
    %228 = vmatmul.mubr.f32.gmra.mxu0 %v152
    %v229 = vpop.f32.mrf.mxu0
    %v230 = vadd.f32 %v141, %v229
    %v231 = vpop.f32.mrf.mxu0
    %v232 = vadd.f32 %v143, %v231
    %233 = vmatprep.mubr.f32.mxu0 0.0
    %234 = vmatmul.mubr.f32.gmra.mxu0 %v155
    %v235 = vpop.f32.mrf.mxu0
    %v236 = vadd.f32 %v147, %v235
    %v237 = vpop.f32.mrf.mxu0
    %v238 = vadd.f32 %v149, %v237
    %239 = vdwg.mxu0
    %v240 = vld [vmem:[%s0 + $0x10] sm:$0xf0]
    %v241 = vld [vmem:[%s0 + $0x18] sm:$0xf0]
    %v242 = vld [vmem:[%s0 + $0x20] sm:$0x3]
    %v243 = vld [vmem:[%s0 + $0x28] sm:$0x3]
    %s244 = scalar_lea.vmem %s1, 32
    %v245 = vld [vmem:[%s244] sm:$0xff]
    %v246 = vld [vmem:[%s244 + $0x8] sm:$0xff]
    %vm251 = vcmask 1043456
    %v252 = vrot.slane %v240, 4
    %v253 = vrot.slane %v242, 4
    %v254 = vsel %vm251, %v252, %v253
    %v255 = vrot.slane %v241, 4
    %v256 = vrot.slane %v243, 4
    %v257 = vsel %vm251, %v255, %v256
    %v259 = vsel %vm62, %v245, 0
    %v262 = vsel %vm62, %v246, 0
    %v264 = vsel %vm69, %v254, 0
    %v266 = vsel %vm69, %v257, 0
    %268 = vmatprep.subr.mxu0 0.0
    %269 = vmatpush1.msra.mxu0 0.0
    %270 = vmatprep.subr.mxu0 0.0
    %271 = vmatpush1.msra.mxu0 0.0
    %272 = vmatprep.subr.mxu0 0.0
    %273 = vmatpush1.msra.mxu0 0.0
    %274 = vmatprep.subr.mxu0 0.0
    %275 = vmatpush1.msra.mxu0 0.0
    %276 = vmatprep.subr.mxu0 0.0
    %277 = vmatpush1.msra.mxu0 0.0
    %278 = vmatprep.subr.mxu0 0.0
    %279 = vmatpush1.msra.mxu0 0.0
    %280 = vmatprep.subr.mxu0 0.0
    %281 = vmatpush1.msra.mxu0 0.0
    %282 = vmatprep.subr.mxu0 0.0
    %283 = vmatpush1.msra.mxu0 0.0
    %284 = vmatprep.subr.mxu0 0.0
    %285 = vmatpush1.msra.mxu0 0.0
    %286 = vmatprep.subr.mxu0 0.0
    %287 = vmatpush1.msra.mxu0 0.0
    %288 = vmatprep.subr.mxu0 0.0
    %289 = vmatpush1.msra.mxu0 0.0
    %290 = vmatprep.subr.mxu0 0.0
    %291 = vmatpush1.msra.mxu0 0.0
    %292 = vmatprep.subr.mxu0 0.0
    %293 = vmatpush1.msra.mxu0 0.0
    %294 = vmatprep.subr.mxu0 0.0
    %295 = vmatpush1.msra.mxu0 0.0
    %296 = vmatprep.subr.mxu0 0.0
    %297 = vmatpush1.msra.mxu0 0.0
    %298 = vmatprep.subr.mxu0 %v266
    %299 = vmatpush1.msra.mxu0 %v264
    %300 = vmatprep.subr.mxu0 0.0
    %301 = vmatpush2.msra.mxu0 0.0
    %302 = vmatprep.subr.mxu0 0.0
    %303 = vmatpush2.msra.mxu0 0.0
    %304 = vmatprep.subr.mxu0 0.0
    %305 = vmatpush2.msra.mxu0 0.0
    %306 = vmatprep.subr.mxu0 0.0
    %307 = vmatpush2.msra.mxu0 0.0
    %308 = vmatprep.subr.mxu0 0.0
    %309 = vmatpush2.msra.mxu0 0.0
    %310 = vmatprep.subr.mxu0 0.0
    %311 = vmatpush2.msra.mxu0 0.0
    %312 = vmatprep.subr.mxu0 0.0
    %313 = vmatpush2.msra.mxu0 0.0
    %314 = vmatprep.subr.mxu0 0.0
    %315 = vmatpush2.msra.mxu0 0.0
    %316 = vmatprep.subr.mxu0 0.0
    %317 = vmatpush2.msra.mxu0 0.0
    %318 = vmatprep.subr.mxu0 0.0
    %319 = vmatpush2.msra.mxu0 0.0
    %320 = vmatprep.subr.mxu0 0.0
    %321 = vmatpush2.msra.mxu0 0.0
    %322 = vmatprep.subr.mxu0 0.0
    %323 = vmatpush2.msra.mxu0 0.0
    %324 = vmatprep.subr.mxu0 0.0
    %325 = vmatpush2.msra.mxu0 0.0
    %326 = vmatprep.subr.mxu0 0.0
    %327 = vmatpush2.msra.mxu0 0.0
    %328 = vmatprep.subr.mxu0 0.0
    %329 = vmatpush2.msra.mxu0 0.0
    %330 = vmatprep.subr.mxu0 0.0
    %331 = vmatpush2.msra.mxu0 0.0
    %332 = vmatprep.mubr.f32.mxu0 0.0
    %333 = vmatmul.mubr.f32.gmra.mxu0 %v259
    %v334 = vpop.f32.mrf.mxu0
    %v335 = vadd.f32 0.0, %v334
    %v336 = vpop.f32.mrf.mxu0
    %v337 = vadd.f32 0.0, %v336
    %338 = vmatprep.mubr.f32.mxu0 0.0
    %339 = vmatmul.mubr.f32.gmra.mxu0 %v262
    %v340 = vpop.f32.mrf.mxu0
    %v341 = vadd.f32 0.0, %v340
    %v342 = vpop.f32.mrf.mxu0
    %v343 = vadd.f32 0.0, %v342
    %344 = vdwg.mxu0
    %v345 = vadd.f32 %v230, %v335
    %v346 = vadd.f32 %v232, %v337
    %v347 = vadd.f32 %v236, %v341
    %v348 = vadd.f32 %v238, %v343
    %v349 = vld [vmem:[%s0 + $0x20] sm:$0xfc]
    %v350 = vld [vmem:[%s0 + $0x28] sm:$0xfc]
    %s351 = scalar_lea.vmem %s1, 48
    %v352 = vld [vmem:[%s351] sm:$0xff]
    %v353 = vld [vmem:[%s351 + $0x8] sm:$0xff]
    %v356 = vrot.slane %v349, 2
    %v357 = vrot.slane %v350, 2
    %v359 = vsel %vm62, %v352, 0
    %v362 = vsel %vm62, %v353, 0
    %v364 = vsel %vm69, %v356, 0
    %v366 = vsel %vm69, %v357, 0
    %368 = vmatprep.subr.mxu0 0.0
    %369 = vmatpush1.msra.mxu0 0.0
    %370 = vmatprep.subr.mxu0 0.0
    %371 = vmatpush1.msra.mxu0 0.0
    %372 = vmatprep.subr.mxu0 0.0
    %373 = vmatpush1.msra.mxu0 0.0
    %374 = vmatprep.subr.mxu0 0.0
    %375 = vmatpush1.msra.mxu0 0.0
    %376 = vmatprep.subr.mxu0 0.0
    %377 = vmatpush1.msra.mxu0 0.0
    %378 = vmatprep.subr.mxu0 0.0
    %379 = vmatpush1.msra.mxu0 0.0
    %380 = vmatprep.subr.mxu0 0.0
    %381 = vmatpush1.msra.mxu0 0.0
    %382 = vmatprep.subr.mxu0 0.0
    %383 = vmatpush1.msra.mxu0 0.0
    %384 = vmatprep.subr.mxu0 0.0
    %385 = vmatpush1.msra.mxu0 0.0
    %386 = vmatprep.subr.mxu0 0.0
    %387 = vmatpush1.msra.mxu0 0.0
    %388 = vmatprep.subr.mxu0 0.0
    %389 = vmatpush1.msra.mxu0 0.0
    %390 = vmatprep.subr.mxu0 0.0
    %391 = vmatpush1.msra.mxu0 0.0
    %392 = vmatprep.subr.mxu0 0.0
    %393 = vmatpush1.msra.mxu0 0.0
    %394 = vmatprep.subr.mxu0 0.0
    %395 = vmatpush1.msra.mxu0 0.0
    %396 = vmatprep.subr.mxu0 0.0
    %397 = vmatpush1.msra.mxu0 0.0
    %398 = vmatprep.subr.mxu0 %v366
    %399 = vmatpush1.msra.mxu0 %v364
    %400 = vmatprep.subr.mxu0 0.0
    %401 = vmatpush2.msra.mxu0 0.0
    %402 = vmatprep.subr.mxu0 0.0
    %403 = vmatpush2.msra.mxu0 0.0
    %404 = vmatprep.subr.mxu0 0.0
    %405 = vmatpush2.msra.mxu0 0.0
    %406 = vmatprep.subr.mxu0 0.0
    %407 = vmatpush2.msra.mxu0 0.0
    %408 = vmatprep.subr.mxu0 0.0
    %409 = vmatpush2.msra.mxu0 0.0
    %410 = vmatprep.subr.mxu0 0.0
    %411 = vmatpush2.msra.mxu0 0.0
    %412 = vmatprep.subr.mxu0 0.0
    %413 = vmatpush2.msra.mxu0 0.0
    %414 = vmatprep.subr.mxu0 0.0
    %415 = vmatpush2.msra.mxu0 0.0
    %416 = vmatprep.subr.mxu0 0.0
    %417 = vmatpush2.msra.mxu0 0.0
    %418 = vmatprep.subr.mxu0 0.0
    %419 = vmatpush2.msra.mxu0 0.0
    %420 = vmatprep.subr.mxu0 0.0
    %421 = vmatpush2.msra.mxu0 0.0
    %422 = vmatprep.subr.mxu0 0.0
    %423 = vmatpush2.msra.mxu0 0.0
    %424 = vmatprep.subr.mxu0 0.0
    %425 = vmatpush2.msra.mxu0 0.0
    %426 = vmatprep.subr.mxu0 0.0
    %427 = vmatpush2.msra.mxu0 0.0
    %428 = vmatprep.subr.mxu0 0.0
    %429 = vmatpush2.msra.mxu0 0.0
    %430 = vmatprep.subr.mxu0 0.0
    %431 = vmatpush2.msra.mxu0 0.0
    %432 = vmatprep.mubr.f32.mxu0 0.0
    %433 = vmatmul.mubr.f32.gmra.mxu0 %v359
    %v434 = vpop.f32.mrf.mxu0
    %v435 = vadd.f32 0.0, %v434
    %v436 = vpop.f32.mrf.mxu0
    %v437 = vadd.f32 0.0, %v436
    %438 = vmatprep.mubr.f32.mxu0 0.0
    %439 = vmatmul.mubr.f32.gmra.mxu0 %v362
    %v440 = vpop.f32.mrf.mxu0
    %v441 = vadd.f32 0.0, %v440
    %v442 = vpop.f32.mrf.mxu0
    %v443 = vadd.f32 0.0, %v442
    %444 = vdwg.mxu0
    %v445 = vadd.f32 %v345, %v435
    %v446 = vadd.f32 %v346, %v437
    %v447 = vadd.f32 %v347, %v441
    %v448 = vadd.f32 %v348, %v443
    %v449 = vld [vmem:[%s0 + $0x30] sm:$0x3f]
    %v450 = vld [vmem:[%s0 + $0x38] sm:$0x3f]
    %s451 = scalar_lea.vmem %s1, 64
    %v452 = vld [vmem:[%s451] sm:$0xff]
    %v453 = vld [vmem:[%s451 + $0x8] sm:$0xff]
    %v455 = vsel %vm62, %v452, 0
    %v458 = vsel %vm62, %v453, 0
    %v461 = vsel %vm69, %v449, 0
    %v464 = vsel %vm69, %v450, 0
    %466 = vmatprep.subr.mxu0 0.0
    %467 = vmatpush1.msra.mxu0 0.0
    %468 = vmatprep.subr.mxu0 0.0
    %469 = vmatpush1.msra.mxu0 0.0
    %470 = vmatprep.subr.mxu0 0.0
    %471 = vmatpush1.msra.mxu0 0.0
    %472 = vmatprep.subr.mxu0 0.0
    %473 = vmatpush1.msra.mxu0 0.0
    %474 = vmatprep.subr.mxu0 0.0
    %475 = vmatpush1.msra.mxu0 0.0
    %476 = vmatprep.subr.mxu0 0.0
    %477 = vmatpush1.msra.mxu0 0.0
    %478 = vmatprep.subr.mxu0 0.0
    %479 = vmatpush1.msra.mxu0 0.0
    %480 = vmatprep.subr.mxu0 0.0
    %481 = vmatpush1.msra.mxu0 0.0
    %482 = vmatprep.subr.mxu0 0.0
    %483 = vmatpush1.msra.mxu0 0.0
    %484 = vmatprep.subr.mxu0 0.0
    %485 = vmatpush1.msra.mxu0 0.0
    %486 = vmatprep.subr.mxu0 0.0
    %487 = vmatpush1.msra.mxu0 0.0
    %488 = vmatprep.subr.mxu0 0.0
    %489 = vmatpush1.msra.mxu0 0.0
    %490 = vmatprep.subr.mxu0 0.0
    %491 = vmatpush1.msra.mxu0 0.0
    %492 = vmatprep.subr.mxu0 0.0
    %493 = vmatpush1.msra.mxu0 0.0
    %494 = vmatprep.subr.mxu0 0.0
    %495 = vmatpush1.msra.mxu0 0.0
    %496 = vmatprep.subr.mxu0 %v464
    %497 = vmatpush1.msra.mxu0 %v461
    %498 = vmatprep.subr.mxu0 0.0
    %499 = vmatpush2.msra.mxu0 0.0
    %500 = vmatprep.subr.mxu0 0.0
    %501 = vmatpush2.msra.mxu0 0.0
    %502 = vmatprep.subr.mxu0 0.0
    %503 = vmatpush2.msra.mxu0 0.0
    %504 = vmatprep.subr.mxu0 0.0
    %505 = vmatpush2.msra.mxu0 0.0
    %506 = vmatprep.subr.mxu0 0.0
    %507 = vmatpush2.msra.mxu0 0.0
    %508 = vmatprep.subr.mxu0 0.0
    %509 = vmatpush2.msra.mxu0 0.0
    %510 = vmatprep.subr.mxu0 0.0
    %511 = vmatpush2.msra.mxu0 0.0
    %512 = vmatprep.subr.mxu0 0.0
    %513 = vmatpush2.msra.mxu0 0.0
    %514 = vmatprep.subr.mxu0 0.0
    %515 = vmatpush2.msra.mxu0 0.0
    %516 = vmatprep.subr.mxu0 0.0
    %517 = vmatpush2.msra.mxu0 0.0
    %518 = vmatprep.subr.mxu0 0.0
    %519 = vmatpush2.msra.mxu0 0.0
    %520 = vmatprep.subr.mxu0 0.0
    %521 = vmatpush2.msra.mxu0 0.0
    %522 = vmatprep.subr.mxu0 0.0
    %523 = vmatpush2.msra.mxu0 0.0
    %524 = vmatprep.subr.mxu0 0.0
    %525 = vmatpush2.msra.mxu0 0.0
    %526 = vmatprep.subr.mxu0 0.0
    %527 = vmatpush2.msra.mxu0 0.0
    %528 = vmatprep.subr.mxu0 0.0
    %529 = vmatpush2.msra.mxu0 0.0
    %530 = vmatprep.mubr.f32.mxu0 0.0
    %531 = vmatmul.mubr.f32.gmra.mxu0 %v455
    %v532 = vpop.f32.mrf.mxu0
    %v533 = vadd.f32 0.0, %v532
    %v534 = vpop.f32.mrf.mxu0
    %v535 = vadd.f32 0.0, %v534
    %536 = vmatprep.mubr.f32.mxu0 0.0
    %537 = vmatmul.mubr.f32.gmra.mxu0 %v458
    %v538 = vpop.f32.mrf.mxu0
    %v539 = vadd.f32 0.0, %v538
    %v540 = vpop.f32.mrf.mxu0
    %v541 = vadd.f32 0.0, %v540
    %542 = vdwg.mxu0
    %v543 = vadd.f32 %v445, %v533
    %v544 = vadd.f32 %v446, %v535
    %v545 = vadd.f32 %v447, %v539
    %v546 = vadd.f32 %v448, %v541
    %s547 = scalar_lea.vmem %s1, 80
    %v548 = vld [vmem:[%s547] sm:$0xff]
    %v549 = vld [vmem:[%s547 + $0x8] sm:$0xff]
    %550 = vrot.lane.b32.xlu0 %v40, 127
    %v551 = vpop.permute.xlu0 %550
    %552 = vrot.lane.b32.xlu0 %v41, 127
    %v553 = vpop.permute.xlu0 %552
    %vm554 = vcmask 1039360
    %v555 = vsel %vm554, %v551, %v553
    %v557 = vsel %vm62, %v548, 0
    %v560 = vsel %vm62, %v549, 0
    %v562 = vsel %vm69, %v555, 0
    %v564 = vsel %vm69, %v553, 0
    %566 = vmatprep.subr.mxu0 0.0
    %567 = vmatpush1.msra.mxu0 0.0
    %568 = vmatprep.subr.mxu0 0.0
    %569 = vmatpush1.msra.mxu0 0.0
    %570 = vmatprep.subr.mxu0 0.0
    %571 = vmatpush1.msra.mxu0 0.0
    %572 = vmatprep.subr.mxu0 0.0
    %573 = vmatpush1.msra.mxu0 0.0
    %574 = vmatprep.subr.mxu0 0.0
    %575 = vmatpush1.msra.mxu0 0.0
    %576 = vmatprep.subr.mxu0 0.0
    %577 = vmatpush1.msra.mxu0 0.0
    %578 = vmatprep.subr.mxu0 0.0
    %579 = vmatpush1.msra.mxu0 0.0
    %580 = vmatprep.subr.mxu0 0.0
    %581 = vmatpush1.msra.mxu0 0.0
    %582 = vmatprep.subr.mxu0 0.0
    %583 = vmatpush1.msra.mxu0 0.0
    %584 = vmatprep.subr.mxu0 0.0
    %585 = vmatpush1.msra.mxu0 0.0
    %586 = vmatprep.subr.mxu0 0.0
    %587 = vmatpush1.msra.mxu0 0.0
    %588 = vmatprep.subr.mxu0 0.0
    %589 = vmatpush1.msra.mxu0 0.0
    %590 = vmatprep.subr.mxu0 0.0
    %591 = vmatpush1.msra.mxu0 0.0
    %592 = vmatprep.subr.mxu0 0.0
    %593 = vmatpush1.msra.mxu0 0.0
    %594 = vmatprep.subr.mxu0 0.0
    %595 = vmatpush1.msra.mxu0 0.0
    %596 = vmatprep.subr.mxu0 %v564
    %597 = vmatpush1.msra.mxu0 %v562
    %598 = vmatprep.subr.mxu0 0.0
    %599 = vmatpush2.msra.mxu0 0.0
    %600 = vmatprep.subr.mxu0 0.0
    %601 = vmatpush2.msra.mxu0 0.0
    %602 = vmatprep.subr.mxu0 0.0
    %603 = vmatpush2.msra.mxu0 0.0
    %604 = vmatprep.subr.mxu0 0.0
    %605 = vmatpush2.msra.mxu0 0.0
    %606 = vmatprep.subr.mxu0 0.0
    %607 = vmatpush2.msra.mxu0 0.0
    %608 = vmatprep.subr.mxu0 0.0
    %609 = vmatpush2.msra.mxu0 0.0
    %610 = vmatprep.subr.mxu0 0.0
    %611 = vmatpush2.msra.mxu0 0.0
    %612 = vmatprep.subr.mxu0 0.0
    %613 = vmatpush2.msra.mxu0 0.0
    %614 = vmatprep.subr.mxu0 0.0
    %615 = vmatpush2.msra.mxu0 0.0
    %616 = vmatprep.subr.mxu0 0.0
    %617 = vmatpush2.msra.mxu0 0.0
    %618 = vmatprep.subr.mxu0 0.0
    %619 = vmatpush2.msra.mxu0 0.0
    %620 = vmatprep.subr.mxu0 0.0
    %621 = vmatpush2.msra.mxu0 0.0
    %622 = vmatprep.subr.mxu0 0.0
    %623 = vmatpush2.msra.mxu0 0.0
    %624 = vmatprep.subr.mxu0 0.0
    %625 = vmatpush2.msra.mxu0 0.0
    %626 = vmatprep.subr.mxu0 0.0
    %627 = vmatpush2.msra.mxu0 0.0
    %628 = vmatprep.subr.mxu0 0.0
    %629 = vmatpush2.msra.mxu0 0.0
    %630 = vmatprep.mubr.f32.mxu0 0.0
    %631 = vmatmul.mubr.f32.gmra.mxu0 %v557
    %v632 = vpop.f32.mrf.mxu0
    %v633 = vadd.f32 0.0, %v632
    %v634 = vpop.f32.mrf.mxu0
    %v635 = vadd.f32 0.0, %v634
    %636 = vmatprep.mubr.f32.mxu0 0.0
    %637 = vmatmul.mubr.f32.gmra.mxu0 %v560
    %v638 = vpop.f32.mrf.mxu0
    %v639 = vadd.f32 0.0, %v638
    %v640 = vpop.f32.mrf.mxu0
    %v641 = vadd.f32 0.0, %v640
    %642 = vdwg.mxu0
    %v643 = vadd.f32 %v543, %v633
    %v644 = vadd.f32 %v544, %v635
    %v645 = vadd.f32 %v545, %v639
    %v646 = vadd.f32 %v546, %v641
    %s647 = scalar_lea.vmem %s1, 96
    %v648 = vld [vmem:[%s647] sm:$0xff]
    %v649 = vld [vmem:[%s647 + $0x8] sm:$0xff]
    %650 = vrot.lane.b32.xlu0 %v58, 127
    %v651 = vpop.permute.xlu0 %650
    %652 = vrot.lane.b32.xlu0 %v61, 127
    %v653 = vpop.permute.xlu0 %652
    %v654 = vsel %vm554, %v651, %v653
    %v656 = vsel %vm62, %v648, 0
    %v659 = vsel %vm62, %v649, 0
    %v661 = vsel %vm69, %v654, 0
    %v663 = vsel %vm69, %v653, 0
    %665 = vmatprep.subr.mxu0 0.0
    %666 = vmatpush1.msra.mxu0 0.0
    %667 = vmatprep.subr.mxu0 0.0
    %668 = vmatpush1.msra.mxu0 0.0
    %669 = vmatprep.subr.mxu0 0.0
    %670 = vmatpush1.msra.mxu0 0.0
    %671 = vmatprep.subr.mxu0 0.0
    %672 = vmatpush1.msra.mxu0 0.0
    %673 = vmatprep.subr.mxu0 0.0
    %674 = vmatpush1.msra.mxu0 0.0
    %675 = vmatprep.subr.mxu0 0.0
    %676 = vmatpush1.msra.mxu0 0.0
    %677 = vmatprep.subr.mxu0 0.0
    %678 = vmatpush1.msra.mxu0 0.0
    %679 = vmatprep.subr.mxu0 0.0
    %680 = vmatpush1.msra.mxu0 0.0
    %681 = vmatprep.subr.mxu0 0.0
    %682 = vmatpush1.msra.mxu0 0.0
    %683 = vmatprep.subr.mxu0 0.0
    %684 = vmatpush1.msra.mxu0 0.0
    %685 = vmatprep.subr.mxu0 0.0
    %686 = vmatpush1.msra.mxu0 0.0
    %687 = vmatprep.subr.mxu0 0.0
    %688 = vmatpush1.msra.mxu0 0.0
    %689 = vmatprep.subr.mxu0 0.0
    %690 = vmatpush1.msra.mxu0 0.0
    %691 = vmatprep.subr.mxu0 0.0
    %692 = vmatpush1.msra.mxu0 0.0
    %693 = vmatprep.subr.mxu0 0.0
    %694 = vmatpush1.msra.mxu0 0.0
    %695 = vmatprep.subr.mxu0 %v663
    %696 = vmatpush1.msra.mxu0 %v661
    %697 = vmatprep.subr.mxu0 0.0
    %698 = vmatpush2.msra.mxu0 0.0
    %699 = vmatprep.subr.mxu0 0.0
    %700 = vmatpush2.msra.mxu0 0.0
    %701 = vmatprep.subr.mxu0 0.0
    %702 = vmatpush2.msra.mxu0 0.0
    %703 = vmatprep.subr.mxu0 0.0
    %704 = vmatpush2.msra.mxu0 0.0
    %705 = vmatprep.subr.mxu0 0.0
    %706 = vmatpush2.msra.mxu0 0.0
    %707 = vmatprep.subr.mxu0 0.0
    %708 = vmatpush2.msra.mxu0 0.0
    %709 = vmatprep.subr.mxu0 0.0
    %710 = vmatpush2.msra.mxu0 0.0
    %711 = vmatprep.subr.mxu0 0.0
    %712 = vmatpush2.msra.mxu0 0.0
    %713 = vmatprep.subr.mxu0 0.0
    %714 = vmatpush2.msra.mxu0 0.0
    %715 = vmatprep.subr.mxu0 0.0
    %716 = vmatpush2.msra.mxu0 0.0
    %717 = vmatprep.subr.mxu0 0.0
    %718 = vmatpush2.msra.mxu0 0.0
    %719 = vmatprep.subr.mxu0 0.0
    %720 = vmatpush2.msra.mxu0 0.0
    %721 = vmatprep.subr.mxu0 0.0
    %722 = vmatpush2.msra.mxu0 0.0
    %723 = vmatprep.subr.mxu0 0.0
    %724 = vmatpush2.msra.mxu0 0.0
    %725 = vmatprep.subr.mxu0 0.0
    %726 = vmatpush2.msra.mxu0 0.0
    %727 = vmatprep.subr.mxu0 0.0
    %728 = vmatpush2.msra.mxu0 0.0
    %729 = vmatprep.mubr.f32.mxu0 0.0
    %730 = vmatmul.mubr.f32.gmra.mxu0 %v656
    %v731 = vpop.f32.mrf.mxu0
    %v732 = vadd.f32 0.0, %v731
    %v733 = vpop.f32.mrf.mxu0
    %v734 = vadd.f32 0.0, %v733
    %735 = vmatprep.mubr.f32.mxu0 0.0
    %736 = vmatmul.mubr.f32.gmra.mxu0 %v659
    %v737 = vpop.f32.mrf.mxu0
    %v738 = vadd.f32 0.0, %v737
    %v739 = vpop.f32.mrf.mxu0
    %v740 = vadd.f32 0.0, %v739
    %741 = vdwg.mxu0
    %v742 = vadd.f32 %v643, %v732
    %v743 = vadd.f32 %v644, %v734
    %v744 = vadd.f32 %v645, %v738
    %v745 = vadd.f32 %v646, %v740
    %s746 = scalar_lea.vmem %s1, 112
    %v747 = vld [vmem:[%s746] sm:$0xff]
    %v748 = vld [vmem:[%s746 + $0x8] sm:$0xff]
    %749 = vrot.lane.b32.xlu0 %v254, 127
    %v750 = vpop.permute.xlu0 %749
    %751 = vrot.lane.b32.xlu0 %v257, 127
    %v752 = vpop.permute.xlu0 %751
    %v753 = vsel %vm554, %v750, %v752
    %v755 = vsel %vm62, %v747, 0
    %v758 = vsel %vm62, %v748, 0
    %v760 = vsel %vm69, %v753, 0
    %v762 = vsel %vm69, %v752, 0
    %764 = vmatprep.subr.mxu0 0.0
    %765 = vmatpush1.msra.mxu0 0.0
    %766 = vmatprep.subr.mxu0 0.0
    %767 = vmatpush1.msra.mxu0 0.0
    %768 = vmatprep.subr.mxu0 0.0
    %769 = vmatpush1.msra.mxu0 0.0
    %770 = vmatprep.subr.mxu0 0.0
    %771 = vmatpush1.msra.mxu0 0.0
    %772 = vmatprep.subr.mxu0 0.0
    %773 = vmatpush1.msra.mxu0 0.0
    %774 = vmatprep.subr.mxu0 0.0
    %775 = vmatpush1.msra.mxu0 0.0
    %776 = vmatprep.subr.mxu0 0.0
    %777 = vmatpush1.msra.mxu0 0.0
    %778 = vmatprep.subr.mxu0 0.0
    %779 = vmatpush1.msra.mxu0 0.0
    %780 = vmatprep.subr.mxu0 0.0
    %781 = vmatpush1.msra.mxu0 0.0
    %782 = vmatprep.subr.mxu0 0.0
    %783 = vmatpush1.msra.mxu0 0.0
    %784 = vmatprep.subr.mxu0 0.0
    %785 = vmatpush1.msra.mxu0 0.0
    %786 = vmatprep.subr.mxu0 0.0
    %787 = vmatpush1.msra.mxu0 0.0
    %788 = vmatprep.subr.mxu0 0.0
    %789 = vmatpush1.msra.mxu0 0.0
    %790 = vmatprep.subr.mxu0 0.0
    %791 = vmatpush1.msra.mxu0 0.0
    %792 = vmatprep.subr.mxu0 0.0
    %793 = vmatpush1.msra.mxu0 0.0
    %794 = vmatprep.subr.mxu0 %v762
    %795 = vmatpush1.msra.mxu0 %v760
    %796 = vmatprep.subr.mxu0 0.0
    %797 = vmatpush2.msra.mxu0 0.0
    %798 = vmatprep.subr.mxu0 0.0
    %799 = vmatpush2.msra.mxu0 0.0
    %800 = vmatprep.subr.mxu0 0.0
    %801 = vmatpush2.msra.mxu0 0.0
    %802 = vmatprep.subr.mxu0 0.0
    %803 = vmatpush2.msra.mxu0 0.0
    %804 = vmatprep.subr.mxu0 0.0
    %805 = vmatpush2.msra.mxu0 0.0
    %806 = vmatprep.subr.mxu0 0.0
    %807 = vmatpush2.msra.mxu0 0.0
    %808 = vmatprep.subr.mxu0 0.0
    %809 = vmatpush2.msra.mxu0 0.0
    %810 = vmatprep.subr.mxu0 0.0
    %811 = vmatpush2.msra.mxu0 0.0
    %812 = vmatprep.subr.mxu0 0.0
    %813 = vmatpush2.msra.mxu0 0.0
    %814 = vmatprep.subr.mxu0 0.0
    %815 = vmatpush2.msra.mxu0 0.0
    %816 = vmatprep.subr.mxu0 0.0
    %817 = vmatpush2.msra.mxu0 0.0
    %818 = vmatprep.subr.mxu0 0.0
    %819 = vmatpush2.msra.mxu0 0.0
    %820 = vmatprep.subr.mxu0 0.0
    %821 = vmatpush2.msra.mxu0 0.0
    %822 = vmatprep.subr.mxu0 0.0
    %823 = vmatpush2.msra.mxu0 0.0
    %824 = vmatprep.subr.mxu0 0.0
    %825 = vmatpush2.msra.mxu0 0.0
    %826 = vmatprep.subr.mxu0 0.0
    %827 = vmatpush2.msra.mxu0 0.0
    %828 = vmatprep.mubr.f32.mxu0 0.0
    %829 = vmatmul.mubr.f32.gmra.mxu0 %v755
    %v830 = vpop.f32.mrf.mxu0
    %v831 = vadd.f32 0.0, %v830
    %v832 = vpop.f32.mrf.mxu0
    %v833 = vadd.f32 0.0, %v832
    %834 = vmatprep.mubr.f32.mxu0 0.0
    %835 = vmatmul.mubr.f32.gmra.mxu0 %v758
    %v836 = vpop.f32.mrf.mxu0
    %v837 = vadd.f32 0.0, %v836
    %v838 = vpop.f32.mrf.mxu0
    %v839 = vadd.f32 0.0, %v838
    %840 = vdwg.mxu0
    %v841 = vadd.f32 %v742, %v831
    %v842 = vadd.f32 %v743, %v833
    %v843 = vadd.f32 %v744, %v837
    %v844 = vadd.f32 %v745, %v839
    %s845 = scalar_lea.vmem %s1, 128
    %v846 = vld [vmem:[%s845] sm:$0xff]
    %v847 = vld [vmem:[%s845 + $0x8] sm:$0xff]
    %848 = vrot.lane.b32.xlu0 %v356, 127
    %v849 = vpop.permute.xlu0 %848
    %850 = vrot.lane.b32.xlu0 %v357, 127
    %v851 = vpop.permute.xlu0 %850
    %v852 = vsel %vm554, %v849, %v851
    %v854 = vsel %vm62, %v846, 0
    %v857 = vsel %vm62, %v847, 0
    %v859 = vsel %vm69, %v852, 0
    %v861 = vsel %vm69, %v851, 0
    %863 = vmatprep.subr.mxu0 0.0
    %864 = vmatpush1.msra.mxu0 0.0
    %865 = vmatprep.subr.mxu0 0.0
    %866 = vmatpush1.msra.mxu0 0.0
    %867 = vmatprep.subr.mxu0 0.0
    %868 = vmatpush1.msra.mxu0 0.0
    %869 = vmatprep.subr.mxu0 0.0
    %870 = vmatpush1.msra.mxu0 0.0
    %871 = vmatprep.subr.mxu0 0.0
    %872 = vmatpush1.msra.mxu0 0.0
    %873 = vmatprep.subr.mxu0 0.0
    %874 = vmatpush1.msra.mxu0 0.0
    %875 = vmatprep.subr.mxu0 0.0
    %876 = vmatpush1.msra.mxu0 0.0
    %877 = vmatprep.subr.mxu0 0.0
    %878 = vmatpush1.msra.mxu0 0.0
    %879 = vmatprep.subr.mxu0 0.0
    %880 = vmatpush1.msra.mxu0 0.0
    %881 = vmatprep.subr.mxu0 0.0
    %882 = vmatpush1.msra.mxu0 0.0
    %883 = vmatprep.subr.mxu0 0.0
    %884 = vmatpush1.msra.mxu0 0.0
    %885 = vmatprep.subr.mxu0 0.0
    %886 = vmatpush1.msra.mxu0 0.0
    %887 = vmatprep.subr.mxu0 0.0
    %888 = vmatpush1.msra.mxu0 0.0
    %889 = vmatprep.subr.mxu0 0.0
    %890 = vmatpush1.msra.mxu0 0.0
    %891 = vmatprep.subr.mxu0 0.0
    %892 = vmatpush1.msra.mxu0 0.0
    %893 = vmatprep.subr.mxu0 %v861
    %894 = vmatpush1.msra.mxu0 %v859
    %895 = vmatprep.subr.mxu0 0.0
    %896 = vmatpush2.msra.mxu0 0.0
    %897 = vmatprep.subr.mxu0 0.0
    %898 = vmatpush2.msra.mxu0 0.0
    %899 = vmatprep.subr.mxu0 0.0
    %900 = vmatpush2.msra.mxu0 0.0
    %901 = vmatprep.subr.mxu0 0.0
    %902 = vmatpush2.msra.mxu0 0.0
    %903 = vmatprep.subr.mxu0 0.0
    %904 = vmatpush2.msra.mxu0 0.0
    %905 = vmatprep.subr.mxu0 0.0
    %906 = vmatpush2.msra.mxu0 0.0
    %907 = vmatprep.subr.mxu0 0.0
    %908 = vmatpush2.msra.mxu0 0.0
    %909 = vmatprep.subr.mxu0 0.0
    %910 = vmatpush2.msra.mxu0 0.0
    %911 = vmatprep.subr.mxu0 0.0
    %912 = vmatpush2.msra.mxu0 0.0
    %913 = vmatprep.subr.mxu0 0.0
    %914 = vmatpush2.msra.mxu0 0.0
    %915 = vmatprep.subr.mxu0 0.0
    %916 = vmatpush2.msra.mxu0 0.0
    %917 = vmatprep.subr.mxu0 0.0
    %918 = vmatpush2.msra.mxu0 0.0
    %919 = vmatprep.subr.mxu0 0.0
    %920 = vmatpush2.msra.mxu0 0.0
    %921 = vmatprep.subr.mxu0 0.0
    %922 = vmatpush2.msra.mxu0 0.0
    %923 = vmatprep.subr.mxu0 0.0
    %924 = vmatpush2.msra.mxu0 0.0
    %925 = vmatprep.subr.mxu0 0.0
    %926 = vmatpush2.msra.mxu0 0.0
    %927 = vmatprep.mubr.f32.mxu0 0.0
    %928 = vmatmul.mubr.f32.gmra.mxu0 %v854
    %v929 = vpop.f32.mrf.mxu0
    %v930 = vadd.f32 0.0, %v929
    %v931 = vpop.f32.mrf.mxu0
    %v932 = vadd.f32 0.0, %v931
    %933 = vmatprep.mubr.f32.mxu0 0.0
    %934 = vmatmul.mubr.f32.gmra.mxu0 %v857
    %v935 = vpop.f32.mrf.mxu0
    %v936 = vadd.f32 0.0, %v935
    %v937 = vpop.f32.mrf.mxu0
    %v938 = vadd.f32 0.0, %v937
    %939 = vdwg.mxu0
    %v940 = vadd.f32 %v841, %v930
    %v941 = vadd.f32 %v842, %v932
    %v942 = vadd.f32 %v843, %v936
    %v943 = vadd.f32 %v844, %v938
    %s944 = scalar_lea.vmem %s1, 144
    %v945 = vld [vmem:[%s944] sm:$0xff]
    %v946 = vld [vmem:[%s944 + $0x8] sm:$0xff]
    %947 = vrot.lane.b32.xlu0 %v449, 127
    %v948 = vpop.permute.xlu0 %947
    %949 = vrot.lane.b32.xlu0 %v450, 127
    %v950 = vpop.permute.xlu0 %949
    %v951 = vsel %vm554, %v948, %v950
    %v953 = vsel %vm62, %v945, 0
    %v956 = vsel %vm62, %v946, 0
    %v958 = vsel %vm69, %v951, 0
    %v960 = vsel %vm69, %v950, 0
    %962 = vmatprep.subr.mxu0 0.0
    %963 = vmatpush1.msra.mxu0 0.0
    %964 = vmatprep.subr.mxu0 0.0
    %965 = vmatpush1.msra.mxu0 0.0
    %966 = vmatprep.subr.mxu0 0.0
    %967 = vmatpush1.msra.mxu0 0.0
    %968 = vmatprep.subr.mxu0 0.0
    %969 = vmatpush1.msra.mxu0 0.0
    %970 = vmatprep.subr.mxu0 0.0
    %971 = vmatpush1.msra.mxu0 0.0
    %972 = vmatprep.subr.mxu0 0.0
    %973 = vmatpush1.msra.mxu0 0.0
    %974 = vmatprep.subr.mxu0 0.0
    %975 = vmatpush1.msra.mxu0 0.0
    %976 = vmatprep.subr.mxu0 0.0
    %977 = vmatpush1.msra.mxu0 0.0
    %978 = vmatprep.subr.mxu0 0.0
    %979 = vmatpush1.msra.mxu0 0.0
    %980 = vmatprep.subr.mxu0 0.0
    %981 = vmatpush1.msra.mxu0 0.0
    %982 = vmatprep.subr.mxu0 0.0
    %983 = vmatpush1.msra.mxu0 0.0
    %984 = vmatprep.subr.mxu0 0.0
    %985 = vmatpush1.msra.mxu0 0.0
    %986 = vmatprep.subr.mxu0 0.0
    %987 = vmatpush1.msra.mxu0 0.0
    %988 = vmatprep.subr.mxu0 0.0
    %989 = vmatpush1.msra.mxu0 0.0
    %990 = vmatprep.subr.mxu0 0.0
    %991 = vmatpush1.msra.mxu0 0.0
    %992 = vmatprep.subr.mxu0 %v960
    %993 = vmatpush1.msra.mxu0 %v958
    %994 = vmatprep.subr.mxu0 0.0
    %995 = vmatpush2.msra.mxu0 0.0
    %996 = vmatprep.subr.mxu0 0.0
    %997 = vmatpush2.msra.mxu0 0.0
    %998 = vmatprep.subr.mxu0 0.0
    %999 = vmatpush2.msra.mxu0 0.0
    %1000 = vmatprep.subr.mxu0 0.0
    %1001 = vmatpush2.msra.mxu0 0.0
    %1002 = vmatprep.subr.mxu0 0.0
    %1003 = vmatpush2.msra.mxu0 0.0
    %1004 = vmatprep.subr.mxu0 0.0
    %1005 = vmatpush2.msra.mxu0 0.0
    %1006 = vmatprep.subr.mxu0 0.0
    %1007 = vmatpush2.msra.mxu0 0.0
    %1008 = vmatprep.subr.mxu0 0.0
    %1009 = vmatpush2.msra.mxu0 0.0
    %1010 = vmatprep.subr.mxu0 0.0
    %1011 = vmatpush2.msra.mxu0 0.0
    %1012 = vmatprep.subr.mxu0 0.0
    %1013 = vmatpush2.msra.mxu0 0.0
    %1014 = vmatprep.subr.mxu0 0.0
    %1015 = vmatpush2.msra.mxu0 0.0
    %1016 = vmatprep.subr.mxu0 0.0
    %1017 = vmatpush2.msra.mxu0 0.0
    %1018 = vmatprep.subr.mxu0 0.0
    %1019 = vmatpush2.msra.mxu0 0.0
    %1020 = vmatprep.subr.mxu0 0.0
    %1021 = vmatpush2.msra.mxu0 0.0
    %1022 = vmatprep.subr.mxu0 0.0
    %1023 = vmatpush2.msra.mxu0 0.0
    %1024 = vmatprep.subr.mxu0 0.0
    %1025 = vmatpush2.msra.mxu0 0.0
    %1026 = vmatprep.mubr.f32.mxu0 0.0
    %1027 = vmatmul.mubr.f32.gmra.mxu0 %v953
    %v1028 = vpop.f32.mrf.mxu0
    %v1029 = vadd.f32 0.0, %v1028
    %v1030 = vpop.f32.mrf.mxu0
    %v1031 = vadd.f32 0.0, %v1030
    %1032 = vmatprep.mubr.f32.mxu0 0.0
    %1033 = vmatmul.mubr.f32.gmra.mxu0 %v956
    %v1034 = vpop.f32.mrf.mxu0
    %v1035 = vadd.f32 0.0, %v1034
    %v1036 = vpop.f32.mrf.mxu0
    %v1037 = vadd.f32 0.0, %v1036
    %1038 = vdwg.mxu0
    %v1039 = vadd.f32 %v940, %v1029
    %v1040 = vadd.f32 %v941, %v1031
    %v1041 = vadd.f32 %v942, %v1035
    %v1042 = vadd.f32 %v943, %v1037
    %v1043 = vld [vmem:[%s2] sm:$0xff]
    %v1044 = vld [vmem:[%s2 + $0x8] sm:$0xff]
    %1046 = vset.pattern.permute.xlu0 0
    %1047 = vperm.xlu0 %1046, %v1043
    %v1048 = vpop.permute.xlu0 %1047
    %1051 = vset.pattern.permute.xlu0 0
    %1052 = vperm.xlu0 %1051, %v1044
    %v1053 = vpop.permute.xlu0 %1052
    %v1055 = vadd.f32 %v1039, %v1048
    %v1056 = vadd.f32 %v1040, %v1048
    %v1057 = vadd.f32 %v1041, %v1053
    %v1058 = vadd.f32 %v1042, %v1053
    %v1059 = vmax.f32 %v1055, 0.0
    %v1060 = vmax.f32 %v1056, 0.0
    %v1061 = vmax.f32 %v1057, 0.0
    %v1062 = vmax.f32 %v1058, 0.0
    %1063 = vst [vmem:[#allocation2] sm:$0xff] %v1059
    %vm1064 = vcmask 580608
    %1065 = vst.msk [vmem:[#allocation2 + $0x8] sm:$0xff] %vm1064, %v1060
    %1066 = vst [vmem:[#allocation2 + $0x10] sm:$0xff] %v1061
    %1067 = vst.msk [vmem:[#allocation2 + $0x18] sm:$0xff] %vm1064, %v1062
    %v1068 = vld [vmem:[%s3] sm:$0xff]
    %v1069 = vld [vmem:[%s3 + $0x8] sm:$0xff]
    %v1070 = vld [vmem:[%s3 + $0x10] sm:$0xff]
    %v1071 = vld [vmem:[%s3 + $0x18] sm:$0xff]
    %v1072 = vld [vmem:[#allocation2] sm:$0xff]
    %v1073 = vld [vmem:[#allocation2 + $0x8] sm:$0xff]
    %v1074 = vld [vmem:[#allocation2 + $0x10] sm:$0xff]
    %v1075 = vld [vmem:[#allocation2 + $0x18] sm:$0xff]
    %s1076 = scalar_lea.vmem %s3, 32
    %v1077 = vld [vmem:[%s1076] sm:$0xff]
    %v1078 = vld [vmem:[%s1076 + $0x8] sm:$0xff]
    %v1079 = vld [vmem:[%s1076 + $0x10] sm:$0xff]
    %v1080 = vld [vmem:[%s1076 + $0x18] sm:$0xff]
    %1085 = vrot.lane.b32.xlu0 %v1072, 127
    %v1086 = vpop.permute.xlu0 %1085
    %1087 = vrot.lane.b32.xlu0 %v1073, 127
    %v1088 = vpop.permute.xlu0 %1087
    %1089 = vrot.lane.b32.xlu0 %v1074, 127
    %v1090 = vpop.permute.xlu0 %1089
    %1091 = vrot.lane.b32.xlu0 %v1075, 127
    %v1092 = vpop.permute.xlu0 %1091
    %v1093 = vsel %vm554, %v1086, %v1088
    %v1094 = vsel %vm554, %v1090, %v1092
    %vm1099 = vcmask 130048
    %v1101 = vsel %vm1099, %v1077, 0
    %v1104 = vsel %vm1099, %v1078, 0
    %v1107 = vsel %vm1099, %v1079, 0
    %v1110 = vsel %vm1099, %v1080, 0
    %1112 = vmatprep.subr.mxu0 0.0
    %1113 = vmatpush1.msra.mxu0 0.0
    %1114 = vmatprep.subr.mxu0 0.0
    %1115 = vmatpush1.msra.mxu0 0.0
    %1116 = vmatprep.subr.mxu0 0.0
    %1117 = vmatpush1.msra.mxu0 0.0
    %1118 = vmatprep.subr.mxu0 0.0
    %1119 = vmatpush1.msra.mxu0 0.0
    %1120 = vmatprep.subr.mxu0 0.0
    %1121 = vmatpush1.msra.mxu0 0.0
    %1122 = vmatprep.subr.mxu0 0.0
    %1123 = vmatpush1.msra.mxu0 0.0
    %1124 = vmatprep.subr.mxu0 0.0
    %1125 = vmatpush1.msra.mxu0 0.0
    %1126 = vmatprep.subr.mxu0 0.0
    %1127 = vmatpush1.msra.mxu0 0.0
    %1128 = vmatprep.subr.mxu0 0.0
    %1129 = vmatpush1.msra.mxu0 0.0
    %1130 = vmatprep.subr.mxu0 0.0
    %1131 = vmatpush1.msra.mxu0 0.0
    %1132 = vmatprep.subr.mxu0 0.0
    %1133 = vmatpush1.msra.mxu0 0.0
    %1134 = vmatprep.subr.mxu0 0.0
    %1135 = vmatpush1.msra.mxu0 0.0
    %1136 = vmatprep.subr.mxu0 0.0
    %1137 = vmatpush1.msra.mxu0 0.0
    %1138 = vmatprep.subr.mxu0 0.0
    %1139 = vmatpush1.msra.mxu0 0.0
    %1140 = vmatprep.subr.mxu0 %v1092
    %1141 = vmatpush1.msra.mxu0 %v1094
    %1142 = vmatprep.subr.mxu0 %v1088
    %1143 = vmatpush1.msra.mxu0 %v1093
    %1144 = vmatprep.subr.mxu0 0.0
    %1145 = vmatpush2.msra.mxu0 0.0
    %1146 = vmatprep.subr.mxu0 0.0
    %1147 = vmatpush2.msra.mxu0 0.0
    %1148 = vmatprep.subr.mxu0 0.0
    %1149 = vmatpush2.msra.mxu0 0.0
    %1150 = vmatprep.subr.mxu0 0.0
    %1151 = vmatpush2.msra.mxu0 0.0
    %1152 = vmatprep.subr.mxu0 0.0
    %1153 = vmatpush2.msra.mxu0 0.0
    %1154 = vmatprep.subr.mxu0 0.0
    %1155 = vmatpush2.msra.mxu0 0.0
    %1156 = vmatprep.subr.mxu0 0.0
    %1157 = vmatpush2.msra.mxu0 0.0
    %1158 = vmatprep.subr.mxu0 0.0
    %1159 = vmatpush2.msra.mxu0 0.0
    %1160 = vmatprep.subr.mxu0 0.0
    %1161 = vmatpush2.msra.mxu0 0.0
    %1162 = vmatprep.subr.mxu0 0.0
    %1163 = vmatpush2.msra.mxu0 0.0
    %1164 = vmatprep.subr.mxu0 0.0
    %1165 = vmatpush2.msra.mxu0 0.0
    %1166 = vmatprep.subr.mxu0 0.0
    %1167 = vmatpush2.msra.mxu0 0.0
    %1168 = vmatprep.subr.mxu0 0.0
    %1169 = vmatpush2.msra.mxu0 0.0
    %1170 = vmatprep.subr.mxu0 0.0
    %1171 = vmatpush2.msra.mxu0 0.0
    %1172 = vmatprep.subr.mxu0 0.0
    %1173 = vmatpush2.msra.mxu0 0.0
    %1174 = vmatprep.subr.mxu0 0.0
    %1175 = vmatpush2.msra.mxu0 0.0
    %1176 = vmatprep.mubr.f32.mxu0 0.0
    %1177 = vmatmul.mubr.f32.gmra.mxu0 %v1101
    %v1178 = vpop.f32.mrf.mxu0
    %v1179 = vadd.f32 0.0, %v1178
    %v1180 = vpop.f32.mrf.mxu0
    %v1181 = vadd.f32 0.0, %v1180
    %1182 = vmatprep.mubr.f32.mxu0 0.0
    %1183 = vmatmul.mubr.f32.gmra.mxu0 %v1104
    %v1184 = vpop.f32.mrf.mxu0
    %v1185 = vadd.f32 0.0, %v1184
    %v1186 = vpop.f32.mrf.mxu0
    %v1187 = vadd.f32 0.0, %v1186
    %1188 = vmatprep.mubr.f32.mxu0 0.0
    %1189 = vmatmul.mubr.f32.gmra.mxu0 %v1107
    %v1190 = vpop.f32.mrf.mxu0
    %v1191 = vadd.f32 0.0, %v1190
    %v1192 = vpop.f32.mrf.mxu0
    %v1193 = vadd.f32 0.0, %v1192
    %1194 = vmatprep.mubr.f32.mxu0 0.0
    %1195 = vmatmul.mubr.f32.gmra.mxu0 %v1110
    %v1196 = vpop.f32.mrf.mxu0
    %v1197 = vadd.f32 0.0, %v1196
    %v1198 = vpop.f32.mrf.mxu0
    %v1199 = vadd.f32 0.0, %v1198
    %1200 = vdwg.mxu0
    %v1202 = vsel %vm1099, %v1068, 0
    %v1205 = vsel %vm1099, %v1069, 0
    %v1208 = vsel %vm1099, %v1070, 0
    %v1211 = vsel %vm1099, %v1071, 0
    %1213 = vmatprep.subr.mxu0 0.0
    %1214 = vmatpush1.msra.mxu0 0.0
    %1215 = vmatprep.subr.mxu0 0.0
    %1216 = vmatpush1.msra.mxu0 0.0
    %1217 = vmatprep.subr.mxu0 0.0
    %1218 = vmatpush1.msra.mxu0 0.0
    %1219 = vmatprep.subr.mxu0 0.0
    %1220 = vmatpush1.msra.mxu0 0.0
    %1221 = vmatprep.subr.mxu0 0.0
    %1222 = vmatpush1.msra.mxu0 0.0
    %1223 = vmatprep.subr.mxu0 0.0
    %1224 = vmatpush1.msra.mxu0 0.0
    %1225 = vmatprep.subr.mxu0 0.0
    %1226 = vmatpush1.msra.mxu0 0.0
    %1227 = vmatprep.subr.mxu0 0.0
    %1228 = vmatpush1.msra.mxu0 0.0
    %1229 = vmatprep.subr.mxu0 0.0
    %1230 = vmatpush1.msra.mxu0 0.0
    %1231 = vmatprep.subr.mxu0 0.0
    %1232 = vmatpush1.msra.mxu0 0.0
    %1233 = vmatprep.subr.mxu0 0.0
    %1234 = vmatpush1.msra.mxu0 0.0
    %1235 = vmatprep.subr.mxu0 0.0
    %1236 = vmatpush1.msra.mxu0 0.0
    %1237 = vmatprep.subr.mxu0 0.0
    %1238 = vmatpush1.msra.mxu0 0.0
    %1239 = vmatprep.subr.mxu0 0.0
    %1240 = vmatpush1.msra.mxu0 0.0
    %1241 = vmatprep.subr.mxu0 %v1075
    %1242 = vmatpush1.msra.mxu0 %v1074
    %1243 = vmatprep.subr.mxu0 %v1073
    %1244 = vmatpush1.msra.mxu0 %v1072
    %1245 = vmatprep.subr.mxu0 0.0
    %1246 = vmatpush2.msra.mxu0 0.0
    %1247 = vmatprep.subr.mxu0 0.0
    %1248 = vmatpush2.msra.mxu0 0.0
    %1249 = vmatprep.subr.mxu0 0.0
    %1250 = vmatpush2.msra.mxu0 0.0
    %1251 = vmatprep.subr.mxu0 0.0
    %1252 = vmatpush2.msra.mxu0 0.0
    %1253 = vmatprep.subr.mxu0 0.0
    %1254 = vmatpush2.msra.mxu0 0.0
    %1255 = vmatprep.subr.mxu0 0.0
    %1256 = vmatpush2.msra.mxu0 0.0
    %1257 = vmatprep.subr.mxu0 0.0
    %1258 = vmatpush2.msra.mxu0 0.0
    %1259 = vmatprep.subr.mxu0 0.0
    %1260 = vmatpush2.msra.mxu0 0.0
    %1261 = vmatprep.subr.mxu0 0.0
    %1262 = vmatpush2.msra.mxu0 0.0
    %1263 = vmatprep.subr.mxu0 0.0
    %1264 = vmatpush2.msra.mxu0 0.0
    %1265 = vmatprep.subr.mxu0 0.0
    %1266 = vmatpush2.msra.mxu0 0.0
    %1267 = vmatprep.subr.mxu0 0.0
    %1268 = vmatpush2.msra.mxu0 0.0
    %1269 = vmatprep.subr.mxu0 0.0
    %1270 = vmatpush2.msra.mxu0 0.0
    %1271 = vmatprep.subr.mxu0 0.0
    %1272 = vmatpush2.msra.mxu0 0.0
    %1273 = vmatprep.subr.mxu0 0.0
    %1274 = vmatpush2.msra.mxu0 0.0
    %1275 = vmatprep.subr.mxu0 0.0
    %1276 = vmatpush2.msra.mxu0 0.0
    %1277 = vmatprep.mubr.f32.mxu0 0.0
    %1278 = vmatmul.mubr.f32.gmra.mxu0 %v1202
    %v1279 = vpop.f32.mrf.mxu0
    %v1280 = vadd.f32 %v1179, %v1279
    %v1281 = vpop.f32.mrf.mxu0
    %v1282 = vadd.f32 %v1181, %v1281
    %1283 = vmatprep.mubr.f32.mxu0 0.0
    %1284 = vmatmul.mubr.f32.gmra.mxu0 %v1205
    %v1285 = vpop.f32.mrf.mxu0
    %v1286 = vadd.f32 %v1185, %v1285
    %v1287 = vpop.f32.mrf.mxu0
    %v1288 = vadd.f32 %v1187, %v1287
    %1289 = vmatprep.mubr.f32.mxu0 0.0
    %1290 = vmatmul.mubr.f32.gmra.mxu0 %v1208
    %v1291 = vpop.f32.mrf.mxu0
    %v1292 = vadd.f32 %v1191, %v1291
    %v1293 = vpop.f32.mrf.mxu0
    %v1294 = vadd.f32 %v1193, %v1293
    %1295 = vmatprep.mubr.f32.mxu0 0.0
    %1296 = vmatmul.mubr.f32.gmra.mxu0 %v1211
    %v1297 = vpop.f32.mrf.mxu0
    %v1298 = vadd.f32 %v1197, %v1297
    %v1299 = vpop.f32.mrf.mxu0
    %v1300 = vadd.f32 %v1199, %v1299
    %1301 = vdwg.mxu0
    %s1302 = scalar_lea.vmem %s3, 64
    %v1303 = vld [vmem:[%s1302] sm:$0xff]
    %v1304 = vld [vmem:[%s1302 + $0x8] sm:$0xff]
    %v1305 = vld [vmem:[%s1302 + $0x10] sm:$0xff]
    %v1306 = vld [vmem:[%s1302 + $0x18] sm:$0xff]
    %1307 = vrot.lane.b32.xlu0 %v1072, 126
    %v1308 = vpop.permute.xlu0 %1307
    %1309 = vrot.lane.b32.xlu0 %v1073, 126
    %v1310 = vpop.permute.xlu0 %1309
    %1311 = vrot.lane.b32.xlu0 %v1074, 126
    %v1312 = vpop.permute.xlu0 %1311
    %1313 = vrot.lane.b32.xlu0 %v1075, 126
    %v1314 = vpop.permute.xlu0 %1313
    %vm1315 = vcmask 1031168
    %v1316 = vsel %vm1315, %v1308, %v1310
    %v1317 = vsel %vm1315, %v1312, %v1314
    %v1323 = vsel %vm1099, %v1303, 0
    %v1326 = vsel %vm1099, %v1304, 0
    %v1329 = vsel %vm1099, %v1305, 0
    %v1332 = vsel %vm1099, %v1306, 0
    %1334 = vmatprep.subr.mxu0 0.0
    %1335 = vmatpush1.msra.mxu0 0.0
    %1336 = vmatprep.subr.mxu0 0.0
    %1337 = vmatpush1.msra.mxu0 0.0
    %1338 = vmatprep.subr.mxu0 0.0
    %1339 = vmatpush1.msra.mxu0 0.0
    %1340 = vmatprep.subr.mxu0 0.0
    %1341 = vmatpush1.msra.mxu0 0.0
    %1342 = vmatprep.subr.mxu0 0.0
    %1343 = vmatpush1.msra.mxu0 0.0
    %1344 = vmatprep.subr.mxu0 0.0
    %1345 = vmatpush1.msra.mxu0 0.0
    %1346 = vmatprep.subr.mxu0 0.0
    %1347 = vmatpush1.msra.mxu0 0.0
    %1348 = vmatprep.subr.mxu0 0.0
    %1349 = vmatpush1.msra.mxu0 0.0
    %1350 = vmatprep.subr.mxu0 0.0
    %1351 = vmatpush1.msra.mxu0 0.0
    %1352 = vmatprep.subr.mxu0 0.0
    %1353 = vmatpush1.msra.mxu0 0.0
    %1354 = vmatprep.subr.mxu0 0.0
    %1355 = vmatpush1.msra.mxu0 0.0
    %1356 = vmatprep.subr.mxu0 0.0
    %1357 = vmatpush1.msra.mxu0 0.0
    %1358 = vmatprep.subr.mxu0 0.0
    %1359 = vmatpush1.msra.mxu0 0.0
    %1360 = vmatprep.subr.mxu0 0.0
    %1361 = vmatpush1.msra.mxu0 0.0
    %1362 = vmatprep.subr.mxu0 %v1314
    %1363 = vmatpush1.msra.mxu0 %v1317
    %1364 = vmatprep.subr.mxu0 %v1310
    %1365 = vmatpush1.msra.mxu0 %v1316
    %1366 = vmatprep.subr.mxu0 0.0
    %1367 = vmatpush2.msra.mxu0 0.0
    %1368 = vmatprep.subr.mxu0 0.0
    %1369 = vmatpush2.msra.mxu0 0.0
    %1370 = vmatprep.subr.mxu0 0.0
    %1371 = vmatpush2.msra.mxu0 0.0
    %1372 = vmatprep.subr.mxu0 0.0
    %1373 = vmatpush2.msra.mxu0 0.0
    %1374 = vmatprep.subr.mxu0 0.0
    %1375 = vmatpush2.msra.mxu0 0.0
    %1376 = vmatprep.subr.mxu0 0.0
    %1377 = vmatpush2.msra.mxu0 0.0
    %1378 = vmatprep.subr.mxu0 0.0
    %1379 = vmatpush2.msra.mxu0 0.0
    %1380 = vmatprep.subr.mxu0 0.0
    %1381 = vmatpush2.msra.mxu0 0.0
    %1382 = vmatprep.subr.mxu0 0.0
    %1383 = vmatpush2.msra.mxu0 0.0
    %1384 = vmatprep.subr.mxu0 0.0
    %1385 = vmatpush2.msra.mxu0 0.0
    %1386 = vmatprep.subr.mxu0 0.0
    %1387 = vmatpush2.msra.mxu0 0.0
    %1388 = vmatprep.subr.mxu0 0.0
    %1389 = vmatpush2.msra.mxu0 0.0
    %1390 = vmatprep.subr.mxu0 0.0
    %1391 = vmatpush2.msra.mxu0 0.0
    %1392 = vmatprep.subr.mxu0 0.0
    %1393 = vmatpush2.msra.mxu0 0.0
    %1394 = vmatprep.subr.mxu0 0.0
    %1395 = vmatpush2.msra.mxu0 0.0
    %1396 = vmatprep.subr.mxu0 0.0
    %1397 = vmatpush2.msra.mxu0 0.0
    %1398 = vmatprep.mubr.f32.mxu0 0.0
    %1399 = vmatmul.mubr.f32.gmra.mxu0 %v1323
    %v1400 = vpop.f32.mrf.mxu0
    %v1401 = vadd.f32 0.0, %v1400
    %v1402 = vpop.f32.mrf.mxu0
    %v1403 = vadd.f32 0.0, %v1402
    %1404 = vmatprep.mubr.f32.mxu0 0.0
    %1405 = vmatmul.mubr.f32.gmra.mxu0 %v1326
    %v1406 = vpop.f32.mrf.mxu0
    %v1407 = vadd.f32 0.0, %v1406
    %v1408 = vpop.f32.mrf.mxu0
    %v1409 = vadd.f32 0.0, %v1408
    %1410 = vmatprep.mubr.f32.mxu0 0.0
    %1411 = vmatmul.mubr.f32.gmra.mxu0 %v1329
    %v1412 = vpop.f32.mrf.mxu0
    %v1413 = vadd.f32 0.0, %v1412
    %v1414 = vpop.f32.mrf.mxu0
    %v1415 = vadd.f32 0.0, %v1414
    %1416 = vmatprep.mubr.f32.mxu0 0.0
    %1417 = vmatmul.mubr.f32.gmra.mxu0 %v1332
    %v1418 = vpop.f32.mrf.mxu0
    %v1419 = vadd.f32 0.0, %v1418
    %v1420 = vpop.f32.mrf.mxu0
    %v1421 = vadd.f32 0.0, %v1420
    %1422 = vdwg.mxu0
    %v1423 = vadd.f32 %v1280, %v1401
    %v1424 = vadd.f32 %v1282, %v1403
    %v1425 = vadd.f32 %v1286, %v1407
    %v1426 = vadd.f32 %v1288, %v1409
    %v1427 = vadd.f32 %v1292, %v1413
    %v1428 = vadd.f32 %v1294, %v1415
    %v1429 = vadd.f32 %v1298, %v1419
    %v1430 = vadd.f32 %v1300, %v1421
    %s1431 = scalar_lea.vmem %s3, 96
    %v1432 = vld [vmem:[%s1431] sm:$0xff]
    %v1433 = vld [vmem:[%s1431 + $0x8] sm:$0xff]
    %v1434 = vld [vmem:[%s1431 + $0x10] sm:$0xff]
    %v1435 = vld [vmem:[%s1431 + $0x18] sm:$0xff]
    %1436 = vrot.lane.b32.xlu0 %v1072, 125
    %v1437 = vpop.permute.xlu0 %1436
    %1438 = vrot.lane.b32.xlu0 %v1073, 125
    %v1439 = vpop.permute.xlu0 %1438
    %1440 = vrot.lane.b32.xlu0 %v1074, 125
    %v1441 = vpop.permute.xlu0 %1440
    %1442 = vrot.lane.b32.xlu0 %v1075, 125
    %v1443 = vpop.permute.xlu0 %1442
    %vm1444 = vcmask 1022976
    %v1445 = vsel %vm1444, %v1437, %v1439
    %v1446 = vsel %vm1444, %v1441, %v1443
    %v1452 = vsel %vm1099, %v1432, 0
    %v1455 = vsel %vm1099, %v1433, 0
    %v1458 = vsel %vm1099, %v1434, 0
    %v1461 = vsel %vm1099, %v1435, 0
    %1463 = vmatprep.subr.mxu0 0.0
    %1464 = vmatpush1.msra.mxu0 0.0
    %1465 = vmatprep.subr.mxu0 0.0
    %1466 = vmatpush1.msra.mxu0 0.0
    %1467 = vmatprep.subr.mxu0 0.0
    %1468 = vmatpush1.msra.mxu0 0.0
    %1469 = vmatprep.subr.mxu0 0.0
    %1470 = vmatpush1.msra.mxu0 0.0
    %1471 = vmatprep.subr.mxu0 0.0
    %1472 = vmatpush1.msra.mxu0 0.0
    %1473 = vmatprep.subr.mxu0 0.0
    %1474 = vmatpush1.msra.mxu0 0.0
    %1475 = vmatprep.subr.mxu0 0.0
    %1476 = vmatpush1.msra.mxu0 0.0
    %1477 = vmatprep.subr.mxu0 0.0
    %1478 = vmatpush1.msra.mxu0 0.0
    %1479 = vmatprep.subr.mxu0 0.0
    %1480 = vmatpush1.msra.mxu0 0.0
    %1481 = vmatprep.subr.mxu0 0.0
    %1482 = vmatpush1.msra.mxu0 0.0
    %1483 = vmatprep.subr.mxu0 0.0
    %1484 = vmatpush1.msra.mxu0 0.0
    %1485 = vmatprep.subr.mxu0 0.0
    %1486 = vmatpush1.msra.mxu0 0.0
    %1487 = vmatprep.subr.mxu0 0.0
    %1488 = vmatpush1.msra.mxu0 0.0
    %1489 = vmatprep.subr.mxu0 0.0
    %1490 = vmatpush1.msra.mxu0 0.0
    %1491 = vmatprep.subr.mxu0 %v1443
    %1492 = vmatpush1.msra.mxu0 %v1446
    %1493 = vmatprep.subr.mxu0 %v1439
    %1494 = vmatpush1.msra.mxu0 %v1445
    %1495 = vmatprep.subr.mxu0 0.0
    %1496 = vmatpush2.msra.mxu0 0.0
    %1497 = vmatprep.subr.mxu0 0.0
    %1498 = vmatpush2.msra.mxu0 0.0
    %1499 = vmatprep.subr.mxu0 0.0
    %1500 = vmatpush2.msra.mxu0 0.0
    %1501 = vmatprep.subr.mxu0 0.0
    %1502 = vmatpush2.msra.mxu0 0.0
    %1503 = vmatprep.subr.mxu0 0.0
    %1504 = vmatpush2.msra.mxu0 0.0
    %1505 = vmatprep.subr.mxu0 0.0
    %1506 = vmatpush2.msra.mxu0 0.0
    %1507 = vmatprep.subr.mxu0 0.0
    %1508 = vmatpush2.msra.mxu0 0.0
    %1509 = vmatprep.subr.mxu0 0.0
    %1510 = vmatpush2.msra.mxu0 0.0
    %1511 = vmatprep.subr.mxu0 0.0
    %1512 = vmatpush2.msra.mxu0 0.0
    %1513 = vmatprep.subr.mxu0 0.0
    %1514 = vmatpush2.msra.mxu0 0.0
    %1515 = vmatprep.subr.mxu0 0.0
    %1516 = vmatpush2.msra.mxu0 0.0
    %1517 = vmatprep.subr.mxu0 0.0
    %1518 = vmatpush2.msra.mxu0 0.0
    %1519 = vmatprep.subr.mxu0 0.0
    %1520 = vmatpush2.msra.mxu0 0.0
    %1521 = vmatprep.subr.mxu0 0.0
    %1522 = vmatpush2.msra.mxu0 0.0
    %1523 = vmatprep.subr.mxu0 0.0
    %1524 = vmatpush2.msra.mxu0 0.0
    %1525 = vmatprep.subr.mxu0 0.0
    %1526 = vmatpush2.msra.mxu0 0.0
    %1527 = vmatprep.mubr.f32.mxu0 0.0
    %1528 = vmatmul.mubr.f32.gmra.mxu0 %v1452
    %v1529 = vpop.f32.mrf.mxu0
    %v1530 = vadd.f32 0.0, %v1529
    %v1531 = vpop.f32.mrf.mxu0
    %v1532 = vadd.f32 0.0, %v1531
    %1533 = vmatprep.mubr.f32.mxu0 0.0
    %1534 = vmatmul.mubr.f32.gmra.mxu0 %v1455
    %v1535 = vpop.f32.mrf.mxu0
    %v1536 = vadd.f32 0.0, %v1535
    %v1537 = vpop.f32.mrf.mxu0
    %v1538 = vadd.f32 0.0, %v1537
    %1539 = vmatprep.mubr.f32.mxu0 0.0
    %1540 = vmatmul.mubr.f32.gmra.mxu0 %v1458
    %v1541 = vpop.f32.mrf.mxu0
    %v1542 = vadd.f32 0.0, %v1541
    %v1543 = vpop.f32.mrf.mxu0
    %v1544 = vadd.f32 0.0, %v1543
    %1545 = vmatprep.mubr.f32.mxu0 0.0
    %1546 = vmatmul.mubr.f32.gmra.mxu0 %v1461
    %v1547 = vpop.f32.mrf.mxu0
    %v1548 = vadd.f32 0.0, %v1547
    %v1549 = vpop.f32.mrf.mxu0
    %v1550 = vadd.f32 0.0, %v1549
    %1551 = vdwg.mxu0
    %v1552 = vadd.f32 %v1423, %v1530
    %v1553 = vadd.f32 %v1424, %v1532
    %v1554 = vadd.f32 %v1425, %v1536
    %v1555 = vadd.f32 %v1426, %v1538
    %v1556 = vadd.f32 %v1427, %v1542
    %v1557 = vadd.f32 %v1428, %v1544
    %v1558 = vadd.f32 %v1429, %v1548
    %v1559 = vadd.f32 %v1430, %v1550
    %v1560 = vld [vmem:[%s4] sm:$0xff]
    %v1561 = vld [vmem:[%s4 + $0x8] sm:$0xff]
    %v1562 = vld [vmem:[%s4 + $0x10] sm:$0xff]
    %v1563 = vld [vmem:[%s4 + $0x18] sm:$0xff]
    %1565 = vset.pattern.permute.xlu0 0
    %1566 = vperm.xlu0 %1565, %v1560
    %v1567 = vpop.permute.xlu0 %1566
    %1570 = vset.pattern.permute.xlu0 0
    %1571 = vperm.xlu0 %1570, %v1561
    %v1572 = vpop.permute.xlu0 %1571
    %1575 = vset.pattern.permute.xlu0 0
    %1576 = vperm.xlu0 %1575, %v1562
    %v1577 = vpop.permute.xlu0 %1576
    %1580 = vset.pattern.permute.xlu0 0
    %1581 = vperm.xlu0 %1580, %v1563
    %v1582 = vpop.permute.xlu0 %1581
    %v1584 = vadd.f32 %v1552, %v1567
    %v1585 = vadd.f32 %v1553, %v1567
    %v1586 = vadd.f32 %v1554, %v1572
    %v1587 = vadd.f32 %v1555, %v1572
    %v1588 = vadd.f32 %v1556, %v1577
    %v1589 = vadd.f32 %v1557, %v1577
    %v1590 = vadd.f32 %v1558, %v1582
    %v1591 = vadd.f32 %v1559, %v1582
    %v1592 = vmax.f32 %v1584, 0.0
    %v1593 = vmax.f32 %v1585, 0.0
    %v1594 = vmax.f32 %v1586, 0.0
    %v1595 = vmax.f32 %v1587, 0.0
    %v1596 = vmax.f32 %v1588, 0.0
    %v1597 = vmax.f32 %v1589, 0.0
    %v1598 = vmax.f32 %v1590, 0.0
    %v1599 = vmax.f32 %v1591, 0.0
    %1600 = vst [vmem:[#allocation3] sm:$0xff] %v1592
    %vm1601 = vcmask 556032
    %1602 = vst.msk [vmem:[#allocation3 + $0x8] sm:$0xff] %vm1601, %v1593
    %1603 = vst [vmem:[#allocation3 + $0x10] sm:$0xff] %v1594
    %1604 = vst.msk [vmem:[#allocation3 + $0x18] sm:$0xff] %vm1601, %v1595
    %1605 = vst [vmem:[#allocation3 + $0x20] sm:$0xff] %v1596
    %1606 = vst.msk [vmem:[#allocation3 + $0x28] sm:$0xff] %vm1601, %v1597
    %1607 = vst [vmem:[#allocation3 + $0x30] sm:$0xff] %v1598
    %1608 = vst.msk [vmem:[#allocation3 + $0x38] sm:$0xff] %vm1601, %v1599
    %v1609 = vld [vmem:[#allocation3] sm:$0x3]
    %v1610 = vld [vmem:[#allocation3 + $0x8] sm:$0x3]
    %v1611 = vpack.c.bf16 %v1609, %v1609
    %v1612 = vpack.c.bf16 %v1610, %v1610
    %v1613 = vld [vmem:[%s5] sm:$0xff]
    %v1614 = vld [vmem:[%s5 + $0x8] sm:$0xff]
    %v1615 = vld [vmem:[%s5 + $0x10] sm:$0xff]
    %v1616 = vld [vmem:[%s5 + $0x18] sm:$0xff]
    %v1617 = vld [vmem:[%s5 + $0x20] sm:$0xff]
    %v1618 = vld [vmem:[%s5 + $0x28] sm:$0xff]
    %v1619 = vld [vmem:[%s5 + $0x30] sm:$0xff]
    %v1620 = vld [vmem:[%s5 + $0x38] sm:$0xff]
    %v1621 = vld [vmem:[%s5 + $0x40] sm:$0xff]
    %v1622 = vld [vmem:[%s5 + $0x48] sm:$0xff]
    %v1623 = vld [vmem:[%s5 + $0x50] sm:$0xff]
    %v1624 = vld [vmem:[%s5 + $0x58] sm:$0xff]
    %v1625 = vld [vmem:[%s5 + $0x60] sm:$0xff]
    %v1626 = vld [vmem:[%s5 + $0x68] sm:$0xff]
    %v1627 = vld [vmem:[%s5 + $0x70] sm:$0xff]
    %v1628 = vld [vmem:[%s5 + $0x78] sm:$0xff]
    %v1629 = vld [vmem:[%s5 + $0x80] sm:$0xff]
    %v1630 = vld [vmem:[%s5 + $0x88] sm:$0xff]
    %v1631 = vld [vmem:[%s5 + $0x90] sm:$0xff]
    %v1632 = vld [vmem:[%s5 + $0x98] sm:$0xff]
    %v1633 = vld [vmem:[%s5 + $0xa0] sm:$0xff]
    %v1634 = vld [vmem:[%s5 + $0xa8] sm:$0xff]
    %v1635 = vld [vmem:[%s5 + $0xb0] sm:$0xff]
    %v1636 = vld [vmem:[%s5 + $0xb8] sm:$0xff]
    %v1637 = vld [vmem:[%s5 + $0xc0] sm:$0xff]
    %v1638 = vld [vmem:[%s5 + $0xc8] sm:$0xff]
    %v1639 = vld [vmem:[%s5 + $0xd0] sm:$0xff]
    %v1640 = vld [vmem:[%s5 + $0xd8] sm:$0xff]
    %v1641 = vld [vmem:[%s5 + $0xe0] sm:$0xff]
    %v1642 = vld [vmem:[%s5 + $0xe8] sm:$0xff]
    %v1643 = vld [vmem:[%s5 + $0xf0] sm:$0xff]
    %v1644 = vld [vmem:[%s5 + $0xf8] sm:$0xff]
    %v1645 = vld [vmem:[%s5 + $0x100] sm:$0xff]
    %v1646 = vld [vmem:[%s5 + $0x108] sm:$0xff]
    %v1647 = vld [vmem:[%s5 + $0x110] sm:$0xff]
    %v1648 = vld [vmem:[%s5 + $0x118] sm:$0xff]
    %v1649 = vld [vmem:[%s5 + $0x120] sm:$0xff]
    %v1650 = vld [vmem:[%s5 + $0x128] sm:$0xff]
    %v1651 = vld [vmem:[%s5 + $0x130] sm:$0xff]
    %v1652 = vld [vmem:[%s5 + $0x138] sm:$0xff]
    %v1653 = vld [vmem:[%s5 + $0x140] sm:$0xff]
    %v1654 = vld [vmem:[%s5 + $0x148] sm:$0xff]
    %v1655 = vld [vmem:[%s5 + $0x150] sm:$0xff]
    %v1656 = vld [vmem:[%s5 + $0x158] sm:$0xff]
    %v1657 = vld [vmem:[%s5 + $0x160] sm:$0xff]
    %v1658 = vld [vmem:[%s5 + $0x168] sm:$0xff]
    %v1659 = vld [vmem:[%s5 + $0x170] sm:$0xff]
    %v1660 = vld [vmem:[%s5 + $0x178] sm:$0xff]
    %v1661 = vld [vmem:[%s5 + $0x180] sm:$0x33]
    %v1662 = vld [vmem:[%s5 + $0x188] sm:$0x33]
    %v1663 = vld [vmem:[#allocation3] sm:$0xc]
    %v1664 = vld [vmem:[#allocation3 + $0x8] sm:$0xc]
    %v1665 = vpack.c.bf16 %v1663, %v1663
    %v1666 = vpack.c.bf16 %v1664, %v1664
    %s1667 = scalar_lea.vmem %s5, 400
    %v1668 = vld [vmem:[%s1667] sm:$0xff]
    %v1669 = vld [vmem:[%s1667 + $0x8] sm:$0xff]
    %v1670 = vld [vmem:[%s1667 + $0x10] sm:$0xff]
    %v1671 = vld [vmem:[%s1667 + $0x18] sm:$0xff]
    %v1672 = vld [vmem:[%s1667 + $0x20] sm:$0xff]
    %v1673 = vld [vmem:[%s1667 + $0x28] sm:$0xff]
    %v1674 = vld [vmem:[%s1667 + $0x30] sm:$0xff]
    %v1675 = vld [vmem:[%s1667 + $0x38] sm:$0xff]
    %v1676 = vld [vmem:[%s1667 + $0x40] sm:$0xff]
    %v1677 = vld [vmem:[%s1667 + $0x48] sm:$0xff]
    %v1678 = vld [vmem:[%s1667 + $0x50] sm:$0xff]
    %v1679 = vld [vmem:[%s1667 + $0x58] sm:$0xff]
    %v1680 = vld [vmem:[%s1667 + $0x60] sm:$0xff]
    %v1681 = vld [vmem:[%s1667 + $0x68] sm:$0xff]
    %v1682 = vld [vmem:[%s1667 + $0x70] sm:$0xff]
    %v1683 = vld [vmem:[%s1667 + $0x78] sm:$0xff]
    %v1684 = vld [vmem:[%s1667 + $0x80] sm:$0xff]
    %v1685 = vld [vmem:[%s1667 + $0x88] sm:$0xff]
    %v1686 = vld [vmem:[%s1667 + $0x90] sm:$0xff]
    %v1687 = vld [vmem:[%s1667 + $0x98] sm:$0xff]
    %v1688 = vld [vmem:[%s1667 + $0xa0] sm:$0xff]
    %v1689 = vld [vmem:[%s1667 + $0xa8] sm:$0xff]
    %v1690 = vld [vmem:[%s1667 + $0xb0] sm:$0xff]
    %v1691 = vld [vmem:[%s1667 + $0xb8] sm:$0xff]
    %v1692 = vld [vmem:[%s1667 + $0xc0] sm:$0xff]
    %v1693 = vld [vmem:[%s1667 + $0xc8] sm:$0xff]
    %v1694 = vld [vmem:[%s1667 + $0xd0] sm:$0xff]
    %v1695 = vld [vmem:[%s1667 + $0xd8] sm:$0xff]
    %v1696 = vld [vmem:[%s1667 + $0xe0] sm:$0xff]
    %v1697 = vld [vmem:[%s1667 + $0xe8] sm:$0xff]
    %v1698 = vld [vmem:[%s1667 + $0xf0] sm:$0xff]
    %v1699 = vld [vmem:[%s1667 + $0xf8] sm:$0xff]
    %v1700 = vld [vmem:[%s1667 + $0x100] sm:$0xff]
    %v1701 = vld [vmem:[%s1667 + $0x108] sm:$0xff]
    %v1702 = vld [vmem:[%s1667 + $0x110] sm:$0xff]
    %v1703 = vld [vmem:[%s1667 + $0x118] sm:$0xff]
    %v1704 = vld [vmem:[%s1667 + $0x120] sm:$0xff]
    %v1705 = vld [vmem:[%s1667 + $0x128] sm:$0xff]
    %v1706 = vld [vmem:[%s1667 + $0x130] sm:$0xff]
    %v1707 = vld [vmem:[%s1667 + $0x138] sm:$0xff]
    %v1708 = vld [vmem:[%s1667 + $0x140] sm:$0xff]
    %v1709 = vld [vmem:[%s1667 + $0x148] sm:$0xff]
    %v1710 = vld [vmem:[%s1667 + $0x150] sm:$0xff]
    %v1711 = vld [vmem:[%s1667 + $0x158] sm:$0xff]
    %v1712 = vld [vmem:[%s1667 + $0x160] sm:$0xff]
    %v1713 = vld [vmem:[%s1667 + $0x168] sm:$0xff]
    %v1714 = vld [vmem:[%s1667 + $0x170] sm:$0xff]
    %v1715 = vld [vmem:[%s1667 + $0x178] sm:$0xff]
    %v1716 = vld [vmem:[%s1667 + $0x180] sm:$0x33]
    %v1717 = vld [vmem:[%s1667 + $0x188] sm:$0x33]
    %v1720 = vrot.slane %v1665, 1
    %v1721 = vrot.slane %v1666, 1
    %v1773 = vunpack.c.l.b16 %v1668
    %v1774 = vunpack.c.h.b16 %v1668
    %v1775 = vunpack.c.l.b16 %v1669
    %v1776 = vunpack.c.h.b16 %v1669
    %v1777 = vunpack.c.l.b16 %v1670
    %v1778 = vunpack.c.h.b16 %v1670
    %v1779 = vunpack.c.l.b16 %v1671
    %v1780 = vunpack.c.h.b16 %v1671
    %v1781 = vunpack.c.l.b16 %v1672
    %v1782 = vunpack.c.h.b16 %v1672
    %v1783 = vunpack.c.l.b16 %v1673
    %v1784 = vunpack.c.h.b16 %v1673
    %v1785 = vunpack.c.l.b16 %v1674
    %v1786 = vunpack.c.h.b16 %v1674
    %v1787 = vunpack.c.l.b16 %v1675
    %v1788 = vunpack.c.h.b16 %v1675
    %v1789 = vunpack.c.l.b16 %v1676
    %v1790 = vunpack.c.h.b16 %v1676
    %v1791 = vunpack.c.l.b16 %v1677
    %v1792 = vunpack.c.h.b16 %v1677
    %v1793 = vunpack.c.l.b16 %v1678
    %v1794 = vunpack.c.h.b16 %v1678
    %v1795 = vunpack.c.l.b16 %v1679
    %v1796 = vunpack.c.h.b16 %v1679
    %v1797 = vunpack.c.l.b16 %v1680
    %v1798 = vunpack.c.h.b16 %v1680
    %v1799 = vunpack.c.l.b16 %v1681
    %v1800 = vunpack.c.h.b16 %v1681
    %v1801 = vunpack.c.l.b16 %v1682
    %v1802 = vunpack.c.h.b16 %v1682
    %v1803 = vunpack.c.l.b16 %v1683
    %v1804 = vunpack.c.h.b16 %v1683
    %v1805 = vunpack.c.l.b16 %v1684
    %v1806 = vunpack.c.h.b16 %v1684
    %v1807 = vunpack.c.l.b16 %v1685
    %v1808 = vunpack.c.h.b16 %v1685
    %v1809 = vunpack.c.l.b16 %v1686
    %v1810 = vunpack.c.h.b16 %v1686
    %v1811 = vunpack.c.l.b16 %v1687
    %v1812 = vunpack.c.h.b16 %v1687
    %v1813 = vunpack.c.l.b16 %v1688
    %v1814 = vunpack.c.h.b16 %v1688
    %v1815 = vunpack.c.l.b16 %v1689
    %v1816 = vunpack.c.h.b16 %v1689
    %v1817 = vunpack.c.l.b16 %v1690
    %v1818 = vunpack.c.h.b16 %v1690
    %v1819 = vunpack.c.l.b16 %v1691
    %v1820 = vunpack.c.h.b16 %v1691
    %v1821 = vunpack.c.l.b16 %v1692
    %v1822 = vunpack.c.h.b16 %v1692
    %v1823 = vunpack.c.l.b16 %v1693
    %v1824 = vunpack.c.h.b16 %v1693
    %v1825 = vunpack.c.l.b16 %v1694
    %v1826 = vunpack.c.h.b16 %v1694
    %v1827 = vunpack.c.l.b16 %v1695
    %v1828 = vunpack.c.h.b16 %v1695
    %v1829 = vunpack.c.l.b16 %v1696
    %v1830 = vunpack.c.h.b16 %v1696
    %v1831 = vunpack.c.l.b16 %v1697
    %v1832 = vunpack.c.h.b16 %v1697
    %v1833 = vunpack.c.l.b16 %v1698
    %v1834 = vunpack.c.h.b16 %v1698
    %v1835 = vunpack.c.l.b16 %v1699
    %v1836 = vunpack.c.h.b16 %v1699
    %v1837 = vunpack.c.l.b16 %v1700
    %v1838 = vunpack.c.h.b16 %v1700
    %v1839 = vunpack.c.l.b16 %v1701
    %v1840 = vunpack.c.h.b16 %v1701
    %v1841 = vunpack.c.l.b16 %v1702
    %v1842 = vunpack.c.h.b16 %v1702
    %v1843 = vunpack.c.l.b16 %v1703
    %v1844 = vunpack.c.h.b16 %v1703
    %v1845 = vunpack.c.l.b16 %v1704
    %v1846 = vunpack.c.h.b16 %v1704
    %v1847 = vunpack.c.l.b16 %v1705
    %v1848 = vunpack.c.h.b16 %v1705
    %v1849 = vunpack.c.l.b16 %v1706
    %v1850 = vunpack.c.h.b16 %v1706
    %v1851 = vunpack.c.l.b16 %v1707
    %v1852 = vunpack.c.h.b16 %v1707
    %v1853 = vunpack.c.l.b16 %v1708
    %v1854 = vunpack.c.h.b16 %v1708
    %v1855 = vunpack.c.l.b16 %v1709
    %v1856 = vunpack.c.h.b16 %v1709
    %v1857 = vunpack.c.l.b16 %v1710
    %v1858 = vunpack.c.h.b16 %v1710
    %v1859 = vunpack.c.l.b16 %v1711
    %v1860 = vunpack.c.h.b16 %v1711
    %v1861 = vunpack.c.l.b16 %v1712
    %v1862 = vunpack.c.h.b16 %v1712
    %v1863 = vunpack.c.l.b16 %v1713
    %v1864 = vunpack.c.h.b16 %v1713
    %v1865 = vunpack.c.l.b16 %v1714
    %v1866 = vunpack.c.h.b16 %v1714
    %v1867 = vunpack.c.l.b16 %v1715
    %v1868 = vunpack.c.h.b16 %v1715
    %v1869 = vunpack.c.l.b16 %v1716
    %v1870 = vunpack.c.h.b16 %v1716
    %v1871 = vunpack.c.l.b16 %v1717
    %v1872 = vunpack.c.h.b16 %v1717
    %v1873 = vpack.c.b16 %v1777, %v1773
    %v1874 = vpack.c.b16 %v1778, %v1774
    %v1875 = vpack.c.b16 %v1779, %v1775
    %v1876 = vpack.c.b16 %v1780, %v1776
    %v1877 = vpack.c.b16 %v1785, %v1781
    %v1878 = vpack.c.b16 %v1786, %v1782
    %v1879 = vpack.c.b16 %v1787, %v1783
    %v1880 = vpack.c.b16 %v1788, %v1784
    %v1881 = vpack.c.b16 %v1793, %v1789
    %v1882 = vpack.c.b16 %v1794, %v1790
    %v1883 = vpack.c.b16 %v1795, %v1791
    %v1884 = vpack.c.b16 %v1796, %v1792
    %v1885 = vpack.c.b16 %v1801, %v1797
    %v1886 = vpack.c.b16 %v1802, %v1798
    %v1887 = vpack.c.b16 %v1803, %v1799
    %v1888 = vpack.c.b16 %v1804, %v1800
    %v1889 = vpack.c.b16 %v1809, %v1805
    %v1890 = vpack.c.b16 %v1810, %v1806
    %v1891 = vpack.c.b16 %v1811, %v1807
    %v1892 = vpack.c.b16 %v1812, %v1808
    %v1893 = vpack.c.b16 %v1817, %v1813
    %v1894 = vpack.c.b16 %v1818, %v1814
    %v1895 = vpack.c.b16 %v1819, %v1815
    %v1896 = vpack.c.b16 %v1820, %v1816
    %v1897 = vpack.c.b16 %v1825, %v1821
    %v1898 = vpack.c.b16 %v1826, %v1822
    %v1899 = vpack.c.b16 %v1827, %v1823
    %v1900 = vpack.c.b16 %v1828, %v1824
    %v1901 = vpack.c.b16 %v1833, %v1829
    %v1902 = vpack.c.b16 %v1834, %v1830
    %v1903 = vpack.c.b16 %v1835, %v1831
    %v1904 = vpack.c.b16 %v1836, %v1832
    %v1905 = vpack.c.b16 %v1841, %v1837
    %v1906 = vpack.c.b16 %v1842, %v1838
    %v1907 = vpack.c.b16 %v1843, %v1839
    %v1908 = vpack.c.b16 %v1844, %v1840
    %v1909 = vpack.c.b16 %v1849, %v1845
    %v1910 = vpack.c.b16 %v1850, %v1846
    %v1911 = vpack.c.b16 %v1851, %v1847
    %v1912 = vpack.c.b16 %v1852, %v1848
    %v1913 = vpack.c.b16 %v1857, %v1853
    %v1914 = vpack.c.b16 %v1858, %v1854
    %v1915 = vpack.c.b16 %v1859, %v1855
    %v1916 = vpack.c.b16 %v1860, %v1856
    %v1917 = vpack.c.b16 %v1865, %v1861
    %v1918 = vpack.c.b16 %v1866, %v1862
    %v1919 = vpack.c.b16 %v1867, %v1863
    %v1920 = vpack.c.b16 %v1868, %v1864
    %v1921 = vpack.c.b16 %v1869, %v1869
    %v1922 = vpack.c.b16 %v1870, %v1870
    %v1923 = vpack.c.b16 %v1871, %v1871
    %v1924 = vpack.c.b16 %v1872, %v1872
    %v1974 = vsel %vm1601, %v1721, 0
    %v1977 = vsel %vm55, %v1921, 0
    %v1980 = vsel %vm55, %v1922, 0
    %v1983 = vsel %vm55, %v1923, 0
    %v1986 = vsel %vm55, %v1924, 0
    %1988 = vmatprep.subr.bf16.mxu0 %v1902
    %1989 = vmatpush1.bf16.msra.mxu0 %v1901
    %1990 = vmatprep.subr.bf16.mxu0 %v1898
    %1991 = vmatpush1.bf16.msra.mxu0 %v1897
    %1992 = vmatprep.subr.bf16.mxu0 %v1894
    %1993 = vmatpush1.bf16.msra.mxu0 %v1893
    %1994 = vmatprep.subr.bf16.mxu0 %v1890
    %1995 = vmatpush1.bf16.msra.mxu0 %v1889
    %1996 = vmatprep.subr.bf16.mxu0 %v1886
    %1997 = vmatpush1.bf16.msra.mxu0 %v1885
    %1998 = vmatprep.subr.bf16.mxu0 %v1882
    %1999 = vmatpush1.bf16.msra.mxu0 %v1881
    %2000 = vmatprep.subr.bf16.mxu0 %v1878
    %2001 = vmatpush1.bf16.msra.mxu0 %v1877
    %2002 = vmatprep.subr.bf16.mxu0 %v1874
    %2003 = vmatpush1.bf16.msra.mxu0 %v1873
    %2004 = vmatprep.subr.bf16.mxu0 0
    %2005 = vmatpush2.bf16.msra.mxu0 0
    %2006 = vmatprep.subr.bf16.mxu0 0
    %2007 = vmatpush2.bf16.msra.mxu0 0
    %2008 = vmatprep.subr.bf16.mxu0 0
    %2009 = vmatpush2.bf16.msra.mxu0 0
    %2010 = vmatprep.subr.bf16.mxu0 %v1980
    %2011 = vmatpush2.bf16.msra.mxu0 %v1977
    %2012 = vmatprep.subr.bf16.mxu0 %v1918
    %2013 = vmatpush2.bf16.msra.mxu0 %v1917
    %2014 = vmatprep.subr.bf16.mxu0 %v1914
    %2015 = vmatpush2.bf16.msra.mxu0 %v1913
    %2016 = vmatprep.subr.bf16.mxu0 %v1910
    %2017 = vmatpush2.bf16.msra.mxu0 %v1909
    %2018 = vmatprep.subr.bf16.mxu0 %v1906
    %2019 = vmatpush2.bf16.msra.mxu0 %v1905
    %2020 = vmatprep.mubr.bf16.mxu0 %v1974
    %2021 = vmatmul.mubr.bf16.gmra.mxu0 %v1720
    %v2022 = vpop.f32.mrf.mxu0
    %v2023 = vadd.f32 0.0, %v2022
    %v2024 = vpop.f32.mrf.mxu0
    %v2025 = vadd.f32 0.0, %v2024
    %v2026 = vpop.f32.mrf.mxu0
    %v2027 = vpop.f32.mrf.mxu0
    %2028 = vdwg.mxu0
    %2029 = vmatprep.subr.bf16.mxu0 %v1904
    %2030 = vmatpush1.bf16.msra.mxu0 %v1903
    %2031 = vmatprep.subr.bf16.mxu0 %v1900
    %2032 = vmatpush1.bf16.msra.mxu0 %v1899
    %2033 = vmatprep.subr.bf16.mxu0 %v1896
    %2034 = vmatpush1.bf16.msra.mxu0 %v1895
    %2035 = vmatprep.subr.bf16.mxu0 %v1892
    %2036 = vmatpush1.bf16.msra.mxu0 %v1891
    %2037 = vmatprep.subr.bf16.mxu0 %v1888
    %2038 = vmatpush1.bf16.msra.mxu0 %v1887
    %2039 = vmatprep.subr.bf16.mxu0 %v1884
    %2040 = vmatpush1.bf16.msra.mxu0 %v1883
    %2041 = vmatprep.subr.bf16.mxu0 %v1880
    %2042 = vmatpush1.bf16.msra.mxu0 %v1879
    %2043 = vmatprep.subr.bf16.mxu0 %v1876
    %2044 = vmatpush1.bf16.msra.mxu0 %v1875
    %2045 = vmatprep.subr.bf16.mxu0 0
    %2046 = vmatpush2.bf16.msra.mxu0 0
    %2047 = vmatprep.subr.bf16.mxu0 0
    %2048 = vmatpush2.bf16.msra.mxu0 0
    %2049 = vmatprep.subr.bf16.mxu0 0
    %2050 = vmatpush2.bf16.msra.mxu0 0
    %2051 = vmatprep.subr.bf16.mxu0 %v1986
    %2052 = vmatpush2.bf16.msra.mxu0 %v1983
    %2053 = vmatprep.subr.bf16.mxu0 %v1920
    %2054 = vmatpush2.bf16.msra.mxu0 %v1919
    %2055 = vmatprep.subr.bf16.mxu0 %v1916
    %2056 = vmatpush2.bf16.msra.mxu0 %v1915
    %2057 = vmatprep.subr.bf16.mxu0 %v1912
    %2058 = vmatpush2.bf16.msra.mxu0 %v1911
    %2059 = vmatprep.subr.bf16.mxu0 %v1908
    %2060 = vmatpush2.bf16.msra.mxu0 %v1907
    %2061 = vmatprep.mubr.bf16.mxu0 %v1974
    %2062 = vmatmul.mubr.bf16.gmra.mxu0 %v1720
    %v2063 = vpop.f32.mrf.mxu0
    %v2064 = vadd.f32 0.0, %v2063
    %v2065 = vpop.f32.mrf.mxu0
    %v2066 = vadd.f32 0.0, %v2065
    %v2067 = vpop.f32.mrf.mxu0
    %v2068 = vpop.f32.mrf.mxu0
    %2069 = vdwg.mxu0
    %v2120 = vunpack.c.l.b16 %v1613
    %v2121 = vunpack.c.h.b16 %v1613
    %v2122 = vunpack.c.l.b16 %v1614
    %v2123 = vunpack.c.h.b16 %v1614
    %v2124 = vunpack.c.l.b16 %v1615
    %v2125 = vunpack.c.h.b16 %v1615
    %v2126 = vunpack.c.l.b16 %v1616
    %v2127 = vunpack.c.h.b16 %v1616
    %v2128 = vunpack.c.l.b16 %v1617
    %v2129 = vunpack.c.h.b16 %v1617
    %v2130 = vunpack.c.l.b16 %v1618
    %v2131 = vunpack.c.h.b16 %v1618
    %v2132 = vunpack.c.l.b16 %v1619
    %v2133 = vunpack.c.h.b16 %v1619
    %v2134 = vunpack.c.l.b16 %v1620
    %v2135 = vunpack.c.h.b16 %v1620
    %v2136 = vunpack.c.l.b16 %v1621
    %v2137 = vunpack.c.h.b16 %v1621
    %v2138 = vunpack.c.l.b16 %v1622
    %v2139 = vunpack.c.h.b16 %v1622
    %v2140 = vunpack.c.l.b16 %v1623
    %v2141 = vunpack.c.h.b16 %v1623
    %v2142 = vunpack.c.l.b16 %v1624
    %v2143 = vunpack.c.h.b16 %v1624
    %v2144 = vunpack.c.l.b16 %v1625
    %v2145 = vunpack.c.h.b16 %v1625
    %v2146 = vunpack.c.l.b16 %v1626
    %v2147 = vunpack.c.h.b16 %v1626
    %v2148 = vunpack.c.l.b16 %v1627
    %v2149 = vunpack.c.h.b16 %v1627
    %v2150 = vunpack.c.l.b16 %v1628
    %v2151 = vunpack.c.h.b16 %v1628
    %v2152 = vunpack.c.l.b16 %v1629
    %v2153 = vunpack.c.h.b16 %v1629
    %v2154 = vunpack.c.l.b16 %v1630
    %v2155 = vunpack.c.h.b16 %v1630
    %v2156 = vunpack.c.l.b16 %v1631
    %v2157 = vunpack.c.h.b16 %v1631
    %v2158 = vunpack.c.l.b16 %v1632
    %v2159 = vunpack.c.h.b16 %v1632
    %v2160 = vunpack.c.l.b16 %v1633
    %v2161 = vunpack.c.h.b16 %v1633
    %v2162 = vunpack.c.l.b16 %v1634
    %v2163 = vunpack.c.h.b16 %v1634
    %v2164 = vunpack.c.l.b16 %v1635
    %v2165 = vunpack.c.h.b16 %v1635
    %v2166 = vunpack.c.l.b16 %v1636
    %v2167 = vunpack.c.h.b16 %v1636
    %v2168 = vunpack.c.l.b16 %v1637
    %v2169 = vunpack.c.h.b16 %v1637
    %v2170 = vunpack.c.l.b16 %v1638
    %v2171 = vunpack.c.h.b16 %v1638
    %v2172 = vunpack.c.l.b16 %v1639
    %v2173 = vunpack.c.h.b16 %v1639
    %v2174 = vunpack.c.l.b16 %v1640
    %v2175 = vunpack.c.h.b16 %v1640
    %v2176 = vunpack.c.l.b16 %v1641
    %v2177 = vunpack.c.h.b16 %v1641
    %v2178 = vunpack.c.l.b16 %v1642
    %v2179 = vunpack.c.h.b16 %v1642
    %v2180 = vunpack.c.l.b16 %v1643
    %v2181 = vunpack.c.h.b16 %v1643
    %v2182 = vunpack.c.l.b16 %v1644
    %v2183 = vunpack.c.h.b16 %v1644
    %v2184 = vunpack.c.l.b16 %v1645
    %v2185 = vunpack.c.h.b16 %v1645
    %v2186 = vunpack.c.l.b16 %v1646
    %v2187 = vunpack.c.h.b16 %v1646
    %v2188 = vunpack.c.l.b16 %v1647
    %v2189 = vunpack.c.h.b16 %v1647
    %v2190 = vunpack.c.l.b16 %v1648
    %v2191 = vunpack.c.h.b16 %v1648
    %v2192 = vunpack.c.l.b16 %v1649
    %v2193 = vunpack.c.h.b16 %v1649
    %v2194 = vunpack.c.l.b16 %v1650
    %v2195 = vunpack.c.h.b16 %v1650
    %v2196 = vunpack.c.l.b16 %v1651
    %v2197 = vunpack.c.h.b16 %v1651
    %v2198 = vunpack.c.l.b16 %v1652
    %v2199 = vunpack.c.h.b16 %v1652
    %v2200 = vunpack.c.l.b16 %v1653
    %v2201 = vunpack.c.h.b16 %v1653
    %v2202 = vunpack.c.l.b16 %v1654
    %v2203 = vunpack.c.h.b16 %v1654
    %v2204 = vunpack.c.l.b16 %v1655
    %v2205 = vunpack.c.h.b16 %v1655
    %v2206 = vunpack.c.l.b16 %v1656
    %v2207 = vunpack.c.h.b16 %v1656
    %v2208 = vunpack.c.l.b16 %v1657
    %v2209 = vunpack.c.h.b16 %v1657
    %v2210 = vunpack.c.l.b16 %v1658
    %v2211 = vunpack.c.h.b16 %v1658
    %v2212 = vunpack.c.l.b16 %v1659
    %v2213 = vunpack.c.h.b16 %v1659
    %v2214 = vunpack.c.l.b16 %v1660
    %v2215 = vunpack.c.h.b16 %v1660
    %v2216 = vunpack.c.l.b16 %v1661
    %v2217 = vunpack.c.h.b16 %v1661
    %v2218 = vunpack.c.l.b16 %v1662
    %v2219 = vunpack.c.h.b16 %v1662
    %v2220 = vpack.c.b16 %v2124, %v2120
    %v2221 = vpack.c.b16 %v2125, %v2121
    %v2222 = vpack.c.b16 %v2126, %v2122
    %v2223 = vpack.c.b16 %v2127, %v2123
    %v2224 = vpack.c.b16 %v2132, %v2128
    %v2225 = vpack.c.b16 %v2133, %v2129
    %v2226 = vpack.c.b16 %v2134, %v2130
    %v2227 = vpack.c.b16 %v2135, %v2131
    %v2228 = vpack.c.b16 %v2140, %v2136
    %v2229 = vpack.c.b16 %v2141, %v2137
    %v2230 = vpack.c.b16 %v2142, %v2138
    %v2231 = vpack.c.b16 %v2143, %v2139
    %v2232 = vpack.c.b16 %v2148, %v2144
    %v2233 = vpack.c.b16 %v2149, %v2145
    %v2234 = vpack.c.b16 %v2150, %v2146
    %v2235 = vpack.c.b16 %v2151, %v2147
    %v2236 = vpack.c.b16 %v2156, %v2152
    %v2237 = vpack.c.b16 %v2157, %v2153
    %v2238 = vpack.c.b16 %v2158, %v2154
    %v2239 = vpack.c.b16 %v2159, %v2155
    %v2240 = vpack.c.b16 %v2164, %v2160
    %v2241 = vpack.c.b16 %v2165, %v2161
    %v2242 = vpack.c.b16 %v2166, %v2162
    %v2243 = vpack.c.b16 %v2167, %v2163
    %v2244 = vpack.c.b16 %v2172, %v2168
    %v2245 = vpack.c.b16 %v2173, %v2169
    %v2246 = vpack.c.b16 %v2174, %v2170
    %v2247 = vpack.c.b16 %v2175, %v2171
    %v2248 = vpack.c.b16 %v2180, %v2176
    %v2249 = vpack.c.b16 %v2181, %v2177
    %v2250 = vpack.c.b16 %v2182, %v2178
    %v2251 = vpack.c.b16 %v2183, %v2179
    %v2252 = vpack.c.b16 %v2188, %v2184
    %v2253 = vpack.c.b16 %v2189, %v2185
    %v2254 = vpack.c.b16 %v2190, %v2186
    %v2255 = vpack.c.b16 %v2191, %v2187
    %v2256 = vpack.c.b16 %v2196, %v2192
    %v2257 = vpack.c.b16 %v2197, %v2193
    %v2258 = vpack.c.b16 %v2198, %v2194
    %v2259 = vpack.c.b16 %v2199, %v2195
    %v2260 = vpack.c.b16 %v2204, %v2200
    %v2261 = vpack.c.b16 %v2205, %v2201
    %v2262 = vpack.c.b16 %v2206, %v2202
    %v2263 = vpack.c.b16 %v2207, %v2203
    %v2264 = vpack.c.b16 %v2212, %v2208
    %v2265 = vpack.c.b16 %v2213, %v2209
    %v2266 = vpack.c.b16 %v2214, %v2210
    %v2267 = vpack.c.b16 %v2215, %v2211
    %v2268 = vpack.c.b16 %v2216, %v2216
    %v2269 = vpack.c.b16 %v2217, %v2217
    %v2270 = vpack.c.b16 %v2218, %v2218
    %v2271 = vpack.c.b16 %v2219, %v2219
    %v2321 = vsel %vm1601, %v1612, 0
    %v2324 = vsel %vm55, %v2268, 0
    %v2327 = vsel %vm55, %v2269, 0
    %v2330 = vsel %vm55, %v2270, 0
    %v2333 = vsel %vm55, %v2271, 0
    %2335 = vmatprep.subr.bf16.mxu0 %v2249
    %2336 = vmatpush1.bf16.msra.mxu0 %v2248
    %2337 = vmatprep.subr.bf16.mxu0 %v2245
    %2338 = vmatpush1.bf16.msra.mxu0 %v2244
    %2339 = vmatprep.subr.bf16.mxu0 %v2241
    %2340 = vmatpush1.bf16.msra.mxu0 %v2240
    %2341 = vmatprep.subr.bf16.mxu0 %v2237
    %2342 = vmatpush1.bf16.msra.mxu0 %v2236
    %2343 = vmatprep.subr.bf16.mxu0 %v2233
    %2344 = vmatpush1.bf16.msra.mxu0 %v2232
    %2345 = vmatprep.subr.bf16.mxu0 %v2229
    %2346 = vmatpush1.bf16.msra.mxu0 %v2228
    %2347 = vmatprep.subr.bf16.mxu0 %v2225
    %2348 = vmatpush1.bf16.msra.mxu0 %v2224
    %2349 = vmatprep.subr.bf16.mxu0 %v2221
    %2350 = vmatpush1.bf16.msra.mxu0 %v2220
    %2351 = vmatprep.subr.bf16.mxu0 0
    %2352 = vmatpush2.bf16.msra.mxu0 0
    %2353 = vmatprep.subr.bf16.mxu0 0
    %2354 = vmatpush2.bf16.msra.mxu0 0
    %2355 = vmatprep.subr.bf16.mxu0 0
    %2356 = vmatpush2.bf16.msra.mxu0 0
    %2357 = vmatprep.subr.bf16.mxu0 %v2327
    %2358 = vmatpush2.bf16.msra.mxu0 %v2324
    %2359 = vmatprep.subr.bf16.mxu0 %v2265
    %2360 = vmatpush2.bf16.msra.mxu0 %v2264
    %2361 = vmatprep.subr.bf16.mxu0 %v2261
    %2362 = vmatpush2.bf16.msra.mxu0 %v2260
    %2363 = vmatprep.subr.bf16.mxu0 %v2257
    %2364 = vmatpush2.bf16.msra.mxu0 %v2256
    %2365 = vmatprep.subr.bf16.mxu0 %v2253
    %2366 = vmatpush2.bf16.msra.mxu0 %v2252
    %2367 = vmatprep.mubr.bf16.mxu0 %v2321
    %2368 = vmatmul.mubr.bf16.gmra.mxu0 %v1611
    %v2369 = vpop.f32.mrf.mxu0
    %v2370 = vadd.f32 %v2023, %v2369
    %v2371 = vpop.f32.mrf.mxu0
    %v2372 = vadd.f32 %v2025, %v2371
    %v2373 = vpop.f32.mrf.mxu0
    %v2374 = vpop.f32.mrf.mxu0
    %2375 = vdwg.mxu0
    %2376 = vmatprep.subr.bf16.mxu0 %v2251
    %2377 = vmatpush1.bf16.msra.mxu0 %v2250
    %2378 = vmatprep.subr.bf16.mxu0 %v2247
    %2379 = vmatpush1.bf16.msra.mxu0 %v2246
    %2380 = vmatprep.subr.bf16.mxu0 %v2243
    %2381 = vmatpush1.bf16.msra.mxu0 %v2242
    %2382 = vmatprep.subr.bf16.mxu0 %v2239
    %2383 = vmatpush1.bf16.msra.mxu0 %v2238
    %2384 = vmatprep.subr.bf16.mxu0 %v2235
    %2385 = vmatpush1.bf16.msra.mxu0 %v2234
    %2386 = vmatprep.subr.bf16.mxu0 %v2231
    %2387 = vmatpush1.bf16.msra.mxu0 %v2230
    %2388 = vmatprep.subr.bf16.mxu0 %v2227
    %2389 = vmatpush1.bf16.msra.mxu0 %v2226
    %2390 = vmatprep.subr.bf16.mxu0 %v2223
    %2391 = vmatpush1.bf16.msra.mxu0 %v2222
    %2392 = vmatprep.subr.bf16.mxu0 0
    %2393 = vmatpush2.bf16.msra.mxu0 0
    %2394 = vmatprep.subr.bf16.mxu0 0
    %2395 = vmatpush2.bf16.msra.mxu0 0
    %2396 = vmatprep.subr.bf16.mxu0 0
    %2397 = vmatpush2.bf16.msra.mxu0 0
    %2398 = vmatprep.subr.bf16.mxu0 %v2333
    %2399 = vmatpush2.bf16.msra.mxu0 %v2330
    %2400 = vmatprep.subr.bf16.mxu0 %v2267
    %2401 = vmatpush2.bf16.msra.mxu0 %v2266
    %2402 = vmatprep.subr.bf16.mxu0 %v2263
    %2403 = vmatpush2.bf16.msra.mxu0 %v2262
    %2404 = vmatprep.subr.bf16.mxu0 %v2259
    %2405 = vmatpush2.bf16.msra.mxu0 %v2258
    %2406 = vmatprep.subr.bf16.mxu0 %v2255
    %2407 = vmatpush2.bf16.msra.mxu0 %v2254
    %2408 = vmatprep.mubr.bf16.mxu0 %v2321
    %2409 = vmatmul.mubr.bf16.gmra.mxu0 %v1611
    %v2410 = vpop.f32.mrf.mxu0
    %v2411 = vadd.f32 %v2064, %v2410
    %v2412 = vpop.f32.mrf.mxu0
    %v2413 = vadd.f32 %v2066, %v2412
    %v2414 = vpop.f32.mrf.mxu0
    %v2415 = vpop.f32.mrf.mxu0
    %2416 = vdwg.mxu0
    %v2417 = vld [vmem:[#allocation3] sm:$0x30]
    %v2418 = vld [vmem:[#allocation3 + $0x8] sm:$0x30]
    %v2419 = vpack.c.bf16 %v2417, %v2417
    %v2420 = vpack.c.bf16 %v2418, %v2418
    %s2421 = scalar_lea.vmem %s5, 800
    %v2422 = vld [vmem:[%s2421] sm:$0xff]
    %v2423 = vld [vmem:[%s2421 + $0x8] sm:$0xff]
    %v2424 = vld [vmem:[%s2421 + $0x10] sm:$0xff]
    %v2425 = vld [vmem:[%s2421 + $0x18] sm:$0xff]
    %v2426 = vld [vmem:[%s2421 + $0x20] sm:$0xff]
    %v2427 = vld [vmem:[%s2421 + $0x28] sm:$0xff]
    %v2428 = vld [vmem:[%s2421 + $0x30] sm:$0xff]
    %v2429 = vld [vmem:[%s2421 + $0x38] sm:$0xff]
    %v2430 = vld [vmem:[%s2421 + $0x40] sm:$0xff]
    %v2431 = vld [vmem:[%s2421 + $0x48] sm:$0xff]
    %v2432 = vld [vmem:[%s2421 + $0x50] sm:$0xff]
    %v2433 = vld [vmem:[%s2421 + $0x58] sm:$0xff]
    %v2434 = vld [vmem:[%s2421 + $0x60] sm:$0xff]
    %v2435 = vld [vmem:[%s2421 + $0x68] sm:$0xff]
    %v2436 = vld [vmem:[%s2421 + $0x70] sm:$0xff]
    %v2437 = vld [vmem:[%s2421 + $0x78] sm:$0xff]
    %v2438 = vld [vmem:[%s2421 + $0x80] sm:$0xff]
    %v2439 = vld [vmem:[%s2421 + $0x88] sm:$0xff]
    %v2440 = vld [vmem:[%s2421 + $0x90] sm:$0xff]
    %v2441 = vld [vmem:[%s2421 + $0x98] sm:$0xff]
    %v2442 = vld [vmem:[%s2421 + $0xa0] sm:$0xff]
    %v2443 = vld [vmem:[%s2421 + $0xa8] sm:$0xff]
    %v2444 = vld [vmem:[%s2421 + $0xb0] sm:$0xff]
    %v2445 = vld [vmem:[%s2421 + $0xb8] sm:$0xff]
    %v2446 = vld [vmem:[%s2421 + $0xc0] sm:$0xff]
    %v2447 = vld [vmem:[%s2421 + $0xc8] sm:$0xff]
    %v2448 = vld [vmem:[%s2421 + $0xd0] sm:$0xff]
    %v2449 = vld [vmem:[%s2421 + $0xd8] sm:$0xff]
    %v2450 = vld [vmem:[%s2421 + $0xe0] sm:$0xff]
    %v2451 = vld [vmem:[%s2421 + $0xe8] sm:$0xff]
    %v2452 = vld [vmem:[%s2421 + $0xf0] sm:$0xff]
    %v2453 = vld [vmem:[%s2421 + $0xf8] sm:$0xff]
    %v2454 = vld [vmem:[%s2421 + $0x100] sm:$0xff]
    %v2455 = vld [vmem:[%s2421 + $0x108] sm:$0xff]
    %v2456 = vld [vmem:[%s2421 + $0x110] sm:$0xff]
    %v2457 = vld [vmem:[%s2421 + $0x118] sm:$0xff]
    %v2458 = vld [vmem:[%s2421 + $0x120] sm:$0xff]
    %v2459 = vld [vmem:[%s2421 + $0x128] sm:$0xff]
    %v2460 = vld [vmem:[%s2421 + $0x130] sm:$0xff]
    %v2461 = vld [vmem:[%s2421 + $0x138] sm:$0xff]
    %v2462 = vld [vmem:[%s2421 + $0x140] sm:$0xff]
    %v2463 = vld [vmem:[%s2421 + $0x148] sm:$0xff]
    %v2464 = vld [vmem:[%s2421 + $0x150] sm:$0xff]
    %v2465 = vld [vmem:[%s2421 + $0x158] sm:$0xff]
    %v2466 = vld [vmem:[%s2421 + $0x160] sm:$0xff]
    %v2467 = vld [vmem:[%s2421 + $0x168] sm:$0xff]
    %v2468 = vld [vmem:[%s2421 + $0x170] sm:$0xff]
    %v2469 = vld [vmem:[%s2421 + $0x178] sm:$0xff]
    %v2470 = vld [vmem:[%s2421 + $0x180] sm:$0x33]
    %v2471 = vld [vmem:[%s2421 + $0x188] sm:$0x33]
    %v2474 = vrot.slane %v2419, 2
    %v2475 = vrot.slane %v2420, 2
    %v2527 = vunpack.c.l.b16 %v2422
    %v2528 = vunpack.c.h.b16 %v2422
    %v2529 = vunpack.c.l.b16 %v2423
    %v2530 = vunpack.c.h.b16 %v2423
    %v2531 = vunpack.c.l.b16 %v2424
    %v2532 = vunpack.c.h.b16 %v2424
    %v2533 = vunpack.c.l.b16 %v2425
    %v2534 = vunpack.c.h.b16 %v2425
    %v2535 = vunpack.c.l.b16 %v2426
    %v2536 = vunpack.c.h.b16 %v2426
    %v2537 = vunpack.c.l.b16 %v2427
    %v2538 = vunpack.c.h.b16 %v2427
    %v2539 = vunpack.c.l.b16 %v2428
    %v2540 = vunpack.c.h.b16 %v2428
    %v2541 = vunpack.c.l.b16 %v2429
    %v2542 = vunpack.c.h.b16 %v2429
    %v2543 = vunpack.c.l.b16 %v2430
    %v2544 = vunpack.c.h.b16 %v2430
    %v2545 = vunpack.c.l.b16 %v2431
    %v2546 = vunpack.c.h.b16 %v2431
    %v2547 = vunpack.c.l.b16 %v2432
    %v2548 = vunpack.c.h.b16 %v2432
    %v2549 = vunpack.c.l.b16 %v2433
    %v2550 = vunpack.c.h.b16 %v2433
    %v2551 = vunpack.c.l.b16 %v2434
    %v2552 = vunpack.c.h.b16 %v2434
    %v2553 = vunpack.c.l.b16 %v2435
    %v2554 = vunpack.c.h.b16 %v2435
    %v2555 = vunpack.c.l.b16 %v2436
    %v2556 = vunpack.c.h.b16 %v2436
    %v2557 = vunpack.c.l.b16 %v2437
    %v2558 = vunpack.c.h.b16 %v2437
    %v2559 = vunpack.c.l.b16 %v2438
    %v2560 = vunpack.c.h.b16 %v2438
    %v2561 = vunpack.c.l.b16 %v2439
    %v2562 = vunpack.c.h.b16 %v2439
    %v2563 = vunpack.c.l.b16 %v2440
    %v2564 = vunpack.c.h.b16 %v2440
    %v2565 = vunpack.c.l.b16 %v2441
    %v2566 = vunpack.c.h.b16 %v2441
    %v2567 = vunpack.c.l.b16 %v2442
    %v2568 = vunpack.c.h.b16 %v2442
    %v2569 = vunpack.c.l.b16 %v2443
    %v2570 = vunpack.c.h.b16 %v2443
    %v2571 = vunpack.c.l.b16 %v2444
    %v2572 = vunpack.c.h.b16 %v2444
    %v2573 = vunpack.c.l.b16 %v2445
    %v2574 = vunpack.c.h.b16 %v2445
    %v2575 = vunpack.c.l.b16 %v2446
    %v2576 = vunpack.c.h.b16 %v2446
    %v2577 = vunpack.c.l.b16 %v2447
    %v2578 = vunpack.c.h.b16 %v2447
    %v2579 = vunpack.c.l.b16 %v2448
    %v2580 = vunpack.c.h.b16 %v2448
    %v2581 = vunpack.c.l.b16 %v2449
    %v2582 = vunpack.c.h.b16 %v2449
    %v2583 = vunpack.c.l.b16 %v2450
    %v2584 = vunpack.c.h.b16 %v2450
    %v2585 = vunpack.c.l.b16 %v2451
    %v2586 = vunpack.c.h.b16 %v2451
    %v2587 = vunpack.c.l.b16 %v2452
    %v2588 = vunpack.c.h.b16 %v2452
    %v2589 = vunpack.c.l.b16 %v2453
    %v2590 = vunpack.c.h.b16 %v2453
    %v2591 = vunpack.c.l.b16 %v2454
    %v2592 = vunpack.c.h.b16 %v2454
    %v2593 = vunpack.c.l.b16 %v2455
    %v2594 = vunpack.c.h.b16 %v2455
    %v2595 = vunpack.c.l.b16 %v2456
    %v2596 = vunpack.c.h.b16 %v2456
    %v2597 = vunpack.c.l.b16 %v2457
    %v2598 = vunpack.c.h.b16 %v2457
    %v2599 = vunpack.c.l.b16 %v2458
    %v2600 = vunpack.c.h.b16 %v2458
    %v2601 = vunpack.c.l.b16 %v2459
    %v2602 = vunpack.c.h.b16 %v2459
    %v2603 = vunpack.c.l.b16 %v2460
    %v2604 = vunpack.c.h.b16 %v2460
    %v2605 = vunpack.c.l.b16 %v2461
    %v2606 = vunpack.c.h.b16 %v2461
    %v2607 = vunpack.c.l.b16 %v2462
    %v2608 = vunpack.c.h.b16 %v2462
    %v2609 = vunpack.c.l.b16 %v2463
    %v2610 = vunpack.c.h.b16 %v2463
    %v2611 = vunpack.c.l.b16 %v2464
    %v2612 = vunpack.c.h.b16 %v2464
    %v2613 = vunpack.c.l.b16 %v2465
    %v2614 = vunpack.c.h.b16 %v2465
    %v2615 = vunpack.c.l.b16 %v2466
    %v2616 = vunpack.c.h.b16 %v2466
    %v2617 = vunpack.c.l.b16 %v2467
    %v2618 = vunpack.c.h.b16 %v2467
    %v2619 = vunpack.c.l.b16 %v2468
    %v2620 = vunpack.c.h.b16 %v2468
    %v2621 = vunpack.c.l.b16 %v2469
    %v2622 = vunpack.c.h.b16 %v2469
    %v2623 = vunpack.c.l.b16 %v2470
    %v2624 = vunpack.c.h.b16 %v2470
    %v2625 = vunpack.c.l.b16 %v2471
    %v2626 = vunpack.c.h.b16 %v2471
    %v2627 = vpack.c.b16 %v2531, %v2527
    %v2628 = vpack.c.b16 %v2532, %v2528
    %v2629 = vpack.c.b16 %v2533, %v2529
    %v2630 = vpack.c.b16 %v2534, %v2530
    %v2631 = vpack.c.b16 %v2539, %v2535
    %v2632 = vpack.c.b16 %v2540, %v2536
    %v2633 = vpack.c.b16 %v2541, %v2537
    %v2634 = vpack.c.b16 %v2542, %v2538
    %v2635 = vpack.c.b16 %v2547, %v2543
    %v2636 = vpack.c.b16 %v2548, %v2544
    %v2637 = vpack.c.b16 %v2549, %v2545
    %v2638 = vpack.c.b16 %v2550, %v2546
    %v2639 = vpack.c.b16 %v2555, %v2551
    %v2640 = vpack.c.b16 %v2556, %v2552
    %v2641 = vpack.c.b16 %v2557, %v2553
    %v2642 = vpack.c.b16 %v2558, %v2554
    %v2643 = vpack.c.b16 %v2563, %v2559
    %v2644 = vpack.c.b16 %v2564, %v2560
    %v2645 = vpack.c.b16 %v2565, %v2561
    %v2646 = vpack.c.b16 %v2566, %v2562
    %v2647 = vpack.c.b16 %v2571, %v2567
    %v2648 = vpack.c.b16 %v2572, %v2568
    %v2649 = vpack.c.b16 %v2573, %v2569
    %v2650 = vpack.c.b16 %v2574, %v2570
    %v2651 = vpack.c.b16 %v2579, %v2575
    %v2652 = vpack.c.b16 %v2580, %v2576
    %v2653 = vpack.c.b16 %v2581, %v2577
    %v2654 = vpack.c.b16 %v2582, %v2578
    %v2655 = vpack.c.b16 %v2587, %v2583
    %v2656 = vpack.c.b16 %v2588, %v2584
    %v2657 = vpack.c.b16 %v2589, %v2585
    %v2658 = vpack.c.b16 %v2590, %v2586
    %v2659 = vpack.c.b16 %v2595, %v2591
    %v2660 = vpack.c.b16 %v2596, %v2592
    %v2661 = vpack.c.b16 %v2597, %v2593
    %v2662 = vpack.c.b16 %v2598, %v2594
    %v2663 = vpack.c.b16 %v2603, %v2599
    %v2664 = vpack.c.b16 %v2604, %v2600
    %v2665 = vpack.c.b16 %v2605, %v2601
    %v2666 = vpack.c.b16 %v2606, %v2602
    %v2667 = vpack.c.b16 %v2611, %v2607
    %v2668 = vpack.c.b16 %v2612, %v2608
    %v2669 = vpack.c.b16 %v2613, %v2609
    %v2670 = vpack.c.b16 %v2614, %v2610
    %v2671 = vpack.c.b16 %v2619, %v2615
    %v2672 = vpack.c.b16 %v2620, %v2616
    %v2673 = vpack.c.b16 %v2621, %v2617
    %v2674 = vpack.c.b16 %v2622, %v2618
    %v2675 = vpack.c.b16 %v2623, %v2623
    %v2676 = vpack.c.b16 %v2624, %v2624
    %v2677 = vpack.c.b16 %v2625, %v2625
    %v2678 = vpack.c.b16 %v2626, %v2626
    %v2728 = vsel %vm1601, %v2475, 0
    %v2731 = vsel %vm55, %v2675, 0
    %v2734 = vsel %vm55, %v2676, 0
    %v2737 = vsel %vm55, %v2677, 0
    %v2740 = vsel %vm55, %v2678, 0
    %2742 = vmatprep.subr.bf16.mxu0 %v2656
    %2743 = vmatpush1.bf16.msra.mxu0 %v2655
    %2744 = vmatprep.subr.bf16.mxu0 %v2652
    %2745 = vmatpush1.bf16.msra.mxu0 %v2651
    %2746 = vmatprep.subr.bf16.mxu0 %v2648
    %2747 = vmatpush1.bf16.msra.mxu0 %v2647
    %2748 = vmatprep.subr.bf16.mxu0 %v2644
    %2749 = vmatpush1.bf16.msra.mxu0 %v2643
    %2750 = vmatprep.subr.bf16.mxu0 %v2640
    %2751 = vmatpush1.bf16.msra.mxu0 %v2639
    %2752 = vmatprep.subr.bf16.mxu0 %v2636
    %2753 = vmatpush1.bf16.msra.mxu0 %v2635
    %2754 = vmatprep.subr.bf16.mxu0 %v2632
    %2755 = vmatpush1.bf16.msra.mxu0 %v2631
    %2756 = vmatprep.subr.bf16.mxu0 %v2628
    %2757 = vmatpush1.bf16.msra.mxu0 %v2627
    %2758 = vmatprep.subr.bf16.mxu0 0
    %2759 = vmatpush2.bf16.msra.mxu0 0
    %2760 = vmatprep.subr.bf16.mxu0 0
    %2761 = vmatpush2.bf16.msra.mxu0 0
    %2762 = vmatprep.subr.bf16.mxu0 0
    %2763 = vmatpush2.bf16.msra.mxu0 0
    %2764 = vmatprep.subr.bf16.mxu0 %v2734
    %2765 = vmatpush2.bf16.msra.mxu0 %v2731
    %2766 = vmatprep.subr.bf16.mxu0 %v2672
    %2767 = vmatpush2.bf16.msra.mxu0 %v2671
    %2768 = vmatprep.subr.bf16.mxu0 %v2668
    %2769 = vmatpush2.bf16.msra.mxu0 %v2667
    %2770 = vmatprep.subr.bf16.mxu0 %v2664
    %2771 = vmatpush2.bf16.msra.mxu0 %v2663
    %2772 = vmatprep.subr.bf16.mxu0 %v2660
    %2773 = vmatpush2.bf16.msra.mxu0 %v2659
    %2774 = vmatprep.mubr.bf16.mxu0 %v2728
    %2775 = vmatmul.mubr.bf16.gmra.mxu0 %v2474
    %v2776 = vpop.f32.mrf.mxu0
    %v2777 = vadd.f32 0.0, %v2776
    %v2778 = vpop.f32.mrf.mxu0
    %v2779 = vadd.f32 0.0, %v2778
    %v2780 = vpop.f32.mrf.mxu0
    %v2781 = vpop.f32.mrf.mxu0
    %2782 = vdwg.mxu0
    %2783 = vmatprep.subr.bf16.mxu0 %v2658
    %2784 = vmatpush1.bf16.msra.mxu0 %v2657
    %2785 = vmatprep.subr.bf16.mxu0 %v2654
    %2786 = vmatpush1.bf16.msra.mxu0 %v2653
    %2787 = vmatprep.subr.bf16.mxu0 %v2650
    %2788 = vmatpush1.bf16.msra.mxu0 %v2649
    %2789 = vmatprep.subr.bf16.mxu0 %v2646
    %2790 = vmatpush1.bf16.msra.mxu0 %v2645
    %2791 = vmatprep.subr.bf16.mxu0 %v2642
    %2792 = vmatpush1.bf16.msra.mxu0 %v2641
    %2793 = vmatprep.subr.bf16.mxu0 %v2638
    %2794 = vmatpush1.bf16.msra.mxu0 %v2637
    %2795 = vmatprep.subr.bf16.mxu0 %v2634
    %2796 = vmatpush1.bf16.msra.mxu0 %v2633
    %2797 = vmatprep.subr.bf16.mxu0 %v2630
    %2798 = vmatpush1.bf16.msra.mxu0 %v2629
    %2799 = vmatprep.subr.bf16.mxu0 0
    %2800 = vmatpush2.bf16.msra.mxu0 0
    %2801 = vmatprep.subr.bf16.mxu0 0
    %2802 = vmatpush2.bf16.msra.mxu0 0
    %2803 = vmatprep.subr.bf16.mxu0 0
    %2804 = vmatpush2.bf16.msra.mxu0 0
    %2805 = vmatprep.subr.bf16.mxu0 %v2740
    %2806 = vmatpush2.bf16.msra.mxu0 %v2737
    %2807 = vmatprep.subr.bf16.mxu0 %v2674
    %2808 = vmatpush2.bf16.msra.mxu0 %v2673
    %2809 = vmatprep.subr.bf16.mxu0 %v2670
    %2810 = vmatpush2.bf16.msra.mxu0 %v2669
    %2811 = vmatprep.subr.bf16.mxu0 %v2666
    %2812 = vmatpush2.bf16.msra.mxu0 %v2665
    %2813 = vmatprep.subr.bf16.mxu0 %v2662
    %2814 = vmatpush2.bf16.msra.mxu0 %v2661
    %2815 = vmatprep.mubr.bf16.mxu0 %v2728
    %2816 = vmatmul.mubr.bf16.gmra.mxu0 %v2474
    %v2817 = vpop.f32.mrf.mxu0
    %v2818 = vadd.f32 0.0, %v2817
    %v2819 = vpop.f32.mrf.mxu0
    %v2820 = vadd.f32 0.0, %v2819
    %v2821 = vpop.f32.mrf.mxu0
    %v2822 = vpop.f32.mrf.mxu0
    %2823 = vdwg.mxu0
    %v2824 = vadd.f32 %v2370, %v2777
    %v2825 = vadd.f32 %v2372, %v2779
    %v2826 = vadd.f32 %v2411, %v2818
    %v2827 = vadd.f32 %v2413, %v2820
    %v2828 = vld [vmem:[#allocation3] sm:$0xc0]
    %v2829 = vld [vmem:[#allocation3 + $0x8] sm:$0xc0]
    %v2830 = vpack.c.bf16 %v2828, %v2828
    %v2831 = vpack.c.bf16 %v2829, %v2829
    %s2832 = scalar_lea.vmem %s5, 1200
    %v2833 = vld [vmem:[%s2832] sm:$0xff]
    %v2834 = vld [vmem:[%s2832 + $0x8] sm:$0xff]
    %v2835 = vld [vmem:[%s2832 + $0x10] sm:$0xff]
    %v2836 = vld [vmem:[%s2832 + $0x18] sm:$0xff]
    %v2837 = vld [vmem:[%s2832 + $0x20] sm:$0xff]
    %v2838 = vld [vmem:[%s2832 + $0x28] sm:$0xff]
    %v2839 = vld [vmem:[%s2832 + $0x30] sm:$0xff]
    %v2840 = vld [vmem:[%s2832 + $0x38] sm:$0xff]
    %v2841 = vld [vmem:[%s2832 + $0x40] sm:$0xff]
    %v2842 = vld [vmem:[%s2832 + $0x48] sm:$0xff]
    %v2843 = vld [vmem:[%s2832 + $0x50] sm:$0xff]
    %v2844 = vld [vmem:[%s2832 + $0x58] sm:$0xff]
    %v2845 = vld [vmem:[%s2832 + $0x60] sm:$0xff]
    %v2846 = vld [vmem:[%s2832 + $0x68] sm:$0xff]
    %v2847 = vld [vmem:[%s2832 + $0x70] sm:$0xff]
    %v2848 = vld [vmem:[%s2832 + $0x78] sm:$0xff]
    %v2849 = vld [vmem:[%s2832 + $0x80] sm:$0xff]
    %v2850 = vld [vmem:[%s2832 + $0x88] sm:$0xff]
    %v2851 = vld [vmem:[%s2832 + $0x90] sm:$0xff]
    %v2852 = vld [vmem:[%s2832 + $0x98] sm:$0xff]
    %v2853 = vld [vmem:[%s2832 + $0xa0] sm:$0xff]
    %v2854 = vld [vmem:[%s2832 + $0xa8] sm:$0xff]
    %v2855 = vld [vmem:[%s2832 + $0xb0] sm:$0xff]
    %v2856 = vld [vmem:[%s2832 + $0xb8] sm:$0xff]
    %v2857 = vld [vmem:[%s2832 + $0xc0] sm:$0xff]
    %v2858 = vld [vmem:[%s2832 + $0xc8] sm:$0xff]
    %v2859 = vld [vmem:[%s2832 + $0xd0] sm:$0xff]
    %v2860 = vld [vmem:[%s2832 + $0xd8] sm:$0xff]
    %v2861 = vld [vmem:[%s2832 + $0xe0] sm:$0xff]
    %v2862 = vld [vmem:[%s2832 + $0xe8] sm:$0xff]
    %v2863 = vld [vmem:[%s2832 + $0xf0] sm:$0xff]
    %v2864 = vld [vmem:[%s2832 + $0xf8] sm:$0xff]
    %v2865 = vld [vmem:[%s2832 + $0x100] sm:$0xff]
    %v2866 = vld [vmem:[%s2832 + $0x108] sm:$0xff]
    %v2867 = vld [vmem:[%s2832 + $0x110] sm:$0xff]
    %v2868 = vld [vmem:[%s2832 + $0x118] sm:$0xff]
    %v2869 = vld [vmem:[%s2832 + $0x120] sm:$0xff]
    %v2870 = vld [vmem:[%s2832 + $0x128] sm:$0xff]
    %v2871 = vld [vmem:[%s2832 + $0x130] sm:$0xff]
    %v2872 = vld [vmem:[%s2832 + $0x138] sm:$0xff]
    %v2873 = vld [vmem:[%s2832 + $0x140] sm:$0xff]
    %v2874 = vld [vmem:[%s2832 + $0x148] sm:$0xff]
    %v2875 = vld [vmem:[%s2832 + $0x150] sm:$0xff]
    %v2876 = vld [vmem:[%s2832 + $0x158] sm:$0xff]
    %v2877 = vld [vmem:[%s2832 + $0x160] sm:$0xff]
    %v2878 = vld [vmem:[%s2832 + $0x168] sm:$0xff]
    %v2879 = vld [vmem:[%s2832 + $0x170] sm:$0xff]
    %v2880 = vld [vmem:[%s2832 + $0x178] sm:$0xff]
    %v2881 = vld [vmem:[%s2832 + $0x180] sm:$0x33]
    %v2882 = vld [vmem:[%s2832 + $0x188] sm:$0x33]
    %v2885 = vrot.slane %v2830, 3
    %v2886 = vrot.slane %v2831, 3
    %v2938 = vunpack.c.l.b16 %v2833
    %v2939 = vunpack.c.h.b16 %v2833
    %v2940 = vunpack.c.l.b16 %v2834
    %v2941 = vunpack.c.h.b16 %v2834
    %v2942 = vunpack.c.l.b16 %v2835
    %v2943 = vunpack.c.h.b16 %v2835
    %v2944 = vunpack.c.l.b16 %v2836
    %v2945 = vunpack.c.h.b16 %v2836
    %v2946 = vunpack.c.l.b16 %v2837
    %v2947 = vunpack.c.h.b16 %v2837
    %v2948 = vunpack.c.l.b16 %v2838
    %v2949 = vunpack.c.h.b16 %v2838
    %v2950 = vunpack.c.l.b16 %v2839
    %v2951 = vunpack.c.h.b16 %v2839
    %v2952 = vunpack.c.l.b16 %v2840
    %v2953 = vunpack.c.h.b16 %v2840
    %v2954 = vunpack.c.l.b16 %v2841
    %v2955 = vunpack.c.h.b16 %v2841
    %v2956 = vunpack.c.l.b16 %v2842
    %v2957 = vunpack.c.h.b16 %v2842
    %v2958 = vunpack.c.l.b16 %v2843
    %v2959 = vunpack.c.h.b16 %v2843
    %v2960 = vunpack.c.l.b16 %v2844
    %v2961 = vunpack.c.h.b16 %v2844
    %v2962 = vunpack.c.l.b16 %v2845
    %v2963 = vunpack.c.h.b16 %v2845
    %v2964 = vunpack.c.l.b16 %v2846
    %v2965 = vunpack.c.h.b16 %v2846
    %v2966 = vunpack.c.l.b16 %v2847
    %v2967 = vunpack.c.h.b16 %v2847
    %v2968 = vunpack.c.l.b16 %v2848
    %v2969 = vunpack.c.h.b16 %v2848
    %v2970 = vunpack.c.l.b16 %v2849
    %v2971 = vunpack.c.h.b16 %v2849
    %v2972 = vunpack.c.l.b16 %v2850
    %v2973 = vunpack.c.h.b16 %v2850
    %v2974 = vunpack.c.l.b16 %v2851
    %v2975 = vunpack.c.h.b16 %v2851
    %v2976 = vunpack.c.l.b16 %v2852
    %v2977 = vunpack.c.h.b16 %v2852
    %v2978 = vunpack.c.l.b16 %v2853
    %v2979 = vunpack.c.h.b16 %v2853
    %v2980 = vunpack.c.l.b16 %v2854
    %v2981 = vunpack.c.h.b16 %v2854
    %v2982 = vunpack.c.l.b16 %v2855
    %v2983 = vunpack.c.h.b16 %v2855
    %v2984 = vunpack.c.l.b16 %v2856
    %v2985 = vunpack.c.h.b16 %v2856
    %v2986 = vunpack.c.l.b16 %v2857
    %v2987 = vunpack.c.h.b16 %v2857
    %v2988 = vunpack.c.l.b16 %v2858
    %v2989 = vunpack.c.h.b16 %v2858
    %v2990 = vunpack.c.l.b16 %v2859
    %v2991 = vunpack.c.h.b16 %v2859
    %v2992 = vunpack.c.l.b16 %v2860
    %v2993 = vunpack.c.h.b16 %v2860
    %v2994 = vunpack.c.l.b16 %v2861
    %v2995 = vunpack.c.h.b16 %v2861
    %v2996 = vunpack.c.l.b16 %v2862
    %v2997 = vunpack.c.h.b16 %v2862
    %v2998 = vunpack.c.l.b16 %v2863
    %v2999 = vunpack.c.h.b16 %v2863
    %v3000 = vunpack.c.l.b16 %v2864
    %v3001 = vunpack.c.h.b16 %v2864
    %v3002 = vunpack.c.l.b16 %v2865
    %v3003 = vunpack.c.h.b16 %v2865
    %v3004 = vunpack.c.l.b16 %v2866
    %v3005 = vunpack.c.h.b16 %v2866
    %v3006 = vunpack.c.l.b16 %v2867
    %v3007 = vunpack.c.h.b16 %v2867
    %v3008 = vunpack.c.l.b16 %v2868
    %v3009 = vunpack.c.h.b16 %v2868
    %v3010 = vunpack.c.l.b16 %v2869
    %v3011 = vunpack.c.h.b16 %v2869
    %v3012 = vunpack.c.l.b16 %v2870
    %v3013 = vunpack.c.h.b16 %v2870
    %v3014 = vunpack.c.l.b16 %v2871
    %v3015 = vunpack.c.h.b16 %v2871
    %v3016 = vunpack.c.l.b16 %v2872
    %v3017 = vunpack.c.h.b16 %v2872
    %v3018 = vunpack.c.l.b16 %v2873
    %v3019 = vunpack.c.h.b16 %v2873
    %v3020 = vunpack.c.l.b16 %v2874
    %v3021 = vunpack.c.h.b16 %v2874
    %v3022 = vunpack.c.l.b16 %v2875
    %v3023 = vunpack.c.h.b16 %v2875
    %v3024 = vunpack.c.l.b16 %v2876
    %v3025 = vunpack.c.h.b16 %v2876
    %v3026 = vunpack.c.l.b16 %v2877
    %v3027 = vunpack.c.h.b16 %v2877
    %v3028 = vunpack.c.l.b16 %v2878
    %v3029 = vunpack.c.h.b16 %v2878
    %v3030 = vunpack.c.l.b16 %v2879
    %v3031 = vunpack.c.h.b16 %v2879
    %v3032 = vunpack.c.l.b16 %v2880
    %v3033 = vunpack.c.h.b16 %v2880
    %v3034 = vunpack.c.l.b16 %v2881
    %v3035 = vunpack.c.h.b16 %v2881
    %v3036 = vunpack.c.l.b16 %v2882
    %v3037 = vunpack.c.h.b16 %v2882
    %v3038 = vpack.c.b16 %v2942, %v2938
    %v3039 = vpack.c.b16 %v2943, %v2939
    %v3040 = vpack.c.b16 %v2944, %v2940
    %v3041 = vpack.c.b16 %v2945, %v2941
    %v3042 = vpack.c.b16 %v2950, %v2946
    %v3043 = vpack.c.b16 %v2951, %v2947
    %v3044 = vpack.c.b16 %v2952, %v2948
    %v3045 = vpack.c.b16 %v2953, %v2949
    %v3046 = vpack.c.b16 %v2958, %v2954
    %v3047 = vpack.c.b16 %v2959, %v2955
    %v3048 = vpack.c.b16 %v2960, %v2956
    %v3049 = vpack.c.b16 %v2961, %v2957
    %v3050 = vpack.c.b16 %v2966, %v2962
    %v3051 = vpack.c.b16 %v2967, %v2963
    %v3052 = vpack.c.b16 %v2968, %v2964
    %v3053 = vpack.c.b16 %v2969, %v2965
    %v3054 = vpack.c.b16 %v2974, %v2970
    %v3055 = vpack.c.b16 %v2975, %v2971
    %v3056 = vpack.c.b16 %v2976, %v2972
    %v3057 = vpack.c.b16 %v2977, %v2973
    %v3058 = vpack.c.b16 %v2982, %v2978
    %v3059 = vpack.c.b16 %v2983, %v2979
    %v3060 = vpack.c.b16 %v2984, %v2980
    %v3061 = vpack.c.b16 %v2985, %v2981
    %v3062 = vpack.c.b16 %v2990, %v2986
    %v3063 = vpack.c.b16 %v2991, %v2987
    %v3064 = vpack.c.b16 %v2992, %v2988
    %v3065 = vpack.c.b16 %v2993, %v2989
    %v3066 = vpack.c.b16 %v2998, %v2994
    %v3067 = vpack.c.b16 %v2999, %v2995
    %v3068 = vpack.c.b16 %v3000, %v2996
    %v3069 = vpack.c.b16 %v3001, %v2997
    %v3070 = vpack.c.b16 %v3006, %v3002
    %v3071 = vpack.c.b16 %v3007, %v3003
    %v3072 = vpack.c.b16 %v3008, %v3004
    %v3073 = vpack.c.b16 %v3009, %v3005
    %v3074 = vpack.c.b16 %v3014, %v3010
    %v3075 = vpack.c.b16 %v3015, %v3011
    %v3076 = vpack.c.b16 %v3016, %v3012
    %v3077 = vpack.c.b16 %v3017, %v3013
    %v3078 = vpack.c.b16 %v3022, %v3018
    %v3079 = vpack.c.b16 %v3023, %v3019
    %v3080 = vpack.c.b16 %v3024, %v3020
    %v3081 = vpack.c.b16 %v3025, %v3021
    %v3082 = vpack.c.b16 %v3030, %v3026
    %v3083 = vpack.c.b16 %v3031, %v3027
    %v3084 = vpack.c.b16 %v3032, %v3028
    %v3085 = vpack.c.b16 %v3033, %v3029
    %v3086 = vpack.c.b16 %v3034, %v3034
    %v3087 = vpack.c.b16 %v3035, %v3035
    %v3088 = vpack.c.b16 %v3036, %v3036
    %v3089 = vpack.c.b16 %v3037, %v3037
    %v3139 = vsel %vm1601, %v2886, 0
    %v3142 = vsel %vm55, %v3086, 0
    %v3145 = vsel %vm55, %v3087, 0
    %v3148 = vsel %vm55, %v3088, 0
    %v3151 = vsel %vm55, %v3089, 0
    %3153 = vmatprep.subr.bf16.mxu0 %v3067
    %3154 = vmatpush1.bf16.msra.mxu0 %v3066
    %3155 = vmatprep.subr.bf16.mxu0 %v3063
    %3156 = vmatpush1.bf16.msra.mxu0 %v3062
    %3157 = vmatprep.subr.bf16.mxu0 %v3059
    %3158 = vmatpush1.bf16.msra.mxu0 %v3058
    %3159 = vmatprep.subr.bf16.mxu0 %v3055
    %3160 = vmatpush1.bf16.msra.mxu0 %v3054
    %3161 = vmatprep.subr.bf16.mxu0 %v3051
    %3162 = vmatpush1.bf16.msra.mxu0 %v3050
    %3163 = vmatprep.subr.bf16.mxu0 %v3047
    %3164 = vmatpush1.bf16.msra.mxu0 %v3046
    %3165 = vmatprep.subr.bf16.mxu0 %v3043
    %3166 = vmatpush1.bf16.msra.mxu0 %v3042
    %3167 = vmatprep.subr.bf16.mxu0 %v3039
    %3168 = vmatpush1.bf16.msra.mxu0 %v3038
    %3169 = vmatprep.subr.bf16.mxu0 0
    %3170 = vmatpush2.bf16.msra.mxu0 0
    %3171 = vmatprep.subr.bf16.mxu0 0
    %3172 = vmatpush2.bf16.msra.mxu0 0
    %3173 = vmatprep.subr.bf16.mxu0 0
    %3174 = vmatpush2.bf16.msra.mxu0 0
    %3175 = vmatprep.subr.bf16.mxu0 %v3145
    %3176 = vmatpush2.bf16.msra.mxu0 %v3142
    %3177 = vmatprep.subr.bf16.mxu0 %v3083
    %3178 = vmatpush2.bf16.msra.mxu0 %v3082
    %3179 = vmatprep.subr.bf16.mxu0 %v3079
    %3180 = vmatpush2.bf16.msra.mxu0 %v3078
    %3181 = vmatprep.subr.bf16.mxu0 %v3075
    %3182 = vmatpush2.bf16.msra.mxu0 %v3074
    %3183 = vmatprep.subr.bf16.mxu0 %v3071
    %3184 = vmatpush2.bf16.msra.mxu0 %v3070
    %3185 = vmatprep.mubr.bf16.mxu0 %v3139
    %3186 = vmatmul.mubr.bf16.gmra.mxu0 %v2885
    %v3187 = vpop.f32.mrf.mxu0
    %v3188 = vadd.f32 0.0, %v3187
    %v3189 = vpop.f32.mrf.mxu0
    %v3190 = vadd.f32 0.0, %v3189
    %v3191 = vpop.f32.mrf.mxu0
    %v3192 = vpop.f32.mrf.mxu0
    %3193 = vdwg.mxu0
    %3194 = vmatprep.subr.bf16.mxu0 %v3069
    %3195 = vmatpush1.bf16.msra.mxu0 %v3068
    %3196 = vmatprep.subr.bf16.mxu0 %v3065
    %3197 = vmatpush1.bf16.msra.mxu0 %v3064
    %3198 = vmatprep.subr.bf16.mxu0 %v3061
    %3199 = vmatpush1.bf16.msra.mxu0 %v3060
    %3200 = vmatprep.subr.bf16.mxu0 %v3057
    %3201 = vmatpush1.bf16.msra.mxu0 %v3056
    %3202 = vmatprep.subr.bf16.mxu0 %v3053
    %3203 = vmatpush1.bf16.msra.mxu0 %v3052
    %3204 = vmatprep.subr.bf16.mxu0 %v3049
    %3205 = vmatpush1.bf16.msra.mxu0 %v3048
    %3206 = vmatprep.subr.bf16.mxu0 %v3045
    %3207 = vmatpush1.bf16.msra.mxu0 %v3044
    %3208 = vmatprep.subr.bf16.mxu0 %v3041
    %3209 = vmatpush1.bf16.msra.mxu0 %v3040
    %3210 = vmatprep.subr.bf16.mxu0 0
    %3211 = vmatpush2.bf16.msra.mxu0 0
    %3212 = vmatprep.subr.bf16.mxu0 0
    %3213 = vmatpush2.bf16.msra.mxu0 0
    %3214 = vmatprep.subr.bf16.mxu0 0
    %3215 = vmatpush2.bf16.msra.mxu0 0
    %3216 = vmatprep.subr.bf16.mxu0 %v3151
    %3217 = vmatpush2.bf16.msra.mxu0 %v3148
    %3218 = vmatprep.subr.bf16.mxu0 %v3085
    %3219 = vmatpush2.bf16.msra.mxu0 %v3084
    %3220 = vmatprep.subr.bf16.mxu0 %v3081
    %3221 = vmatpush2.bf16.msra.mxu0 %v3080
    %3222 = vmatprep.subr.bf16.mxu0 %v3077
    %3223 = vmatpush2.bf16.msra.mxu0 %v3076
    %3224 = vmatprep.subr.bf16.mxu0 %v3073
    %3225 = vmatpush2.bf16.msra.mxu0 %v3072
    %3226 = vmatprep.mubr.bf16.mxu0 %v3139
    %3227 = vmatmul.mubr.bf16.gmra.mxu0 %v2885
    %v3228 = vpop.f32.mrf.mxu0
    %v3229 = vadd.f32 0.0, %v3228
    %v3230 = vpop.f32.mrf.mxu0
    %v3231 = vadd.f32 0.0, %v3230
    %v3232 = vpop.f32.mrf.mxu0
    %v3233 = vpop.f32.mrf.mxu0
    %3234 = vdwg.mxu0
    %v3235 = vadd.f32 %v2824, %v3188
    %v3236 = vadd.f32 %v2825, %v3190
    %v3237 = vadd.f32 %v2826, %v3229
    %v3238 = vadd.f32 %v2827, %v3231
    %v3239 = vld [vmem:[#allocation3 + $0x10] sm:$0x3]
    %v3240 = vld [vmem:[#allocation3 + $0x18] sm:$0x3]
    %v3241 = vpack.c.bf16 %v3239, %v3239
    %v3242 = vpack.c.bf16 %v3240, %v3240
    %s3243 = scalar_lea.vmem %s5, 1600
    %v3244 = vld [vmem:[%s3243] sm:$0xff]
    %v3245 = vld [vmem:[%s3243 + $0x8] sm:$0xff]
    %v3246 = vld [vmem:[%s3243 + $0x10] sm:$0xff]
    %v3247 = vld [vmem:[%s3243 + $0x18] sm:$0xff]
    %v3248 = vld [vmem:[%s3243 + $0x20] sm:$0xff]
    %v3249 = vld [vmem:[%s3243 + $0x28] sm:$0xff]
    %v3250 = vld [vmem:[%s3243 + $0x30] sm:$0xff]
    %v3251 = vld [vmem:[%s3243 + $0x38] sm:$0xff]
    %v3252 = vld [vmem:[%s3243 + $0x40] sm:$0xff]
    %v3253 = vld [vmem:[%s3243 + $0x48] sm:$0xff]
    %v3254 = vld [vmem:[%s3243 + $0x50] sm:$0xff]
    %v3255 = vld [vmem:[%s3243 + $0x58] sm:$0xff]
    %v3256 = vld [vmem:[%s3243 + $0x60] sm:$0xff]
    %v3257 = vld [vmem:[%s3243 + $0x68] sm:$0xff]
    %v3258 = vld [vmem:[%s3243 + $0x70] sm:$0xff]
    %v3259 = vld [vmem:[%s3243 + $0x78] sm:$0xff]
    %v3260 = vld [vmem:[%s3243 + $0x80] sm:$0xff]
    %v3261 = vld [vmem:[%s3243 + $0x88] sm:$0xff]
    %v3262 = vld [vmem:[%s3243 + $0x90] sm:$0xff]
    %v3263 = vld [vmem:[%s3243 + $0x98] sm:$0xff]
    %v3264 = vld [vmem:[%s3243 + $0xa0] sm:$0xff]
    %v3265 = vld [vmem:[%s3243 + $0xa8] sm:$0xff]
    %v3266 = vld [vmem:[%s3243 + $0xb0] sm:$0xff]
    %v3267 = vld [vmem:[%s3243 + $0xb8] sm:$0xff]
    %v3268 = vld [vmem:[%s3243 + $0xc0] sm:$0xff]
    %v3269 = vld [vmem:[%s3243 + $0xc8] sm:$0xff]
    %v3270 = vld [vmem:[%s3243 + $0xd0] sm:$0xff]
    %v3271 = vld [vmem:[%s3243 + $0xd8] sm:$0xff]
    %v3272 = vld [vmem:[%s3243 + $0xe0] sm:$0xff]
    %v3273 = vld [vmem:[%s3243 + $0xe8] sm:$0xff]
    %v3274 = vld [vmem:[%s3243 + $0xf0] sm:$0xff]
    %v3275 = vld [vmem:[%s3243 + $0xf8] sm:$0xff]
    %v3276 = vld [vmem:[%s3243 + $0x100] sm:$0xff]
    %v3277 = vld [vmem:[%s3243 + $0x108] sm:$0xff]
    %v3278 = vld [vmem:[%s3243 + $0x110] sm:$0xff]
    %v3279 = vld [vmem:[%s3243 + $0x118] sm:$0xff]
    %v3280 = vld [vmem:[%s3243 + $0x120] sm:$0xff]
    %v3281 = vld [vmem:[%s3243 + $0x128] sm:$0xff]
    %v3282 = vld [vmem:[%s3243 + $0x130] sm:$0xff]
    %v3283 = vld [vmem:[%s3243 + $0x138] sm:$0xff]
    %v3284 = vld [vmem:[%s3243 + $0x140] sm:$0xff]
    %v3285 = vld [vmem:[%s3243 + $0x148] sm:$0xff]
    %v3286 = vld [vmem:[%s3243 + $0x150] sm:$0xff]
    %v3287 = vld [vmem:[%s3243 + $0x158] sm:$0xff]
    %v3288 = vld [vmem:[%s3243 + $0x160] sm:$0xff]
    %v3289 = vld [vmem:[%s3243 + $0x168] sm:$0xff]
    %v3290 = vld [vmem:[%s3243 + $0x170] sm:$0xff]
    %v3291 = vld [vmem:[%s3243 + $0x178] sm:$0xff]
    %v3292 = vld [vmem:[%s3243 + $0x180] sm:$0x33]
    %v3293 = vld [vmem:[%s3243 + $0x188] sm:$0x33]
    %v3344 = vunpack.c.l.b16 %v3244
    %v3345 = vunpack.c.h.b16 %v3244
    %v3346 = vunpack.c.l.b16 %v3245
    %v3347 = vunpack.c.h.b16 %v3245
    %v3348 = vunpack.c.l.b16 %v3246
    %v3349 = vunpack.c.h.b16 %v3246
    %v3350 = vunpack.c.l.b16 %v3247
    %v3351 = vunpack.c.h.b16 %v3247
    %v3352 = vunpack.c.l.b16 %v3248
    %v3353 = vunpack.c.h.b16 %v3248
    %v3354 = vunpack.c.l.b16 %v3249
    %v3355 = vunpack.c.h.b16 %v3249
    %v3356 = vunpack.c.l.b16 %v3250
    %v3357 = vunpack.c.h.b16 %v3250
    %v3358 = vunpack.c.l.b16 %v3251
    %v3359 = vunpack.c.h.b16 %v3251
    %v3360 = vunpack.c.l.b16 %v3252
    %v3361 = vunpack.c.h.b16 %v3252
    %v3362 = vunpack.c.l.b16 %v3253
    %v3363 = vunpack.c.h.b16 %v3253
    %v3364 = vunpack.c.l.b16 %v3254
    %v3365 = vunpack.c.h.b16 %v3254
    %v3366 = vunpack.c.l.b16 %v3255
    %v3367 = vunpack.c.h.b16 %v3255
    %v3368 = vunpack.c.l.b16 %v3256
    %v3369 = vunpack.c.h.b16 %v3256
    %v3370 = vunpack.c.l.b16 %v3257
    %v3371 = vunpack.c.h.b16 %v3257
    %v3372 = vunpack.c.l.b16 %v3258
    %v3373 = vunpack.c.h.b16 %v3258
    %v3374 = vunpack.c.l.b16 %v3259
    %v3375 = vunpack.c.h.b16 %v3259
    %v3376 = vunpack.c.l.b16 %v3260
    %v3377 = vunpack.c.h.b16 %v3260
    %v3378 = vunpack.c.l.b16 %v3261
    %v3379 = vunpack.c.h.b16 %v3261
    %v3380 = vunpack.c.l.b16 %v3262
    %v3381 = vunpack.c.h.b16 %v3262
    %v3382 = vunpack.c.l.b16 %v3263
    %v3383 = vunpack.c.h.b16 %v3263
    %v3384 = vunpack.c.l.b16 %v3264
    %v3385 = vunpack.c.h.b16 %v3264
    %v3386 = vunpack.c.l.b16 %v3265
    %v3387 = vunpack.c.h.b16 %v3265
    %v3388 = vunpack.c.l.b16 %v3266
    %v3389 = vunpack.c.h.b16 %v3266
    %v3390 = vunpack.c.l.b16 %v3267
    %v3391 = vunpack.c.h.b16 %v3267
    %v3392 = vunpack.c.l.b16 %v3268
    %v3393 = vunpack.c.h.b16 %v3268
    %v3394 = vunpack.c.l.b16 %v3269
    %v3395 = vunpack.c.h.b16 %v3269
    %v3396 = vunpack.c.l.b16 %v3270
    %v3397 = vunpack.c.h.b16 %v3270
    %v3398 = vunpack.c.l.b16 %v3271
    %v3399 = vunpack.c.h.b16 %v3271
    %v3400 = vunpack.c.l.b16 %v3272
    %v3401 = vunpack.c.h.b16 %v3272
    %v3402 = vunpack.c.l.b16 %v3273
    %v3403 = vunpack.c.h.b16 %v3273
    %v3404 = vunpack.c.l.b16 %v3274
    %v3405 = vunpack.c.h.b16 %v3274
    %v3406 = vunpack.c.l.b16 %v3275
    %v3407 = vunpack.c.h.b16 %v3275
    %v3408 = vunpack.c.l.b16 %v3276
    %v3409 = vunpack.c.h.b16 %v3276
    %v3410 = vunpack.c.l.b16 %v3277
    %v3411 = vunpack.c.h.b16 %v3277
    %v3412 = vunpack.c.l.b16 %v3278
    %v3413 = vunpack.c.h.b16 %v3278
    %v3414 = vunpack.c.l.b16 %v3279
    %v3415 = vunpack.c.h.b16 %v3279
    %v3416 = vunpack.c.l.b16 %v3280
    %v3417 = vunpack.c.h.b16 %v3280
    %v3418 = vunpack.c.l.b16 %v3281
    %v3419 = vunpack.c.h.b16 %v3281
    %v3420 = vunpack.c.l.b16 %v3282
    %v3421 = vunpack.c.h.b16 %v3282
    %v3422 = vunpack.c.l.b16 %v3283
    %v3423 = vunpack.c.h.b16 %v3283
    %v3424 = vunpack.c.l.b16 %v3284
    %v3425 = vunpack.c.h.b16 %v3284
    %v3426 = vunpack.c.l.b16 %v3285
    %v3427 = vunpack.c.h.b16 %v3285
    %v3428 = vunpack.c.l.b16 %v3286
    %v3429 = vunpack.c.h.b16 %v3286
    %v3430 = vunpack.c.l.b16 %v3287
    %v3431 = vunpack.c.h.b16 %v3287
    %v3432 = vunpack.c.l.b16 %v3288
    %v3433 = vunpack.c.h.b16 %v3288
    %v3434 = vunpack.c.l.b16 %v3289
    %v3435 = vunpack.c.h.b16 %v3289
    %v3436 = vunpack.c.l.b16 %v3290
    %v3437 = vunpack.c.h.b16 %v3290
    %v3438 = vunpack.c.l.b16 %v3291
    %v3439 = vunpack.c.h.b16 %v3291
    %v3440 = vunpack.c.l.b16 %v3292
    %v3441 = vunpack.c.h.b16 %v3292
    %v3442 = vunpack.c.l.b16 %v3293
    %v3443 = vunpack.c.h.b16 %v3293
    %v3444 = vpack.c.b16 %v3348, %v3344
    %v3445 = vpack.c.b16 %v3349, %v3345
    %v3446 = vpack.c.b16 %v3350, %v3346
    %v3447 = vpack.c.b16 %v3351, %v3347
    %v3448 = vpack.c.b16 %v3356, %v3352
    %v3449 = vpack.c.b16 %v3357, %v3353
    %v3450 = vpack.c.b16 %v3358, %v3354
    %v3451 = vpack.c.b16 %v3359, %v3355
    %v3452 = vpack.c.b16 %v3364, %v3360
    %v3453 = vpack.c.b16 %v3365, %v3361
    %v3454 = vpack.c.b16 %v3366, %v3362
    %v3455 = vpack.c.b16 %v3367, %v3363
    %v3456 = vpack.c.b16 %v3372, %v3368
    %v3457 = vpack.c.b16 %v3373, %v3369
    %v3458 = vpack.c.b16 %v3374, %v3370
    %v3459 = vpack.c.b16 %v3375, %v3371
    %v3460 = vpack.c.b16 %v3380, %v3376
    %v3461 = vpack.c.b16 %v3381, %v3377
    %v3462 = vpack.c.b16 %v3382, %v3378
    %v3463 = vpack.c.b16 %v3383, %v3379
    %v3464 = vpack.c.b16 %v3388, %v3384
    %v3465 = vpack.c.b16 %v3389, %v3385
    %v3466 = vpack.c.b16 %v3390, %v3386
    %v3467 = vpack.c.b16 %v3391, %v3387
    %v3468 = vpack.c.b16 %v3396, %v3392
    %v3469 = vpack.c.b16 %v3397, %v3393
    %v3470 = vpack.c.b16 %v3398, %v3394
    %v3471 = vpack.c.b16 %v3399, %v3395
    %v3472 = vpack.c.b16 %v3404, %v3400
    %v3473 = vpack.c.b16 %v3405, %v3401
    %v3474 = vpack.c.b16 %v3406, %v3402
    %v3475 = vpack.c.b16 %v3407, %v3403
    %v3476 = vpack.c.b16 %v3412, %v3408
    %v3477 = vpack.c.b16 %v3413, %v3409
    %v3478 = vpack.c.b16 %v3414, %v3410
    %v3479 = vpack.c.b16 %v3415, %v3411
    %v3480 = vpack.c.b16 %v3420, %v3416
    %v3481 = vpack.c.b16 %v3421, %v3417
    %v3482 = vpack.c.b16 %v3422, %v3418
    %v3483 = vpack.c.b16 %v3423, %v3419
    %v3484 = vpack.c.b16 %v3428, %v3424
    %v3485 = vpack.c.b16 %v3429, %v3425
    %v3486 = vpack.c.b16 %v3430, %v3426
    %v3487 = vpack.c.b16 %v3431, %v3427
    %v3488 = vpack.c.b16 %v3436, %v3432
    %v3489 = vpack.c.b16 %v3437, %v3433
    %v3490 = vpack.c.b16 %v3438, %v3434
    %v3491 = vpack.c.b16 %v3439, %v3435
    %v3492 = vpack.c.b16 %v3440, %v3440
    %v3493 = vpack.c.b16 %v3441, %v3441
    %v3494 = vpack.c.b16 %v3442, %v3442
    %v3495 = vpack.c.b16 %v3443, %v3443
    %v3545 = vsel %vm1601, %v3242, 0
    %v3548 = vsel %vm55, %v3492, 0
    %v3551 = vsel %vm55, %v3493, 0
    %v3554 = vsel %vm55, %v3494, 0
    %v3557 = vsel %vm55, %v3495, 0
    %3559 = vmatprep.subr.bf16.mxu0 %v3473
    %3560 = vmatpush1.bf16.msra.mxu0 %v3472
    %3561 = vmatprep.subr.bf16.mxu0 %v3469
    %3562 = vmatpush1.bf16.msra.mxu0 %v3468
    %3563 = vmatprep.subr.bf16.mxu0 %v3465
    %3564 = vmatpush1.bf16.msra.mxu0 %v3464
    %3565 = vmatprep.subr.bf16.mxu0 %v3461
    %3566 = vmatpush1.bf16.msra.mxu0 %v3460
    %3567 = vmatprep.subr.bf16.mxu0 %v3457
    %3568 = vmatpush1.bf16.msra.mxu0 %v3456
    %3569 = vmatprep.subr.bf16.mxu0 %v3453
    %3570 = vmatpush1.bf16.msra.mxu0 %v3452
    %3571 = vmatprep.subr.bf16.mxu0 %v3449
    %3572 = vmatpush1.bf16.msra.mxu0 %v3448
    %3573 = vmatprep.subr.bf16.mxu0 %v3445
    %3574 = vmatpush1.bf16.msra.mxu0 %v3444
    %3575 = vmatprep.subr.bf16.mxu0 0
    %3576 = vmatpush2.bf16.msra.mxu0 0
    %3577 = vmatprep.subr.bf16.mxu0 0
    %3578 = vmatpush2.bf16.msra.mxu0 0
    %3579 = vmatprep.subr.bf16.mxu0 0
    %3580 = vmatpush2.bf16.msra.mxu0 0
    %3581 = vmatprep.subr.bf16.mxu0 %v3551
    %3582 = vmatpush2.bf16.msra.mxu0 %v3548
    %3583 = vmatprep.subr.bf16.mxu0 %v3489
    %3584 = vmatpush2.bf16.msra.mxu0 %v3488
    %3585 = vmatprep.subr.bf16.mxu0 %v3485
    %3586 = vmatpush2.bf16.msra.mxu0 %v3484
    %3587 = vmatprep.subr.bf16.mxu0 %v3481
    %3588 = vmatpush2.bf16.msra.mxu0 %v3480
    %3589 = vmatprep.subr.bf16.mxu0 %v3477
    %3590 = vmatpush2.bf16.msra.mxu0 %v3476
    %3591 = vmatprep.mubr.bf16.mxu0 %v3545
    %3592 = vmatmul.mubr.bf16.gmra.mxu0 %v3241
    %v3593 = vpop.f32.mrf.mxu0
    %v3594 = vadd.f32 0.0, %v3593
    %v3595 = vpop.f32.mrf.mxu0
    %v3596 = vadd.f32 0.0, %v3595
    %v3597 = vpop.f32.mrf.mxu0
    %v3598 = vpop.f32.mrf.mxu0
    %3599 = vdwg.mxu0
    %3600 = vmatprep.subr.bf16.mxu0 %v3475
    %3601 = vmatpush1.bf16.msra.mxu0 %v3474
    %3602 = vmatprep.subr.bf16.mxu0 %v3471
    %3603 = vmatpush1.bf16.msra.mxu0 %v3470
    %3604 = vmatprep.subr.bf16.mxu0 %v3467
    %3605 = vmatpush1.bf16.msra.mxu0 %v3466
    %3606 = vmatprep.subr.bf16.mxu0 %v3463
    %3607 = vmatpush1.bf16.msra.mxu0 %v3462
    %3608 = vmatprep.subr.bf16.mxu0 %v3459
    %3609 = vmatpush1.bf16.msra.mxu0 %v3458
    %3610 = vmatprep.subr.bf16.mxu0 %v3455
    %3611 = vmatpush1.bf16.msra.mxu0 %v3454
    %3612 = vmatprep.subr.bf16.mxu0 %v3451
    %3613 = vmatpush1.bf16.msra.mxu0 %v3450
    %3614 = vmatprep.subr.bf16.mxu0 %v3447
    %3615 = vmatpush1.bf16.msra.mxu0 %v3446
    %3616 = vmatprep.subr.bf16.mxu0 0
    %3617 = vmatpush2.bf16.msra.mxu0 0
    %3618 = vmatprep.subr.bf16.mxu0 0
    %3619 = vmatpush2.bf16.msra.mxu0 0
    %3620 = vmatprep.subr.bf16.mxu0 0
    %3621 = vmatpush2.bf16.msra.mxu0 0
    %3622 = vmatprep.subr.bf16.mxu0 %v3557
    %3623 = vmatpush2.bf16.msra.mxu0 %v3554
    %3624 = vmatprep.subr.bf16.mxu0 %v3491
    %3625 = vmatpush2.bf16.msra.mxu0 %v3490
    %3626 = vmatprep.subr.bf16.mxu0 %v3487
    %3627 = vmatpush2.bf16.msra.mxu0 %v3486
    %3628 = vmatprep.subr.bf16.mxu0 %v3483
    %3629 = vmatpush2.bf16.msra.mxu0 %v3482
    %3630 = vmatprep.subr.bf16.mxu0 %v3479
    %3631 = vmatpush2.bf16.msra.mxu0 %v3478
    %3632 = vmatprep.mubr.bf16.mxu0 %v3545
    %3633 = vmatmul.mubr.bf16.gmra.mxu0 %v3241
    %v3634 = vpop.f32.mrf.mxu0
    %v3635 = vadd.f32 0.0, %v3634
    %v3636 = vpop.f32.mrf.mxu0
    %v3637 = vadd.f32 0.0, %v3636
    %v3638 = vpop.f32.mrf.mxu0
    %v3639 = vpop.f32.mrf.mxu0
    %3640 = vdwg.mxu0
    %v3641 = vadd.f32 %v3235, %v3594
    %v3642 = vadd.f32 %v3236, %v3596
    %v3643 = vadd.f32 %v3237, %v3635
    %v3644 = vadd.f32 %v3238, %v3637
    %v3645 = vld [vmem:[#allocation3 + $0x10] sm:$0xc]
    %v3646 = vld [vmem:[#allocation3 + $0x18] sm:$0xc]
    %v3647 = vpack.c.bf16 %v3645, %v3645
    %v3648 = vpack.c.bf16 %v3646, %v3646
    %s3649 = scalar_lea.vmem %s5, 2000
    %v3650 = vld [vmem:[%s3649] sm:$0xff]
    %v3651 = vld [vmem:[%s3649 + $0x8] sm:$0xff]
    %v3652 = vld [vmem:[%s3649 + $0x10] sm:$0xff]
    %v3653 = vld [vmem:[%s3649 + $0x18] sm:$0xff]
    %v3654 = vld [vmem:[%s3649 + $0x20] sm:$0xff]
    %v3655 = vld [vmem:[%s3649 + $0x28] sm:$0xff]
    %v3656 = vld [vmem:[%s3649 + $0x30] sm:$0xff]
    %v3657 = vld [vmem:[%s3649 + $0x38] sm:$0xff]
    %v3658 = vld [vmem:[%s3649 + $0x40] sm:$0xff]
    %v3659 = vld [vmem:[%s3649 + $0x48] sm:$0xff]
    %v3660 = vld [vmem:[%s3649 + $0x50] sm:$0xff]
    %v3661 = vld [vmem:[%s3649 + $0x58] sm:$0xff]
    %v3662 = vld [vmem:[%s3649 + $0x60] sm:$0xff]
    %v3663 = vld [vmem:[%s3649 + $0x68] sm:$0xff]
    %v3664 = vld [vmem:[%s3649 + $0x70] sm:$0xff]
    %v3665 = vld [vmem:[%s3649 + $0x78] sm:$0xff]
    %v3666 = vld [vmem:[%s3649 + $0x80] sm:$0xff]
    %v3667 = vld [vmem:[%s3649 + $0x88] sm:$0xff]
    %v3668 = vld [vmem:[%s3649 + $0x90] sm:$0xff]
    %v3669 = vld [vmem:[%s3649 + $0x98] sm:$0xff]
    %v3670 = vld [vmem:[%s3649 + $0xa0] sm:$0xff]
    %v3671 = vld [vmem:[%s3649 + $0xa8] sm:$0xff]
    %v3672 = vld [vmem:[%s3649 + $0xb0] sm:$0xff]
    %v3673 = vld [vmem:[%s3649 + $0xb8] sm:$0xff]
    %v3674 = vld [vmem:[%s3649 + $0xc0] sm:$0xff]
    %v3675 = vld [vmem:[%s3649 + $0xc8] sm:$0xff]
    %v3676 = vld [vmem:[%s3649 + $0xd0] sm:$0xff]
    %v3677 = vld [vmem:[%s3649 + $0xd8] sm:$0xff]
    %v3678 = vld [vmem:[%s3649 + $0xe0] sm:$0xff]
    %v3679 = vld [vmem:[%s3649 + $0xe8] sm:$0xff]
    %v3680 = vld [vmem:[%s3649 + $0xf0] sm:$0xff]
    %v3681 = vld [vmem:[%s3649 + $0xf8] sm:$0xff]
    %v3682 = vld [vmem:[%s3649 + $0x100] sm:$0xff]
    %v3683 = vld [vmem:[%s3649 + $0x108] sm:$0xff]
    %v3684 = vld [vmem:[%s3649 + $0x110] sm:$0xff]
    %v3685 = vld [vmem:[%s3649 + $0x118] sm:$0xff]
    %v3686 = vld [vmem:[%s3649 + $0x120] sm:$0xff]
    %v3687 = vld [vmem:[%s3649 + $0x128] sm:$0xff]
    %v3688 = vld [vmem:[%s3649 + $0x130] sm:$0xff]
    %v3689 = vld [vmem:[%s3649 + $0x138] sm:$0xff]
    %v3690 = vld [vmem:[%s3649 + $0x140] sm:$0xff]
    %v3691 = vld [vmem:[%s3649 + $0x148] sm:$0xff]
    %v3692 = vld [vmem:[%s3649 + $0x150] sm:$0xff]
    %v3693 = vld [vmem:[%s3649 + $0x158] sm:$0xff]
    %v3694 = vld [vmem:[%s3649 + $0x160] sm:$0xff]
    %v3695 = vld [vmem:[%s3649 + $0x168] sm:$0xff]
    %v3696 = vld [vmem:[%s3649 + $0x170] sm:$0xff]
    %v3697 = vld [vmem:[%s3649 + $0x178] sm:$0xff]
    %v3698 = vld [vmem:[%s3649 + $0x180] sm:$0x33]
    %v3699 = vld [vmem:[%s3649 + $0x188] sm:$0x33]
    %v3702 = vrot.slane %v3647, 1
    %v3703 = vrot.slane %v3648, 1
    %v3755 = vunpack.c.l.b16 %v3650
    %v3756 = vunpack.c.h.b16 %v3650
    %v3757 = vunpack.c.l.b16 %v3651
    %v3758 = vunpack.c.h.b16 %v3651
    %v3759 = vunpack.c.l.b16 %v3652
    %v3760 = vunpack.c.h.b16 %v3652
    %v3761 = vunpack.c.l.b16 %v3653
    %v3762 = vunpack.c.h.b16 %v3653
    %v3763 = vunpack.c.l.b16 %v3654
    %v3764 = vunpack.c.h.b16 %v3654
    %v3765 = vunpack.c.l.b16 %v3655
    %v3766 = vunpack.c.h.b16 %v3655
    %v3767 = vunpack.c.l.b16 %v3656
    %v3768 = vunpack.c.h.b16 %v3656
    %v3769 = vunpack.c.l.b16 %v3657
    %v3770 = vunpack.c.h.b16 %v3657
    %v3771 = vunpack.c.l.b16 %v3658
    %v3772 = vunpack.c.h.b16 %v3658
    %v3773 = vunpack.c.l.b16 %v3659
    %v3774 = vunpack.c.h.b16 %v3659
    %v3775 = vunpack.c.l.b16 %v3660
    %v3776 = vunpack.c.h.b16 %v3660
    %v3777 = vunpack.c.l.b16 %v3661
    %v3778 = vunpack.c.h.b16 %v3661
    %v3779 = vunpack.c.l.b16 %v3662
    %v3780 = vunpack.c.h.b16 %v3662
    %v3781 = vunpack.c.l.b16 %v3663
    %v3782 = vunpack.c.h.b16 %v3663
    %v3783 = vunpack.c.l.b16 %v3664
    %v3784 = vunpack.c.h.b16 %v3664
    %v3785 = vunpack.c.l.b16 %v3665
    %v3786 = vunpack.c.h.b16 %v3665
    %v3787 = vunpack.c.l.b16 %v3666
    %v3788 = vunpack.c.h.b16 %v3666
    %v3789 = vunpack.c.l.b16 %v3667
    %v3790 = vunpack.c.h.b16 %v3667
    %v3791 = vunpack.c.l.b16 %v3668
    %v3792 = vunpack.c.h.b16 %v3668
    %v3793 = vunpack.c.l.b16 %v3669
    %v3794 = vunpack.c.h.b16 %v3669
    %v3795 = vunpack.c.l.b16 %v3670
    %v3796 = vunpack.c.h.b16 %v3670
    %v3797 = vunpack.c.l.b16 %v3671
    %v3798 = vunpack.c.h.b16 %v3671
    %v3799 = vunpack.c.l.b16 %v3672
    %v3800 = vunpack.c.h.b16 %v3672
    %v3801 = vunpack.c.l.b16 %v3673
    %v3802 = vunpack.c.h.b16 %v3673
    %v3803 = vunpack.c.l.b16 %v3674
    %v3804 = vunpack.c.h.b16 %v3674
    %v3805 = vunpack.c.l.b16 %v3675
    %v3806 = vunpack.c.h.b16 %v3675
    %v3807 = vunpack.c.l.b16 %v3676
    %v3808 = vunpack.c.h.b16 %v3676
    %v3809 = vunpack.c.l.b16 %v3677
    %v3810 = vunpack.c.h.b16 %v3677
    %v3811 = vunpack.c.l.b16 %v3678
    %v3812 = vunpack.c.h.b16 %v3678
    %v3813 = vunpack.c.l.b16 %v3679
    %v3814 = vunpack.c.h.b16 %v3679
    %v3815 = vunpack.c.l.b16 %v3680
    %v3816 = vunpack.c.h.b16 %v3680
    %v3817 = vunpack.c.l.b16 %v3681
    %v3818 = vunpack.c.h.b16 %v3681
    %v3819 = vunpack.c.l.b16 %v3682
    %v3820 = vunpack.c.h.b16 %v3682
    %v3821 = vunpack.c.l.b16 %v3683
    %v3822 = vunpack.c.h.b16 %v3683
    %v3823 = vunpack.c.l.b16 %v3684
    %v3824 = vunpack.c.h.b16 %v3684
    %v3825 = vunpack.c.l.b16 %v3685
    %v3826 = vunpack.c.h.b16 %v3685
    %v3827 = vunpack.c.l.b16 %v3686
    %v3828 = vunpack.c.h.b16 %v3686
    %v3829 = vunpack.c.l.b16 %v3687
    %v3830 = vunpack.c.h.b16 %v3687
    %v3831 = vunpack.c.l.b16 %v3688
    %v3832 = vunpack.c.h.b16 %v3688
    %v3833 = vunpack.c.l.b16 %v3689
    %v3834 = vunpack.c.h.b16 %v3689
    %v3835 = vunpack.c.l.b16 %v3690
    %v3836 = vunpack.c.h.b16 %v3690
    %v3837 = vunpack.c.l.b16 %v3691
    %v3838 = vunpack.c.h.b16 %v3691
    %v3839 = vunpack.c.l.b16 %v3692
    %v3840 = vunpack.c.h.b16 %v3692
    %v3841 = vunpack.c.l.b16 %v3693
    %v3842 = vunpack.c.h.b16 %v3693
    %v3843 = vunpack.c.l.b16 %v3694
    %v3844 = vunpack.c.h.b16 %v3694
    %v3845 = vunpack.c.l.b16 %v3695
    %v3846 = vunpack.c.h.b16 %v3695
    %v3847 = vunpack.c.l.b16 %v3696
    %v3848 = vunpack.c.h.b16 %v3696
    %v3849 = vunpack.c.l.b16 %v3697
    %v3850 = vunpack.c.h.b16 %v3697
    %v3851 = vunpack.c.l.b16 %v3698
    %v3852 = vunpack.c.h.b16 %v3698
    %v3853 = vunpack.c.l.b16 %v3699
    %v3854 = vunpack.c.h.b16 %v3699
    %v3855 = vpack.c.b16 %v3759, %v3755
    %v3856 = vpack.c.b16 %v3760, %v3756
    %v3857 = vpack.c.b16 %v3761, %v3757
    %v3858 = vpack.c.b16 %v3762, %v3758
    %v3859 = vpack.c.b16 %v3767, %v3763
    %v3860 = vpack.c.b16 %v3768, %v3764
    %v3861 = vpack.c.b16 %v3769, %v3765
    %v3862 = vpack.c.b16 %v3770, %v3766
    %v3863 = vpack.c.b16 %v3775, %v3771
    %v3864 = vpack.c.b16 %v3776, %v3772
    %v3865 = vpack.c.b16 %v3777, %v3773
    %v3866 = vpack.c.b16 %v3778, %v3774
    %v3867 = vpack.c.b16 %v3783, %v3779
    %v3868 = vpack.c.b16 %v3784, %v3780
    %v3869 = vpack.c.b16 %v3785, %v3781
    %v3870 = vpack.c.b16 %v3786, %v3782
    %v3871 = vpack.c.b16 %v3791, %v3787
    %v3872 = vpack.c.b16 %v3792, %v3788
    %v3873 = vpack.c.b16 %v3793, %v3789
    %v3874 = vpack.c.b16 %v3794, %v3790
    %v3875 = vpack.c.b16 %v3799, %v3795
    %v3876 = vpack.c.b16 %v3800, %v3796
    %v3877 = vpack.c.b16 %v3801, %v3797
    %v3878 = vpack.c.b16 %v3802, %v3798
    %v3879 = vpack.c.b16 %v3807, %v3803
    %v3880 = vpack.c.b16 %v3808, %v3804
    %v3881 = vpack.c.b16 %v3809, %v3805
    %v3882 = vpack.c.b16 %v3810, %v3806
    %v3883 = vpack.c.b16 %v3815, %v3811
    %v3884 = vpack.c.b16 %v3816, %v3812
    %v3885 = vpack.c.b16 %v3817, %v3813
    %v3886 = vpack.c.b16 %v3818, %v3814
    %v3887 = vpack.c.b16 %v3823, %v3819
    %v3888 = vpack.c.b16 %v3824, %v3820
    %v3889 = vpack.c.b16 %v3825, %v3821
    %v3890 = vpack.c.b16 %v3826, %v3822
    %v3891 = vpack.c.b16 %v3831, %v3827
    %v3892 = vpack.c.b16 %v3832, %v3828
    %v3893 = vpack.c.b16 %v3833, %v3829
    %v3894 = vpack.c.b16 %v3834, %v3830
    %v3895 = vpack.c.b16 %v3839, %v3835
    %v3896 = vpack.c.b16 %v3840, %v3836
    %v3897 = vpack.c.b16 %v3841, %v3837
    %v3898 = vpack.c.b16 %v3842, %v3838
    %v3899 = vpack.c.b16 %v3847, %v3843
    %v3900 = vpack.c.b16 %v3848, %v3844
    %v3901 = vpack.c.b16 %v3849, %v3845
    %v3902 = vpack.c.b16 %v3850, %v3846
    %v3903 = vpack.c.b16 %v3851, %v3851
    %v3904 = vpack.c.b16 %v3852, %v3852
    %v3905 = vpack.c.b16 %v3853, %v3853
    %v3906 = vpack.c.b16 %v3854, %v3854
    %v3956 = vsel %vm1601, %v3703, 0
    %v3959 = vsel %vm55, %v3903, 0
    %v3962 = vsel %vm55, %v3904, 0
    %v3965 = vsel %vm55, %v3905, 0
    %v3968 = vsel %vm55, %v3906, 0
    %3970 = vmatprep.subr.bf16.mxu0 %v3884
    %3971 = vmatpush1.bf16.msra.mxu0 %v3883
    %3972 = vmatprep.subr.bf16.mxu0 %v3880
    %3973 = vmatpush1.bf16.msra.mxu0 %v3879
    %3974 = vmatprep.subr.bf16.mxu0 %v3876
    %3975 = vmatpush1.bf16.msra.mxu0 %v3875
    %3976 = vmatprep.subr.bf16.mxu0 %v3872
    %3977 = vmatpush1.bf16.msra.mxu0 %v3871
    %3978 = vmatprep.subr.bf16.mxu0 %v3868
    %3979 = vmatpush1.bf16.msra.mxu0 %v3867
    %3980 = vmatprep.subr.bf16.mxu0 %v3864
    %3981 = vmatpush1.bf16.msra.mxu0 %v3863
    %3982 = vmatprep.subr.bf16.mxu0 %v3860
    %3983 = vmatpush1.bf16.msra.mxu0 %v3859
    %3984 = vmatprep.subr.bf16.mxu0 %v3856
    %3985 = vmatpush1.bf16.msra.mxu0 %v3855
    %3986 = vmatprep.subr.bf16.mxu0 0
    %3987 = vmatpush2.bf16.msra.mxu0 0
    %3988 = vmatprep.subr.bf16.mxu0 0
    %3989 = vmatpush2.bf16.msra.mxu0 0
    %3990 = vmatprep.subr.bf16.mxu0 0
    %3991 = vmatpush2.bf16.msra.mxu0 0
    %3992 = vmatprep.subr.bf16.mxu0 %v3962
    %3993 = vmatpush2.bf16.msra.mxu0 %v3959
    %3994 = vmatprep.subr.bf16.mxu0 %v3900
    %3995 = vmatpush2.bf16.msra.mxu0 %v3899
    %3996 = vmatprep.subr.bf16.mxu0 %v3896
    %3997 = vmatpush2.bf16.msra.mxu0 %v3895
    %3998 = vmatprep.subr.bf16.mxu0 %v3892
    %3999 = vmatpush2.bf16.msra.mxu0 %v3891
    %4000 = vmatprep.subr.bf16.mxu0 %v3888
    %4001 = vmatpush2.bf16.msra.mxu0 %v3887
    %4002 = vmatprep.mubr.bf16.mxu0 %v3956
    %4003 = vmatmul.mubr.bf16.gmra.mxu0 %v3702
    %v4004 = vpop.f32.mrf.mxu0
    %v4005 = vadd.f32 0.0, %v4004
    %v4006 = vpop.f32.mrf.mxu0
    %v4007 = vadd.f32 0.0, %v4006
    %v4008 = vpop.f32.mrf.mxu0
    %v4009 = vpop.f32.mrf.mxu0
    %4010 = vdwg.mxu0
    %4011 = vmatprep.subr.bf16.mxu0 %v3886
    %4012 = vmatpush1.bf16.msra.mxu0 %v3885
    %4013 = vmatprep.subr.bf16.mxu0 %v3882
    %4014 = vmatpush1.bf16.msra.mxu0 %v3881
    %4015 = vmatprep.subr.bf16.mxu0 %v3878
    %4016 = vmatpush1.bf16.msra.mxu0 %v3877
    %4017 = vmatprep.subr.bf16.mxu0 %v3874
    %4018 = vmatpush1.bf16.msra.mxu0 %v3873
    %4019 = vmatprep.subr.bf16.mxu0 %v3870
    %4020 = vmatpush1.bf16.msra.mxu0 %v3869
    %4021 = vmatprep.subr.bf16.mxu0 %v3866
    %4022 = vmatpush1.bf16.msra.mxu0 %v3865
    %4023 = vmatprep.subr.bf16.mxu0 %v3862
    %4024 = vmatpush1.bf16.msra.mxu0 %v3861
    %4025 = vmatprep.subr.bf16.mxu0 %v3858
    %4026 = vmatpush1.bf16.msra.mxu0 %v3857
    %4027 = vmatprep.subr.bf16.mxu0 0
    %4028 = vmatpush2.bf16.msra.mxu0 0
    %4029 = vmatprep.subr.bf16.mxu0 0
    %4030 = vmatpush2.bf16.msra.mxu0 0
    %4031 = vmatprep.subr.bf16.mxu0 0
    %4032 = vmatpush2.bf16.msra.mxu0 0
    %4033 = vmatprep.subr.bf16.mxu0 %v3968
    %4034 = vmatpush2.bf16.msra.mxu0 %v3965
    %4035 = vmatprep.subr.bf16.mxu0 %v3902
    %4036 = vmatpush2.bf16.msra.mxu0 %v3901
    %4037 = vmatprep.subr.bf16.mxu0 %v3898
    %4038 = vmatpush2.bf16.msra.mxu0 %v3897
    %4039 = vmatprep.subr.bf16.mxu0 %v3894
    %4040 = vmatpush2.bf16.msra.mxu0 %v3893
    %4041 = vmatprep.subr.bf16.mxu0 %v3890
    %4042 = vmatpush2.bf16.msra.mxu0 %v3889
    %4043 = vmatprep.mubr.bf16.mxu0 %v3956
    %4044 = vmatmul.mubr.bf16.gmra.mxu0 %v3702
    %v4045 = vpop.f32.mrf.mxu0
    %v4046 = vadd.f32 0.0, %v4045
    %v4047 = vpop.f32.mrf.mxu0
    %v4048 = vadd.f32 0.0, %v4047
    %v4049 = vpop.f32.mrf.mxu0
    %v4050 = vpop.f32.mrf.mxu0
    %4051 = vdwg.mxu0
    %v4052 = vadd.f32 %v3641, %v4005
    %v4053 = vadd.f32 %v3642, %v4007
    %v4054 = vadd.f32 %v3643, %v4046
    %v4055 = vadd.f32 %v3644, %v4048
    %v4056 = vld [vmem:[#allocation3 + $0x10] sm:$0x30]
    %v4057 = vld [vmem:[#allocation3 + $0x18] sm:$0x30]
    %v4058 = vpack.c.bf16 %v4056, %v4056
    %v4059 = vpack.c.bf16 %v4057, %v4057
    %s4060 = scalar_lea.vmem %s5, 2400
    %v4061 = vld [vmem:[%s4060] sm:$0xff]
    %v4062 = vld [vmem:[%s4060 + $0x8] sm:$0xff]
    %v4063 = vld [vmem:[%s4060 + $0x10] sm:$0xff]
    %v4064 = vld [vmem:[%s4060 + $0x18] sm:$0xff]
    %v4065 = vld [vmem:[%s4060 + $0x20] sm:$0xff]
    %v4066 = vld [vmem:[%s4060 + $0x28] sm:$0xff]
    %v4067 = vld [vmem:[%s4060 + $0x30] sm:$0xff]
    %v4068 = vld [vmem:[%s4060 + $0x38] sm:$0xff]
    %v4069 = vld [vmem:[%s4060 + $0x40] sm:$0xff]
    %v4070 = vld [vmem:[%s4060 + $0x48] sm:$0xff]
    %v4071 = vld [vmem:[%s4060 + $0x50] sm:$0xff]
    %v4072 = vld [vmem:[%s4060 + $0x58] sm:$0xff]
    %v4073 = vld [vmem:[%s4060 + $0x60] sm:$0xff]
    %v4074 = vld [vmem:[%s4060 + $0x68] sm:$0xff]
    %v4075 = vld [vmem:[%s4060 + $0x70] sm:$0xff]
    %v4076 = vld [vmem:[%s4060 + $0x78] sm:$0xff]
    %v4077 = vld [vmem:[%s4060 + $0x80] sm:$0xff]
    %v4078 = vld [vmem:[%s4060 + $0x88] sm:$0xff]
    %v4079 = vld [vmem:[%s4060 + $0x90] sm:$0xff]
    %v4080 = vld [vmem:[%s4060 + $0x98] sm:$0xff]
    %v4081 = vld [vmem:[%s4060 + $0xa0] sm:$0xff]
    %v4082 = vld [vmem:[%s4060 + $0xa8] sm:$0xff]
    %v4083 = vld [vmem:[%s4060 + $0xb0] sm:$0xff]
    %v4084 = vld [vmem:[%s4060 + $0xb8] sm:$0xff]
    %v4085 = vld [vmem:[%s4060 + $0xc0] sm:$0xff]
    %v4086 = vld [vmem:[%s4060 + $0xc8] sm:$0xff]
    %v4087 = vld [vmem:[%s4060 + $0xd0] sm:$0xff]
    %v4088 = vld [vmem:[%s4060 + $0xd8] sm:$0xff]
    %v4089 = vld [vmem:[%s4060 + $0xe0] sm:$0xff]
    %v4090 = vld [vmem:[%s4060 + $0xe8] sm:$0xff]
    %v4091 = vld [vmem:[%s4060 + $0xf0] sm:$0xff]
    %v4092 = vld [vmem:[%s4060 + $0xf8] sm:$0xff]
    %v4093 = vld [vmem:[%s4060 + $0x100] sm:$0xff]
    %v4094 = vld [vmem:[%s4060 + $0x108] sm:$0xff]
    %v4095 = vld [vmem:[%s4060 + $0x110] sm:$0xff]
    %v4096 = vld [vmem:[%s4060 + $0x118] sm:$0xff]
    %v4097 = vld [vmem:[%s4060 + $0x120] sm:$0xff]
    %v4098 = vld [vmem:[%s4060 + $0x128] sm:$0xff]
    %v4099 = vld [vmem:[%s4060 + $0x130] sm:$0xff]
    %v4100 = vld [vmem:[%s4060 + $0x138] sm:$0xff]
    %v4101 = vld [vmem:[%s4060 + $0x140] sm:$0xff]
    %v4102 = vld [vmem:[%s4060 + $0x148] sm:$0xff]
    %v4103 = vld [vmem:[%s4060 + $0x150] sm:$0xff]
    %v4104 = vld [vmem:[%s4060 + $0x158] sm:$0xff]
    %v4105 = vld [vmem:[%s4060 + $0x160] sm:$0xff]
    %v4106 = vld [vmem:[%s4060 + $0x168] sm:$0xff]
    %v4107 = vld [vmem:[%s4060 + $0x170] sm:$0xff]
    %v4108 = vld [vmem:[%s4060 + $0x178] sm:$0xff]
    %v4109 = vld [vmem:[%s4060 + $0x180] sm:$0x33]
    %v4110 = vld [vmem:[%s4060 + $0x188] sm:$0x33]
    %v4113 = vrot.slane %v4058, 2
    %v4114 = vrot.slane %v4059, 2
    %v4166 = vunpack.c.l.b16 %v4061
    %v4167 = vunpack.c.h.b16 %v4061
    %v4168 = vunpack.c.l.b16 %v4062
    %v4169 = vunpack.c.h.b16 %v4062
    %v4170 = vunpack.c.l.b16 %v4063
    %v4171 = vunpack.c.h.b16 %v4063
    %v4172 = vunpack.c.l.b16 %v4064
    %v4173 = vunpack.c.h.b16 %v4064
    %v4174 = vunpack.c.l.b16 %v4065
    %v4175 = vunpack.c.h.b16 %v4065
    %v4176 = vunpack.c.l.b16 %v4066
    %v4177 = vunpack.c.h.b16 %v4066
    %v4178 = vunpack.c.l.b16 %v4067
    %v4179 = vunpack.c.h.b16 %v4067
    %v4180 = vunpack.c.l.b16 %v4068
    %v4181 = vunpack.c.h.b16 %v4068
    %v4182 = vunpack.c.l.b16 %v4069
    %v4183 = vunpack.c.h.b16 %v4069
    %v4184 = vunpack.c.l.b16 %v4070
    %v4185 = vunpack.c.h.b16 %v4070
    %v4186 = vunpack.c.l.b16 %v4071
    %v4187 = vunpack.c.h.b16 %v4071
    %v4188 = vunpack.c.l.b16 %v4072
    %v4189 = vunpack.c.h.b16 %v4072
    %v4190 = vunpack.c.l.b16 %v4073
    %v4191 = vunpack.c.h.b16 %v4073
    %v4192 = vunpack.c.l.b16 %v4074
    %v4193 = vunpack.c.h.b16 %v4074
    %v4194 = vunpack.c.l.b16 %v4075
    %v4195 = vunpack.c.h.b16 %v4075
    %v4196 = vunpack.c.l.b16 %v4076
    %v4197 = vunpack.c.h.b16 %v4076
    %v4198 = vunpack.c.l.b16 %v4077
    %v4199 = vunpack.c.h.b16 %v4077
    %v4200 = vunpack.c.l.b16 %v4078
    %v4201 = vunpack.c.h.b16 %v4078
    %v4202 = vunpack.c.l.b16 %v4079
    %v4203 = vunpack.c.h.b16 %v4079
    %v4204 = vunpack.c.l.b16 %v4080
    %v4205 = vunpack.c.h.b16 %v4080
    %v4206 = vunpack.c.l.b16 %v4081
    %v4207 = vunpack.c.h.b16 %v4081
    %v4208 = vunpack.c.l.b16 %v4082
    %v4209 = vunpack.c.h.b16 %v4082
    %v4210 = vunpack.c.l.b16 %v4083
    %v4211 = vunpack.c.h.b16 %v4083
    %v4212 = vunpack.c.l.b16 %v4084
    %v4213 = vunpack.c.h.b16 %v4084
    %v4214 = vunpack.c.l.b16 %v4085
    %v4215 = vunpack.c.h.b16 %v4085
    %v4216 = vunpack.c.l.b16 %v4086
    %v4217 = vunpack.c.h.b16 %v4086
    %v4218 = vunpack.c.l.b16 %v4087
    %v4219 = vunpack.c.h.b16 %v4087
    %v4220 = vunpack.c.l.b16 %v4088
    %v4221 = vunpack.c.h.b16 %v4088
    %v4222 = vunpack.c.l.b16 %v4089
    %v4223 = vunpack.c.h.b16 %v4089
    %v4224 = vunpack.c.l.b16 %v4090
    %v4225 = vunpack.c.h.b16 %v4090
    %v4226 = vunpack.c.l.b16 %v4091
    %v4227 = vunpack.c.h.b16 %v4091
    %v4228 = vunpack.c.l.b16 %v4092
    %v4229 = vunpack.c.h.b16 %v4092
    %v4230 = vunpack.c.l.b16 %v4093
    %v4231 = vunpack.c.h.b16 %v4093
    %v4232 = vunpack.c.l.b16 %v4094
    %v4233 = vunpack.c.h.b16 %v4094
    %v4234 = vunpack.c.l.b16 %v4095
    %v4235 = vunpack.c.h.b16 %v4095
    %v4236 = vunpack.c.l.b16 %v4096
    %v4237 = vunpack.c.h.b16 %v4096
    %v4238 = vunpack.c.l.b16 %v4097
    %v4239 = vunpack.c.h.b16 %v4097
    %v4240 = vunpack.c.l.b16 %v4098
    %v4241 = vunpack.c.h.b16 %v4098
    %v4242 = vunpack.c.l.b16 %v4099
    %v4243 = vunpack.c.h.b16 %v4099
    %v4244 = vunpack.c.l.b16 %v4100
    %v4245 = vunpack.c.h.b16 %v4100
    %v4246 = vunpack.c.l.b16 %v4101
    %v4247 = vunpack.c.h.b16 %v4101
    %v4248 = vunpack.c.l.b16 %v4102
    %v4249 = vunpack.c.h.b16 %v4102
    %v4250 = vunpack.c.l.b16 %v4103
    %v4251 = vunpack.c.h.b16 %v4103
    %v4252 = vunpack.c.l.b16 %v4104
    %v4253 = vunpack.c.h.b16 %v4104
    %v4254 = vunpack.c.l.b16 %v4105
    %v4255 = vunpack.c.h.b16 %v4105
    %v4256 = vunpack.c.l.b16 %v4106
    %v4257 = vunpack.c.h.b16 %v4106
    %v4258 = vunpack.c.l.b16 %v4107
    %v4259 = vunpack.c.h.b16 %v4107
    %v4260 = vunpack.c.l.b16 %v4108
    %v4261 = vunpack.c.h.b16 %v4108
    %v4262 = vunpack.c.l.b16 %v4109
    %v4263 = vunpack.c.h.b16 %v4109
    %v4264 = vunpack.c.l.b16 %v4110
    %v4265 = vunpack.c.h.b16 %v4110
    %v4266 = vpack.c.b16 %v4170, %v4166
    %v4267 = vpack.c.b16 %v4171, %v4167
    %v4268 = vpack.c.b16 %v4172, %v4168
    %v4269 = vpack.c.b16 %v4173, %v4169
    %v4270 = vpack.c.b16 %v4178, %v4174
    %v4271 = vpack.c.b16 %v4179, %v4175
    %v4272 = vpack.c.b16 %v4180, %v4176
    %v4273 = vpack.c.b16 %v4181, %v4177
    %v4274 = vpack.c.b16 %v4186, %v4182
    %v4275 = vpack.c.b16 %v4187, %v4183
    %v4276 = vpack.c.b16 %v4188, %v4184
    %v4277 = vpack.c.b16 %v4189, %v4185
    %v4278 = vpack.c.b16 %v4194, %v4190
    %v4279 = vpack.c.b16 %v4195, %v4191
    %v4280 = vpack.c.b16 %v4196, %v4192
    %v4281 = vpack.c.b16 %v4197, %v4193
    %v4282 = vpack.c.b16 %v4202, %v4198
    %v4283 = vpack.c.b16 %v4203, %v4199
    %v4284 = vpack.c.b16 %v4204, %v4200
    %v4285 = vpack.c.b16 %v4205, %v4201
    %v4286 = vpack.c.b16 %v4210, %v4206
    %v4287 = vpack.c.b16 %v4211, %v4207
    %v4288 = vpack.c.b16 %v4212, %v4208
    %v4289 = vpack.c.b16 %v4213, %v4209
    %v4290 = vpack.c.b16 %v4218, %v4214
    %v4291 = vpack.c.b16 %v4219, %v4215
    %v4292 = vpack.c.b16 %v4220, %v4216
    %v4293 = vpack.c.b16 %v4221, %v4217
    %v4294 = vpack.c.b16 %v4226, %v4222
    %v4295 = vpack.c.b16 %v4227, %v4223
    %v4296 = vpack.c.b16 %v4228, %v4224
    %v4297 = vpack.c.b16 %v4229, %v4225
    %v4298 = vpack.c.b16 %v4234, %v4230
    %v4299 = vpack.c.b16 %v4235, %v4231
    %v4300 = vpack.c.b16 %v4236, %v4232
    %v4301 = vpack.c.b16 %v4237, %v4233
    %v4302 = vpack.c.b16 %v4242, %v4238
    %v4303 = vpack.c.b16 %v4243, %v4239
    %v4304 = vpack.c.b16 %v4244, %v4240
    %v4305 = vpack.c.b16 %v4245, %v4241
    %v4306 = vpack.c.b16 %v4250, %v4246
    %v4307 = vpack.c.b16 %v4251, %v4247
    %v4308 = vpack.c.b16 %v4252, %v4248
    %v4309 = vpack.c.b16 %v4253, %v4249
    %v4310 = vpack.c.b16 %v4258, %v4254
    %v4311 = vpack.c.b16 %v4259, %v4255
    %v4312 = vpack.c.b16 %v4260, %v4256
    %v4313 = vpack.c.b16 %v4261, %v4257
    %v4314 = vpack.c.b16 %v4262, %v4262
    %v4315 = vpack.c.b16 %v4263, %v4263
    %v4316 = vpack.c.b16 %v4264, %v4264
    %v4317 = vpack.c.b16 %v4265, %v4265
    %v4367 = vsel %vm1601, %v4114, 0
    %v4370 = vsel %vm55, %v4314, 0
    %v4373 = vsel %vm55, %v4315, 0
    %v4376 = vsel %vm55, %v4316, 0
    %v4379 = vsel %vm55, %v4317, 0
    %4381 = vmatprep.subr.bf16.mxu0 %v4295
    %4382 = vmatpush1.bf16.msra.mxu0 %v4294
    %4383 = vmatprep.subr.bf16.mxu0 %v4291
    %4384 = vmatpush1.bf16.msra.mxu0 %v4290
    %4385 = vmatprep.subr.bf16.mxu0 %v4287
    %4386 = vmatpush1.bf16.msra.mxu0 %v4286
    %4387 = vmatprep.subr.bf16.mxu0 %v4283
    %4388 = vmatpush1.bf16.msra.mxu0 %v4282
    %4389 = vmatprep.subr.bf16.mxu0 %v4279
    %4390 = vmatpush1.bf16.msra.mxu0 %v4278
    %4391 = vmatprep.subr.bf16.mxu0 %v4275
    %4392 = vmatpush1.bf16.msra.mxu0 %v4274
    %4393 = vmatprep.subr.bf16.mxu0 %v4271
    %4394 = vmatpush1.bf16.msra.mxu0 %v4270
    %4395 = vmatprep.subr.bf16.mxu0 %v4267
    %4396 = vmatpush1.bf16.msra.mxu0 %v4266
    %4397 = vmatprep.subr.bf16.mxu0 0
    %4398 = vmatpush2.bf16.msra.mxu0 0
    %4399 = vmatprep.subr.bf16.mxu0 0
    %4400 = vmatpush2.bf16.msra.mxu0 0
    %4401 = vmatprep.subr.bf16.mxu0 0
    %4402 = vmatpush2.bf16.msra.mxu0 0
    %4403 = vmatprep.subr.bf16.mxu0 %v4373
    %4404 = vmatpush2.bf16.msra.mxu0 %v4370
    %4405 = vmatprep.subr.bf16.mxu0 %v4311
    %4406 = vmatpush2.bf16.msra.mxu0 %v4310
    %4407 = vmatprep.subr.bf16.mxu0 %v4307
    %4408 = vmatpush2.bf16.msra.mxu0 %v4306
    %4409 = vmatprep.subr.bf16.mxu0 %v4303
    %4410 = vmatpush2.bf16.msra.mxu0 %v4302
    %4411 = vmatprep.subr.bf16.mxu0 %v4299
    %4412 = vmatpush2.bf16.msra.mxu0 %v4298
    %4413 = vmatprep.mubr.bf16.mxu0 %v4367
    %4414 = vmatmul.mubr.bf16.gmra.mxu0 %v4113
    %v4415 = vpop.f32.mrf.mxu0
    %v4416 = vadd.f32 0.0, %v4415
    %v4417 = vpop.f32.mrf.mxu0
    %v4418 = vadd.f32 0.0, %v4417
    %v4419 = vpop.f32.mrf.mxu0
    %v4420 = vpop.f32.mrf.mxu0
    %4421 = vdwg.mxu0
    %4422 = vmatprep.subr.bf16.mxu0 %v4297
    %4423 = vmatpush1.bf16.msra.mxu0 %v4296
    %4424 = vmatprep.subr.bf16.mxu0 %v4293
    %4425 = vmatpush1.bf16.msra.mxu0 %v4292
    %4426 = vmatprep.subr.bf16.mxu0 %v4289
    %4427 = vmatpush1.bf16.msra.mxu0 %v4288
    %4428 = vmatprep.subr.bf16.mxu0 %v4285
    %4429 = vmatpush1.bf16.msra.mxu0 %v4284
    %4430 = vmatprep.subr.bf16.mxu0 %v4281
    %4431 = vmatpush1.bf16.msra.mxu0 %v4280
    %4432 = vmatprep.subr.bf16.mxu0 %v4277
    %4433 = vmatpush1.bf16.msra.mxu0 %v4276
    %4434 = vmatprep.subr.bf16.mxu0 %v4273
    %4435 = vmatpush1.bf16.msra.mxu0 %v4272
    %4436 = vmatprep.subr.bf16.mxu0 %v4269
    %4437 = vmatpush1.bf16.msra.mxu0 %v4268
    %4438 = vmatprep.subr.bf16.mxu0 0
    %4439 = vmatpush2.bf16.msra.mxu0 0
    %4440 = vmatprep.subr.bf16.mxu0 0
    %4441 = vmatpush2.bf16.msra.mxu0 0
    %4442 = vmatprep.subr.bf16.mxu0 0
    %4443 = vmatpush2.bf16.msra.mxu0 0
    %4444 = vmatprep.subr.bf16.mxu0 %v4379
    %4445 = vmatpush2.bf16.msra.mxu0 %v4376
    %4446 = vmatprep.subr.bf16.mxu0 %v4313
    %4447 = vmatpush2.bf16.msra.mxu0 %v4312
    %4448 = vmatprep.subr.bf16.mxu0 %v4309
    %4449 = vmatpush2.bf16.msra.mxu0 %v4308
    %4450 = vmatprep.subr.bf16.mxu0 %v4305
    %4451 = vmatpush2.bf16.msra.mxu0 %v4304
    %4452 = vmatprep.subr.bf16.mxu0 %v4301
    %4453 = vmatpush2.bf16.msra.mxu0 %v4300
    %4454 = vmatprep.mubr.bf16.mxu0 %v4367
    %4455 = vmatmul.mubr.bf16.gmra.mxu0 %v4113
    %v4456 = vpop.f32.mrf.mxu0
    %v4457 = vadd.f32 0.0, %v4456
    %v4458 = vpop.f32.mrf.mxu0
    %v4459 = vadd.f32 0.0, %v4458
    %v4460 = vpop.f32.mrf.mxu0
    %v4461 = vpop.f32.mrf.mxu0
    %4462 = vdwg.mxu0
    %v4463 = vadd.f32 %v4052, %v4416
    %v4464 = vadd.f32 %v4053, %v4418
    %v4465 = vadd.f32 %v4054, %v4457
    %v4466 = vadd.f32 %v4055, %v4459
    %v4467 = vld [vmem:[#allocation3 + $0x10] sm:$0xc0]
    %v4468 = vld [vmem:[#allocation3 + $0x18] sm:$0xc0]
    %v4469 = vpack.c.bf16 %v4467, %v4467
    %v4470 = vpack.c.bf16 %v4468, %v4468
    %s4471 = scalar_lea.vmem %s5, 2800
    %v4472 = vld [vmem:[%s4471] sm:$0xff]
    %v4473 = vld [vmem:[%s4471 + $0x8] sm:$0xff]
    %v4474 = vld [vmem:[%s4471 + $0x10] sm:$0xff]
    %v4475 = vld [vmem:[%s4471 + $0x18] sm:$0xff]
    %v4476 = vld [vmem:[%s4471 + $0x20] sm:$0xff]
    %v4477 = vld [vmem:[%s4471 + $0x28] sm:$0xff]
    %v4478 = vld [vmem:[%s4471 + $0x30] sm:$0xff]
    %v4479 = vld [vmem:[%s4471 + $0x38] sm:$0xff]
    %v4480 = vld [vmem:[%s4471 + $0x40] sm:$0xff]
    %v4481 = vld [vmem:[%s4471 + $0x48] sm:$0xff]
    %v4482 = vld [vmem:[%s4471 + $0x50] sm:$0xff]
    %v4483 = vld [vmem:[%s4471 + $0x58] sm:$0xff]
    %v4484 = vld [vmem:[%s4471 + $0x60] sm:$0xff]
    %v4485 = vld [vmem:[%s4471 + $0x68] sm:$0xff]
    %v4486 = vld [vmem:[%s4471 + $0x70] sm:$0xff]
    %v4487 = vld [vmem:[%s4471 + $0x78] sm:$0xff]
    %v4488 = vld [vmem:[%s4471 + $0x80] sm:$0xff]
    %v4489 = vld [vmem:[%s4471 + $0x88] sm:$0xff]
    %v4490 = vld [vmem:[%s4471 + $0x90] sm:$0xff]
    %v4491 = vld [vmem:[%s4471 + $0x98] sm:$0xff]
    %v4492 = vld [vmem:[%s4471 + $0xa0] sm:$0xff]
    %v4493 = vld [vmem:[%s4471 + $0xa8] sm:$0xff]
    %v4494 = vld [vmem:[%s4471 + $0xb0] sm:$0xff]
    %v4495 = vld [vmem:[%s4471 + $0xb8] sm:$0xff]
    %v4496 = vld [vmem:[%s4471 + $0xc0] sm:$0xff]
    %v4497 = vld [vmem:[%s4471 + $0xc8] sm:$0xff]
    %v4498 = vld [vmem:[%s4471 + $0xd0] sm:$0xff]
    %v4499 = vld [vmem:[%s4471 + $0xd8] sm:$0xff]
    %v4500 = vld [vmem:[%s4471 + $0xe0] sm:$0xff]
    %v4501 = vld [vmem:[%s4471 + $0xe8] sm:$0xff]
    %v4502 = vld [vmem:[%s4471 + $0xf0] sm:$0xff]
    %v4503 = vld [vmem:[%s4471 + $0xf8] sm:$0xff]
    %v4504 = vld [vmem:[%s4471 + $0x100] sm:$0xff]
    %v4505 = vld [vmem:[%s4471 + $0x108] sm:$0xff]
    %v4506 = vld [vmem:[%s4471 + $0x110] sm:$0xff]
    %v4507 = vld [vmem:[%s4471 + $0x118] sm:$0xff]
    %v4508 = vld [vmem:[%s4471 + $0x120] sm:$0xff]
    %v4509 = vld [vmem:[%s4471 + $0x128] sm:$0xff]
    %v4510 = vld [vmem:[%s4471 + $0x130] sm:$0xff]
    %v4511 = vld [vmem:[%s4471 + $0x138] sm:$0xff]
    %v4512 = vld [vmem:[%s4471 + $0x140] sm:$0xff]
    %v4513 = vld [vmem:[%s4471 + $0x148] sm:$0xff]
    %v4514 = vld [vmem:[%s4471 + $0x150] sm:$0xff]
    %v4515 = vld [vmem:[%s4471 + $0x158] sm:$0xff]
    %v4516 = vld [vmem:[%s4471 + $0x160] sm:$0xff]
    %v4517 = vld [vmem:[%s4471 + $0x168] sm:$0xff]
    %v4518 = vld [vmem:[%s4471 + $0x170] sm:$0xff]
    %v4519 = vld [vmem:[%s4471 + $0x178] sm:$0xff]
    %v4520 = vld [vmem:[%s4471 + $0x180] sm:$0x33]
    %v4521 = vld [vmem:[%s4471 + $0x188] sm:$0x33]
    %v4524 = vrot.slane %v4469, 3
    %v4525 = vrot.slane %v4470, 3
    %v4577 = vunpack.c.l.b16 %v4472
    %v4578 = vunpack.c.h.b16 %v4472
    %v4579 = vunpack.c.l.b16 %v4473
    %v4580 = vunpack.c.h.b16 %v4473
    %v4581 = vunpack.c.l.b16 %v4474
    %v4582 = vunpack.c.h.b16 %v4474
    %v4583 = vunpack.c.l.b16 %v4475
    %v4584 = vunpack.c.h.b16 %v4475
    %v4585 = vunpack.c.l.b16 %v4476
    %v4586 = vunpack.c.h.b16 %v4476
    %v4587 = vunpack.c.l.b16 %v4477
    %v4588 = vunpack.c.h.b16 %v4477
    %v4589 = vunpack.c.l.b16 %v4478
    %v4590 = vunpack.c.h.b16 %v4478
    %v4591 = vunpack.c.l.b16 %v4479
    %v4592 = vunpack.c.h.b16 %v4479
    %v4593 = vunpack.c.l.b16 %v4480
    %v4594 = vunpack.c.h.b16 %v4480
    %v4595 = vunpack.c.l.b16 %v4481
    %v4596 = vunpack.c.h.b16 %v4481
    %v4597 = vunpack.c.l.b16 %v4482
    %v4598 = vunpack.c.h.b16 %v4482
    %v4599 = vunpack.c.l.b16 %v4483
    %v4600 = vunpack.c.h.b16 %v4483
    %v4601 = vunpack.c.l.b16 %v4484
    %v4602 = vunpack.c.h.b16 %v4484
    %v4603 = vunpack.c.l.b16 %v4485
    %v4604 = vunpack.c.h.b16 %v4485
    %v4605 = vunpack.c.l.b16 %v4486
    %v4606 = vunpack.c.h.b16 %v4486
    %v4607 = vunpack.c.l.b16 %v4487
    %v4608 = vunpack.c.h.b16 %v4487
    %v4609 = vunpack.c.l.b16 %v4488
    %v4610 = vunpack.c.h.b16 %v4488
    %v4611 = vunpack.c.l.b16 %v4489
    %v4612 = vunpack.c.h.b16 %v4489
    %v4613 = vunpack.c.l.b16 %v4490
    %v4614 = vunpack.c.h.b16 %v4490
    %v4615 = vunpack.c.l.b16 %v4491
    %v4616 = vunpack.c.h.b16 %v4491
    %v4617 = vunpack.c.l.b16 %v4492
    %v4618 = vunpack.c.h.b16 %v4492
    %v4619 = vunpack.c.l.b16 %v4493
    %v4620 = vunpack.c.h.b16 %v4493
    %v4621 = vunpack.c.l.b16 %v4494
    %v4622 = vunpack.c.h.b16 %v4494
    %v4623 = vunpack.c.l.b16 %v4495
    %v4624 = vunpack.c.h.b16 %v4495
    %v4625 = vunpack.c.l.b16 %v4496
    %v4626 = vunpack.c.h.b16 %v4496
    %v4627 = vunpack.c.l.b16 %v4497
    %v4628 = vunpack.c.h.b16 %v4497
    %v4629 = vunpack.c.l.b16 %v4498
    %v4630 = vunpack.c.h.b16 %v4498
    %v4631 = vunpack.c.l.b16 %v4499
    %v4632 = vunpack.c.h.b16 %v4499
    %v4633 = vunpack.c.l.b16 %v4500
    %v4634 = vunpack.c.h.b16 %v4500
    %v4635 = vunpack.c.l.b16 %v4501
    %v4636 = vunpack.c.h.b16 %v4501
    %v4637 = vunpack.c.l.b16 %v4502
    %v4638 = vunpack.c.h.b16 %v4502
    %v4639 = vunpack.c.l.b16 %v4503
    %v4640 = vunpack.c.h.b16 %v4503
    %v4641 = vunpack.c.l.b16 %v4504
    %v4642 = vunpack.c.h.b16 %v4504
    %v4643 = vunpack.c.l.b16 %v4505
    %v4644 = vunpack.c.h.b16 %v4505
    %v4645 = vunpack.c.l.b16 %v4506
    %v4646 = vunpack.c.h.b16 %v4506
    %v4647 = vunpack.c.l.b16 %v4507
    %v4648 = vunpack.c.h.b16 %v4507
    %v4649 = vunpack.c.l.b16 %v4508
    %v4650 = vunpack.c.h.b16 %v4508
    %v4651 = vunpack.c.l.b16 %v4509
    %v4652 = vunpack.c.h.b16 %v4509
    %v4653 = vunpack.c.l.b16 %v4510
    %v4654 = vunpack.c.h.b16 %v4510
    %v4655 = vunpack.c.l.b16 %v4511
    %v4656 = vunpack.c.h.b16 %v4511
    %v4657 = vunpack.c.l.b16 %v4512
    %v4658 = vunpack.c.h.b16 %v4512
    %v4659 = vunpack.c.l.b16 %v4513
    %v4660 = vunpack.c.h.b16 %v4513
    %v4661 = vunpack.c.l.b16 %v4514
    %v4662 = vunpack.c.h.b16 %v4514
    %v4663 = vunpack.c.l.b16 %v4515
    %v4664 = vunpack.c.h.b16 %v4515
    %v4665 = vunpack.c.l.b16 %v4516
    %v4666 = vunpack.c.h.b16 %v4516
    %v4667 = vunpack.c.l.b16 %v4517
    %v4668 = vunpack.c.h.b16 %v4517
    %v4669 = vunpack.c.l.b16 %v4518
    %v4670 = vunpack.c.h.b16 %v4518
    %v4671 = vunpack.c.l.b16 %v4519
    %v4672 = vunpack.c.h.b16 %v4519
    %v4673 = vunpack.c.l.b16 %v4520
    %v4674 = vunpack.c.h.b16 %v4520
    %v4675 = vunpack.c.l.b16 %v4521
    %v4676 = vunpack.c.h.b16 %v4521
    %v4677 = vpack.c.b16 %v4581, %v4577
    %v4678 = vpack.c.b16 %v4582, %v4578
    %v4679 = vpack.c.b16 %v4583, %v4579
    %v4680 = vpack.c.b16 %v4584, %v4580
    %v4681 = vpack.c.b16 %v4589, %v4585
    %v4682 = vpack.c.b16 %v4590, %v4586
    %v4683 = vpack.c.b16 %v4591, %v4587
    %v4684 = vpack.c.b16 %v4592, %v4588
    %v4685 = vpack.c.b16 %v4597, %v4593
    %v4686 = vpack.c.b16 %v4598, %v4594
    %v4687 = vpack.c.b16 %v4599, %v4595
    %v4688 = vpack.c.b16 %v4600, %v4596
    %v4689 = vpack.c.b16 %v4605, %v4601
    %v4690 = vpack.c.b16 %v4606, %v4602
    %v4691 = vpack.c.b16 %v4607, %v4603
    %v4692 = vpack.c.b16 %v4608, %v4604
    %v4693 = vpack.c.b16 %v4613, %v4609
    %v4694 = vpack.c.b16 %v4614, %v4610
    %v4695 = vpack.c.b16 %v4615, %v4611
    %v4696 = vpack.c.b16 %v4616, %v4612
    %v4697 = vpack.c.b16 %v4621, %v4617
    %v4698 = vpack.c.b16 %v4622, %v4618
    %v4699 = vpack.c.b16 %v4623, %v4619
    %v4700 = vpack.c.b16 %v4624, %v4620
    %v4701 = vpack.c.b16 %v4629, %v4625
    %v4702 = vpack.c.b16 %v4630, %v4626
    %v4703 = vpack.c.b16 %v4631, %v4627
    %v4704 = vpack.c.b16 %v4632, %v4628
    %v4705 = vpack.c.b16 %v4637, %v4633
    %v4706 = vpack.c.b16 %v4638, %v4634
    %v4707 = vpack.c.b16 %v4639, %v4635
    %v4708 = vpack.c.b16 %v4640, %v4636
    %v4709 = vpack.c.b16 %v4645, %v4641
    %v4710 = vpack.c.b16 %v4646, %v4642
    %v4711 = vpack.c.b16 %v4647, %v4643
    %v4712 = vpack.c.b16 %v4648, %v4644
    %v4713 = vpack.c.b16 %v4653, %v4649
    %v4714 = vpack.c.b16 %v4654, %v4650
    %v4715 = vpack.c.b16 %v4655, %v4651
    %v4716 = vpack.c.b16 %v4656, %v4652
    %v4717 = vpack.c.b16 %v4661, %v4657
    %v4718 = vpack.c.b16 %v4662, %v4658
    %v4719 = vpack.c.b16 %v4663, %v4659
    %v4720 = vpack.c.b16 %v4664, %v4660
    %v4721 = vpack.c.b16 %v4669, %v4665
    %v4722 = vpack.c.b16 %v4670, %v4666
    %v4723 = vpack.c.b16 %v4671, %v4667
    %v4724 = vpack.c.b16 %v4672, %v4668
    %v4725 = vpack.c.b16 %v4673, %v4673
    %v4726 = vpack.c.b16 %v4674, %v4674
    %v4727 = vpack.c.b16 %v4675, %v4675
    %v4728 = vpack.c.b16 %v4676, %v4676
    %v4778 = vsel %vm1601, %v4525, 0
    %v4781 = vsel %vm55, %v4725, 0
    %v4784 = vsel %vm55, %v4726, 0
    %v4787 = vsel %vm55, %v4727, 0
    %v4790 = vsel %vm55, %v4728, 0
    %4792 = vmatprep.subr.bf16.mxu0 %v4706
    %4793 = vmatpush1.bf16.msra.mxu0 %v4705
    %4794 = vmatprep.subr.bf16.mxu0 %v4702
    %4795 = vmatpush1.bf16.msra.mxu0 %v4701
    %4796 = vmatprep.subr.bf16.mxu0 %v4698
    %4797 = vmatpush1.bf16.msra.mxu0 %v4697
    %4798 = vmatprep.subr.bf16.mxu0 %v4694
    %4799 = vmatpush1.bf16.msra.mxu0 %v4693
    %4800 = vmatprep.subr.bf16.mxu0 %v4690
    %4801 = vmatpush1.bf16.msra.mxu0 %v4689
    %4802 = vmatprep.subr.bf16.mxu0 %v4686
    %4803 = vmatpush1.bf16.msra.mxu0 %v4685
    %4804 = vmatprep.subr.bf16.mxu0 %v4682
    %4805 = vmatpush1.bf16.msra.mxu0 %v4681
    %4806 = vmatprep.subr.bf16.mxu0 %v4678
    %4807 = vmatpush1.bf16.msra.mxu0 %v4677
    %4808 = vmatprep.subr.bf16.mxu0 0
    %4809 = vmatpush2.bf16.msra.mxu0 0
    %4810 = vmatprep.subr.bf16.mxu0 0
    %4811 = vmatpush2.bf16.msra.mxu0 0
    %4812 = vmatprep.subr.bf16.mxu0 0
    %4813 = vmatpush2.bf16.msra.mxu0 0
    %4814 = vmatprep.subr.bf16.mxu0 %v4784
    %4815 = vmatpush2.bf16.msra.mxu0 %v4781
    %4816 = vmatprep.subr.bf16.mxu0 %v4722
    %4817 = vmatpush2.bf16.msra.mxu0 %v4721
    %4818 = vmatprep.subr.bf16.mxu0 %v4718
    %4819 = vmatpush2.bf16.msra.mxu0 %v4717
    %4820 = vmatprep.subr.bf16.mxu0 %v4714
    %4821 = vmatpush2.bf16.msra.mxu0 %v4713
    %4822 = vmatprep.subr.bf16.mxu0 %v4710
    %4823 = vmatpush2.bf16.msra.mxu0 %v4709
    %4824 = vmatprep.mubr.bf16.mxu0 %v4778
    %4825 = vmatmul.mubr.bf16.gmra.mxu0 %v4524
    %v4826 = vpop.f32.mrf.mxu0
    %v4827 = vadd.f32 0.0, %v4826
    %v4828 = vpop.f32.mrf.mxu0
    %v4829 = vadd.f32 0.0, %v4828
    %v4830 = vpop.f32.mrf.mxu0
    %v4831 = vpop.f32.mrf.mxu0
    %4832 = vdwg.mxu0
    %4833 = vmatprep.subr.bf16.mxu0 %v4708
    %4834 = vmatpush1.bf16.msra.mxu0 %v4707
    %4835 = vmatprep.subr.bf16.mxu0 %v4704
    %4836 = vmatpush1.bf16.msra.mxu0 %v4703
    %4837 = vmatprep.subr.bf16.mxu0 %v4700
    %4838 = vmatpush1.bf16.msra.mxu0 %v4699
    %4839 = vmatprep.subr.bf16.mxu0 %v4696
    %4840 = vmatpush1.bf16.msra.mxu0 %v4695
    %4841 = vmatprep.subr.bf16.mxu0 %v4692
    %4842 = vmatpush1.bf16.msra.mxu0 %v4691
    %4843 = vmatprep.subr.bf16.mxu0 %v4688
    %4844 = vmatpush1.bf16.msra.mxu0 %v4687
    %4845 = vmatprep.subr.bf16.mxu0 %v4684
    %4846 = vmatpush1.bf16.msra.mxu0 %v4683
    %4847 = vmatprep.subr.bf16.mxu0 %v4680
    %4848 = vmatpush1.bf16.msra.mxu0 %v4679
    %4849 = vmatprep.subr.bf16.mxu0 0
    %4850 = vmatpush2.bf16.msra.mxu0 0
    %4851 = vmatprep.subr.bf16.mxu0 0
    %4852 = vmatpush2.bf16.msra.mxu0 0
    %4853 = vmatprep.subr.bf16.mxu0 0
    %4854 = vmatpush2.bf16.msra.mxu0 0
    %4855 = vmatprep.subr.bf16.mxu0 %v4790
    %4856 = vmatpush2.bf16.msra.mxu0 %v4787
    %4857 = vmatprep.subr.bf16.mxu0 %v4724
    %4858 = vmatpush2.bf16.msra.mxu0 %v4723
    %4859 = vmatprep.subr.bf16.mxu0 %v4720
    %4860 = vmatpush2.bf16.msra.mxu0 %v4719
    %4861 = vmatprep.subr.bf16.mxu0 %v4716
    %4862 = vmatpush2.bf16.msra.mxu0 %v4715
    %4863 = vmatprep.subr.bf16.mxu0 %v4712
    %4864 = vmatpush2.bf16.msra.mxu0 %v4711
    %4865 = vmatprep.mubr.bf16.mxu0 %v4778
    %4866 = vmatmul.mubr.bf16.gmra.mxu0 %v4524
    %v4867 = vpop.f32.mrf.mxu0
    %v4868 = vadd.f32 0.0, %v4867
    %v4869 = vpop.f32.mrf.mxu0
    %v4870 = vadd.f32 0.0, %v4869
    %v4871 = vpop.f32.mrf.mxu0
    %v4872 = vpop.f32.mrf.mxu0
    %4873 = vdwg.mxu0
    %v4874 = vadd.f32 %v4463, %v4827
    %v4875 = vadd.f32 %v4464, %v4829
    %v4876 = vadd.f32 %v4465, %v4868
    %v4877 = vadd.f32 %v4466, %v4870
    %v4878 = vld [vmem:[#allocation3 + $0x20] sm:$0x3]
    %v4879 = vld [vmem:[#allocation3 + $0x28] sm:$0x3]
    %v4880 = vpack.c.bf16 %v4878, %v4878
    %v4881 = vpack.c.bf16 %v4879, %v4879
    %s4882 = scalar_lea.vmem %s5, 3200
    %v4883 = vld [vmem:[%s4882] sm:$0xff]
    %v4884 = vld [vmem:[%s4882 + $0x8] sm:$0xff]
    %v4885 = vld [vmem:[%s4882 + $0x10] sm:$0xff]
    %v4886 = vld [vmem:[%s4882 + $0x18] sm:$0xff]
    %v4887 = vld [vmem:[%s4882 + $0x20] sm:$0xff]
    %v4888 = vld [vmem:[%s4882 + $0x28] sm:$0xff]
    %v4889 = vld [vmem:[%s4882 + $0x30] sm:$0xff]
    %v4890 = vld [vmem:[%s4882 + $0x38] sm:$0xff]
    %v4891 = vld [vmem:[%s4882 + $0x40] sm:$0xff]
    %v4892 = vld [vmem:[%s4882 + $0x48] sm:$0xff]
    %v4893 = vld [vmem:[%s4882 + $0x50] sm:$0xff]
    %v4894 = vld [vmem:[%s4882 + $0x58] sm:$0xff]
    %v4895 = vld [vmem:[%s4882 + $0x60] sm:$0xff]
    %v4896 = vld [vmem:[%s4882 + $0x68] sm:$0xff]
    %v4897 = vld [vmem:[%s4882 + $0x70] sm:$0xff]
    %v4898 = vld [vmem:[%s4882 + $0x78] sm:$0xff]
    %v4899 = vld [vmem:[%s4882 + $0x80] sm:$0xff]
    %v4900 = vld [vmem:[%s4882 + $0x88] sm:$0xff]
    %v4901 = vld [vmem:[%s4882 + $0x90] sm:$0xff]
    %v4902 = vld [vmem:[%s4882 + $0x98] sm:$0xff]
    %v4903 = vld [vmem:[%s4882 + $0xa0] sm:$0xff]
    %v4904 = vld [vmem:[%s4882 + $0xa8] sm:$0xff]
    %v4905 = vld [vmem:[%s4882 + $0xb0] sm:$0xff]
    %v4906 = vld [vmem:[%s4882 + $0xb8] sm:$0xff]
    %v4907 = vld [vmem:[%s4882 + $0xc0] sm:$0xff]
    %v4908 = vld [vmem:[%s4882 + $0xc8] sm:$0xff]
    %v4909 = vld [vmem:[%s4882 + $0xd0] sm:$0xff]
    %v4910 = vld [vmem:[%s4882 + $0xd8] sm:$0xff]
    %v4911 = vld [vmem:[%s4882 + $0xe0] sm:$0xff]
    %v4912 = vld [vmem:[%s4882 + $0xe8] sm:$0xff]
    %v4913 = vld [vmem:[%s4882 + $0xf0] sm:$0xff]
    %v4914 = vld [vmem:[%s4882 + $0xf8] sm:$0xff]
    %v4915 = vld [vmem:[%s4882 + $0x100] sm:$0xff]
    %v4916 = vld [vmem:[%s4882 + $0x108] sm:$0xff]
    %v4917 = vld [vmem:[%s4882 + $0x110] sm:$0xff]
    %v4918 = vld [vmem:[%s4882 + $0x118] sm:$0xff]
    %v4919 = vld [vmem:[%s4882 + $0x120] sm:$0xff]
    %v4920 = vld [vmem:[%s4882 + $0x128] sm:$0xff]
    %v4921 = vld [vmem:[%s4882 + $0x130] sm:$0xff]
    %v4922 = vld [vmem:[%s4882 + $0x138] sm:$0xff]
    %v4923 = vld [vmem:[%s4882 + $0x140] sm:$0xff]
    %v4924 = vld [vmem:[%s4882 + $0x148] sm:$0xff]
    %v4925 = vld [vmem:[%s4882 + $0x150] sm:$0xff]
    %v4926 = vld [vmem:[%s4882 + $0x158] sm:$0xff]
    %v4927 = vld [vmem:[%s4882 + $0x160] sm:$0xff]
    %v4928 = vld [vmem:[%s4882 + $0x168] sm:$0xff]
    %v4929 = vld [vmem:[%s4882 + $0x170] sm:$0xff]
    %v4930 = vld [vmem:[%s4882 + $0x178] sm:$0xff]
    %v4931 = vld [vmem:[%s4882 + $0x180] sm:$0x33]
    %v4932 = vld [vmem:[%s4882 + $0x188] sm:$0x33]
    %v4983 = vunpack.c.l.b16 %v4883
    %v4984 = vunpack.c.h.b16 %v4883
    %v4985 = vunpack.c.l.b16 %v4884
    %v4986 = vunpack.c.h.b16 %v4884
    %v4987 = vunpack.c.l.b16 %v4885
    %v4988 = vunpack.c.h.b16 %v4885
    %v4989 = vunpack.c.l.b16 %v4886
    %v4990 = vunpack.c.h.b16 %v4886
    %v4991 = vunpack.c.l.b16 %v4887
    %v4992 = vunpack.c.h.b16 %v4887
    %v4993 = vunpack.c.l.b16 %v4888
    %v4994 = vunpack.c.h.b16 %v4888
    %v4995 = vunpack.c.l.b16 %v4889
    %v4996 = vunpack.c.h.b16 %v4889
    %v4997 = vunpack.c.l.b16 %v4890
    %v4998 = vunpack.c.h.b16 %v4890
    %v4999 = vunpack.c.l.b16 %v4891
    %v5000 = vunpack.c.h.b16 %v4891
    %v5001 = vunpack.c.l.b16 %v4892
    %v5002 = vunpack.c.h.b16 %v4892
    %v5003 = vunpack.c.l.b16 %v4893
    %v5004 = vunpack.c.h.b16 %v4893
    %v5005 = vunpack.c.l.b16 %v4894
    %v5006 = vunpack.c.h.b16 %v4894
    %v5007 = vunpack.c.l.b16 %v4895
    %v5008 = vunpack.c.h.b16 %v4895
    %v5009 = vunpack.c.l.b16 %v4896
    %v5010 = vunpack.c.h.b16 %v4896
    %v5011 = vunpack.c.l.b16 %v4897
    %v5012 = vunpack.c.h.b16 %v4897
    %v5013 = vunpack.c.l.b16 %v4898
    %v5014 = vunpack.c.h.b16 %v4898
    %v5015 = vunpack.c.l.b16 %v4899
    %v5016 = vunpack.c.h.b16 %v4899
    %v5017 = vunpack.c.l.b16 %v4900
    %v5018 = vunpack.c.h.b16 %v4900
    %v5019 = vunpack.c.l.b16 %v4901
    %v5020 = vunpack.c.h.b16 %v4901
    %v5021 = vunpack.c.l.b16 %v4902
    %v5022 = vunpack.c.h.b16 %v4902
    %v5023 = vunpack.c.l.b16 %v4903
    %v5024 = vunpack.c.h.b16 %v4903
    %v5025 = vunpack.c.l.b16 %v4904
    %v5026 = vunpack.c.h.b16 %v4904
    %v5027 = vunpack.c.l.b16 %v4905
    %v5028 = vunpack.c.h.b16 %v4905
    %v5029 = vunpack.c.l.b16 %v4906
    %v5030 = vunpack.c.h.b16 %v4906
    %v5031 = vunpack.c.l.b16 %v4907
    %v5032 = vunpack.c.h.b16 %v4907
    %v5033 = vunpack.c.l.b16 %v4908
    %v5034 = vunpack.c.h.b16 %v4908
    %v5035 = vunpack.c.l.b16 %v4909
    %v5036 = vunpack.c.h.b16 %v4909
    %v5037 = vunpack.c.l.b16 %v4910
    %v5038 = vunpack.c.h.b16 %v4910
    %v5039 = vunpack.c.l.b16 %v4911
    %v5040 = vunpack.c.h.b16 %v4911
    %v5041 = vunpack.c.l.b16 %v4912
    %v5042 = vunpack.c.h.b16 %v4912
    %v5043 = vunpack.c.l.b16 %v4913
    %v5044 = vunpack.c.h.b16 %v4913
    %v5045 = vunpack.c.l.b16 %v4914
    %v5046 = vunpack.c.h.b16 %v4914
    %v5047 = vunpack.c.l.b16 %v4915
    %v5048 = vunpack.c.h.b16 %v4915
    %v5049 = vunpack.c.l.b16 %v4916
    %v5050 = vunpack.c.h.b16 %v4916
    %v5051 = vunpack.c.l.b16 %v4917
    %v5052 = vunpack.c.h.b16 %v4917
    %v5053 = vunpack.c.l.b16 %v4918
    %v5054 = vunpack.c.h.b16 %v4918
    %v5055 = vunpack.c.l.b16 %v4919
    %v5056 = vunpack.c.h.b16 %v4919
    %v5057 = vunpack.c.l.b16 %v4920
    %v5058 = vunpack.c.h.b16 %v4920
    %v5059 = vunpack.c.l.b16 %v4921
    %v5060 = vunpack.c.h.b16 %v4921
    %v5061 = vunpack.c.l.b16 %v4922
    %v5062 = vunpack.c.h.b16 %v4922
    %v5063 = vunpack.c.l.b16 %v4923
    %v5064 = vunpack.c.h.b16 %v4923
    %v5065 = vunpack.c.l.b16 %v4924
    %v5066 = vunpack.c.h.b16 %v4924
    %v5067 = vunpack.c.l.b16 %v4925
    %v5068 = vunpack.c.h.b16 %v4925
    %v5069 = vunpack.c.l.b16 %v4926
    %v5070 = vunpack.c.h.b16 %v4926
    %v5071 = vunpack.c.l.b16 %v4927
    %v5072 = vunpack.c.h.b16 %v4927
    %v5073 = vunpack.c.l.b16 %v4928
    %v5074 = vunpack.c.h.b16 %v4928
    %v5075 = vunpack.c.l.b16 %v4929
    %v5076 = vunpack.c.h.b16 %v4929
    %v5077 = vunpack.c.l.b16 %v4930
    %v5078 = vunpack.c.h.b16 %v4930
    %v5079 = vunpack.c.l.b16 %v4931
    %v5080 = vunpack.c.h.b16 %v4931
    %v5081 = vunpack.c.l.b16 %v4932
    %v5082 = vunpack.c.h.b16 %v4932
    %v5083 = vpack.c.b16 %v4987, %v4983
    %v5084 = vpack.c.b16 %v4988, %v4984
    %v5085 = vpack.c.b16 %v4989, %v4985
    %v5086 = vpack.c.b16 %v4990, %v4986
    %v5087 = vpack.c.b16 %v4995, %v4991
    %v5088 = vpack.c.b16 %v4996, %v4992
    %v5089 = vpack.c.b16 %v4997, %v4993
    %v5090 = vpack.c.b16 %v4998, %v4994
    %v5091 = vpack.c.b16 %v5003, %v4999
    %v5092 = vpack.c.b16 %v5004, %v5000
    %v5093 = vpack.c.b16 %v5005, %v5001
    %v5094 = vpack.c.b16 %v5006, %v5002
    %v5095 = vpack.c.b16 %v5011, %v5007
    %v5096 = vpack.c.b16 %v5012, %v5008
    %v5097 = vpack.c.b16 %v5013, %v5009
    %v5098 = vpack.c.b16 %v5014, %v5010
    %v5099 = vpack.c.b16 %v5019, %v5015
    %v5100 = vpack.c.b16 %v5020, %v5016
    %v5101 = vpack.c.b16 %v5021, %v5017
    %v5102 = vpack.c.b16 %v5022, %v5018
    %v5103 = vpack.c.b16 %v5027, %v5023
    %v5104 = vpack.c.b16 %v5028, %v5024
    %v5105 = vpack.c.b16 %v5029, %v5025
    %v5106 = vpack.c.b16 %v5030, %v5026
    %v5107 = vpack.c.b16 %v5035, %v5031
    %v5108 = vpack.c.b16 %v5036, %v5032
    %v5109 = vpack.c.b16 %v5037, %v5033
    %v5110 = vpack.c.b16 %v5038, %v5034
    %v5111 = vpack.c.b16 %v5043, %v5039
    %v5112 = vpack.c.b16 %v5044, %v5040
    %v5113 = vpack.c.b16 %v5045, %v5041
    %v5114 = vpack.c.b16 %v5046, %v5042
    %v5115 = vpack.c.b16 %v5051, %v5047
    %v5116 = vpack.c.b16 %v5052, %v5048
    %v5117 = vpack.c.b16 %v5053, %v5049
    %v5118 = vpack.c.b16 %v5054, %v5050
    %v5119 = vpack.c.b16 %v5059, %v5055
    %v5120 = vpack.c.b16 %v5060, %v5056
    %v5121 = vpack.c.b16 %v5061, %v5057
    %v5122 = vpack.c.b16 %v5062, %v5058
    %v5123 = vpack.c.b16 %v5067, %v5063
    %v5124 = vpack.c.b16 %v5068, %v5064
    %v5125 = vpack.c.b16 %v5069, %v5065
    %v5126 = vpack.c.b16 %v5070, %v5066
    %v5127 = vpack.c.b16 %v5075, %v5071
    %v5128 = vpack.c.b16 %v5076, %v5072
    %v5129 = vpack.c.b16 %v5077, %v5073
    %v5130 = vpack.c.b16 %v5078, %v5074
    %v5131 = vpack.c.b16 %v5079, %v5079
    %v5132 = vpack.c.b16 %v5080, %v5080
    %v5133 = vpack.c.b16 %v5081, %v5081
    %v5134 = vpack.c.b16 %v5082, %v5082
    %v5184 = vsel %vm1601, %v4881, 0
    %v5187 = vsel %vm55, %v5131, 0
    %v5190 = vsel %vm55, %v5132, 0
    %v5193 = vsel %vm55, %v5133, 0
    %v5196 = vsel %vm55, %v5134, 0
    %5198 = vmatprep.subr.bf16.mxu0 %v5112
    %5199 = vmatpush1.bf16.msra.mxu0 %v5111
    %5200 = vmatprep.subr.bf16.mxu0 %v5108
    %5201 = vmatpush1.bf16.msra.mxu0 %v5107
    %5202 = vmatprep.subr.bf16.mxu0 %v5104
    %5203 = vmatpush1.bf16.msra.mxu0 %v5103
    %5204 = vmatprep.subr.bf16.mxu0 %v5100
    %5205 = vmatpush1.bf16.msra.mxu0 %v5099
    %5206 = vmatprep.subr.bf16.mxu0 %v5096
    %5207 = vmatpush1.bf16.msra.mxu0 %v5095
    %5208 = vmatprep.subr.bf16.mxu0 %v5092
    %5209 = vmatpush1.bf16.msra.mxu0 %v5091
    %5210 = vmatprep.subr.bf16.mxu0 %v5088
    %5211 = vmatpush1.bf16.msra.mxu0 %v5087
    %5212 = vmatprep.subr.bf16.mxu0 %v5084
    %5213 = vmatpush1.bf16.msra.mxu0 %v5083
    %5214 = vmatprep.subr.bf16.mxu0 0
    %5215 = vmatpush2.bf16.msra.mxu0 0
    %5216 = vmatprep.subr.bf16.mxu0 0
    %5217 = vmatpush2.bf16.msra.mxu0 0
    %5218 = vmatprep.subr.bf16.mxu0 0
    %5219 = vmatpush2.bf16.msra.mxu0 0
    %5220 = vmatprep.subr.bf16.mxu0 %v5190
    %5221 = vmatpush2.bf16.msra.mxu0 %v5187
    %5222 = vmatprep.subr.bf16.mxu0 %v5128
    %5223 = vmatpush2.bf16.msra.mxu0 %v5127
    %5224 = vmatprep.subr.bf16.mxu0 %v5124
    %5225 = vmatpush2.bf16.msra.mxu0 %v5123
    %5226 = vmatprep.subr.bf16.mxu0 %v5120
    %5227 = vmatpush2.bf16.msra.mxu0 %v5119
    %5228 = vmatprep.subr.bf16.mxu0 %v5116
    %5229 = vmatpush2.bf16.msra.mxu0 %v5115
    %5230 = vmatprep.mubr.bf16.mxu0 %v5184
    %5231 = vmatmul.mubr.bf16.gmra.mxu0 %v4880
    %v5232 = vpop.f32.mrf.mxu0
    %v5233 = vadd.f32 0.0, %v5232
    %v5234 = vpop.f32.mrf.mxu0
    %v5235 = vadd.f32 0.0, %v5234
    %v5236 = vpop.f32.mrf.mxu0
    %v5237 = vpop.f32.mrf.mxu0
    %5238 = vdwg.mxu0
    %5239 = vmatprep.subr.bf16.mxu0 %v5114
    %5240 = vmatpush1.bf16.msra.mxu0 %v5113
    %5241 = vmatprep.subr.bf16.mxu0 %v5110
    %5242 = vmatpush1.bf16.msra.mxu0 %v5109
    %5243 = vmatprep.subr.bf16.mxu0 %v5106
    %5244 = vmatpush1.bf16.msra.mxu0 %v5105
    %5245 = vmatprep.subr.bf16.mxu0 %v5102
    %5246 = vmatpush1.bf16.msra.mxu0 %v5101
    %5247 = vmatprep.subr.bf16.mxu0 %v5098
    %5248 = vmatpush1.bf16.msra.mxu0 %v5097
    %5249 = vmatprep.subr.bf16.mxu0 %v5094
    %5250 = vmatpush1.bf16.msra.mxu0 %v5093
    %5251 = vmatprep.subr.bf16.mxu0 %v5090
    %5252 = vmatpush1.bf16.msra.mxu0 %v5089
    %5253 = vmatprep.subr.bf16.mxu0 %v5086
    %5254 = vmatpush1.bf16.msra.mxu0 %v5085
    %5255 = vmatprep.subr.bf16.mxu0 0
    %5256 = vmatpush2.bf16.msra.mxu0 0
    %5257 = vmatprep.subr.bf16.mxu0 0
    %5258 = vmatpush2.bf16.msra.mxu0 0
    %5259 = vmatprep.subr.bf16.mxu0 0
    %5260 = vmatpush2.bf16.msra.mxu0 0
    %5261 = vmatprep.subr.bf16.mxu0 %v5196
    %5262 = vmatpush2.bf16.msra.mxu0 %v5193
    %5263 = vmatprep.subr.bf16.mxu0 %v5130
    %5264 = vmatpush2.bf16.msra.mxu0 %v5129
    %5265 = vmatprep.subr.bf16.mxu0 %v5126
    %5266 = vmatpush2.bf16.msra.mxu0 %v5125
    %5267 = vmatprep.subr.bf16.mxu0 %v5122
    %5268 = vmatpush2.bf16.msra.mxu0 %v5121
    %5269 = vmatprep.subr.bf16.mxu0 %v5118
    %5270 = vmatpush2.bf16.msra.mxu0 %v5117
    %5271 = vmatprep.mubr.bf16.mxu0 %v5184
    %5272 = vmatmul.mubr.bf16.gmra.mxu0 %v4880
    %v5273 = vpop.f32.mrf.mxu0
    %v5274 = vadd.f32 0.0, %v5273
    %v5275 = vpop.f32.mrf.mxu0
    %v5276 = vadd.f32 0.0, %v5275
    %v5277 = vpop.f32.mrf.mxu0
    %v5278 = vpop.f32.mrf.mxu0
    %5279 = vdwg.mxu0
    %v5280 = vadd.f32 %v4874, %v5233
    %v5281 = vadd.f32 %v4875, %v5235
    %v5282 = vadd.f32 %v4876, %v5274
    %v5283 = vadd.f32 %v4877, %v5276
    %v5284 = vld [vmem:[#allocation3 + $0x20] sm:$0xc]
    %v5285 = vld [vmem:[#allocation3 + $0x28] sm:$0xc]
    %v5286 = vpack.c.bf16 %v5284, %v5284
    %v5287 = vpack.c.bf16 %v5285, %v5285
    %s5288 = scalar_lea.vmem %s5, 3600
    %v5289 = vld [vmem:[%s5288] sm:$0xff]
    %v5290 = vld [vmem:[%s5288 + $0x8] sm:$0xff]
    %v5291 = vld [vmem:[%s5288 + $0x10] sm:$0xff]
    %v5292 = vld [vmem:[%s5288 + $0x18] sm:$0xff]
    %v5293 = vld [vmem:[%s5288 + $0x20] sm:$0xff]
    %v5294 = vld [vmem:[%s5288 + $0x28] sm:$0xff]
    %v5295 = vld [vmem:[%s5288 + $0x30] sm:$0xff]
    %v5296 = vld [vmem:[%s5288 + $0x38] sm:$0xff]
    %v5297 = vld [vmem:[%s5288 + $0x40] sm:$0xff]
    %v5298 = vld [vmem:[%s5288 + $0x48] sm:$0xff]
    %v5299 = vld [vmem:[%s5288 + $0x50] sm:$0xff]
    %v5300 = vld [vmem:[%s5288 + $0x58] sm:$0xff]
    %v5301 = vld [vmem:[%s5288 + $0x60] sm:$0xff]
    %v5302 = vld [vmem:[%s5288 + $0x68] sm:$0xff]
    %v5303 = vld [vmem:[%s5288 + $0x70] sm:$0xff]
    %v5304 = vld [vmem:[%s5288 + $0x78] sm:$0xff]
    %v5305 = vld [vmem:[%s5288 + $0x80] sm:$0xff]
    %v5306 = vld [vmem:[%s5288 + $0x88] sm:$0xff]
    %v5307 = vld [vmem:[%s5288 + $0x90] sm:$0xff]
    %v5308 = vld [vmem:[%s5288 + $0x98] sm:$0xff]
    %v5309 = vld [vmem:[%s5288 + $0xa0] sm:$0xff]
    %v5310 = vld [vmem:[%s5288 + $0xa8] sm:$0xff]
    %v5311 = vld [vmem:[%s5288 + $0xb0] sm:$0xff]
    %v5312 = vld [vmem:[%s5288 + $0xb8] sm:$0xff]
    %v5313 = vld [vmem:[%s5288 + $0xc0] sm:$0xff]
    %v5314 = vld [vmem:[%s5288 + $0xc8] sm:$0xff]
    %v5315 = vld [vmem:[%s5288 + $0xd0] sm:$0xff]
    %v5316 = vld [vmem:[%s5288 + $0xd8] sm:$0xff]
    %v5317 = vld [vmem:[%s5288 + $0xe0] sm:$0xff]
    %v5318 = vld [vmem:[%s5288 + $0xe8] sm:$0xff]
    %v5319 = vld [vmem:[%s5288 + $0xf0] sm:$0xff]
    %v5320 = vld [vmem:[%s5288 + $0xf8] sm:$0xff]
    %v5321 = vld [vmem:[%s5288 + $0x100] sm:$0xff]
    %v5322 = vld [vmem:[%s5288 + $0x108] sm:$0xff]
    %v5323 = vld [vmem:[%s5288 + $0x110] sm:$0xff]
    %v5324 = vld [vmem:[%s5288 + $0x118] sm:$0xff]
    %v5325 = vld [vmem:[%s5288 + $0x120] sm:$0xff]
    %v5326 = vld [vmem:[%s5288 + $0x128] sm:$0xff]
    %v5327 = vld [vmem:[%s5288 + $0x130] sm:$0xff]
    %v5328 = vld [vmem:[%s5288 + $0x138] sm:$0xff]
    %v5329 = vld [vmem:[%s5288 + $0x140] sm:$0xff]
    %v5330 = vld [vmem:[%s5288 + $0x148] sm:$0xff]
    %v5331 = vld [vmem:[%s5288 + $0x150] sm:$0xff]
    %v5332 = vld [vmem:[%s5288 + $0x158] sm:$0xff]
    %v5333 = vld [vmem:[%s5288 + $0x160] sm:$0xff]
    %v5334 = vld [vmem:[%s5288 + $0x168] sm:$0xff]
    %v5335 = vld [vmem:[%s5288 + $0x170] sm:$0xff]
    %v5336 = vld [vmem:[%s5288 + $0x178] sm:$0xff]
    %v5337 = vld [vmem:[%s5288 + $0x180] sm:$0x33]
    %v5338 = vld [vmem:[%s5288 + $0x188] sm:$0x33]
    %v5341 = vrot.slane %v5286, 1
    %v5342 = vrot.slane %v5287, 1
    %v5394 = vunpack.c.l.b16 %v5289
    %v5395 = vunpack.c.h.b16 %v5289
    %v5396 = vunpack.c.l.b16 %v5290
    %v5397 = vunpack.c.h.b16 %v5290
    %v5398 = vunpack.c.l.b16 %v5291
    %v5399 = vunpack.c.h.b16 %v5291
    %v5400 = vunpack.c.l.b16 %v5292
    %v5401 = vunpack.c.h.b16 %v5292
    %v5402 = vunpack.c.l.b16 %v5293
    %v5403 = vunpack.c.h.b16 %v5293
    %v5404 = vunpack.c.l.b16 %v5294
    %v5405 = vunpack.c.h.b16 %v5294
    %v5406 = vunpack.c.l.b16 %v5295
    %v5407 = vunpack.c.h.b16 %v5295
    %v5408 = vunpack.c.l.b16 %v5296
    %v5409 = vunpack.c.h.b16 %v5296
    %v5410 = vunpack.c.l.b16 %v5297
    %v5411 = vunpack.c.h.b16 %v5297
    %v5412 = vunpack.c.l.b16 %v5298
    %v5413 = vunpack.c.h.b16 %v5298
    %v5414 = vunpack.c.l.b16 %v5299
    %v5415 = vunpack.c.h.b16 %v5299
    %v5416 = vunpack.c.l.b16 %v5300
    %v5417 = vunpack.c.h.b16 %v5300
    %v5418 = vunpack.c.l.b16 %v5301
    %v5419 = vunpack.c.h.b16 %v5301
    %v5420 = vunpack.c.l.b16 %v5302
    %v5421 = vunpack.c.h.b16 %v5302
    %v5422 = vunpack.c.l.b16 %v5303
    %v5423 = vunpack.c.h.b16 %v5303
    %v5424 = vunpack.c.l.b16 %v5304
    %v5425 = vunpack.c.h.b16 %v5304
    %v5426 = vunpack.c.l.b16 %v5305
    %v5427 = vunpack.c.h.b16 %v5305
    %v5428 = vunpack.c.l.b16 %v5306
    %v5429 = vunpack.c.h.b16 %v5306
    %v5430 = vunpack.c.l.b16 %v5307
    %v5431 = vunpack.c.h.b16 %v5307
    %v5432 = vunpack.c.l.b16 %v5308
    %v5433 = vunpack.c.h.b16 %v5308
    %v5434 = vunpack.c.l.b16 %v5309
    %v5435 = vunpack.c.h.b16 %v5309
    %v5436 = vunpack.c.l.b16 %v5310
    %v5437 = vunpack.c.h.b16 %v5310
    %v5438 = vunpack.c.l.b16 %v5311
    %v5439 = vunpack.c.h.b16 %v5311
    %v5440 = vunpack.c.l.b16 %v5312
    %v5441 = vunpack.c.h.b16 %v5312
    %v5442 = vunpack.c.l.b16 %v5313
    %v5443 = vunpack.c.h.b16 %v5313
    %v5444 = vunpack.c.l.b16 %v5314
    %v5445 = vunpack.c.h.b16 %v5314
    %v5446 = vunpack.c.l.b16 %v5315
    %v5447 = vunpack.c.h.b16 %v5315
    %v5448 = vunpack.c.l.b16 %v5316
    %v5449 = vunpack.c.h.b16 %v5316
    %v5450 = vunpack.c.l.b16 %v5317
    %v5451 = vunpack.c.h.b16 %v5317
    %v5452 = vunpack.c.l.b16 %v5318
    %v5453 = vunpack.c.h.b16 %v5318
    %v5454 = vunpack.c.l.b16 %v5319
    %v5455 = vunpack.c.h.b16 %v5319
    %v5456 = vunpack.c.l.b16 %v5320
    %v5457 = vunpack.c.h.b16 %v5320
    %v5458 = vunpack.c.l.b16 %v5321
    %v5459 = vunpack.c.h.b16 %v5321
    %v5460 = vunpack.c.l.b16 %v5322
    %v5461 = vunpack.c.h.b16 %v5322
    %v5462 = vunpack.c.l.b16 %v5323
    %v5463 = vunpack.c.h.b16 %v5323
    %v5464 = vunpack.c.l.b16 %v5324
    %v5465 = vunpack.c.h.b16 %v5324
    %v5466 = vunpack.c.l.b16 %v5325
    %v5467 = vunpack.c.h.b16 %v5325
    %v5468 = vunpack.c.l.b16 %v5326
    %v5469 = vunpack.c.h.b16 %v5326
    %v5470 = vunpack.c.l.b16 %v5327
    %v5471 = vunpack.c.h.b16 %v5327
    %v5472 = vunpack.c.l.b16 %v5328
    %v5473 = vunpack.c.h.b16 %v5328
    %v5474 = vunpack.c.l.b16 %v5329
    %v5475 = vunpack.c.h.b16 %v5329
    %v5476 = vunpack.c.l.b16 %v5330
    %v5477 = vunpack.c.h.b16 %v5330
    %v5478 = vunpack.c.l.b16 %v5331
    %v5479 = vunpack.c.h.b16 %v5331
    %v5480 = vunpack.c.l.b16 %v5332
    %v5481 = vunpack.c.h.b16 %v5332
    %v5482 = vunpack.c.l.b16 %v5333
    %v5483 = vunpack.c.h.b16 %v5333
    %v5484 = vunpack.c.l.b16 %v5334
    %v5485 = vunpack.c.h.b16 %v5334
    %v5486 = vunpack.c.l.b16 %v5335
    %v5487 = vunpack.c.h.b16 %v5335
    %v5488 = vunpack.c.l.b16 %v5336
    %v5489 = vunpack.c.h.b16 %v5336
    %v5490 = vunpack.c.l.b16 %v5337
    %v5491 = vunpack.c.h.b16 %v5337
    %v5492 = vunpack.c.l.b16 %v5338
    %v5493 = vunpack.c.h.b16 %v5338
    %v5494 = vpack.c.b16 %v5398, %v5394
    %v5495 = vpack.c.b16 %v5399, %v5395
    %v5496 = vpack.c.b16 %v5400, %v5396
    %v5497 = vpack.c.b16 %v5401, %v5397
    %v5498 = vpack.c.b16 %v5406, %v5402
    %v5499 = vpack.c.b16 %v5407, %v5403
    %v5500 = vpack.c.b16 %v5408, %v5404
    %v5501 = vpack.c.b16 %v5409, %v5405
    %v5502 = vpack.c.b16 %v5414, %v5410
    %v5503 = vpack.c.b16 %v5415, %v5411
    %v5504 = vpack.c.b16 %v5416, %v5412
    %v5505 = vpack.c.b16 %v5417, %v5413
    %v5506 = vpack.c.b16 %v5422, %v5418
    %v5507 = vpack.c.b16 %v5423, %v5419
    %v5508 = vpack.c.b16 %v5424, %v5420
    %v5509 = vpack.c.b16 %v5425, %v5421
    %v5510 = vpack.c.b16 %v5430, %v5426
    %v5511 = vpack.c.b16 %v5431, %v5427
    %v5512 = vpack.c.b16 %v5432, %v5428
    %v5513 = vpack.c.b16 %v5433, %v5429
    %v5514 = vpack.c.b16 %v5438, %v5434
    %v5515 = vpack.c.b16 %v5439, %v5435
    %v5516 = vpack.c.b16 %v5440, %v5436
    %v5517 = vpack.c.b16 %v5441, %v5437
    %v5518 = vpack.c.b16 %v5446, %v5442
    %v5519 = vpack.c.b16 %v5447, %v5443
    %v5520 = vpack.c.b16 %v5448, %v5444
    %v5521 = vpack.c.b16 %v5449, %v5445
    %v5522 = vpack.c.b16 %v5454, %v5450
    %v5523 = vpack.c.b16 %v5455, %v5451
    %v5524 = vpack.c.b16 %v5456, %v5452
    %v5525 = vpack.c.b16 %v5457, %v5453
    %v5526 = vpack.c.b16 %v5462, %v5458
    %v5527 = vpack.c.b16 %v5463, %v5459
    %v5528 = vpack.c.b16 %v5464, %v5460
    %v5529 = vpack.c.b16 %v5465, %v5461
    %v5530 = vpack.c.b16 %v5470, %v5466
    %v5531 = vpack.c.b16 %v5471, %v5467
    %v5532 = vpack.c.b16 %v5472, %v5468
    %v5533 = vpack.c.b16 %v5473, %v5469
    %v5534 = vpack.c.b16 %v5478, %v5474
    %v5535 = vpack.c.b16 %v5479, %v5475
    %v5536 = vpack.c.b16 %v5480, %v5476
    %v5537 = vpack.c.b16 %v5481, %v5477
    %v5538 = vpack.c.b16 %v5486, %v5482
    %v5539 = vpack.c.b16 %v5487, %v5483
    %v5540 = vpack.c.b16 %v5488, %v5484
    %v5541 = vpack.c.b16 %v5489, %v5485
    %v5542 = vpack.c.b16 %v5490, %v5490
    %v5543 = vpack.c.b16 %v5491, %v5491
    %v5544 = vpack.c.b16 %v5492, %v5492
    %v5545 = vpack.c.b16 %v5493, %v5493
    %v5595 = vsel %vm1601, %v5342, 0
    %v5598 = vsel %vm55, %v5542, 0
    %v5601 = vsel %vm55, %v5543, 0
    %v5604 = vsel %vm55, %v5544, 0
    %v5607 = vsel %vm55, %v5545, 0
    %5609 = vmatprep.subr.bf16.mxu0 %v5523
    %5610 = vmatpush1.bf16.msra.mxu0 %v5522
    %5611 = vmatprep.subr.bf16.mxu0 %v5519
    %5612 = vmatpush1.bf16.msra.mxu0 %v5518
    %5613 = vmatprep.subr.bf16.mxu0 %v5515
    %5614 = vmatpush1.bf16.msra.mxu0 %v5514
    %5615 = vmatprep.subr.bf16.mxu0 %v5511
    %5616 = vmatpush1.bf16.msra.mxu0 %v5510
    %5617 = vmatprep.subr.bf16.mxu0 %v5507
    %5618 = vmatpush1.bf16.msra.mxu0 %v5506
    %5619 = vmatprep.subr.bf16.mxu0 %v5503
    %5620 = vmatpush1.bf16.msra.mxu0 %v5502
    %5621 = vmatprep.subr.bf16.mxu0 %v5499
    %5622 = vmatpush1.bf16.msra.mxu0 %v5498
    %5623 = vmatprep.subr.bf16.mxu0 %v5495
    %5624 = vmatpush1.bf16.msra.mxu0 %v5494
    %5625 = vmatprep.subr.bf16.mxu0 0
    %5626 = vmatpush2.bf16.msra.mxu0 0
    %5627 = vmatprep.subr.bf16.mxu0 0
    %5628 = vmatpush2.bf16.msra.mxu0 0
    %5629 = vmatprep.subr.bf16.mxu0 0
    %5630 = vmatpush2.bf16.msra.mxu0 0
    %5631 = vmatprep.subr.bf16.mxu0 %v5601
    %5632 = vmatpush2.bf16.msra.mxu0 %v5598
    %5633 = vmatprep.subr.bf16.mxu0 %v5539
    %5634 = vmatpush2.bf16.msra.mxu0 %v5538
    %5635 = vmatprep.subr.bf16.mxu0 %v5535
    %5636 = vmatpush2.bf16.msra.mxu0 %v5534
    %5637 = vmatprep.subr.bf16.mxu0 %v5531
    %5638 = vmatpush2.bf16.msra.mxu0 %v5530
    %5639 = vmatprep.subr.bf16.mxu0 %v5527
    %5640 = vmatpush2.bf16.msra.mxu0 %v5526
    %5641 = vmatprep.mubr.bf16.mxu0 %v5595
    %5642 = vmatmul.mubr.bf16.gmra.mxu0 %v5341
    %v5643 = vpop.f32.mrf.mxu0
    %v5644 = vadd.f32 0.0, %v5643
    %v5645 = vpop.f32.mrf.mxu0
    %v5646 = vadd.f32 0.0, %v5645
    %v5647 = vpop.f32.mrf.mxu0
    %v5648 = vpop.f32.mrf.mxu0
    %5649 = vdwg.mxu0
    %5650 = vmatprep.subr.bf16.mxu0 %v5525
    %5651 = vmatpush1.bf16.msra.mxu0 %v5524
    %5652 = vmatprep.subr.bf16.mxu0 %v5521
    %5653 = vmatpush1.bf16.msra.mxu0 %v5520
    %5654 = vmatprep.subr.bf16.mxu0 %v5517
    %5655 = vmatpush1.bf16.msra.mxu0 %v5516
    %5656 = vmatprep.subr.bf16.mxu0 %v5513
    %5657 = vmatpush1.bf16.msra.mxu0 %v5512
    %5658 = vmatprep.subr.bf16.mxu0 %v5509
    %5659 = vmatpush1.bf16.msra.mxu0 %v5508
    %5660 = vmatprep.subr.bf16.mxu0 %v5505
    %5661 = vmatpush1.bf16.msra.mxu0 %v5504
    %5662 = vmatprep.subr.bf16.mxu0 %v5501
    %5663 = vmatpush1.bf16.msra.mxu0 %v5500
    %5664 = vmatprep.subr.bf16.mxu0 %v5497
    %5665 = vmatpush1.bf16.msra.mxu0 %v5496
    %5666 = vmatprep.subr.bf16.mxu0 0
    %5667 = vmatpush2.bf16.msra.mxu0 0
    %5668 = vmatprep.subr.bf16.mxu0 0
    %5669 = vmatpush2.bf16.msra.mxu0 0
    %5670 = vmatprep.subr.bf16.mxu0 0
    %5671 = vmatpush2.bf16.msra.mxu0 0
    %5672 = vmatprep.subr.bf16.mxu0 %v5607
    %5673 = vmatpush2.bf16.msra.mxu0 %v5604
    %5674 = vmatprep.subr.bf16.mxu0 %v5541
    %5675 = vmatpush2.bf16.msra.mxu0 %v5540
    %5676 = vmatprep.subr.bf16.mxu0 %v5537
    %5677 = vmatpush2.bf16.msra.mxu0 %v5536
    %5678 = vmatprep.subr.bf16.mxu0 %v5533
    %5679 = vmatpush2.bf16.msra.mxu0 %v5532
    %5680 = vmatprep.subr.bf16.mxu0 %v5529
    %5681 = vmatpush2.bf16.msra.mxu0 %v5528
    %5682 = vmatprep.mubr.bf16.mxu0 %v5595
    %5683 = vmatmul.mubr.bf16.gmra.mxu0 %v5341
    %v5684 = vpop.f32.mrf.mxu0
    %v5685 = vadd.f32 0.0, %v5684
    %v5686 = vpop.f32.mrf.mxu0
    %v5687 = vadd.f32 0.0, %v5686
    %v5688 = vpop.f32.mrf.mxu0
    %v5689 = vpop.f32.mrf.mxu0
    %5690 = vdwg.mxu0
    %v5691 = vadd.f32 %v5280, %v5644
    %v5692 = vadd.f32 %v5281, %v5646
    %v5693 = vadd.f32 %v5282, %v5685
    %v5694 = vadd.f32 %v5283, %v5687
    %v5695 = vld [vmem:[#allocation3 + $0x20] sm:$0x30]
    %v5696 = vld [vmem:[#allocation3 + $0x28] sm:$0x30]
    %v5697 = vpack.c.bf16 %v5695, %v5695
    %v5698 = vpack.c.bf16 %v5696, %v5696
    %s5699 = scalar_lea.vmem %s5, 4000
    %v5700 = vld [vmem:[%s5699] sm:$0xff]
    %v5701 = vld [vmem:[%s5699 + $0x8] sm:$0xff]
    %v5702 = vld [vmem:[%s5699 + $0x10] sm:$0xff]
    %v5703 = vld [vmem:[%s5699 + $0x18] sm:$0xff]
    %v5704 = vld [vmem:[%s5699 + $0x20] sm:$0xff]
    %v5705 = vld [vmem:[%s5699 + $0x28] sm:$0xff]
    %v5706 = vld [vmem:[%s5699 + $0x30] sm:$0xff]
    %v5707 = vld [vmem:[%s5699 + $0x38] sm:$0xff]
    %v5708 = vld [vmem:[%s5699 + $0x40] sm:$0xff]
    %v5709 = vld [vmem:[%s5699 + $0x48] sm:$0xff]
    %v5710 = vld [vmem:[%s5699 + $0x50] sm:$0xff]
    %v5711 = vld [vmem:[%s5699 + $0x58] sm:$0xff]
    %v5712 = vld [vmem:[%s5699 + $0x60] sm:$0xff]
    %v5713 = vld [vmem:[%s5699 + $0x68] sm:$0xff]
    %v5714 = vld [vmem:[%s5699 + $0x70] sm:$0xff]
    %v5715 = vld [vmem:[%s5699 + $0x78] sm:$0xff]
    %v5716 = vld [vmem:[%s5699 + $0x80] sm:$0xff]
    %v5717 = vld [vmem:[%s5699 + $0x88] sm:$0xff]
    %v5718 = vld [vmem:[%s5699 + $0x90] sm:$0xff]
    %v5719 = vld [vmem:[%s5699 + $0x98] sm:$0xff]
    %v5720 = vld [vmem:[%s5699 + $0xa0] sm:$0xff]
    %v5721 = vld [vmem:[%s5699 + $0xa8] sm:$0xff]
    %v5722 = vld [vmem:[%s5699 + $0xb0] sm:$0xff]
    %v5723 = vld [vmem:[%s5699 + $0xb8] sm:$0xff]
    %v5724 = vld [vmem:[%s5699 + $0xc0] sm:$0xff]
    %v5725 = vld [vmem:[%s5699 + $0xc8] sm:$0xff]
    %v5726 = vld [vmem:[%s5699 + $0xd0] sm:$0xff]
    %v5727 = vld [vmem:[%s5699 + $0xd8] sm:$0xff]
    %v5728 = vld [vmem:[%s5699 + $0xe0] sm:$0xff]
    %v5729 = vld [vmem:[%s5699 + $0xe8] sm:$0xff]
    %v5730 = vld [vmem:[%s5699 + $0xf0] sm:$0xff]
    %v5731 = vld [vmem:[%s5699 + $0xf8] sm:$0xff]
    %v5732 = vld [vmem:[%s5699 + $0x100] sm:$0xff]
    %v5733 = vld [vmem:[%s5699 + $0x108] sm:$0xff]
    %v5734 = vld [vmem:[%s5699 + $0x110] sm:$0xff]
    %v5735 = vld [vmem:[%s5699 + $0x118] sm:$0xff]
    %v5736 = vld [vmem:[%s5699 + $0x120] sm:$0xff]
    %v5737 = vld [vmem:[%s5699 + $0x128] sm:$0xff]
    %v5738 = vld [vmem:[%s5699 + $0x130] sm:$0xff]
    %v5739 = vld [vmem:[%s5699 + $0x138] sm:$0xff]
    %v5740 = vld [vmem:[%s5699 + $0x140] sm:$0xff]
    %v5741 = vld [vmem:[%s5699 + $0x148] sm:$0xff]
    %v5742 = vld [vmem:[%s5699 + $0x150] sm:$0xff]
    %v5743 = vld [vmem:[%s5699 + $0x158] sm:$0xff]
    %v5744 = vld [vmem:[%s5699 + $0x160] sm:$0xff]
    %v5745 = vld [vmem:[%s5699 + $0x168] sm:$0xff]
    %v5746 = vld [vmem:[%s5699 + $0x170] sm:$0xff]
    %v5747 = vld [vmem:[%s5699 + $0x178] sm:$0xff]
    %v5748 = vld [vmem:[%s5699 + $0x180] sm:$0x33]
    %v5749 = vld [vmem:[%s5699 + $0x188] sm:$0x33]
    %v5752 = vrot.slane %v5697, 2
    %v5753 = vrot.slane %v5698, 2
    %v5805 = vunpack.c.l.b16 %v5700
    %v5806 = vunpack.c.h.b16 %v5700
    %v5807 = vunpack.c.l.b16 %v5701
    %v5808 = vunpack.c.h.b16 %v5701
    %v5809 = vunpack.c.l.b16 %v5702
    %v5810 = vunpack.c.h.b16 %v5702
    %v5811 = vunpack.c.l.b16 %v5703
    %v5812 = vunpack.c.h.b16 %v5703
    %v5813 = vunpack.c.l.b16 %v5704
    %v5814 = vunpack.c.h.b16 %v5704
    %v5815 = vunpack.c.l.b16 %v5705
    %v5816 = vunpack.c.h.b16 %v5705
    %v5817 = vunpack.c.l.b16 %v5706
    %v5818 = vunpack.c.h.b16 %v5706
    %v5819 = vunpack.c.l.b16 %v5707
    %v5820 = vunpack.c.h.b16 %v5707
    %v5821 = vunpack.c.l.b16 %v5708
    %v5822 = vunpack.c.h.b16 %v5708
    %v5823 = vunpack.c.l.b16 %v5709
    %v5824 = vunpack.c.h.b16 %v5709
    %v5825 = vunpack.c.l.b16 %v5710
    %v5826 = vunpack.c.h.b16 %v5710
    %v5827 = vunpack.c.l.b16 %v5711
    %v5828 = vunpack.c.h.b16 %v5711
    %v5829 = vunpack.c.l.b16 %v5712
    %v5830 = vunpack.c.h.b16 %v5712
    %v5831 = vunpack.c.l.b16 %v5713
    %v5832 = vunpack.c.h.b16 %v5713
    %v5833 = vunpack.c.l.b16 %v5714
    %v5834 = vunpack.c.h.b16 %v5714
    %v5835 = vunpack.c.l.b16 %v5715
    %v5836 = vunpack.c.h.b16 %v5715
    %v5837 = vunpack.c.l.b16 %v5716
    %v5838 = vunpack.c.h.b16 %v5716
    %v5839 = vunpack.c.l.b16 %v5717
    %v5840 = vunpack.c.h.b16 %v5717
    %v5841 = vunpack.c.l.b16 %v5718
    %v5842 = vunpack.c.h.b16 %v5718
    %v5843 = vunpack.c.l.b16 %v5719
    %v5844 = vunpack.c.h.b16 %v5719
    %v5845 = vunpack.c.l.b16 %v5720
    %v5846 = vunpack.c.h.b16 %v5720
    %v5847 = vunpack.c.l.b16 %v5721
    %v5848 = vunpack.c.h.b16 %v5721
    %v5849 = vunpack.c.l.b16 %v5722
    %v5850 = vunpack.c.h.b16 %v5722
    %v5851 = vunpack.c.l.b16 %v5723
    %v5852 = vunpack.c.h.b16 %v5723
    %v5853 = vunpack.c.l.b16 %v5724
    %v5854 = vunpack.c.h.b16 %v5724
    %v5855 = vunpack.c.l.b16 %v5725
    %v5856 = vunpack.c.h.b16 %v5725
    %v5857 = vunpack.c.l.b16 %v5726
    %v5858 = vunpack.c.h.b16 %v5726
    %v5859 = vunpack.c.l.b16 %v5727
    %v5860 = vunpack.c.h.b16 %v5727
    %v5861 = vunpack.c.l.b16 %v5728
    %v5862 = vunpack.c.h.b16 %v5728
    %v5863 = vunpack.c.l.b16 %v5729
    %v5864 = vunpack.c.h.b16 %v5729
    %v5865 = vunpack.c.l.b16 %v5730
    %v5866 = vunpack.c.h.b16 %v5730
    %v5867 = vunpack.c.l.b16 %v5731
    %v5868 = vunpack.c.h.b16 %v5731
    %v5869 = vunpack.c.l.b16 %v5732
    %v5870 = vunpack.c.h.b16 %v5732
    %v5871 = vunpack.c.l.b16 %v5733
    %v5872 = vunpack.c.h.b16 %v5733
    %v5873 = vunpack.c.l.b16 %v5734
    %v5874 = vunpack.c.h.b16 %v5734
    %v5875 = vunpack.c.l.b16 %v5735
    %v5876 = vunpack.c.h.b16 %v5735
    %v5877 = vunpack.c.l.b16 %v5736
    %v5878 = vunpack.c.h.b16 %v5736
    %v5879 = vunpack.c.l.b16 %v5737
    %v5880 = vunpack.c.h.b16 %v5737
    %v5881 = vunpack.c.l.b16 %v5738
    %v5882 = vunpack.c.h.b16 %v5738
    %v5883 = vunpack.c.l.b16 %v5739
    %v5884 = vunpack.c.h.b16 %v5739
    %v5885 = vunpack.c.l.b16 %v5740
    %v5886 = vunpack.c.h.b16 %v5740
    %v5887 = vunpack.c.l.b16 %v5741
    %v5888 = vunpack.c.h.b16 %v5741
    %v5889 = vunpack.c.l.b16 %v5742
    %v5890 = vunpack.c.h.b16 %v5742
    %v5891 = vunpack.c.l.b16 %v5743
    %v5892 = vunpack.c.h.b16 %v5743
    %v5893 = vunpack.c.l.b16 %v5744
    %v5894 = vunpack.c.h.b16 %v5744
    %v5895 = vunpack.c.l.b16 %v5745
    %v5896 = vunpack.c.h.b16 %v5745
    %v5897 = vunpack.c.l.b16 %v5746
    %v5898 = vunpack.c.h.b16 %v5746
    %v5899 = vunpack.c.l.b16 %v5747
    %v5900 = vunpack.c.h.b16 %v5747
    %v5901 = vunpack.c.l.b16 %v5748
    %v5902 = vunpack.c.h.b16 %v5748
    %v5903 = vunpack.c.l.b16 %v5749
    %v5904 = vunpack.c.h.b16 %v5749
    %v5905 = vpack.c.b16 %v5809, %v5805
    %v5906 = vpack.c.b16 %v5810, %v5806
    %v5907 = vpack.c.b16 %v5811, %v5807
    %v5908 = vpack.c.b16 %v5812, %v5808
    %v5909 = vpack.c.b16 %v5817, %v5813
    %v5910 = vpack.c.b16 %v5818, %v5814
    %v5911 = vpack.c.b16 %v5819, %v5815
    %v5912 = vpack.c.b16 %v5820, %v5816
    %v5913 = vpack.c.b16 %v5825, %v5821
    %v5914 = vpack.c.b16 %v5826, %v5822
    %v5915 = vpack.c.b16 %v5827, %v5823
    %v5916 = vpack.c.b16 %v5828, %v5824
    %v5917 = vpack.c.b16 %v5833, %v5829
    %v5918 = vpack.c.b16 %v5834, %v5830
    %v5919 = vpack.c.b16 %v5835, %v5831
    %v5920 = vpack.c.b16 %v5836, %v5832
    %v5921 = vpack.c.b16 %v5841, %v5837
    %v5922 = vpack.c.b16 %v5842, %v5838
    %v5923 = vpack.c.b16 %v5843, %v5839
    %v5924 = vpack.c.b16 %v5844, %v5840
    %v5925 = vpack.c.b16 %v5849, %v5845
    %v5926 = vpack.c.b16 %v5850, %v5846
    %v5927 = vpack.c.b16 %v5851, %v5847
    %v5928 = vpack.c.b16 %v5852, %v5848
    %v5929 = vpack.c.b16 %v5857, %v5853
    %v5930 = vpack.c.b16 %v5858, %v5854
    %v5931 = vpack.c.b16 %v5859, %v5855
    %v5932 = vpack.c.b16 %v5860, %v5856
    %v5933 = vpack.c.b16 %v5865, %v5861
    %v5934 = vpack.c.b16 %v5866, %v5862
    %v5935 = vpack.c.b16 %v5867, %v5863
    %v5936 = vpack.c.b16 %v5868, %v5864
    %v5937 = vpack.c.b16 %v5873, %v5869
    %v5938 = vpack.c.b16 %v5874, %v5870
    %v5939 = vpack.c.b16 %v5875, %v5871
    %v5940 = vpack.c.b16 %v5876, %v5872
    %v5941 = vpack.c.b16 %v5881, %v5877
    %v5942 = vpack.c.b16 %v5882, %v5878
    %v5943 = vpack.c.b16 %v5883, %v5879
    %v5944 = vpack.c.b16 %v5884, %v5880
    %v5945 = vpack.c.b16 %v5889, %v5885
    %v5946 = vpack.c.b16 %v5890, %v5886
    %v5947 = vpack.c.b16 %v5891, %v5887
    %v5948 = vpack.c.b16 %v5892, %v5888
    %v5949 = vpack.c.b16 %v5897, %v5893
    %v5950 = vpack.c.b16 %v5898, %v5894
    %v5951 = vpack.c.b16 %v5899, %v5895
    %v5952 = vpack.c.b16 %v5900, %v5896
    %v5953 = vpack.c.b16 %v5901, %v5901
    %v5954 = vpack.c.b16 %v5902, %v5902
    %v5955 = vpack.c.b16 %v5903, %v5903
    %v5956 = vpack.c.b16 %v5904, %v5904
    %v6006 = vsel %vm1601, %v5753, 0
    %v6009 = vsel %vm55, %v5953, 0
    %v6012 = vsel %vm55, %v5954, 0
    %v6015 = vsel %vm55, %v5955, 0
    %v6018 = vsel %vm55, %v5956, 0
    %6020 = vmatprep.subr.bf16.mxu0 %v5934
    %6021 = vmatpush1.bf16.msra.mxu0 %v5933
    %6022 = vmatprep.subr.bf16.mxu0 %v5930
    %6023 = vmatpush1.bf16.msra.mxu0 %v5929
    %6024 = vmatprep.subr.bf16.mxu0 %v5926
    %6025 = vmatpush1.bf16.msra.mxu0 %v5925
    %6026 = vmatprep.subr.bf16.mxu0 %v5922
    %6027 = vmatpush1.bf16.msra.mxu0 %v5921
    %6028 = vmatprep.subr.bf16.mxu0 %v5918
    %6029 = vmatpush1.bf16.msra.mxu0 %v5917
    %6030 = vmatprep.subr.bf16.mxu0 %v5914
    %6031 = vmatpush1.bf16.msra.mxu0 %v5913
    %6032 = vmatprep.subr.bf16.mxu0 %v5910
    %6033 = vmatpush1.bf16.msra.mxu0 %v5909
    %6034 = vmatprep.subr.bf16.mxu0 %v5906
    %6035 = vmatpush1.bf16.msra.mxu0 %v5905
    %6036 = vmatprep.subr.bf16.mxu0 0
    %6037 = vmatpush2.bf16.msra.mxu0 0
    %6038 = vmatprep.subr.bf16.mxu0 0
    %6039 = vmatpush2.bf16.msra.mxu0 0
    %6040 = vmatprep.subr.bf16.mxu0 0
    %6041 = vmatpush2.bf16.msra.mxu0 0
    %6042 = vmatprep.subr.bf16.mxu0 %v6012
    %6043 = vmatpush2.bf16.msra.mxu0 %v6009
    %6044 = vmatprep.subr.bf16.mxu0 %v5950
    %6045 = vmatpush2.bf16.msra.mxu0 %v5949
    %6046 = vmatprep.subr.bf16.mxu0 %v5946
    %6047 = vmatpush2.bf16.msra.mxu0 %v5945
    %6048 = vmatprep.subr.bf16.mxu0 %v5942
    %6049 = vmatpush2.bf16.msra.mxu0 %v5941
    %6050 = vmatprep.subr.bf16.mxu0 %v5938
    %6051 = vmatpush2.bf16.msra.mxu0 %v5937
    %6052 = vmatprep.mubr.bf16.mxu0 %v6006
    %6053 = vmatmul.mubr.bf16.gmra.mxu0 %v5752
    %v6054 = vpop.f32.mrf.mxu0
    %v6055 = vadd.f32 0.0, %v6054
    %v6056 = vpop.f32.mrf.mxu0
    %v6057 = vadd.f32 0.0, %v6056
    %v6058 = vpop.f32.mrf.mxu0
    %v6059 = vpop.f32.mrf.mxu0
    %6060 = vdwg.mxu0
    %6061 = vmatprep.subr.bf16.mxu0 %v5936
    %6062 = vmatpush1.bf16.msra.mxu0 %v5935
    %6063 = vmatprep.subr.bf16.mxu0 %v5932
    %6064 = vmatpush1.bf16.msra.mxu0 %v5931
    %6065 = vmatprep.subr.bf16.mxu0 %v5928
    %6066 = vmatpush1.bf16.msra.mxu0 %v5927
    %6067 = vmatprep.subr.bf16.mxu0 %v5924
    %6068 = vmatpush1.bf16.msra.mxu0 %v5923
    %6069 = vmatprep.subr.bf16.mxu0 %v5920
    %6070 = vmatpush1.bf16.msra.mxu0 %v5919
    %6071 = vmatprep.subr.bf16.mxu0 %v5916
    %6072 = vmatpush1.bf16.msra.mxu0 %v5915
    %6073 = vmatprep.subr.bf16.mxu0 %v5912
    %6074 = vmatpush1.bf16.msra.mxu0 %v5911
    %6075 = vmatprep.subr.bf16.mxu0 %v5908
    %6076 = vmatpush1.bf16.msra.mxu0 %v5907
    %6077 = vmatprep.subr.bf16.mxu0 0
    %6078 = vmatpush2.bf16.msra.mxu0 0
    %6079 = vmatprep.subr.bf16.mxu0 0
    %6080 = vmatpush2.bf16.msra.mxu0 0
    %6081 = vmatprep.subr.bf16.mxu0 0
    %6082 = vmatpush2.bf16.msra.mxu0 0
    %6083 = vmatprep.subr.bf16.mxu0 %v6018
    %6084 = vmatpush2.bf16.msra.mxu0 %v6015
    %6085 = vmatprep.subr.bf16.mxu0 %v5952
    %6086 = vmatpush2.bf16.msra.mxu0 %v5951
    %6087 = vmatprep.subr.bf16.mxu0 %v5948
    %6088 = vmatpush2.bf16.msra.mxu0 %v5947
    %6089 = vmatprep.subr.bf16.mxu0 %v5944
    %6090 = vmatpush2.bf16.msra.mxu0 %v5943
    %6091 = vmatprep.subr.bf16.mxu0 %v5940
    %6092 = vmatpush2.bf16.msra.mxu0 %v5939
    %6093 = vmatprep.mubr.bf16.mxu0 %v6006
    %6094 = vmatmul.mubr.bf16.gmra.mxu0 %v5752
    %v6095 = vpop.f32.mrf.mxu0
    %v6096 = vadd.f32 0.0, %v6095
    %v6097 = vpop.f32.mrf.mxu0
    %v6098 = vadd.f32 0.0, %v6097
    %v6099 = vpop.f32.mrf.mxu0
    %v6100 = vpop.f32.mrf.mxu0
    %6101 = vdwg.mxu0
    %v6102 = vadd.f32 %v5691, %v6055
    %v6103 = vadd.f32 %v5692, %v6057
    %v6104 = vadd.f32 %v5693, %v6096
    %v6105 = vadd.f32 %v5694, %v6098
    %v6106 = vld [vmem:[#allocation3 + $0x20] sm:$0xc0]
    %v6107 = vld [vmem:[#allocation3 + $0x28] sm:$0xc0]
    %v6108 = vpack.c.bf16 %v6106, %v6106
    %v6109 = vpack.c.bf16 %v6107, %v6107
    %s6110 = scalar_lea.vmem %s5, 4400
    %v6111 = vld [vmem:[%s6110] sm:$0xff]
    %v6112 = vld [vmem:[%s6110 + $0x8] sm:$0xff]
    %v6113 = vld [vmem:[%s6110 + $0x10] sm:$0xff]
    %v6114 = vld [vmem:[%s6110 + $0x18] sm:$0xff]
    %v6115 = vld [vmem:[%s6110 + $0x20] sm:$0xff]
    %v6116 = vld [vmem:[%s6110 + $0x28] sm:$0xff]
    %v6117 = vld [vmem:[%s6110 + $0x30] sm:$0xff]
    %v6118 = vld [vmem:[%s6110 + $0x38] sm:$0xff]
    %v6119 = vld [vmem:[%s6110 + $0x40] sm:$0xff]
    %v6120 = vld [vmem:[%s6110 + $0x48] sm:$0xff]
    %v6121 = vld [vmem:[%s6110 + $0x50] sm:$0xff]
    %v6122 = vld [vmem:[%s6110 + $0x58] sm:$0xff]
    %v6123 = vld [vmem:[%s6110 + $0x60] sm:$0xff]
    %v6124 = vld [vmem:[%s6110 + $0x68] sm:$0xff]
    %v6125 = vld [vmem:[%s6110 + $0x70] sm:$0xff]
    %v6126 = vld [vmem:[%s6110 + $0x78] sm:$0xff]
    %v6127 = vld [vmem:[%s6110 + $0x80] sm:$0xff]
    %v6128 = vld [vmem:[%s6110 + $0x88] sm:$0xff]
    %v6129 = vld [vmem:[%s6110 + $0x90] sm:$0xff]
    %v6130 = vld [vmem:[%s6110 + $0x98] sm:$0xff]
    %v6131 = vld [vmem:[%s6110 + $0xa0] sm:$0xff]
    %v6132 = vld [vmem:[%s6110 + $0xa8] sm:$0xff]
    %v6133 = vld [vmem:[%s6110 + $0xb0] sm:$0xff]
    %v6134 = vld [vmem:[%s6110 + $0xb8] sm:$0xff]
    %v6135 = vld [vmem:[%s6110 + $0xc0] sm:$0xff]
    %v6136 = vld [vmem:[%s6110 + $0xc8] sm:$0xff]
    %v6137 = vld [vmem:[%s6110 + $0xd0] sm:$0xff]
    %v6138 = vld [vmem:[%s6110 + $0xd8] sm:$0xff]
    %v6139 = vld [vmem:[%s6110 + $0xe0] sm:$0xff]
    %v6140 = vld [vmem:[%s6110 + $0xe8] sm:$0xff]
    %v6141 = vld [vmem:[%s6110 + $0xf0] sm:$0xff]
    %v6142 = vld [vmem:[%s6110 + $0xf8] sm:$0xff]
    %v6143 = vld [vmem:[%s6110 + $0x100] sm:$0xff]
    %v6144 = vld [vmem:[%s6110 + $0x108] sm:$0xff]
    %v6145 = vld [vmem:[%s6110 + $0x110] sm:$0xff]
    %v6146 = vld [vmem:[%s6110 + $0x118] sm:$0xff]
    %v6147 = vld [vmem:[%s6110 + $0x120] sm:$0xff]
    %v6148 = vld [vmem:[%s6110 + $0x128] sm:$0xff]
    %v6149 = vld [vmem:[%s6110 + $0x130] sm:$0xff]
    %v6150 = vld [vmem:[%s6110 + $0x138] sm:$0xff]
    %v6151 = vld [vmem:[%s6110 + $0x140] sm:$0xff]
    %v6152 = vld [vmem:[%s6110 + $0x148] sm:$0xff]
    %v6153 = vld [vmem:[%s6110 + $0x150] sm:$0xff]
    %v6154 = vld [vmem:[%s6110 + $0x158] sm:$0xff]
    %v6155 = vld [vmem:[%s6110 + $0x160] sm:$0xff]
    %v6156 = vld [vmem:[%s6110 + $0x168] sm:$0xff]
    %v6157 = vld [vmem:[%s6110 + $0x170] sm:$0xff]
    %v6158 = vld [vmem:[%s6110 + $0x178] sm:$0xff]
    %v6159 = vld [vmem:[%s6110 + $0x180] sm:$0x33]
    %v6160 = vld [vmem:[%s6110 + $0x188] sm:$0x33]
    %v6163 = vrot.slane %v6108, 3
    %v6164 = vrot.slane %v6109, 3
    %v6216 = vunpack.c.l.b16 %v6111
    %v6217 = vunpack.c.h.b16 %v6111
    %v6218 = vunpack.c.l.b16 %v6112
    %v6219 = vunpack.c.h.b16 %v6112
    %v6220 = vunpack.c.l.b16 %v6113
    %v6221 = vunpack.c.h.b16 %v6113
    %v6222 = vunpack.c.l.b16 %v6114
    %v6223 = vunpack.c.h.b16 %v6114
    %v6224 = vunpack.c.l.b16 %v6115
    %v6225 = vunpack.c.h.b16 %v6115
    %v6226 = vunpack.c.l.b16 %v6116
    %v6227 = vunpack.c.h.b16 %v6116
    %v6228 = vunpack.c.l.b16 %v6117
    %v6229 = vunpack.c.h.b16 %v6117
    %v6230 = vunpack.c.l.b16 %v6118
    %v6231 = vunpack.c.h.b16 %v6118
    %v6232 = vunpack.c.l.b16 %v6119
    %v6233 = vunpack.c.h.b16 %v6119
    %v6234 = vunpack.c.l.b16 %v6120
    %v6235 = vunpack.c.h.b16 %v6120
    %v6236 = vunpack.c.l.b16 %v6121
    %v6237 = vunpack.c.h.b16 %v6121
    %v6238 = vunpack.c.l.b16 %v6122
    %v6239 = vunpack.c.h.b16 %v6122
    %v6240 = vunpack.c.l.b16 %v6123
    %v6241 = vunpack.c.h.b16 %v6123
    %v6242 = vunpack.c.l.b16 %v6124
    %v6243 = vunpack.c.h.b16 %v6124
    %v6244 = vunpack.c.l.b16 %v6125
    %v6245 = vunpack.c.h.b16 %v6125
    %v6246 = vunpack.c.l.b16 %v6126
    %v6247 = vunpack.c.h.b16 %v6126
    %v6248 = vunpack.c.l.b16 %v6127
    %v6249 = vunpack.c.h.b16 %v6127
    %v6250 = vunpack.c.l.b16 %v6128
    %v6251 = vunpack.c.h.b16 %v6128
    %v6252 = vunpack.c.l.b16 %v6129
    %v6253 = vunpack.c.h.b16 %v6129
    %v6254 = vunpack.c.l.b16 %v6130
    %v6255 = vunpack.c.h.b16 %v6130
    %v6256 = vunpack.c.l.b16 %v6131
    %v6257 = vunpack.c.h.b16 %v6131
    %v6258 = vunpack.c.l.b16 %v6132
    %v6259 = vunpack.c.h.b16 %v6132
    %v6260 = vunpack.c.l.b16 %v6133
    %v6261 = vunpack.c.h.b16 %v6133
    %v6262 = vunpack.c.l.b16 %v6134
    %v6263 = vunpack.c.h.b16 %v6134
    %v6264 = vunpack.c.l.b16 %v6135
    %v6265 = vunpack.c.h.b16 %v6135
    %v6266 = vunpack.c.l.b16 %v6136
    %v6267 = vunpack.c.h.b16 %v6136
    %v6268 = vunpack.c.l.b16 %v6137
    %v6269 = vunpack.c.h.b16 %v6137
    %v6270 = vunpack.c.l.b16 %v6138
    %v6271 = vunpack.c.h.b16 %v6138
    %v6272 = vunpack.c.l.b16 %v6139
    %v6273 = vunpack.c.h.b16 %v6139
    %v6274 = vunpack.c.l.b16 %v6140
    %v6275 = vunpack.c.h.b16 %v6140
    %v6276 = vunpack.c.l.b16 %v6141
    %v6277 = vunpack.c.h.b16 %v6141
    %v6278 = vunpack.c.l.b16 %v6142
    %v6279 = vunpack.c.h.b16 %v6142
    %v6280 = vunpack.c.l.b16 %v6143
    %v6281 = vunpack.c.h.b16 %v6143
    %v6282 = vunpack.c.l.b16 %v6144
    %v6283 = vunpack.c.h.b16 %v6144
    %v6284 = vunpack.c.l.b16 %v6145
    %v6285 = vunpack.c.h.b16 %v6145
    %v6286 = vunpack.c.l.b16 %v6146
    %v6287 = vunpack.c.h.b16 %v6146
    %v6288 = vunpack.c.l.b16 %v6147
    %v6289 = vunpack.c.h.b16 %v6147
    %v6290 = vunpack.c.l.b16 %v6148
    %v6291 = vunpack.c.h.b16 %v6148
    %v6292 = vunpack.c.l.b16 %v6149
    %v6293 = vunpack.c.h.b16 %v6149
    %v6294 = vunpack.c.l.b16 %v6150
    %v6295 = vunpack.c.h.b16 %v6150
    %v6296 = vunpack.c.l.b16 %v6151
    %v6297 = vunpack.c.h.b16 %v6151
    %v6298 = vunpack.c.l.b16 %v6152
    %v6299 = vunpack.c.h.b16 %v6152
    %v6300 = vunpack.c.l.b16 %v6153
    %v6301 = vunpack.c.h.b16 %v6153
    %v6302 = vunpack.c.l.b16 %v6154
    %v6303 = vunpack.c.h.b16 %v6154
    %v6304 = vunpack.c.l.b16 %v6155
    %v6305 = vunpack.c.h.b16 %v6155
    %v6306 = vunpack.c.l.b16 %v6156
    %v6307 = vunpack.c.h.b16 %v6156
    %v6308 = vunpack.c.l.b16 %v6157
    %v6309 = vunpack.c.h.b16 %v6157
    %v6310 = vunpack.c.l.b16 %v6158
    %v6311 = vunpack.c.h.b16 %v6158
    %v6312 = vunpack.c.l.b16 %v6159
    %v6313 = vunpack.c.h.b16 %v6159
    %v6314 = vunpack.c.l.b16 %v6160
    %v6315 = vunpack.c.h.b16 %v6160
    %v6316 = vpack.c.b16 %v6220, %v6216
    %v6317 = vpack.c.b16 %v6221, %v6217
    %v6318 = vpack.c.b16 %v6222, %v6218
    %v6319 = vpack.c.b16 %v6223, %v6219
    %v6320 = vpack.c.b16 %v6228, %v6224
    %v6321 = vpack.c.b16 %v6229, %v6225
    %v6322 = vpack.c.b16 %v6230, %v6226
    %v6323 = vpack.c.b16 %v6231, %v6227
    %v6324 = vpack.c.b16 %v6236, %v6232
    %v6325 = vpack.c.b16 %v6237, %v6233
    %v6326 = vpack.c.b16 %v6238, %v6234
    %v6327 = vpack.c.b16 %v6239, %v6235
    %v6328 = vpack.c.b16 %v6244, %v6240
    %v6329 = vpack.c.b16 %v6245, %v6241
    %v6330 = vpack.c.b16 %v6246, %v6242
    %v6331 = vpack.c.b16 %v6247, %v6243
    %v6332 = vpack.c.b16 %v6252, %v6248
    %v6333 = vpack.c.b16 %v6253, %v6249
    %v6334 = vpack.c.b16 %v6254, %v6250
    %v6335 = vpack.c.b16 %v6255, %v6251
    %v6336 = vpack.c.b16 %v6260, %v6256
    %v6337 = vpack.c.b16 %v6261, %v6257
    %v6338 = vpack.c.b16 %v6262, %v6258
    %v6339 = vpack.c.b16 %v6263, %v6259
    %v6340 = vpack.c.b16 %v6268, %v6264
    %v6341 = vpack.c.b16 %v6269, %v6265
    %v6342 = vpack.c.b16 %v6270, %v6266
    %v6343 = vpack.c.b16 %v6271, %v6267
    %v6344 = vpack.c.b16 %v6276, %v6272
    %v6345 = vpack.c.b16 %v6277, %v6273
    %v6346 = vpack.c.b16 %v6278, %v6274
    %v6347 = vpack.c.b16 %v6279, %v6275
    %v6348 = vpack.c.b16 %v6284, %v6280
    %v6349 = vpack.c.b16 %v6285, %v6281
    %v6350 = vpack.c.b16 %v6286, %v6282
    %v6351 = vpack.c.b16 %v6287, %v6283
    %v6352 = vpack.c.b16 %v6292, %v6288
    %v6353 = vpack.c.b16 %v6293, %v6289
    %v6354 = vpack.c.b16 %v6294, %v6290
    %v6355 = vpack.c.b16 %v6295, %v6291
    %v6356 = vpack.c.b16 %v6300, %v6296
    %v6357 = vpack.c.b16 %v6301, %v6297
    %v6358 = vpack.c.b16 %v6302, %v6298
    %v6359 = vpack.c.b16 %v6303, %v6299
    %v6360 = vpack.c.b16 %v6308, %v6304
    %v6361 = vpack.c.b16 %v6309, %v6305
    %v6362 = vpack.c.b16 %v6310, %v6306
    %v6363 = vpack.c.b16 %v6311, %v6307
    %v6364 = vpack.c.b16 %v6312, %v6312
    %v6365 = vpack.c.b16 %v6313, %v6313
    %v6366 = vpack.c.b16 %v6314, %v6314
    %v6367 = vpack.c.b16 %v6315, %v6315
    %v6417 = vsel %vm1601, %v6164, 0
    %v6420 = vsel %vm55, %v6364, 0
    %v6423 = vsel %vm55, %v6365, 0
    %v6426 = vsel %vm55, %v6366, 0
    %v6429 = vsel %vm55, %v6367, 0
    %6431 = vmatprep.subr.bf16.mxu0 %v6345
    %6432 = vmatpush1.bf16.msra.mxu0 %v6344
    %6433 = vmatprep.subr.bf16.mxu0 %v6341
    %6434 = vmatpush1.bf16.msra.mxu0 %v6340
    %6435 = vmatprep.subr.bf16.mxu0 %v6337
    %6436 = vmatpush1.bf16.msra.mxu0 %v6336
    %6437 = vmatprep.subr.bf16.mxu0 %v6333
    %6438 = vmatpush1.bf16.msra.mxu0 %v6332
    %6439 = vmatprep.subr.bf16.mxu0 %v6329
    %6440 = vmatpush1.bf16.msra.mxu0 %v6328
    %6441 = vmatprep.subr.bf16.mxu0 %v6325
    %6442 = vmatpush1.bf16.msra.mxu0 %v6324
    %6443 = vmatprep.subr.bf16.mxu0 %v6321
    %6444 = vmatpush1.bf16.msra.mxu0 %v6320
    %6445 = vmatprep.subr.bf16.mxu0 %v6317
    %6446 = vmatpush1.bf16.msra.mxu0 %v6316
    %6447 = vmatprep.subr.bf16.mxu0 0
    %6448 = vmatpush2.bf16.msra.mxu0 0
    %6449 = vmatprep.subr.bf16.mxu0 0
    %6450 = vmatpush2.bf16.msra.mxu0 0
    %6451 = vmatprep.subr.bf16.mxu0 0
    %6452 = vmatpush2.bf16.msra.mxu0 0
    %6453 = vmatprep.subr.bf16.mxu0 %v6423
    %6454 = vmatpush2.bf16.msra.mxu0 %v6420
    %6455 = vmatprep.subr.bf16.mxu0 %v6361
    %6456 = vmatpush2.bf16.msra.mxu0 %v6360
    %6457 = vmatprep.subr.bf16.mxu0 %v6357
    %6458 = vmatpush2.bf16.msra.mxu0 %v6356
    %6459 = vmatprep.subr.bf16.mxu0 %v6353
    %6460 = vmatpush2.bf16.msra.mxu0 %v6352
    %6461 = vmatprep.subr.bf16.mxu0 %v6349
    %6462 = vmatpush2.bf16.msra.mxu0 %v6348
    %6463 = vmatprep.mubr.bf16.mxu0 %v6417
    %6464 = vmatmul.mubr.bf16.gmra.mxu0 %v6163
    %v6465 = vpop.f32.mrf.mxu0
    %v6466 = vadd.f32 0.0, %v6465
    %v6467 = vpop.f32.mrf.mxu0
    %v6468 = vadd.f32 0.0, %v6467
    %v6469 = vpop.f32.mrf.mxu0
    %v6470 = vpop.f32.mrf.mxu0
    %6471 = vdwg.mxu0
    %6472 = vmatprep.subr.bf16.mxu0 %v6347
    %6473 = vmatpush1.bf16.msra.mxu0 %v6346
    %6474 = vmatprep.subr.bf16.mxu0 %v6343
    %6475 = vmatpush1.bf16.msra.mxu0 %v6342
    %6476 = vmatprep.subr.bf16.mxu0 %v6339
    %6477 = vmatpush1.bf16.msra.mxu0 %v6338
    %6478 = vmatprep.subr.bf16.mxu0 %v6335
    %6479 = vmatpush1.bf16.msra.mxu0 %v6334
    %6480 = vmatprep.subr.bf16.mxu0 %v6331
    %6481 = vmatpush1.bf16.msra.mxu0 %v6330
    %6482 = vmatprep.subr.bf16.mxu0 %v6327
    %6483 = vmatpush1.bf16.msra.mxu0 %v6326
    %6484 = vmatprep.subr.bf16.mxu0 %v6323
    %6485 = vmatpush1.bf16.msra.mxu0 %v6322
    %6486 = vmatprep.subr.bf16.mxu0 %v6319
    %6487 = vmatpush1.bf16.msra.mxu0 %v6318
    %6488 = vmatprep.subr.bf16.mxu0 0
    %6489 = vmatpush2.bf16.msra.mxu0 0
    %6490 = vmatprep.subr.bf16.mxu0 0
    %6491 = vmatpush2.bf16.msra.mxu0 0
    %6492 = vmatprep.subr.bf16.mxu0 0
    %6493 = vmatpush2.bf16.msra.mxu0 0
    %6494 = vmatprep.subr.bf16.mxu0 %v6429
    %6495 = vmatpush2.bf16.msra.mxu0 %v6426
    %6496 = vmatprep.subr.bf16.mxu0 %v6363
    %6497 = vmatpush2.bf16.msra.mxu0 %v6362
    %6498 = vmatprep.subr.bf16.mxu0 %v6359
    %6499 = vmatpush2.bf16.msra.mxu0 %v6358
    %6500 = vmatprep.subr.bf16.mxu0 %v6355
    %6501 = vmatpush2.bf16.msra.mxu0 %v6354
    %6502 = vmatprep.subr.bf16.mxu0 %v6351
    %6503 = vmatpush2.bf16.msra.mxu0 %v6350
    %6504 = vmatprep.mubr.bf16.mxu0 %v6417
    %6505 = vmatmul.mubr.bf16.gmra.mxu0 %v6163
    %v6506 = vpop.f32.mrf.mxu0
    %v6507 = vadd.f32 0.0, %v6506
    %v6508 = vpop.f32.mrf.mxu0
    %v6509 = vadd.f32 0.0, %v6508
    %v6510 = vpop.f32.mrf.mxu0
    %v6511 = vpop.f32.mrf.mxu0
    %6512 = vdwg.mxu0
    %v6513 = vadd.f32 %v6102, %v6466
    %v6514 = vadd.f32 %v6103, %v6468
    %v6515 = vadd.f32 %v6104, %v6507
    %v6516 = vadd.f32 %v6105, %v6509
    %v6517 = vld [vmem:[#allocation3 + $0x30] sm:$0x3]
    %v6518 = vld [vmem:[#allocation3 + $0x38] sm:$0x3]
    %v6519 = vpack.c.bf16 %v6517, %v6517
    %v6520 = vpack.c.bf16 %v6518, %v6518
    %s6521 = scalar_lea.vmem %s5, 4800
    %v6522 = vld [vmem:[%s6521] sm:$0xff]
    %v6523 = vld [vmem:[%s6521 + $0x8] sm:$0xff]
    %v6524 = vld [vmem:[%s6521 + $0x10] sm:$0xff]
    %v6525 = vld [vmem:[%s6521 + $0x18] sm:$0xff]
    %v6526 = vld [vmem:[%s6521 + $0x20] sm:$0xff]
    %v6527 = vld [vmem:[%s6521 + $0x28] sm:$0xff]
    %v6528 = vld [vmem:[%s6521 + $0x30] sm:$0xff]
    %v6529 = vld [vmem:[%s6521 + $0x38] sm:$0xff]
    %v6530 = vld [vmem:[%s6521 + $0x40] sm:$0xff]
    %v6531 = vld [vmem:[%s6521 + $0x48] sm:$0xff]
    %v6532 = vld [vmem:[%s6521 + $0x50] sm:$0xff]
    %v6533 = vld [vmem:[%s6521 + $0x58] sm:$0xff]
    %v6534 = vld [vmem:[%s6521 + $0x60] sm:$0xff]
    %v6535 = vld [vmem:[%s6521 + $0x68] sm:$0xff]
    %v6536 = vld [vmem:[%s6521 + $0x70] sm:$0xff]
    %v6537 = vld [vmem:[%s6521 + $0x78] sm:$0xff]
    %v6538 = vld [vmem:[%s6521 + $0x80] sm:$0xff]
    %v6539 = vld [vmem:[%s6521 + $0x88] sm:$0xff]
    %v6540 = vld [vmem:[%s6521 + $0x90] sm:$0xff]
    %v6541 = vld [vmem:[%s6521 + $0x98] sm:$0xff]
    %v6542 = vld [vmem:[%s6521 + $0xa0] sm:$0xff]
    %v6543 = vld [vmem:[%s6521 + $0xa8] sm:$0xff]
    %v6544 = vld [vmem:[%s6521 + $0xb0] sm:$0xff]
    %v6545 = vld [vmem:[%s6521 + $0xb8] sm:$0xff]
    %v6546 = vld [vmem:[%s6521 + $0xc0] sm:$0xff]
    %v6547 = vld [vmem:[%s6521 + $0xc8] sm:$0xff]
    %v6548 = vld [vmem:[%s6521 + $0xd0] sm:$0xff]
    %v6549 = vld [vmem:[%s6521 + $0xd8] sm:$0xff]
    %v6550 = vld [vmem:[%s6521 + $0xe0] sm:$0xff]
    %v6551 = vld [vmem:[%s6521 + $0xe8] sm:$0xff]
    %v6552 = vld [vmem:[%s6521 + $0xf0] sm:$0xff]
    %v6553 = vld [vmem:[%s6521 + $0xf8] sm:$0xff]
    %v6554 = vld [vmem:[%s6521 + $0x100] sm:$0xff]
    %v6555 = vld [vmem:[%s6521 + $0x108] sm:$0xff]
    %v6556 = vld [vmem:[%s6521 + $0x110] sm:$0xff]
    %v6557 = vld [vmem:[%s6521 + $0x118] sm:$0xff]
    %v6558 = vld [vmem:[%s6521 + $0x120] sm:$0xff]
    %v6559 = vld [vmem:[%s6521 + $0x128] sm:$0xff]
    %v6560 = vld [vmem:[%s6521 + $0x130] sm:$0xff]
    %v6561 = vld [vmem:[%s6521 + $0x138] sm:$0xff]
    %v6562 = vld [vmem:[%s6521 + $0x140] sm:$0xff]
    %v6563 = vld [vmem:[%s6521 + $0x148] sm:$0xff]
    %v6564 = vld [vmem:[%s6521 + $0x150] sm:$0xff]
    %v6565 = vld [vmem:[%s6521 + $0x158] sm:$0xff]
    %v6566 = vld [vmem:[%s6521 + $0x160] sm:$0xff]
    %v6567 = vld [vmem:[%s6521 + $0x168] sm:$0xff]
    %v6568 = vld [vmem:[%s6521 + $0x170] sm:$0xff]
    %v6569 = vld [vmem:[%s6521 + $0x178] sm:$0xff]
    %v6570 = vld [vmem:[%s6521 + $0x180] sm:$0x33]
    %v6571 = vld [vmem:[%s6521 + $0x188] sm:$0x33]
    %v6622 = vunpack.c.l.b16 %v6522
    %v6623 = vunpack.c.h.b16 %v6522
    %v6624 = vunpack.c.l.b16 %v6523
    %v6625 = vunpack.c.h.b16 %v6523
    %v6626 = vunpack.c.l.b16 %v6524
    %v6627 = vunpack.c.h.b16 %v6524
    %v6628 = vunpack.c.l.b16 %v6525
    %v6629 = vunpack.c.h.b16 %v6525
    %v6630 = vunpack.c.l.b16 %v6526
    %v6631 = vunpack.c.h.b16 %v6526
    %v6632 = vunpack.c.l.b16 %v6527
    %v6633 = vunpack.c.h.b16 %v6527
    %v6634 = vunpack.c.l.b16 %v6528
    %v6635 = vunpack.c.h.b16 %v6528
    %v6636 = vunpack.c.l.b16 %v6529
    %v6637 = vunpack.c.h.b16 %v6529
    %v6638 = vunpack.c.l.b16 %v6530
    %v6639 = vunpack.c.h.b16 %v6530
    %v6640 = vunpack.c.l.b16 %v6531
    %v6641 = vunpack.c.h.b16 %v6531
    %v6642 = vunpack.c.l.b16 %v6532
    %v6643 = vunpack.c.h.b16 %v6532
    %v6644 = vunpack.c.l.b16 %v6533
    %v6645 = vunpack.c.h.b16 %v6533
    %v6646 = vunpack.c.l.b16 %v6534
    %v6647 = vunpack.c.h.b16 %v6534
    %v6648 = vunpack.c.l.b16 %v6535
    %v6649 = vunpack.c.h.b16 %v6535
    %v6650 = vunpack.c.l.b16 %v6536
    %v6651 = vunpack.c.h.b16 %v6536
    %v6652 = vunpack.c.l.b16 %v6537
    %v6653 = vunpack.c.h.b16 %v6537
    %v6654 = vunpack.c.l.b16 %v6538
    %v6655 = vunpack.c.h.b16 %v6538
    %v6656 = vunpack.c.l.b16 %v6539
    %v6657 = vunpack.c.h.b16 %v6539
    %v6658 = vunpack.c.l.b16 %v6540
    %v6659 = vunpack.c.h.b16 %v6540
    %v6660 = vunpack.c.l.b16 %v6541
    %v6661 = vunpack.c.h.b16 %v6541
    %v6662 = vunpack.c.l.b16 %v6542
    %v6663 = vunpack.c.h.b16 %v6542
    %v6664 = vunpack.c.l.b16 %v6543
    %v6665 = vunpack.c.h.b16 %v6543
    %v6666 = vunpack.c.l.b16 %v6544
    %v6667 = vunpack.c.h.b16 %v6544
    %v6668 = vunpack.c.l.b16 %v6545
    %v6669 = vunpack.c.h.b16 %v6545
    %v6670 = vunpack.c.l.b16 %v6546
    %v6671 = vunpack.c.h.b16 %v6546
    %v6672 = vunpack.c.l.b16 %v6547
    %v6673 = vunpack.c.h.b16 %v6547
    %v6674 = vunpack.c.l.b16 %v6548
    %v6675 = vunpack.c.h.b16 %v6548
    %v6676 = vunpack.c.l.b16 %v6549
    %v6677 = vunpack.c.h.b16 %v6549
    %v6678 = vunpack.c.l.b16 %v6550
    %v6679 = vunpack.c.h.b16 %v6550
    %v6680 = vunpack.c.l.b16 %v6551
    %v6681 = vunpack.c.h.b16 %v6551
    %v6682 = vunpack.c.l.b16 %v6552
    %v6683 = vunpack.c.h.b16 %v6552
    %v6684 = vunpack.c.l.b16 %v6553
    %v6685 = vunpack.c.h.b16 %v6553
    %v6686 = vunpack.c.l.b16 %v6554
    %v6687 = vunpack.c.h.b16 %v6554
    %v6688 = vunpack.c.l.b16 %v6555
    %v6689 = vunpack.c.h.b16 %v6555
    %v6690 = vunpack.c.l.b16 %v6556
    %v6691 = vunpack.c.h.b16 %v6556
    %v6692 = vunpack.c.l.b16 %v6557
    %v6693 = vunpack.c.h.b16 %v6557
    %v6694 = vunpack.c.l.b16 %v6558
    %v6695 = vunpack.c.h.b16 %v6558
    %v6696 = vunpack.c.l.b16 %v6559
    %v6697 = vunpack.c.h.b16 %v6559
    %v6698 = vunpack.c.l.b16 %v6560
    %v6699 = vunpack.c.h.b16 %v6560
    %v6700 = vunpack.c.l.b16 %v6561
    %v6701 = vunpack.c.h.b16 %v6561
    %v6702 = vunpack.c.l.b16 %v6562
    %v6703 = vunpack.c.h.b16 %v6562
    %v6704 = vunpack.c.l.b16 %v6563
    %v6705 = vunpack.c.h.b16 %v6563
    %v6706 = vunpack.c.l.b16 %v6564
    %v6707 = vunpack.c.h.b16 %v6564
    %v6708 = vunpack.c.l.b16 %v6565
    %v6709 = vunpack.c.h.b16 %v6565
    %v6710 = vunpack.c.l.b16 %v6566
    %v6711 = vunpack.c.h.b16 %v6566
    %v6712 = vunpack.c.l.b16 %v6567
    %v6713 = vunpack.c.h.b16 %v6567
    %v6714 = vunpack.c.l.b16 %v6568
    %v6715 = vunpack.c.h.b16 %v6568
    %v6716 = vunpack.c.l.b16 %v6569
    %v6717 = vunpack.c.h.b16 %v6569
    %v6718 = vunpack.c.l.b16 %v6570
    %v6719 = vunpack.c.h.b16 %v6570
    %v6720 = vunpack.c.l.b16 %v6571
    %v6721 = vunpack.c.h.b16 %v6571
    %v6722 = vpack.c.b16 %v6626, %v6622
    %v6723 = vpack.c.b16 %v6627, %v6623
    %v6724 = vpack.c.b16 %v6628, %v6624
    %v6725 = vpack.c.b16 %v6629, %v6625
    %v6726 = vpack.c.b16 %v6634, %v6630
    %v6727 = vpack.c.b16 %v6635, %v6631
    %v6728 = vpack.c.b16 %v6636, %v6632
    %v6729 = vpack.c.b16 %v6637, %v6633
    %v6730 = vpack.c.b16 %v6642, %v6638
    %v6731 = vpack.c.b16 %v6643, %v6639
    %v6732 = vpack.c.b16 %v6644, %v6640
    %v6733 = vpack.c.b16 %v6645, %v6641
    %v6734 = vpack.c.b16 %v6650, %v6646
    %v6735 = vpack.c.b16 %v6651, %v6647
    %v6736 = vpack.c.b16 %v6652, %v6648
    %v6737 = vpack.c.b16 %v6653, %v6649
    %v6738 = vpack.c.b16 %v6658, %v6654
    %v6739 = vpack.c.b16 %v6659, %v6655
    %v6740 = vpack.c.b16 %v6660, %v6656
    %v6741 = vpack.c.b16 %v6661, %v6657
    %v6742 = vpack.c.b16 %v6666, %v6662
    %v6743 = vpack.c.b16 %v6667, %v6663
    %v6744 = vpack.c.b16 %v6668, %v6664
    %v6745 = vpack.c.b16 %v6669, %v6665
    %v6746 = vpack.c.b16 %v6674, %v6670
    %v6747 = vpack.c.b16 %v6675, %v6671
    %v6748 = vpack.c.b16 %v6676, %v6672
    %v6749 = vpack.c.b16 %v6677, %v6673
    %v6750 = vpack.c.b16 %v6682, %v6678
    %v6751 = vpack.c.b16 %v6683, %v6679
    %v6752 = vpack.c.b16 %v6684, %v6680
    %v6753 = vpack.c.b16 %v6685, %v6681
    %v6754 = vpack.c.b16 %v6690, %v6686
    %v6755 = vpack.c.b16 %v6691, %v6687
    %v6756 = vpack.c.b16 %v6692, %v6688
    %v6757 = vpack.c.b16 %v6693, %v6689
    %v6758 = vpack.c.b16 %v6698, %v6694
    %v6759 = vpack.c.b16 %v6699, %v6695
    %v6760 = vpack.c.b16 %v6700, %v6696
    %v6761 = vpack.c.b16 %v6701, %v6697
    %v6762 = vpack.c.b16 %v6706, %v6702
    %v6763 = vpack.c.b16 %v6707, %v6703
    %v6764 = vpack.c.b16 %v6708, %v6704
    %v6765 = vpack.c.b16 %v6709, %v6705
    %v6766 = vpack.c.b16 %v6714, %v6710
    %v6767 = vpack.c.b16 %v6715, %v6711
    %v6768 = vpack.c.b16 %v6716, %v6712
    %v6769 = vpack.c.b16 %v6717, %v6713
    %v6770 = vpack.c.b16 %v6718, %v6718
    %v6771 = vpack.c.b16 %v6719, %v6719
    %v6772 = vpack.c.b16 %v6720, %v6720
    %v6773 = vpack.c.b16 %v6721, %v6721
    %v6823 = vsel %vm1601, %v6520, 0
    %v6826 = vsel %vm55, %v6770, 0
    %v6829 = vsel %vm55, %v6771, 0
    %v6832 = vsel %vm55, %v6772, 0
    %v6835 = vsel %vm55, %v6773, 0
    %6837 = vmatprep.subr.bf16.mxu0 %v6751
    %6838 = vmatpush1.bf16.msra.mxu0 %v6750
    %6839 = vmatprep.subr.bf16.mxu0 %v6747
    %6840 = vmatpush1.bf16.msra.mxu0 %v6746
    %6841 = vmatprep.subr.bf16.mxu0 %v6743
    %6842 = vmatpush1.bf16.msra.mxu0 %v6742
    %6843 = vmatprep.subr.bf16.mxu0 %v6739
    %6844 = vmatpush1.bf16.msra.mxu0 %v6738
    %6845 = vmatprep.subr.bf16.mxu0 %v6735
    %6846 = vmatpush1.bf16.msra.mxu0 %v6734
    %6847 = vmatprep.subr.bf16.mxu0 %v6731
    %6848 = vmatpush1.bf16.msra.mxu0 %v6730
    %6849 = vmatprep.subr.bf16.mxu0 %v6727
    %6850 = vmatpush1.bf16.msra.mxu0 %v6726
    %6851 = vmatprep.subr.bf16.mxu0 %v6723
    %6852 = vmatpush1.bf16.msra.mxu0 %v6722
    %6853 = vmatprep.subr.bf16.mxu0 0
    %6854 = vmatpush2.bf16.msra.mxu0 0
    %6855 = vmatprep.subr.bf16.mxu0 0
    %6856 = vmatpush2.bf16.msra.mxu0 0
    %6857 = vmatprep.subr.bf16.mxu0 0
    %6858 = vmatpush2.bf16.msra.mxu0 0
    %6859 = vmatprep.subr.bf16.mxu0 %v6829
    %6860 = vmatpush2.bf16.msra.mxu0 %v6826
    %6861 = vmatprep.subr.bf16.mxu0 %v6767
    %6862 = vmatpush2.bf16.msra.mxu0 %v6766
    %6863 = vmatprep.subr.bf16.mxu0 %v6763
    %6864 = vmatpush2.bf16.msra.mxu0 %v6762
    %6865 = vmatprep.subr.bf16.mxu0 %v6759
    %6866 = vmatpush2.bf16.msra.mxu0 %v6758
    %6867 = vmatprep.subr.bf16.mxu0 %v6755
    %6868 = vmatpush2.bf16.msra.mxu0 %v6754
    %6869 = vmatprep.mubr.bf16.mxu0 %v6823
    %6870 = vmatmul.mubr.bf16.gmra.mxu0 %v6519
    %v6871 = vpop.f32.mrf.mxu0
    %v6872 = vadd.f32 0.0, %v6871
    %v6873 = vpop.f32.mrf.mxu0
    %v6874 = vadd.f32 0.0, %v6873
    %v6875 = vpop.f32.mrf.mxu0
    %v6876 = vpop.f32.mrf.mxu0
    %6877 = vdwg.mxu0
    %6878 = vmatprep.subr.bf16.mxu0 %v6753
    %6879 = vmatpush1.bf16.msra.mxu0 %v6752
    %6880 = vmatprep.subr.bf16.mxu0 %v6749
    %6881 = vmatpush1.bf16.msra.mxu0 %v6748
    %6882 = vmatprep.subr.bf16.mxu0 %v6745
    %6883 = vmatpush1.bf16.msra.mxu0 %v6744
    %6884 = vmatprep.subr.bf16.mxu0 %v6741
    %6885 = vmatpush1.bf16.msra.mxu0 %v6740
    %6886 = vmatprep.subr.bf16.mxu0 %v6737
    %6887 = vmatpush1.bf16.msra.mxu0 %v6736
    %6888 = vmatprep.subr.bf16.mxu0 %v6733
    %6889 = vmatpush1.bf16.msra.mxu0 %v6732
    %6890 = vmatprep.subr.bf16.mxu0 %v6729
    %6891 = vmatpush1.bf16.msra.mxu0 %v6728
    %6892 = vmatprep.subr.bf16.mxu0 %v6725
    %6893 = vmatpush1.bf16.msra.mxu0 %v6724
    %6894 = vmatprep.subr.bf16.mxu0 0
    %6895 = vmatpush2.bf16.msra.mxu0 0
    %6896 = vmatprep.subr.bf16.mxu0 0
    %6897 = vmatpush2.bf16.msra.mxu0 0
    %6898 = vmatprep.subr.bf16.mxu0 0
    %6899 = vmatpush2.bf16.msra.mxu0 0
    %6900 = vmatprep.subr.bf16.mxu0 %v6835
    %6901 = vmatpush2.bf16.msra.mxu0 %v6832
    %6902 = vmatprep.subr.bf16.mxu0 %v6769
    %6903 = vmatpush2.bf16.msra.mxu0 %v6768
    %6904 = vmatprep.subr.bf16.mxu0 %v6765
    %6905 = vmatpush2.bf16.msra.mxu0 %v6764
    %6906 = vmatprep.subr.bf16.mxu0 %v6761
    %6907 = vmatpush2.bf16.msra.mxu0 %v6760
    %6908 = vmatprep.subr.bf16.mxu0 %v6757
    %6909 = vmatpush2.bf16.msra.mxu0 %v6756
    %6910 = vmatprep.mubr.bf16.mxu0 %v6823
    %6911 = vmatmul.mubr.bf16.gmra.mxu0 %v6519
    %v6912 = vpop.f32.mrf.mxu0
    %v6913 = vadd.f32 0.0, %v6912
    %v6914 = vpop.f32.mrf.mxu0
    %v6915 = vadd.f32 0.0, %v6914
    %v6916 = vpop.f32.mrf.mxu0
    %v6917 = vpop.f32.mrf.mxu0
    %6918 = vdwg.mxu0
    %v6919 = vadd.f32 %v6513, %v6872
    %v6920 = vadd.f32 %v6514, %v6874
    %v6921 = vadd.f32 %v6515, %v6913
    %v6922 = vadd.f32 %v6516, %v6915
    %v6923 = vld [vmem:[#allocation3 + $0x30] sm:$0xc]
    %v6924 = vld [vmem:[#allocation3 + $0x38] sm:$0xc]
    %v6925 = vpack.c.bf16 %v6923, %v6923
    %v6926 = vpack.c.bf16 %v6924, %v6924
    %s6927 = scalar_lea.vmem %s5, 5200
    %v6928 = vld [vmem:[%s6927] sm:$0xff]
    %v6929 = vld [vmem:[%s6927 + $0x8] sm:$0xff]
    %v6930 = vld [vmem:[%s6927 + $0x10] sm:$0xff]
    %v6931 = vld [vmem:[%s6927 + $0x18] sm:$0xff]
    %v6932 = vld [vmem:[%s6927 + $0x20] sm:$0xff]
    %v6933 = vld [vmem:[%s6927 + $0x28] sm:$0xff]
    %v6934 = vld [vmem:[%s6927 + $0x30] sm:$0xff]
    %v6935 = vld [vmem:[%s6927 + $0x38] sm:$0xff]
    %v6936 = vld [vmem:[%s6927 + $0x40] sm:$0xff]
    %v6937 = vld [vmem:[%s6927 + $0x48] sm:$0xff]
    %v6938 = vld [vmem:[%s6927 + $0x50] sm:$0xff]
    %v6939 = vld [vmem:[%s6927 + $0x58] sm:$0xff]
    %v6940 = vld [vmem:[%s6927 + $0x60] sm:$0xff]
    %v6941 = vld [vmem:[%s6927 + $0x68] sm:$0xff]
    %v6942 = vld [vmem:[%s6927 + $0x70] sm:$0xff]
    %v6943 = vld [vmem:[%s6927 + $0x78] sm:$0xff]
    %v6944 = vld [vmem:[%s6927 + $0x80] sm:$0xff]
    %v6945 = vld [vmem:[%s6927 + $0x88] sm:$0xff]
    %v6946 = vld [vmem:[%s6927 + $0x90] sm:$0xff]
    %v6947 = vld [vmem:[%s6927 + $0x98] sm:$0xff]
    %v6948 = vld [vmem:[%s6927 + $0xa0] sm:$0xff]
    %v6949 = vld [vmem:[%s6927 + $0xa8] sm:$0xff]
    %v6950 = vld [vmem:[%s6927 + $0xb0] sm:$0xff]
    %v6951 = vld [vmem:[%s6927 + $0xb8] sm:$0xff]
    %v6952 = vld [vmem:[%s6927 + $0xc0] sm:$0xff]
    %v6953 = vld [vmem:[%s6927 + $0xc8] sm:$0xff]
    %v6954 = vld [vmem:[%s6927 + $0xd0] sm:$0xff]
    %v6955 = vld [vmem:[%s6927 + $0xd8] sm:$0xff]
    %v6956 = vld [vmem:[%s6927 + $0xe0] sm:$0xff]
    %v6957 = vld [vmem:[%s6927 + $0xe8] sm:$0xff]
    %v6958 = vld [vmem:[%s6927 + $0xf0] sm:$0xff]
    %v6959 = vld [vmem:[%s6927 + $0xf8] sm:$0xff]
    %v6960 = vld [vmem:[%s6927 + $0x100] sm:$0xff]
    %v6961 = vld [vmem:[%s6927 + $0x108] sm:$0xff]
    %v6962 = vld [vmem:[%s6927 + $0x110] sm:$0xff]
    %v6963 = vld [vmem:[%s6927 + $0x118] sm:$0xff]
    %v6964 = vld [vmem:[%s6927 + $0x120] sm:$0xff]
    %v6965 = vld [vmem:[%s6927 + $0x128] sm:$0xff]
    %v6966 = vld [vmem:[%s6927 + $0x130] sm:$0xff]
    %v6967 = vld [vmem:[%s6927 + $0x138] sm:$0xff]
    %v6968 = vld [vmem:[%s6927 + $0x140] sm:$0xff]
    %v6969 = vld [vmem:[%s6927 + $0x148] sm:$0xff]
    %v6970 = vld [vmem:[%s6927 + $0x150] sm:$0xff]
    %v6971 = vld [vmem:[%s6927 + $0x158] sm:$0xff]
    %v6972 = vld [vmem:[%s6927 + $0x160] sm:$0xff]
    %v6973 = vld [vmem:[%s6927 + $0x168] sm:$0xff]
    %v6974 = vld [vmem:[%s6927 + $0x170] sm:$0xff]
    %v6975 = vld [vmem:[%s6927 + $0x178] sm:$0xff]
    %v6976 = vld [vmem:[%s6927 + $0x180] sm:$0x33]
    %v6977 = vld [vmem:[%s6927 + $0x188] sm:$0x33]
    %v6980 = vrot.slane %v6925, 1
    %v6981 = vrot.slane %v6926, 1
    %v7033 = vunpack.c.l.b16 %v6928
    %v7034 = vunpack.c.h.b16 %v6928
    %v7035 = vunpack.c.l.b16 %v6929
    %v7036 = vunpack.c.h.b16 %v6929
    %v7037 = vunpack.c.l.b16 %v6930
    %v7038 = vunpack.c.h.b16 %v6930
    %v7039 = vunpack.c.l.b16 %v6931
    %v7040 = vunpack.c.h.b16 %v6931
    %v7041 = vunpack.c.l.b16 %v6932
    %v7042 = vunpack.c.h.b16 %v6932
    %v7043 = vunpack.c.l.b16 %v6933
    %v7044 = vunpack.c.h.b16 %v6933
    %v7045 = vunpack.c.l.b16 %v6934
    %v7046 = vunpack.c.h.b16 %v6934
    %v7047 = vunpack.c.l.b16 %v6935
    %v7048 = vunpack.c.h.b16 %v6935
    %v7049 = vunpack.c.l.b16 %v6936
    %v7050 = vunpack.c.h.b16 %v6936
    %v7051 = vunpack.c.l.b16 %v6937
    %v7052 = vunpack.c.h.b16 %v6937
    %v7053 = vunpack.c.l.b16 %v6938
    %v7054 = vunpack.c.h.b16 %v6938
    %v7055 = vunpack.c.l.b16 %v6939
    %v7056 = vunpack.c.h.b16 %v6939
    %v7057 = vunpack.c.l.b16 %v6940
    %v7058 = vunpack.c.h.b16 %v6940
    %v7059 = vunpack.c.l.b16 %v6941
    %v7060 = vunpack.c.h.b16 %v6941
    %v7061 = vunpack.c.l.b16 %v6942
    %v7062 = vunpack.c.h.b16 %v6942
    %v7063 = vunpack.c.l.b16 %v6943
    %v7064 = vunpack.c.h.b16 %v6943
    %v7065 = vunpack.c.l.b16 %v6944
    %v7066 = vunpack.c.h.b16 %v6944
    %v7067 = vunpack.c.l.b16 %v6945
    %v7068 = vunpack.c.h.b16 %v6945
    %v7069 = vunpack.c.l.b16 %v6946
    %v7070 = vunpack.c.h.b16 %v6946
    %v7071 = vunpack.c.l.b16 %v6947
    %v7072 = vunpack.c.h.b16 %v6947
    %v7073 = vunpack.c.l.b16 %v6948
    %v7074 = vunpack.c.h.b16 %v6948
    %v7075 = vunpack.c.l.b16 %v6949
    %v7076 = vunpack.c.h.b16 %v6949
    %v7077 = vunpack.c.l.b16 %v6950
    %v7078 = vunpack.c.h.b16 %v6950
    %v7079 = vunpack.c.l.b16 %v6951
    %v7080 = vunpack.c.h.b16 %v6951
    %v7081 = vunpack.c.l.b16 %v6952
    %v7082 = vunpack.c.h.b16 %v6952
    %v7083 = vunpack.c.l.b16 %v6953
    %v7084 = vunpack.c.h.b16 %v6953
    %v7085 = vunpack.c.l.b16 %v6954
    %v7086 = vunpack.c.h.b16 %v6954
    %v7087 = vunpack.c.l.b16 %v6955
    %v7088 = vunpack.c.h.b16 %v6955
    %v7089 = vunpack.c.l.b16 %v6956
    %v7090 = vunpack.c.h.b16 %v6956
    %v7091 = vunpack.c.l.b16 %v6957
    %v7092 = vunpack.c.h.b16 %v6957
    %v7093 = vunpack.c.l.b16 %v6958
    %v7094 = vunpack.c.h.b16 %v6958
    %v7095 = vunpack.c.l.b16 %v6959
    %v7096 = vunpack.c.h.b16 %v6959
    %v7097 = vunpack.c.l.b16 %v6960
    %v7098 = vunpack.c.h.b16 %v6960
    %v7099 = vunpack.c.l.b16 %v6961
    %v7100 = vunpack.c.h.b16 %v6961
    %v7101 = vunpack.c.l.b16 %v6962
    %v7102 = vunpack.c.h.b16 %v6962
    %v7103 = vunpack.c.l.b16 %v6963
    %v7104 = vunpack.c.h.b16 %v6963
    %v7105 = vunpack.c.l.b16 %v6964
    %v7106 = vunpack.c.h.b16 %v6964
    %v7107 = vunpack.c.l.b16 %v6965
    %v7108 = vunpack.c.h.b16 %v6965
    %v7109 = vunpack.c.l.b16 %v6966
    %v7110 = vunpack.c.h.b16 %v6966
    %v7111 = vunpack.c.l.b16 %v6967
    %v7112 = vunpack.c.h.b16 %v6967
    %v7113 = vunpack.c.l.b16 %v6968
    %v7114 = vunpack.c.h.b16 %v6968
    %v7115 = vunpack.c.l.b16 %v6969
    %v7116 = vunpack.c.h.b16 %v6969
    %v7117 = vunpack.c.l.b16 %v6970
    %v7118 = vunpack.c.h.b16 %v6970
    %v7119 = vunpack.c.l.b16 %v6971
    %v7120 = vunpack.c.h.b16 %v6971
    %v7121 = vunpack.c.l.b16 %v6972
    %v7122 = vunpack.c.h.b16 %v6972
    %v7123 = vunpack.c.l.b16 %v6973
    %v7124 = vunpack.c.h.b16 %v6973
    %v7125 = vunpack.c.l.b16 %v6974
    %v7126 = vunpack.c.h.b16 %v6974
    %v7127 = vunpack.c.l.b16 %v6975
    %v7128 = vunpack.c.h.b16 %v6975
    %v7129 = vunpack.c.l.b16 %v6976
    %v7130 = vunpack.c.h.b16 %v6976
    %v7131 = vunpack.c.l.b16 %v6977
    %v7132 = vunpack.c.h.b16 %v6977
    %v7133 = vpack.c.b16 %v7037, %v7033
    %v7134 = vpack.c.b16 %v7038, %v7034
    %v7135 = vpack.c.b16 %v7039, %v7035
    %v7136 = vpack.c.b16 %v7040, %v7036
    %v7137 = vpack.c.b16 %v7045, %v7041
    %v7138 = vpack.c.b16 %v7046, %v7042
    %v7139 = vpack.c.b16 %v7047, %v7043
    %v7140 = vpack.c.b16 %v7048, %v7044
    %v7141 = vpack.c.b16 %v7053, %v7049
    %v7142 = vpack.c.b16 %v7054, %v7050
    %v7143 = vpack.c.b16 %v7055, %v7051
    %v7144 = vpack.c.b16 %v7056, %v7052
    %v7145 = vpack.c.b16 %v7061, %v7057
    %v7146 = vpack.c.b16 %v7062, %v7058
    %v7147 = vpack.c.b16 %v7063, %v7059
    %v7148 = vpack.c.b16 %v7064, %v7060
    %v7149 = vpack.c.b16 %v7069, %v7065
    %v7150 = vpack.c.b16 %v7070, %v7066
    %v7151 = vpack.c.b16 %v7071, %v7067
    %v7152 = vpack.c.b16 %v7072, %v7068
    %v7153 = vpack.c.b16 %v7077, %v7073
    %v7154 = vpack.c.b16 %v7078, %v7074
    %v7155 = vpack.c.b16 %v7079, %v7075
    %v7156 = vpack.c.b16 %v7080, %v7076
    %v7157 = vpack.c.b16 %v7085, %v7081
    %v7158 = vpack.c.b16 %v7086, %v7082
    %v7159 = vpack.c.b16 %v7087, %v7083
    %v7160 = vpack.c.b16 %v7088, %v7084
    %v7161 = vpack.c.b16 %v7093, %v7089
    %v7162 = vpack.c.b16 %v7094, %v7090
    %v7163 = vpack.c.b16 %v7095, %v7091
    %v7164 = vpack.c.b16 %v7096, %v7092
    %v7165 = vpack.c.b16 %v7101, %v7097
    %v7166 = vpack.c.b16 %v7102, %v7098
    %v7167 = vpack.c.b16 %v7103, %v7099
    %v7168 = vpack.c.b16 %v7104, %v7100
    %v7169 = vpack.c.b16 %v7109, %v7105
    %v7170 = vpack.c.b16 %v7110, %v7106
    %v7171 = vpack.c.b16 %v7111, %v7107
    %v7172 = vpack.c.b16 %v7112, %v7108
    %v7173 = vpack.c.b16 %v7117, %v7113
    %v7174 = vpack.c.b16 %v7118, %v7114
    %v7175 = vpack.c.b16 %v7119, %v7115
    %v7176 = vpack.c.b16 %v7120, %v7116
    %v7177 = vpack.c.b16 %v7125, %v7121
    %v7178 = vpack.c.b16 %v7126, %v7122
    %v7179 = vpack.c.b16 %v7127, %v7123
    %v7180 = vpack.c.b16 %v7128, %v7124
    %v7181 = vpack.c.b16 %v7129, %v7129
    %v7182 = vpack.c.b16 %v7130, %v7130
    %v7183 = vpack.c.b16 %v7131, %v7131
    %v7184 = vpack.c.b16 %v7132, %v7132
    %v7234 = vsel %vm1601, %v6981, 0
    %v7237 = vsel %vm55, %v7181, 0
    %v7240 = vsel %vm55, %v7182, 0
    %v7243 = vsel %vm55, %v7183, 0
    %v7246 = vsel %vm55, %v7184, 0
    %7248 = vmatprep.subr.bf16.mxu0 %v7162
    %7249 = vmatpush1.bf16.msra.mxu0 %v7161
    %7250 = vmatprep.subr.bf16.mxu0 %v7158
    %7251 = vmatpush1.bf16.msra.mxu0 %v7157
    %7252 = vmatprep.subr.bf16.mxu0 %v7154
    %7253 = vmatpush1.bf16.msra.mxu0 %v7153
    %7254 = vmatprep.subr.bf16.mxu0 %v7150
    %7255 = vmatpush1.bf16.msra.mxu0 %v7149
    %7256 = vmatprep.subr.bf16.mxu0 %v7146
    %7257 = vmatpush1.bf16.msra.mxu0 %v7145
    %7258 = vmatprep.subr.bf16.mxu0 %v7142
    %7259 = vmatpush1.bf16.msra.mxu0 %v7141
    %7260 = vmatprep.subr.bf16.mxu0 %v7138
    %7261 = vmatpush1.bf16.msra.mxu0 %v7137
    %7262 = vmatprep.subr.bf16.mxu0 %v7134
    %7263 = vmatpush1.bf16.msra.mxu0 %v7133
    %7264 = vmatprep.subr.bf16.mxu0 0
    %7265 = vmatpush2.bf16.msra.mxu0 0
    %7266 = vmatprep.subr.bf16.mxu0 0
    %7267 = vmatpush2.bf16.msra.mxu0 0
    %7268 = vmatprep.subr.bf16.mxu0 0
    %7269 = vmatpush2.bf16.msra.mxu0 0
    %7270 = vmatprep.subr.bf16.mxu0 %v7240
    %7271 = vmatpush2.bf16.msra.mxu0 %v7237
    %7272 = vmatprep.subr.bf16.mxu0 %v7178
    %7273 = vmatpush2.bf16.msra.mxu0 %v7177
    %7274 = vmatprep.subr.bf16.mxu0 %v7174
    %7275 = vmatpush2.bf16.msra.mxu0 %v7173
    %7276 = vmatprep.subr.bf16.mxu0 %v7170
    %7277 = vmatpush2.bf16.msra.mxu0 %v7169
    %7278 = vmatprep.subr.bf16.mxu0 %v7166
    %7279 = vmatpush2.bf16.msra.mxu0 %v7165
    %7280 = vmatprep.mubr.bf16.mxu0 %v7234
    %7281 = vmatmul.mubr.bf16.gmra.mxu0 %v6980
    %v7282 = vpop.f32.mrf.mxu0
    %v7283 = vadd.f32 0.0, %v7282
    %v7284 = vpop.f32.mrf.mxu0
    %v7285 = vadd.f32 0.0, %v7284
    %v7286 = vpop.f32.mrf.mxu0
    %v7287 = vpop.f32.mrf.mxu0
    %7288 = vdwg.mxu0
    %7289 = vmatprep.subr.bf16.mxu0 %v7164
    %7290 = vmatpush1.bf16.msra.mxu0 %v7163
    %7291 = vmatprep.subr.bf16.mxu0 %v7160
    %7292 = vmatpush1.bf16.msra.mxu0 %v7159
    %7293 = vmatprep.subr.bf16.mxu0 %v7156
    %7294 = vmatpush1.bf16.msra.mxu0 %v7155
    %7295 = vmatprep.subr.bf16.mxu0 %v7152
    %7296 = vmatpush1.bf16.msra.mxu0 %v7151
    %7297 = vmatprep.subr.bf16.mxu0 %v7148
    %7298 = vmatpush1.bf16.msra.mxu0 %v7147
    %7299 = vmatprep.subr.bf16.mxu0 %v7144
    %7300 = vmatpush1.bf16.msra.mxu0 %v7143
    %7301 = vmatprep.subr.bf16.mxu0 %v7140
    %7302 = vmatpush1.bf16.msra.mxu0 %v7139
    %7303 = vmatprep.subr.bf16.mxu0 %v7136
    %7304 = vmatpush1.bf16.msra.mxu0 %v7135
    %7305 = vmatprep.subr.bf16.mxu0 0
    %7306 = vmatpush2.bf16.msra.mxu0 0
    %7307 = vmatprep.subr.bf16.mxu0 0
    %7308 = vmatpush2.bf16.msra.mxu0 0
    %7309 = vmatprep.subr.bf16.mxu0 0
    %7310 = vmatpush2.bf16.msra.mxu0 0
    %7311 = vmatprep.subr.bf16.mxu0 %v7246
    %7312 = vmatpush2.bf16.msra.mxu0 %v7243
    %7313 = vmatprep.subr.bf16.mxu0 %v7180
    %7314 = vmatpush2.bf16.msra.mxu0 %v7179
    %7315 = vmatprep.subr.bf16.mxu0 %v7176
    %7316 = vmatpush2.bf16.msra.mxu0 %v7175
    %7317 = vmatprep.subr.bf16.mxu0 %v7172
    %7318 = vmatpush2.bf16.msra.mxu0 %v7171
    %7319 = vmatprep.subr.bf16.mxu0 %v7168
    %7320 = vmatpush2.bf16.msra.mxu0 %v7167
    %7321 = vmatprep.mubr.bf16.mxu0 %v7234
    %7322 = vmatmul.mubr.bf16.gmra.mxu0 %v6980
    %v7323 = vpop.f32.mrf.mxu0
    %v7324 = vadd.f32 0.0, %v7323
    %v7325 = vpop.f32.mrf.mxu0
    %v7326 = vadd.f32 0.0, %v7325
    %v7327 = vpop.f32.mrf.mxu0
    %v7328 = vpop.f32.mrf.mxu0
    %7329 = vdwg.mxu0
    %v7330 = vadd.f32 %v6919, %v7283
    %v7331 = vadd.f32 %v6920, %v7285
    %v7332 = vadd.f32 %v6921, %v7324
    %v7333 = vadd.f32 %v6922, %v7326
    %v7334 = vld [vmem:[#allocation3 + $0x30] sm:$0x30]
    %v7335 = vld [vmem:[#allocation3 + $0x38] sm:$0x30]
    %v7336 = vpack.c.bf16 %v7334, %v7334
    %v7337 = vpack.c.bf16 %v7335, %v7335
    %s7338 = scalar_lea.vmem %s5, 5600
    %v7339 = vld [vmem:[%s7338] sm:$0xff]
    %v7340 = vld [vmem:[%s7338 + $0x8] sm:$0xff]
    %v7341 = vld [vmem:[%s7338 + $0x10] sm:$0xff]
    %v7342 = vld [vmem:[%s7338 + $0x18] sm:$0xff]
    %v7343 = vld [vmem:[%s7338 + $0x20] sm:$0xff]
    %v7344 = vld [vmem:[%s7338 + $0x28] sm:$0xff]
    %v7345 = vld [vmem:[%s7338 + $0x30] sm:$0xff]
    %v7346 = vld [vmem:[%s7338 + $0x38] sm:$0xff]
    %v7347 = vld [vmem:[%s7338 + $0x40] sm:$0xff]
    %v7348 = vld [vmem:[%s7338 + $0x48] sm:$0xff]
    %v7349 = vld [vmem:[%s7338 + $0x50] sm:$0xff]
    %v7350 = vld [vmem:[%s7338 + $0x58] sm:$0xff]
    %v7351 = vld [vmem:[%s7338 + $0x60] sm:$0xff]
    %v7352 = vld [vmem:[%s7338 + $0x68] sm:$0xff]
    %v7353 = vld [vmem:[%s7338 + $0x70] sm:$0xff]
    %v7354 = vld [vmem:[%s7338 + $0x78] sm:$0xff]
    %v7355 = vld [vmem:[%s7338 + $0x80] sm:$0xff]
    %v7356 = vld [vmem:[%s7338 + $0x88] sm:$0xff]
    %v7357 = vld [vmem:[%s7338 + $0x90] sm:$0xff]
    %v7358 = vld [vmem:[%s7338 + $0x98] sm:$0xff]
    %v7359 = vld [vmem:[%s7338 + $0xa0] sm:$0xff]
    %v7360 = vld [vmem:[%s7338 + $0xa8] sm:$0xff]
    %v7361 = vld [vmem:[%s7338 + $0xb0] sm:$0xff]
    %v7362 = vld [vmem:[%s7338 + $0xb8] sm:$0xff]
    %v7363 = vld [vmem:[%s7338 + $0xc0] sm:$0xff]
    %v7364 = vld [vmem:[%s7338 + $0xc8] sm:$0xff]
    %v7365 = vld [vmem:[%s7338 + $0xd0] sm:$0xff]
    %v7366 = vld [vmem:[%s7338 + $0xd8] sm:$0xff]
    %v7367 = vld [vmem:[%s7338 + $0xe0] sm:$0xff]
    %v7368 = vld [vmem:[%s7338 + $0xe8] sm:$0xff]
    %v7369 = vld [vmem:[%s7338 + $0xf0] sm:$0xff]
    %v7370 = vld [vmem:[%s7338 + $0xf8] sm:$0xff]
    %v7371 = vld [vmem:[%s7338 + $0x100] sm:$0xff]
    %v7372 = vld [vmem:[%s7338 + $0x108] sm:$0xff]
    %v7373 = vld [vmem:[%s7338 + $0x110] sm:$0xff]
    %v7374 = vld [vmem:[%s7338 + $0x118] sm:$0xff]
    %v7375 = vld [vmem:[%s7338 + $0x120] sm:$0xff]
    %v7376 = vld [vmem:[%s7338 + $0x128] sm:$0xff]
    %v7377 = vld [vmem:[%s7338 + $0x130] sm:$0xff]
    %v7378 = vld [vmem:[%s7338 + $0x138] sm:$0xff]
    %v7379 = vld [vmem:[%s7338 + $0x140] sm:$0xff]
    %v7380 = vld [vmem:[%s7338 + $0x148] sm:$0xff]
    %v7381 = vld [vmem:[%s7338 + $0x150] sm:$0xff]
    %v7382 = vld [vmem:[%s7338 + $0x158] sm:$0xff]
    %v7383 = vld [vmem:[%s7338 + $0x160] sm:$0xff]
    %v7384 = vld [vmem:[%s7338 + $0x168] sm:$0xff]
    %v7385 = vld [vmem:[%s7338 + $0x170] sm:$0xff]
    %v7386 = vld [vmem:[%s7338 + $0x178] sm:$0xff]
    %v7387 = vld [vmem:[%s7338 + $0x180] sm:$0x33]
    %v7388 = vld [vmem:[%s7338 + $0x188] sm:$0x33]
    %v7391 = vrot.slane %v7336, 2
    %v7392 = vrot.slane %v7337, 2
    %v7444 = vunpack.c.l.b16 %v7339
    %v7445 = vunpack.c.h.b16 %v7339
    %v7446 = vunpack.c.l.b16 %v7340
    %v7447 = vunpack.c.h.b16 %v7340
    %v7448 = vunpack.c.l.b16 %v7341
    %v7449 = vunpack.c.h.b16 %v7341
    %v7450 = vunpack.c.l.b16 %v7342
    %v7451 = vunpack.c.h.b16 %v7342
    %v7452 = vunpack.c.l.b16 %v7343
    %v7453 = vunpack.c.h.b16 %v7343
    %v7454 = vunpack.c.l.b16 %v7344
    %v7455 = vunpack.c.h.b16 %v7344
    %v7456 = vunpack.c.l.b16 %v7345
    %v7457 = vunpack.c.h.b16 %v7345
    %v7458 = vunpack.c.l.b16 %v7346
    %v7459 = vunpack.c.h.b16 %v7346
    %v7460 = vunpack.c.l.b16 %v7347
    %v7461 = vunpack.c.h.b16 %v7347
    %v7462 = vunpack.c.l.b16 %v7348
    %v7463 = vunpack.c.h.b16 %v7348
    %v7464 = vunpack.c.l.b16 %v7349
    %v7465 = vunpack.c.h.b16 %v7349
    %v7466 = vunpack.c.l.b16 %v7350
    %v7467 = vunpack.c.h.b16 %v7350
    %v7468 = vunpack.c.l.b16 %v7351
    %v7469 = vunpack.c.h.b16 %v7351
    %v7470 = vunpack.c.l.b16 %v7352
    %v7471 = vunpack.c.h.b16 %v7352
    %v7472 = vunpack.c.l.b16 %v7353
    %v7473 = vunpack.c.h.b16 %v7353
    %v7474 = vunpack.c.l.b16 %v7354
    %v7475 = vunpack.c.h.b16 %v7354
    %v7476 = vunpack.c.l.b16 %v7355
    %v7477 = vunpack.c.h.b16 %v7355
    %v7478 = vunpack.c.l.b16 %v7356
    %v7479 = vunpack.c.h.b16 %v7356
    %v7480 = vunpack.c.l.b16 %v7357
    %v7481 = vunpack.c.h.b16 %v7357
    %v7482 = vunpack.c.l.b16 %v7358
    %v7483 = vunpack.c.h.b16 %v7358
    %v7484 = vunpack.c.l.b16 %v7359
    %v7485 = vunpack.c.h.b16 %v7359
    %v7486 = vunpack.c.l.b16 %v7360
    %v7487 = vunpack.c.h.b16 %v7360
    %v7488 = vunpack.c.l.b16 %v7361
    %v7489 = vunpack.c.h.b16 %v7361
    %v7490 = vunpack.c.l.b16 %v7362
    %v7491 = vunpack.c.h.b16 %v7362
    %v7492 = vunpack.c.l.b16 %v7363
    %v7493 = vunpack.c.h.b16 %v7363
    %v7494 = vunpack.c.l.b16 %v7364
    %v7495 = vunpack.c.h.b16 %v7364
    %v7496 = vunpack.c.l.b16 %v7365
    %v7497 = vunpack.c.h.b16 %v7365
    %v7498 = vunpack.c.l.b16 %v7366
    %v7499 = vunpack.c.h.b16 %v7366
    %v7500 = vunpack.c.l.b16 %v7367
    %v7501 = vunpack.c.h.b16 %v7367
    %v7502 = vunpack.c.l.b16 %v7368
    %v7503 = vunpack.c.h.b16 %v7368
    %v7504 = vunpack.c.l.b16 %v7369
    %v7505 = vunpack.c.h.b16 %v7369
    %v7506 = vunpack.c.l.b16 %v7370
    %v7507 = vunpack.c.h.b16 %v7370
    %v7508 = vunpack.c.l.b16 %v7371
    %v7509 = vunpack.c.h.b16 %v7371
    %v7510 = vunpack.c.l.b16 %v7372
    %v7511 = vunpack.c.h.b16 %v7372
    %v7512 = vunpack.c.l.b16 %v7373
    %v7513 = vunpack.c.h.b16 %v7373
    %v7514 = vunpack.c.l.b16 %v7374
    %v7515 = vunpack.c.h.b16 %v7374
    %v7516 = vunpack.c.l.b16 %v7375
    %v7517 = vunpack.c.h.b16 %v7375
    %v7518 = vunpack.c.l.b16 %v7376
    %v7519 = vunpack.c.h.b16 %v7376
    %v7520 = vunpack.c.l.b16 %v7377
    %v7521 = vunpack.c.h.b16 %v7377
    %v7522 = vunpack.c.l.b16 %v7378
    %v7523 = vunpack.c.h.b16 %v7378
    %v7524 = vunpack.c.l.b16 %v7379
    %v7525 = vunpack.c.h.b16 %v7379
    %v7526 = vunpack.c.l.b16 %v7380
    %v7527 = vunpack.c.h.b16 %v7380
    %v7528 = vunpack.c.l.b16 %v7381
    %v7529 = vunpack.c.h.b16 %v7381
    %v7530 = vunpack.c.l.b16 %v7382
    %v7531 = vunpack.c.h.b16 %v7382
    %v7532 = vunpack.c.l.b16 %v7383
    %v7533 = vunpack.c.h.b16 %v7383
    %v7534 = vunpack.c.l.b16 %v7384
    %v7535 = vunpack.c.h.b16 %v7384
    %v7536 = vunpack.c.l.b16 %v7385
    %v7537 = vunpack.c.h.b16 %v7385
    %v7538 = vunpack.c.l.b16 %v7386
    %v7539 = vunpack.c.h.b16 %v7386
    %v7540 = vunpack.c.l.b16 %v7387
    %v7541 = vunpack.c.h.b16 %v7387
    %v7542 = vunpack.c.l.b16 %v7388
    %v7543 = vunpack.c.h.b16 %v7388
    %v7544 = vpack.c.b16 %v7448, %v7444
    %v7545 = vpack.c.b16 %v7449, %v7445
    %v7546 = vpack.c.b16 %v7450, %v7446
    %v7547 = vpack.c.b16 %v7451, %v7447
    %v7548 = vpack.c.b16 %v7456, %v7452
    %v7549 = vpack.c.b16 %v7457, %v7453
    %v7550 = vpack.c.b16 %v7458, %v7454
    %v7551 = vpack.c.b16 %v7459, %v7455
    %v7552 = vpack.c.b16 %v7464, %v7460
    %v7553 = vpack.c.b16 %v7465, %v7461
    %v7554 = vpack.c.b16 %v7466, %v7462
    %v7555 = vpack.c.b16 %v7467, %v7463
    %v7556 = vpack.c.b16 %v7472, %v7468
    %v7557 = vpack.c.b16 %v7473, %v7469
    %v7558 = vpack.c.b16 %v7474, %v7470
    %v7559 = vpack.c.b16 %v7475, %v7471
    %v7560 = vpack.c.b16 %v7480, %v7476
    %v7561 = vpack.c.b16 %v7481, %v7477
    %v7562 = vpack.c.b16 %v7482, %v7478
    %v7563 = vpack.c.b16 %v7483, %v7479
    %v7564 = vpack.c.b16 %v7488, %v7484
    %v7565 = vpack.c.b16 %v7489, %v7485
    %v7566 = vpack.c.b16 %v7490, %v7486
    %v7567 = vpack.c.b16 %v7491, %v7487
    %v7568 = vpack.c.b16 %v7496, %v7492
    %v7569 = vpack.c.b16 %v7497, %v7493
    %v7570 = vpack.c.b16 %v7498, %v7494
    %v7571 = vpack.c.b16 %v7499, %v7495
    %v7572 = vpack.c.b16 %v7504, %v7500
    %v7573 = vpack.c.b16 %v7505, %v7501
    %v7574 = vpack.c.b16 %v7506, %v7502
    %v7575 = vpack.c.b16 %v7507, %v7503
    %v7576 = vpack.c.b16 %v7512, %v7508
    %v7577 = vpack.c.b16 %v7513, %v7509
    %v7578 = vpack.c.b16 %v7514, %v7510
    %v7579 = vpack.c.b16 %v7515, %v7511
    %v7580 = vpack.c.b16 %v7520, %v7516
    %v7581 = vpack.c.b16 %v7521, %v7517
    %v7582 = vpack.c.b16 %v7522, %v7518
    %v7583 = vpack.c.b16 %v7523, %v7519
    %v7584 = vpack.c.b16 %v7528, %v7524
    %v7585 = vpack.c.b16 %v7529, %v7525
    %v7586 = vpack.c.b16 %v7530, %v7526
    %v7587 = vpack.c.b16 %v7531, %v7527
    %v7588 = vpack.c.b16 %v7536, %v7532
    %v7589 = vpack.c.b16 %v7537, %v7533
    %v7590 = vpack.c.b16 %v7538, %v7534
    %v7591 = vpack.c.b16 %v7539, %v7535
    %v7592 = vpack.c.b16 %v7540, %v7540
    %v7593 = vpack.c.b16 %v7541, %v7541
    %v7594 = vpack.c.b16 %v7542, %v7542
    %v7595 = vpack.c.b16 %v7543, %v7543
    %v7645 = vsel %vm1601, %v7392, 0
    %v7648 = vsel %vm55, %v7592, 0
    %v7651 = vsel %vm55, %v7593, 0
    %v7654 = vsel %vm55, %v7594, 0
    %v7657 = vsel %vm55, %v7595, 0
    %7659 = vmatprep.subr.bf16.mxu0 %v7573
    %7660 = vmatpush1.bf16.msra.mxu0 %v7572
    %7661 = vmatprep.subr.bf16.mxu0 %v7569
    %7662 = vmatpush1.bf16.msra.mxu0 %v7568
    %7663 = vmatprep.subr.bf16.mxu0 %v7565
    %7664 = vmatpush1.bf16.msra.mxu0 %v7564
    %7665 = vmatprep.subr.bf16.mxu0 %v7561
    %7666 = vmatpush1.bf16.msra.mxu0 %v7560
    %7667 = vmatprep.subr.bf16.mxu0 %v7557
    %7668 = vmatpush1.bf16.msra.mxu0 %v7556
    %7669 = vmatprep.subr.bf16.mxu0 %v7553
    %7670 = vmatpush1.bf16.msra.mxu0 %v7552
    %7671 = vmatprep.subr.bf16.mxu0 %v7549
    %7672 = vmatpush1.bf16.msra.mxu0 %v7548
    %7673 = vmatprep.subr.bf16.mxu0 %v7545
    %7674 = vmatpush1.bf16.msra.mxu0 %v7544
    %7675 = vmatprep.subr.bf16.mxu0 0
    %7676 = vmatpush2.bf16.msra.mxu0 0
    %7677 = vmatprep.subr.bf16.mxu0 0
    %7678 = vmatpush2.bf16.msra.mxu0 0
    %7679 = vmatprep.subr.bf16.mxu0 0
    %7680 = vmatpush2.bf16.msra.mxu0 0
    %7681 = vmatprep.subr.bf16.mxu0 %v7651
    %7682 = vmatpush2.bf16.msra.mxu0 %v7648
    %7683 = vmatprep.subr.bf16.mxu0 %v7589
    %7684 = vmatpush2.bf16.msra.mxu0 %v7588
    %7685 = vmatprep.subr.bf16.mxu0 %v7585
    %7686 = vmatpush2.bf16.msra.mxu0 %v7584
    %7687 = vmatprep.subr.bf16.mxu0 %v7581
    %7688 = vmatpush2.bf16.msra.mxu0 %v7580
    %7689 = vmatprep.subr.bf16.mxu0 %v7577
    %7690 = vmatpush2.bf16.msra.mxu0 %v7576
    %7691 = vmatprep.mubr.bf16.mxu0 %v7645
    %7692 = vmatmul.mubr.bf16.gmra.mxu0 %v7391
    %v7693 = vpop.f32.mrf.mxu0
    %v7694 = vadd.f32 0.0, %v7693
    %v7695 = vpop.f32.mrf.mxu0
    %v7696 = vadd.f32 0.0, %v7695
    %v7697 = vpop.f32.mrf.mxu0
    %v7698 = vpop.f32.mrf.mxu0
    %7699 = vdwg.mxu0
    %7700 = vmatprep.subr.bf16.mxu0 %v7575
    %7701 = vmatpush1.bf16.msra.mxu0 %v7574
    %7702 = vmatprep.subr.bf16.mxu0 %v7571
    %7703 = vmatpush1.bf16.msra.mxu0 %v7570
    %7704 = vmatprep.subr.bf16.mxu0 %v7567
    %7705 = vmatpush1.bf16.msra.mxu0 %v7566
    %7706 = vmatprep.subr.bf16.mxu0 %v7563
    %7707 = vmatpush1.bf16.msra.mxu0 %v7562
    %7708 = vmatprep.subr.bf16.mxu0 %v7559
    %7709 = vmatpush1.bf16.msra.mxu0 %v7558
    %7710 = vmatprep.subr.bf16.mxu0 %v7555
    %7711 = vmatpush1.bf16.msra.mxu0 %v7554
    %7712 = vmatprep.subr.bf16.mxu0 %v7551
    %7713 = vmatpush1.bf16.msra.mxu0 %v7550
    %7714 = vmatprep.subr.bf16.mxu0 %v7547
    %7715 = vmatpush1.bf16.msra.mxu0 %v7546
    %7716 = vmatprep.subr.bf16.mxu0 0
    %7717 = vmatpush2.bf16.msra.mxu0 0
    %7718 = vmatprep.subr.bf16.mxu0 0
    %7719 = vmatpush2.bf16.msra.mxu0 0
    %7720 = vmatprep.subr.bf16.mxu0 0
    %7721 = vmatpush2.bf16.msra.mxu0 0
    %7722 = vmatprep.subr.bf16.mxu0 %v7657
    %7723 = vmatpush2.bf16.msra.mxu0 %v7654
    %7724 = vmatprep.subr.bf16.mxu0 %v7591
    %7725 = vmatpush2.bf16.msra.mxu0 %v7590
    %7726 = vmatprep.subr.bf16.mxu0 %v7587
    %7727 = vmatpush2.bf16.msra.mxu0 %v7586
    %7728 = vmatprep.subr.bf16.mxu0 %v7583
    %7729 = vmatpush2.bf16.msra.mxu0 %v7582
    %7730 = vmatprep.subr.bf16.mxu0 %v7579
    %7731 = vmatpush2.bf16.msra.mxu0 %v7578
    %7732 = vmatprep.mubr.bf16.mxu0 %v7645
    %7733 = vmatmul.mubr.bf16.gmra.mxu0 %v7391
    %v7734 = vpop.f32.mrf.mxu0
    %v7735 = vadd.f32 0.0, %v7734
    %v7736 = vpop.f32.mrf.mxu0
    %v7737 = vadd.f32 0.0, %v7736
    %v7738 = vpop.f32.mrf.mxu0
    %v7739 = vpop.f32.mrf.mxu0
    %7740 = vdwg.mxu0
    %v7741 = vadd.f32 %v7330, %v7694
    %v7742 = vadd.f32 %v7331, %v7696
    %v7743 = vadd.f32 %v7332, %v7735
    %v7744 = vadd.f32 %v7333, %v7737
    %v7745 = vld [vmem:[#allocation3 + $0x30] sm:$0xc0]
    %v7746 = vld [vmem:[#allocation3 + $0x38] sm:$0xc0]
    %v7747 = vpack.c.bf16 %v7745, %v7745
    %v7748 = vpack.c.bf16 %v7746, %v7746
    %s7749 = scalar_lea.vmem %s5, 6000
    %v7750 = vld [vmem:[%s7749] sm:$0xff]
    %v7751 = vld [vmem:[%s7749 + $0x8] sm:$0xff]
    %v7752 = vld [vmem:[%s7749 + $0x10] sm:$0xff]
    %v7753 = vld [vmem:[%s7749 + $0x18] sm:$0xff]
    %v7754 = vld [vmem:[%s7749 + $0x20] sm:$0xff]
    %v7755 = vld [vmem:[%s7749 + $0x28] sm:$0xff]
    %v7756 = vld [vmem:[%s7749 + $0x30] sm:$0xff]
    %v7757 = vld [vmem:[%s7749 + $0x38] sm:$0xff]
    %v7758 = vld [vmem:[%s7749 + $0x40] sm:$0xff]
    %v7759 = vld [vmem:[%s7749 + $0x48] sm:$0xff]
    %v7760 = vld [vmem:[%s7749 + $0x50] sm:$0xff]
    %v7761 = vld [vmem:[%s7749 + $0x58] sm:$0xff]
    %v7762 = vld [vmem:[%s7749 + $0x60] sm:$0xff]
    %v7763 = vld [vmem:[%s7749 + $0x68] sm:$0xff]
    %v7764 = vld [vmem:[%s7749 + $0x70] sm:$0xff]
    %v7765 = vld [vmem:[%s7749 + $0x78] sm:$0xff]
    %v7766 = vld [vmem:[%s7749 + $0x80] sm:$0xff]
    %v7767 = vld [vmem:[%s7749 + $0x88] sm:$0xff]
    %v7768 = vld [vmem:[%s7749 + $0x90] sm:$0xff]
    %v7769 = vld [vmem:[%s7749 + $0x98] sm:$0xff]
    %v7770 = vld [vmem:[%s7749 + $0xa0] sm:$0xff]
    %v7771 = vld [vmem:[%s7749 + $0xa8] sm:$0xff]
    %v7772 = vld [vmem:[%s7749 + $0xb0] sm:$0xff]
    %v7773 = vld [vmem:[%s7749 + $0xb8] sm:$0xff]
    %v7774 = vld [vmem:[%s7749 + $0xc0] sm:$0xff]
    %v7775 = vld [vmem:[%s7749 + $0xc8] sm:$0xff]
    %v7776 = vld [vmem:[%s7749 + $0xd0] sm:$0xff]
    %v7777 = vld [vmem:[%s7749 + $0xd8] sm:$0xff]
    %v7778 = vld [vmem:[%s7749 + $0xe0] sm:$0xff]
    %v7779 = vld [vmem:[%s7749 + $0xe8] sm:$0xff]
    %v7780 = vld [vmem:[%s7749 + $0xf0] sm:$0xff]
    %v7781 = vld [vmem:[%s7749 + $0xf8] sm:$0xff]
    %v7782 = vld [vmem:[%s7749 + $0x100] sm:$0xff]
    %v7783 = vld [vmem:[%s7749 + $0x108] sm:$0xff]
    %v7784 = vld [vmem:[%s7749 + $0x110] sm:$0xff]
    %v7785 = vld [vmem:[%s7749 + $0x118] sm:$0xff]
    %v7786 = vld [vmem:[%s7749 + $0x120] sm:$0xff]
    %v7787 = vld [vmem:[%s7749 + $0x128] sm:$0xff]
    %v7788 = vld [vmem:[%s7749 + $0x130] sm:$0xff]
    %v7789 = vld [vmem:[%s7749 + $0x138] sm:$0xff]
    %v7790 = vld [vmem:[%s7749 + $0x140] sm:$0xff]
    %v7791 = vld [vmem:[%s7749 + $0x148] sm:$0xff]
    %v7792 = vld [vmem:[%s7749 + $0x150] sm:$0xff]
    %v7793 = vld [vmem:[%s7749 + $0x158] sm:$0xff]
    %v7794 = vld [vmem:[%s7749 + $0x160] sm:$0xff]
    %v7795 = vld [vmem:[%s7749 + $0x168] sm:$0xff]
    %v7796 = vld [vmem:[%s7749 + $0x170] sm:$0xff]
    %v7797 = vld [vmem:[%s7749 + $0x178] sm:$0xff]
    %v7798 = vld [vmem:[%s7749 + $0x180] sm:$0x33]
    %v7799 = vld [vmem:[%s7749 + $0x188] sm:$0x33]
    %v7802 = vrot.slane %v7747, 3
    %v7803 = vrot.slane %v7748, 3
    %v7855 = vunpack.c.l.b16 %v7750
    %v7856 = vunpack.c.h.b16 %v7750
    %v7857 = vunpack.c.l.b16 %v7751
    %v7858 = vunpack.c.h.b16 %v7751
    %v7859 = vunpack.c.l.b16 %v7752
    %v7860 = vunpack.c.h.b16 %v7752
    %v7861 = vunpack.c.l.b16 %v7753
    %v7862 = vunpack.c.h.b16 %v7753
    %v7863 = vunpack.c.l.b16 %v7754
    %v7864 = vunpack.c.h.b16 %v7754
    %v7865 = vunpack.c.l.b16 %v7755
    %v7866 = vunpack.c.h.b16 %v7755
    %v7867 = vunpack.c.l.b16 %v7756
    %v7868 = vunpack.c.h.b16 %v7756
    %v7869 = vunpack.c.l.b16 %v7757
    %v7870 = vunpack.c.h.b16 %v7757
    %v7871 = vunpack.c.l.b16 %v7758
    %v7872 = vunpack.c.h.b16 %v7758
    %v7873 = vunpack.c.l.b16 %v7759
    %v7874 = vunpack.c.h.b16 %v7759
    %v7875 = vunpack.c.l.b16 %v7760
    %v7876 = vunpack.c.h.b16 %v7760
    %v7877 = vunpack.c.l.b16 %v7761
    %v7878 = vunpack.c.h.b16 %v7761
    %v7879 = vunpack.c.l.b16 %v7762
    %v7880 = vunpack.c.h.b16 %v7762
    %v7881 = vunpack.c.l.b16 %v7763
    %v7882 = vunpack.c.h.b16 %v7763
    %v7883 = vunpack.c.l.b16 %v7764
    %v7884 = vunpack.c.h.b16 %v7764
    %v7885 = vunpack.c.l.b16 %v7765
    %v7886 = vunpack.c.h.b16 %v7765
    %v7887 = vunpack.c.l.b16 %v7766
    %v7888 = vunpack.c.h.b16 %v7766
    %v7889 = vunpack.c.l.b16 %v7767
    %v7890 = vunpack.c.h.b16 %v7767
    %v7891 = vunpack.c.l.b16 %v7768
    %v7892 = vunpack.c.h.b16 %v7768
    %v7893 = vunpack.c.l.b16 %v7769
    %v7894 = vunpack.c.h.b16 %v7769
    %v7895 = vunpack.c.l.b16 %v7770
    %v7896 = vunpack.c.h.b16 %v7770
    %v7897 = vunpack.c.l.b16 %v7771
    %v7898 = vunpack.c.h.b16 %v7771
    %v7899 = vunpack.c.l.b16 %v7772
    %v7900 = vunpack.c.h.b16 %v7772
    %v7901 = vunpack.c.l.b16 %v7773
    %v7902 = vunpack.c.h.b16 %v7773
    %v7903 = vunpack.c.l.b16 %v7774
    %v7904 = vunpack.c.h.b16 %v7774
    %v7905 = vunpack.c.l.b16 %v7775
    %v7906 = vunpack.c.h.b16 %v7775
    %v7907 = vunpack.c.l.b16 %v7776
    %v7908 = vunpack.c.h.b16 %v7776
    %v7909 = vunpack.c.l.b16 %v7777
    %v7910 = vunpack.c.h.b16 %v7777
    %v7911 = vunpack.c.l.b16 %v7778
    %v7912 = vunpack.c.h.b16 %v7778
    %v7913 = vunpack.c.l.b16 %v7779
    %v7914 = vunpack.c.h.b16 %v7779
    %v7915 = vunpack.c.l.b16 %v7780
    %v7916 = vunpack.c.h.b16 %v7780
    %v7917 = vunpack.c.l.b16 %v7781
    %v7918 = vunpack.c.h.b16 %v7781
    %v7919 = vunpack.c.l.b16 %v7782
    %v7920 = vunpack.c.h.b16 %v7782
    %v7921 = vunpack.c.l.b16 %v7783
    %v7922 = vunpack.c.h.b16 %v7783
    %v7923 = vunpack.c.l.b16 %v7784
    %v7924 = vunpack.c.h.b16 %v7784
    %v7925 = vunpack.c.l.b16 %v7785
    %v7926 = vunpack.c.h.b16 %v7785
    %v7927 = vunpack.c.l.b16 %v7786
    %v7928 = vunpack.c.h.b16 %v7786
    %v7929 = vunpack.c.l.b16 %v7787
    %v7930 = vunpack.c.h.b16 %v7787
    %v7931 = vunpack.c.l.b16 %v7788
    %v7932 = vunpack.c.h.b16 %v7788
    %v7933 = vunpack.c.l.b16 %v7789
    %v7934 = vunpack.c.h.b16 %v7789
    %v7935 = vunpack.c.l.b16 %v7790
    %v7936 = vunpack.c.h.b16 %v7790
    %v7937 = vunpack.c.l.b16 %v7791
    %v7938 = vunpack.c.h.b16 %v7791
    %v7939 = vunpack.c.l.b16 %v7792
    %v7940 = vunpack.c.h.b16 %v7792
    %v7941 = vunpack.c.l.b16 %v7793
    %v7942 = vunpack.c.h.b16 %v7793
    %v7943 = vunpack.c.l.b16 %v7794
    %v7944 = vunpack.c.h.b16 %v7794
    %v7945 = vunpack.c.l.b16 %v7795
    %v7946 = vunpack.c.h.b16 %v7795
    %v7947 = vunpack.c.l.b16 %v7796
    %v7948 = vunpack.c.h.b16 %v7796
    %v7949 = vunpack.c.l.b16 %v7797
    %v7950 = vunpack.c.h.b16 %v7797
    %v7951 = vunpack.c.l.b16 %v7798
    %v7952 = vunpack.c.h.b16 %v7798
    %v7953 = vunpack.c.l.b16 %v7799
    %v7954 = vunpack.c.h.b16 %v7799
    %v7955 = vpack.c.b16 %v7859, %v7855
    %v7956 = vpack.c.b16 %v7860, %v7856
    %v7957 = vpack.c.b16 %v7861, %v7857
    %v7958 = vpack.c.b16 %v7862, %v7858
    %v7959 = vpack.c.b16 %v7867, %v7863
    %v7960 = vpack.c.b16 %v7868, %v7864
    %v7961 = vpack.c.b16 %v7869, %v7865
    %v7962 = vpack.c.b16 %v7870, %v7866
    %v7963 = vpack.c.b16 %v7875, %v7871
    %v7964 = vpack.c.b16 %v7876, %v7872
    %v7965 = vpack.c.b16 %v7877, %v7873
    %v7966 = vpack.c.b16 %v7878, %v7874
    %v7967 = vpack.c.b16 %v7883, %v7879
    %v7968 = vpack.c.b16 %v7884, %v7880
    %v7969 = vpack.c.b16 %v7885, %v7881
    %v7970 = vpack.c.b16 %v7886, %v7882
    %v7971 = vpack.c.b16 %v7891, %v7887
    %v7972 = vpack.c.b16 %v7892, %v7888
    %v7973 = vpack.c.b16 %v7893, %v7889
    %v7974 = vpack.c.b16 %v7894, %v7890
    %v7975 = vpack.c.b16 %v7899, %v7895
    %v7976 = vpack.c.b16 %v7900, %v7896
    %v7977 = vpack.c.b16 %v7901, %v7897
    %v7978 = vpack.c.b16 %v7902, %v7898
    %v7979 = vpack.c.b16 %v7907, %v7903
    %v7980 = vpack.c.b16 %v7908, %v7904
    %v7981 = vpack.c.b16 %v7909, %v7905
    %v7982 = vpack.c.b16 %v7910, %v7906
    %v7983 = vpack.c.b16 %v7915, %v7911
    %v7984 = vpack.c.b16 %v7916, %v7912
    %v7985 = vpack.c.b16 %v7917, %v7913
    %v7986 = vpack.c.b16 %v7918, %v7914
    %v7987 = vpack.c.b16 %v7923, %v7919
    %v7988 = vpack.c.b16 %v7924, %v7920
    %v7989 = vpack.c.b16 %v7925, %v7921
    %v7990 = vpack.c.b16 %v7926, %v7922
    %v7991 = vpack.c.b16 %v7931, %v7927
    %v7992 = vpack.c.b16 %v7932, %v7928
    %v7993 = vpack.c.b16 %v7933, %v7929
    %v7994 = vpack.c.b16 %v7934, %v7930
    %v7995 = vpack.c.b16 %v7939, %v7935
    %v7996 = vpack.c.b16 %v7940, %v7936
    %v7997 = vpack.c.b16 %v7941, %v7937
    %v7998 = vpack.c.b16 %v7942, %v7938
    %v7999 = vpack.c.b16 %v7947, %v7943
    %v8000 = vpack.c.b16 %v7948, %v7944
    %v8001 = vpack.c.b16 %v7949, %v7945
    %v8002 = vpack.c.b16 %v7950, %v7946
    %v8003 = vpack.c.b16 %v7951, %v7951
    %v8004 = vpack.c.b16 %v7952, %v7952
    %v8005 = vpack.c.b16 %v7953, %v7953
    %v8006 = vpack.c.b16 %v7954, %v7954
    %v8056 = vsel %vm1601, %v7803, 0
    %v8059 = vsel %vm55, %v8003, 0
    %v8062 = vsel %vm55, %v8004, 0
    %v8065 = vsel %vm55, %v8005, 0
    %v8068 = vsel %vm55, %v8006, 0
    %8070 = vmatprep.subr.bf16.mxu0 %v7984
    %8071 = vmatpush1.bf16.msra.mxu0 %v7983
    %8072 = vmatprep.subr.bf16.mxu0 %v7980
    %8073 = vmatpush1.bf16.msra.mxu0 %v7979
    %8074 = vmatprep.subr.bf16.mxu0 %v7976
    %8075 = vmatpush1.bf16.msra.mxu0 %v7975
    %8076 = vmatprep.subr.bf16.mxu0 %v7972
    %8077 = vmatpush1.bf16.msra.mxu0 %v7971
    %8078 = vmatprep.subr.bf16.mxu0 %v7968
    %8079 = vmatpush1.bf16.msra.mxu0 %v7967
    %8080 = vmatprep.subr.bf16.mxu0 %v7964
    %8081 = vmatpush1.bf16.msra.mxu0 %v7963
    %8082 = vmatprep.subr.bf16.mxu0 %v7960
    %8083 = vmatpush1.bf16.msra.mxu0 %v7959
    %8084 = vmatprep.subr.bf16.mxu0 %v7956
    %8085 = vmatpush1.bf16.msra.mxu0 %v7955
    %8086 = vmatprep.subr.bf16.mxu0 0
    %8087 = vmatpush2.bf16.msra.mxu0 0
    %8088 = vmatprep.subr.bf16.mxu0 0
    %8089 = vmatpush2.bf16.msra.mxu0 0
    %8090 = vmatprep.subr.bf16.mxu0 0
    %8091 = vmatpush2.bf16.msra.mxu0 0
    %8092 = vmatprep.subr.bf16.mxu0 %v8062
    %8093 = vmatpush2.bf16.msra.mxu0 %v8059
    %8094 = vmatprep.subr.bf16.mxu0 %v8000
    %8095 = vmatpush2.bf16.msra.mxu0 %v7999
    %8096 = vmatprep.subr.bf16.mxu0 %v7996
    %8097 = vmatpush2.bf16.msra.mxu0 %v7995
    %8098 = vmatprep.subr.bf16.mxu0 %v7992
    %8099 = vmatpush2.bf16.msra.mxu0 %v7991
    %8100 = vmatprep.subr.bf16.mxu0 %v7988
    %8101 = vmatpush2.bf16.msra.mxu0 %v7987
    %8102 = vmatprep.mubr.bf16.mxu0 %v8056
    %8103 = vmatmul.mubr.bf16.gmra.mxu0 %v7802
    %v8104 = vpop.f32.mrf.mxu0
    %v8105 = vadd.f32 0.0, %v8104
    %v8106 = vpop.f32.mrf.mxu0
    %v8107 = vadd.f32 0.0, %v8106
    %v8108 = vpop.f32.mrf.mxu0
    %v8109 = vpop.f32.mrf.mxu0
    %8110 = vdwg.mxu0
    %8111 = vmatprep.subr.bf16.mxu0 %v7986
    %8112 = vmatpush1.bf16.msra.mxu0 %v7985
    %8113 = vmatprep.subr.bf16.mxu0 %v7982
    %8114 = vmatpush1.bf16.msra.mxu0 %v7981
    %8115 = vmatprep.subr.bf16.mxu0 %v7978
    %8116 = vmatpush1.bf16.msra.mxu0 %v7977
    %8117 = vmatprep.subr.bf16.mxu0 %v7974
    %8118 = vmatpush1.bf16.msra.mxu0 %v7973
    %8119 = vmatprep.subr.bf16.mxu0 %v7970
    %8120 = vmatpush1.bf16.msra.mxu0 %v7969
    %8121 = vmatprep.subr.bf16.mxu0 %v7966
    %8122 = vmatpush1.bf16.msra.mxu0 %v7965
    %8123 = vmatprep.subr.bf16.mxu0 %v7962
    %8124 = vmatpush1.bf16.msra.mxu0 %v7961
    %8125 = vmatprep.subr.bf16.mxu0 %v7958
    %8126 = vmatpush1.bf16.msra.mxu0 %v7957
    %8127 = vmatprep.subr.bf16.mxu0 0
    %8128 = vmatpush2.bf16.msra.mxu0 0
    %8129 = vmatprep.subr.bf16.mxu0 0
    %8130 = vmatpush2.bf16.msra.mxu0 0
    %8131 = vmatprep.subr.bf16.mxu0 0
    %8132 = vmatpush2.bf16.msra.mxu0 0
    %8133 = vmatprep.subr.bf16.mxu0 %v8068
    %8134 = vmatpush2.bf16.msra.mxu0 %v8065
    %8135 = vmatprep.subr.bf16.mxu0 %v8002
    %8136 = vmatpush2.bf16.msra.mxu0 %v8001
    %8137 = vmatprep.subr.bf16.mxu0 %v7998
    %8138 = vmatpush2.bf16.msra.mxu0 %v7997
    %8139 = vmatprep.subr.bf16.mxu0 %v7994
    %8140 = vmatpush2.bf16.msra.mxu0 %v7993
    %8141 = vmatprep.subr.bf16.mxu0 %v7990
    %8142 = vmatpush2.bf16.msra.mxu0 %v7989
    %8143 = vmatprep.mubr.bf16.mxu0 %v8056
    %8144 = vmatmul.mubr.bf16.gmra.mxu0 %v7802
    %v8145 = vpop.f32.mrf.mxu0
    %v8146 = vadd.f32 0.0, %v8145
    %v8147 = vpop.f32.mrf.mxu0
    %v8148 = vadd.f32 0.0, %v8147
    %v8149 = vpop.f32.mrf.mxu0
    %v8150 = vpop.f32.mrf.mxu0
    %8151 = vdwg.mxu0
    %v8152 = vadd.f32 %v7741, %v8105
    %v8153 = vadd.f32 %v7742, %v8107
    %v8154 = vadd.f32 %v7743, %v8146
    %v8155 = vadd.f32 %v7744, %v8148
    %v8156 = vld [vmem:[%s6] sm:$0xf]
    %v8158 = vlaneseq
    %v8159 = vshrl.u32 %v8158, 7
    %v8160 = vsub.s32 0, %v8159
    %v8161 = vrot.slane %v8156, %v8160
    %v8162 = vlaneseq
    %v8163 = vshrl.u32 %v8162, 7
    %v8164 = vsub.s32 1, %v8163
    %v8165 = vrot.slane %v8156, %v8164
    %v8166 = vlaneseq
    %v8167 = vshrl.u32 %v8166, 7
    %v8168 = vsub.s32 2, %v8167
    %v8169 = vrot.slane %v8156, %v8168
    %v8170 = vlaneseq
    %v8171 = vshrl.u32 %v8170, 7
    %v8172 = vsub.s32 3, %v8171
    %v8173 = vrot.slane %v8156, %v8172
    %v8178 = vadd.f32 %v8152, %v8161
    %v8179 = vadd.f32 %v8153, %v8165
    %v8180 = vadd.f32 %v8154, %v8169
    %v8181 = vadd.f32 %v8155, %v8173
    %v8182 = vmax.f32 %v8178, 0.0
    %v8183 = vmax.f32 %v8179, 0.0
    %v8184 = vmax.f32 %v8180, 0.0
    %v8185 = vmax.f32 %v8181, 0.0
    %v8186 = vpack.c.bf16 %v8182, %v8182
    %v8187 = vpack.c.bf16 %v8183, %v8183
    %v8188 = vpack.c.bf16 %v8184, %v8184
    %v8189 = vpack.c.bf16 %v8185, %v8185
    %v8190 = vld [vmem:[%s7] sm:$0xff]
    %v8191 = vld [vmem:[%s7 + $0x8] sm:$0xff]
    %v8192 = vld [vmem:[%s7 + $0x10] sm:$0xff]
    %v8193 = vld [vmem:[%s7 + $0x18] sm:$0xff]
    %v8194 = vld [vmem:[%s7 + $0x20] sm:$0xff]
    %v8195 = vld [vmem:[%s7 + $0x28] sm:$0xff]
    %v8196 = vld [vmem:[%s7 + $0x30] sm:$0xff]
    %v8197 = vld [vmem:[%s7 + $0x38] sm:$0xff]
    %v8198 = vld [vmem:[%s7 + $0x40] sm:$0xff]
    %v8199 = vld [vmem:[%s7 + $0x48] sm:$0xff]
    %v8200 = vld [vmem:[%s7 + $0x50] sm:$0xff]
    %v8201 = vld [vmem:[%s7 + $0x58] sm:$0xff]
    %v8202 = vld [vmem:[%s7 + $0x60] sm:$0xff]
    %v8203 = vld [vmem:[%s7 + $0x68] sm:$0xff]
    %v8204 = vld [vmem:[%s7 + $0x70] sm:$0xff]
    %v8205 = vld [vmem:[%s7 + $0x78] sm:$0xff]
    %v8206 = vld [vmem:[%s7 + $0x80] sm:$0xff]
    %v8207 = vld [vmem:[%s7 + $0x88] sm:$0xff]
    %v8208 = vld [vmem:[%s7 + $0x90] sm:$0xff]
    %v8209 = vld [vmem:[%s7 + $0x98] sm:$0xff]
    %v8210 = vld [vmem:[%s7 + $0xa0] sm:$0xff]
    %v8211 = vld [vmem:[%s7 + $0xa8] sm:$0xff]
    %v8212 = vld [vmem:[%s7 + $0xb0] sm:$0xff]
    %v8213 = vld [vmem:[%s7 + $0xb8] sm:$0xff]
    %v8214 = vld [vmem:[%s7 + $0xc0] sm:$0xff]
    %v8215 = vld [vmem:[%s7 + $0xc8] sm:$0xff]
    %v8216 = vld [vmem:[%s7 + $0xd0] sm:$0xff]
    %v8217 = vld [vmem:[%s7 + $0xd8] sm:$0xff]
    %v8218 = vld [vmem:[%s7 + $0xe0] sm:$0xff]
    %v8219 = vld [vmem:[%s7 + $0xe8] sm:$0xff]
    %v8220 = vld [vmem:[%s7 + $0xf0] sm:$0xff]
    %v8221 = vld [vmem:[%s7 + $0xf8] sm:$0xff]
    %v8222 = vld [vmem:[%s7 + $0x100] sm:$0xff]
    %v8223 = vld [vmem:[%s7 + $0x108] sm:$0xff]
    %v8224 = vld [vmem:[%s7 + $0x110] sm:$0xff]
    %v8225 = vld [vmem:[%s7 + $0x118] sm:$0xff]
    %v8226 = vld [vmem:[%s7 + $0x120] sm:$0xff]
    %v8227 = vld [vmem:[%s7 + $0x128] sm:$0xff]
    %v8228 = vld [vmem:[%s7 + $0x130] sm:$0xff]
    %v8229 = vld [vmem:[%s7 + $0x138] sm:$0xff]
    %v8230 = vld [vmem:[%s7 + $0x140] sm:$0xff]
    %v8231 = vld [vmem:[%s7 + $0x148] sm:$0xff]
    %v8232 = vld [vmem:[%s7 + $0x150] sm:$0xff]
    %v8233 = vld [vmem:[%s7 + $0x158] sm:$0xff]
    %v8234 = vld [vmem:[%s7 + $0x160] sm:$0xff]
    %v8235 = vld [vmem:[%s7 + $0x168] sm:$0xff]
    %v8236 = vld [vmem:[%s7 + $0x170] sm:$0xff]
    %v8237 = vld [vmem:[%s7 + $0x178] sm:$0xff]
    %v8238 = vld [vmem:[%s7 + $0x180] sm:$0xff]
    %v8239 = vld [vmem:[%s7 + $0x188] sm:$0xff]
    %v8240 = vld [vmem:[%s7 + $0x190] sm:$0xff]
    %v8241 = vld [vmem:[%s7 + $0x198] sm:$0xff]
    %v8242 = vld [vmem:[%s7 + $0x1a0] sm:$0xff]
    %v8243 = vld [vmem:[%s7 + $0x1a8] sm:$0xff]
    %v8244 = vld [vmem:[%s7 + $0x1b0] sm:$0xff]
    %v8245 = vld [vmem:[%s7 + $0x1b8] sm:$0xff]
    %v8246 = vld [vmem:[%s7 + $0x1c0] sm:$0xff]
    %v8247 = vld [vmem:[%s7 + $0x1c8] sm:$0xff]
    %v8248 = vld [vmem:[%s7 + $0x1d0] sm:$0xff]
    %v8249 = vld [vmem:[%s7 + $0x1d8] sm:$0xff]
    %v8250 = vld [vmem:[%s7 + $0x1e0] sm:$0xff]
    %v8251 = vld [vmem:[%s7 + $0x1e8] sm:$0xff]
    %v8252 = vld [vmem:[%s7 + $0x1f0] sm:$0xff]
    %v8253 = vld [vmem:[%s7 + $0x1f8] sm:$0xff]
    %v8254 = vld [vmem:[%s8] sm:$0x3]
    %v8256 = vlaneseq
    %v8257 = vshrl.u32 %v8256, 7
    %v8258 = vsub.s32 0, %v8257
    %v8259 = vrot.slane %v8254, %v8258
    %v8260 = vlaneseq
    %v8261 = vshrl.u32 %v8260, 7
    %v8262 = vsub.s32 1, %v8261
    %v8263 = vrot.slane %v8254, %v8262
    %v8330 = vunpack.c.l.b16 %v8190
    %v8331 = vunpack.c.h.b16 %v8190
    %v8332 = vunpack.c.l.b16 %v8191
    %v8333 = vunpack.c.h.b16 %v8191
    %v8334 = vunpack.c.l.b16 %v8192
    %v8335 = vunpack.c.h.b16 %v8192
    %v8336 = vunpack.c.l.b16 %v8193
    %v8337 = vunpack.c.h.b16 %v8193
    %v8338 = vunpack.c.l.b16 %v8194
    %v8339 = vunpack.c.h.b16 %v8194
    %v8340 = vunpack.c.l.b16 %v8195
    %v8341 = vunpack.c.h.b16 %v8195
    %v8342 = vunpack.c.l.b16 %v8196
    %v8343 = vunpack.c.h.b16 %v8196
    %v8344 = vunpack.c.l.b16 %v8197
    %v8345 = vunpack.c.h.b16 %v8197
    %v8346 = vunpack.c.l.b16 %v8198
    %v8347 = vunpack.c.h.b16 %v8198
    %v8348 = vunpack.c.l.b16 %v8199
    %v8349 = vunpack.c.h.b16 %v8199
    %v8350 = vunpack.c.l.b16 %v8200
    %v8351 = vunpack.c.h.b16 %v8200
    %v8352 = vunpack.c.l.b16 %v8201
    %v8353 = vunpack.c.h.b16 %v8201
    %v8354 = vunpack.c.l.b16 %v8202
    %v8355 = vunpack.c.h.b16 %v8202
    %v8356 = vunpack.c.l.b16 %v8203
    %v8357 = vunpack.c.h.b16 %v8203
    %v8358 = vunpack.c.l.b16 %v8204
    %v8359 = vunpack.c.h.b16 %v8204
    %v8360 = vunpack.c.l.b16 %v8205
    %v8361 = vunpack.c.h.b16 %v8205
    %v8362 = vunpack.c.l.b16 %v8206
    %v8363 = vunpack.c.h.b16 %v8206
    %v8364 = vunpack.c.l.b16 %v8207
    %v8365 = vunpack.c.h.b16 %v8207
    %v8366 = vunpack.c.l.b16 %v8208
    %v8367 = vunpack.c.h.b16 %v8208
    %v8368 = vunpack.c.l.b16 %v8209
    %v8369 = vunpack.c.h.b16 %v8209
    %v8370 = vunpack.c.l.b16 %v8210
    %v8371 = vunpack.c.h.b16 %v8210
    %v8372 = vunpack.c.l.b16 %v8211
    %v8373 = vunpack.c.h.b16 %v8211
    %v8374 = vunpack.c.l.b16 %v8212
    %v8375 = vunpack.c.h.b16 %v8212
    %v8376 = vunpack.c.l.b16 %v8213
    %v8377 = vunpack.c.h.b16 %v8213
    %v8378 = vunpack.c.l.b16 %v8214
    %v8379 = vunpack.c.h.b16 %v8214
    %v8380 = vunpack.c.l.b16 %v8215
    %v8381 = vunpack.c.h.b16 %v8215
    %v8382 = vunpack.c.l.b16 %v8216
    %v8383 = vunpack.c.h.b16 %v8216
    %v8384 = vunpack.c.l.b16 %v8217
    %v8385 = vunpack.c.h.b16 %v8217
    %v8386 = vunpack.c.l.b16 %v8218
    %v8387 = vunpack.c.h.b16 %v8218
    %v8388 = vunpack.c.l.b16 %v8219
    %v8389 = vunpack.c.h.b16 %v8219
    %v8390 = vunpack.c.l.b16 %v8220
    %v8391 = vunpack.c.h.b16 %v8220
    %v8392 = vunpack.c.l.b16 %v8221
    %v8393 = vunpack.c.h.b16 %v8221
    %v8394 = vunpack.c.l.b16 %v8222
    %v8395 = vunpack.c.h.b16 %v8222
    %v8396 = vunpack.c.l.b16 %v8223
    %v8397 = vunpack.c.h.b16 %v8223
    %v8398 = vunpack.c.l.b16 %v8224
    %v8399 = vunpack.c.h.b16 %v8224
    %v8400 = vunpack.c.l.b16 %v8225
    %v8401 = vunpack.c.h.b16 %v8225
    %v8402 = vunpack.c.l.b16 %v8226
    %v8403 = vunpack.c.h.b16 %v8226
    %v8404 = vunpack.c.l.b16 %v8227
    %v8405 = vunpack.c.h.b16 %v8227
    %v8406 = vunpack.c.l.b16 %v8228
    %v8407 = vunpack.c.h.b16 %v8228
    %v8408 = vunpack.c.l.b16 %v8229
    %v8409 = vunpack.c.h.b16 %v8229
    %v8410 = vunpack.c.l.b16 %v8230
    %v8411 = vunpack.c.h.b16 %v8230
    %v8412 = vunpack.c.l.b16 %v8231
    %v8413 = vunpack.c.h.b16 %v8231
    %v8414 = vunpack.c.l.b16 %v8232
    %v8415 = vunpack.c.h.b16 %v8232
    %v8416 = vunpack.c.l.b16 %v8233
    %v8417 = vunpack.c.h.b16 %v8233
    %v8418 = vunpack.c.l.b16 %v8234
    %v8419 = vunpack.c.h.b16 %v8234
    %v8420 = vunpack.c.l.b16 %v8235
    %v8421 = vunpack.c.h.b16 %v8235
    %v8422 = vunpack.c.l.b16 %v8236
    %v8423 = vunpack.c.h.b16 %v8236
    %v8424 = vunpack.c.l.b16 %v8237
    %v8425 = vunpack.c.h.b16 %v8237
    %v8426 = vunpack.c.l.b16 %v8238
    %v8427 = vunpack.c.h.b16 %v8238
    %v8428 = vunpack.c.l.b16 %v8239
    %v8429 = vunpack.c.h.b16 %v8239
    %v8430 = vunpack.c.l.b16 %v8240
    %v8431 = vunpack.c.h.b16 %v8240
    %v8432 = vunpack.c.l.b16 %v8241
    %v8433 = vunpack.c.h.b16 %v8241
    %v8434 = vunpack.c.l.b16 %v8242
    %v8435 = vunpack.c.h.b16 %v8242
    %v8436 = vunpack.c.l.b16 %v8243
    %v8437 = vunpack.c.h.b16 %v8243
    %v8438 = vunpack.c.l.b16 %v8244
    %v8439 = vunpack.c.h.b16 %v8244
    %v8440 = vunpack.c.l.b16 %v8245
    %v8441 = vunpack.c.h.b16 %v8245
    %v8442 = vunpack.c.l.b16 %v8246
    %v8443 = vunpack.c.h.b16 %v8246
    %v8444 = vunpack.c.l.b16 %v8247
    %v8445 = vunpack.c.h.b16 %v8247
    %v8446 = vunpack.c.l.b16 %v8248
    %v8447 = vunpack.c.h.b16 %v8248
    %v8448 = vunpack.c.l.b16 %v8249
    %v8449 = vunpack.c.h.b16 %v8249
    %v8450 = vunpack.c.l.b16 %v8250
    %v8451 = vunpack.c.h.b16 %v8250
    %v8452 = vunpack.c.l.b16 %v8251
    %v8453 = vunpack.c.h.b16 %v8251
    %v8454 = vunpack.c.l.b16 %v8252
    %v8455 = vunpack.c.h.b16 %v8252
    %v8456 = vunpack.c.l.b16 %v8253
    %v8457 = vunpack.c.h.b16 %v8253
    %v8458 = vpack.c.b16 %v8332, %v8330
    %v8459 = vpack.c.b16 %v8333, %v8331
    %v8460 = vpack.c.b16 %v8336, %v8334
    %v8461 = vpack.c.b16 %v8337, %v8335
    %v8462 = vpack.c.b16 %v8340, %v8338
    %v8463 = vpack.c.b16 %v8341, %v8339
    %v8464 = vpack.c.b16 %v8344, %v8342
    %v8465 = vpack.c.b16 %v8345, %v8343
    %v8466 = vpack.c.b16 %v8348, %v8346
    %v8467 = vpack.c.b16 %v8349, %v8347
    %v8468 = vpack.c.b16 %v8352, %v8350
    %v8469 = vpack.c.b16 %v8353, %v8351
    %v8470 = vpack.c.b16 %v8356, %v8354
    %v8471 = vpack.c.b16 %v8357, %v8355
    %v8472 = vpack.c.b16 %v8360, %v8358
    %v8473 = vpack.c.b16 %v8361, %v8359
    %v8474 = vpack.c.b16 %v8364, %v8362
    %v8475 = vpack.c.b16 %v8365, %v8363
    %v8476 = vpack.c.b16 %v8368, %v8366
    %v8477 = vpack.c.b16 %v8369, %v8367
    %v8478 = vpack.c.b16 %v8372, %v8370
    %v8479 = vpack.c.b16 %v8373, %v8371
    %v8480 = vpack.c.b16 %v8376, %v8374
    %v8481 = vpack.c.b16 %v8377, %v8375
    %v8482 = vpack.c.b16 %v8380, %v8378
    %v8483 = vpack.c.b16 %v8381, %v8379
    %v8484 = vpack.c.b16 %v8384, %v8382
    %v8485 = vpack.c.b16 %v8385, %v8383
    %v8486 = vpack.c.b16 %v8388, %v8386
    %v8487 = vpack.c.b16 %v8389, %v8387
    %v8488 = vpack.c.b16 %v8392, %v8390
    %v8489 = vpack.c.b16 %v8393, %v8391
    %v8490 = vpack.c.b16 %v8396, %v8394
    %v8491 = vpack.c.b16 %v8397, %v8395
    %v8492 = vpack.c.b16 %v8400, %v8398
    %v8493 = vpack.c.b16 %v8401, %v8399
    %v8494 = vpack.c.b16 %v8404, %v8402
    %v8495 = vpack.c.b16 %v8405, %v8403
    %v8496 = vpack.c.b16 %v8408, %v8406
    %v8497 = vpack.c.b16 %v8409, %v8407
    %v8498 = vpack.c.b16 %v8412, %v8410
    %v8499 = vpack.c.b16 %v8413, %v8411
    %v8500 = vpack.c.b16 %v8416, %v8414
    %v8501 = vpack.c.b16 %v8417, %v8415
    %v8502 = vpack.c.b16 %v8420, %v8418
    %v8503 = vpack.c.b16 %v8421, %v8419
    %v8504 = vpack.c.b16 %v8424, %v8422
    %v8505 = vpack.c.b16 %v8425, %v8423
    %v8506 = vpack.c.b16 %v8428, %v8426
    %v8507 = vpack.c.b16 %v8429, %v8427
    %v8508 = vpack.c.b16 %v8432, %v8430
    %v8509 = vpack.c.b16 %v8433, %v8431
    %v8510 = vpack.c.b16 %v8436, %v8434
    %v8511 = vpack.c.b16 %v8437, %v8435
    %v8512 = vpack.c.b16 %v8440, %v8438
    %v8513 = vpack.c.b16 %v8441, %v8439
    %v8514 = vpack.c.b16 %v8444, %v8442
    %v8515 = vpack.c.b16 %v8445, %v8443
    %v8516 = vpack.c.b16 %v8448, %v8446
    %v8517 = vpack.c.b16 %v8449, %v8447
    %v8518 = vpack.c.b16 %v8452, %v8450
    %v8519 = vpack.c.b16 %v8453, %v8451
    %v8520 = vpack.c.b16 %v8456, %v8454
    %v8521 = vpack.c.b16 %v8457, %v8455
    %8586 = vmatprep.subr.bf16.mxu0 %v8473
    %8587 = vmatpush1.bf16.msra.mxu0 %v8472
    %8588 = vmatprep.subr.bf16.mxu0 %v8471
    %8589 = vmatpush1.bf16.msra.mxu0 %v8470
    %8590 = vmatprep.subr.bf16.mxu0 %v8469
    %8591 = vmatpush1.bf16.msra.mxu0 %v8468
    %8592 = vmatprep.subr.bf16.mxu0 %v8467
    %8593 = vmatpush1.bf16.msra.mxu0 %v8466
    %8594 = vmatprep.subr.bf16.mxu0 %v8465
    %8595 = vmatpush1.bf16.msra.mxu0 %v8464
    %8596 = vmatprep.subr.bf16.mxu0 %v8463
    %8597 = vmatpush1.bf16.msra.mxu0 %v8462
    %8598 = vmatprep.subr.bf16.mxu0 %v8461
    %8599 = vmatpush1.bf16.msra.mxu0 %v8460
    %8600 = vmatprep.subr.bf16.mxu0 %v8459
    %8601 = vmatpush1.bf16.msra.mxu0 %v8458
    %8602 = vmatprep.subr.bf16.mxu0 %v8489
    %8603 = vmatpush2.bf16.msra.mxu0 %v8488
    %8604 = vmatprep.subr.bf16.mxu0 %v8487
    %8605 = vmatpush2.bf16.msra.mxu0 %v8486
    %8606 = vmatprep.subr.bf16.mxu0 %v8485
    %8607 = vmatpush2.bf16.msra.mxu0 %v8484
    %8608 = vmatprep.subr.bf16.mxu0 %v8483
    %8609 = vmatpush2.bf16.msra.mxu0 %v8482
    %8610 = vmatprep.subr.bf16.mxu0 %v8481
    %8611 = vmatpush2.bf16.msra.mxu0 %v8480
    %8612 = vmatprep.subr.bf16.mxu0 %v8479
    %8613 = vmatpush2.bf16.msra.mxu0 %v8478
    %8614 = vmatprep.subr.bf16.mxu0 %v8477
    %8615 = vmatpush2.bf16.msra.mxu0 %v8476
    %8616 = vmatprep.subr.bf16.mxu0 %v8475
    %8617 = vmatpush2.bf16.msra.mxu0 %v8474
    %8618 = vmatprep.mubr.bf16.mxu0 %v8187
    %8619 = vmatmul.mubr.bf16.gmra.mxu0 %v8186
    %v8620 = vpop.f32.mrf.mxu0
    %v8621 = vadd.f32 %v8259, %v8620
    %v8622 = vpop.f32.mrf.mxu0
    %v8623 = vadd.f32 %v8263, %v8622
    %v8624 = vpop.f32.mrf.mxu0
    %v8625 = vpop.f32.mrf.mxu0
    %8626 = vdwg.mxu0
    %8627 = vmatprep.subr.bf16.mxu0 %v8505
    %8628 = vmatpush1.bf16.msra.mxu0 %v8504
    %8629 = vmatprep.subr.bf16.mxu0 %v8503
    %8630 = vmatpush1.bf16.msra.mxu0 %v8502
    %8631 = vmatprep.subr.bf16.mxu0 %v8501
    %8632 = vmatpush1.bf16.msra.mxu0 %v8500
    %8633 = vmatprep.subr.bf16.mxu0 %v8499
    %8634 = vmatpush1.bf16.msra.mxu0 %v8498
    %8635 = vmatprep.subr.bf16.mxu0 %v8497
    %8636 = vmatpush1.bf16.msra.mxu0 %v8496
    %8637 = vmatprep.subr.bf16.mxu0 %v8495
    %8638 = vmatpush1.bf16.msra.mxu0 %v8494
    %8639 = vmatprep.subr.bf16.mxu0 %v8493
    %8640 = vmatpush1.bf16.msra.mxu0 %v8492
    %8641 = vmatprep.subr.bf16.mxu0 %v8491
    %8642 = vmatpush1.bf16.msra.mxu0 %v8490
    %8643 = vmatprep.subr.bf16.mxu0 %v8521
    %8644 = vmatpush2.bf16.msra.mxu0 %v8520
    %8645 = vmatprep.subr.bf16.mxu0 %v8519
    %8646 = vmatpush2.bf16.msra.mxu0 %v8518
    %8647 = vmatprep.subr.bf16.mxu0 %v8517
    %8648 = vmatpush2.bf16.msra.mxu0 %v8516
    %8649 = vmatprep.subr.bf16.mxu0 %v8515
    %8650 = vmatpush2.bf16.msra.mxu0 %v8514
    %8651 = vmatprep.subr.bf16.mxu0 %v8513
    %8652 = vmatpush2.bf16.msra.mxu0 %v8512
    %8653 = vmatprep.subr.bf16.mxu0 %v8511
    %8654 = vmatpush2.bf16.msra.mxu0 %v8510
    %8655 = vmatprep.subr.bf16.mxu0 %v8509
    %8656 = vmatpush2.bf16.msra.mxu0 %v8508
    %8657 = vmatprep.subr.bf16.mxu0 %v8507
    %8658 = vmatpush2.bf16.msra.mxu0 %v8506
    %8659 = vmatprep.mubr.bf16.mxu0 %v8189
    %8660 = vmatmul.mubr.bf16.gmra.mxu0 %v8188
    %v8661 = vpop.f32.mrf.mxu0
    %v8662 = vadd.f32 %v8621, %v8661
    %v8663 = vpop.f32.mrf.mxu0
    %v8664 = vadd.f32 %v8623, %v8663
    %v8665 = vpop.f32.mrf.mxu0
    %v8666 = vpop.f32.mrf.mxu0
    %8667 = vdwg.mxu0
    %v8668 = vmax.f32 %v8662, 0.0
    %v8669 = vmax.f32 %v8664, 0.0
    %v8670 = vpack.c.bf16 %v8668, %v8668
    %v8671 = vpack.c.bf16 %v8669, %v8669
    %v8672 = vld [vmem:[%s9] sm:$0xf]
    %v8673 = vld [vmem:[%s9 + $0x4] sm:$0xf]
    %v8674 = vld [vmem:[%s9 + $0x8] sm:$0xf]
    %v8675 = vld [vmem:[%s9 + $0xc] sm:$0xf]
    %v8676 = vld [vmem:[%s9 + $0x10] sm:$0xf]
    %v8677 = vld [vmem:[%s9 + $0x14] sm:$0xf]
    %v8678 = vld [vmem:[%s9 + $0x18] sm:$0xf]
    %v8679 = vld [vmem:[%s9 + $0x1c] sm:$0xf]
    %v8680 = vld [vmem:[%s9 + $0x20] sm:$0xf]
    %v8681 = vld [vmem:[%s9 + $0x24] sm:$0xf]
    %v8682 = vld [vmem:[%s9 + $0x28] sm:$0xf]
    %v8683 = vld [vmem:[%s9 + $0x2c] sm:$0xf]
    %v8684 = vld [vmem:[%s9 + $0x30] sm:$0xf]
    %v8685 = vld [vmem:[%s9 + $0x34] sm:$0xf]
    %v8686 = vld [vmem:[%s9 + $0x38] sm:$0xf]
    %v8687 = vld [vmem:[%s9 + $0x3c] sm:$0xf]
    %v8688 = vld [vmem:[%s9 + $0x40] sm:$0xf]
    %v8689 = vld [vmem:[%s9 + $0x44] sm:$0xf]
    %v8690 = vld [vmem:[%s9 + $0x48] sm:$0xf]
    %v8691 = vld [vmem:[%s9 + $0x4c] sm:$0xf]
    %v8692 = vld [vmem:[%s9 + $0x50] sm:$0xf]
    %v8693 = vld [vmem:[%s9 + $0x54] sm:$0xf]
    %v8694 = vld [vmem:[%s9 + $0x58] sm:$0xf]
    %v8695 = vld [vmem:[%s9 + $0x5c] sm:$0xf]
    %v8696 = vld [vmem:[%s9 + $0x60] sm:$0xf]
    %v8697 = vld [vmem:[%s9 + $0x64] sm:$0xf]
    %v8698 = vld [vmem:[%s9 + $0x68] sm:$0xf]
    %v8699 = vld [vmem:[%s9 + $0x6c] sm:$0xf]
    %v8700 = vld [vmem:[%s9 + $0x70] sm:$0xf]
    %v8701 = vld [vmem:[%s9 + $0x74] sm:$0xf]
    %v8702 = vld [vmem:[%s9 + $0x78] sm:$0xf]
    %v8703 = vld [vmem:[%s9 + $0x7c] sm:$0xf]
    %v8704 = vld [vmem:[%s10] sm:$0x1]
    %v8706 = vlaneseq
    %v8707 = vshrl.u32 %v8706, 7
    %v8708 = vsub.s32 0, %v8707
    %v8709 = vrot.slane %v8704, %v8708
    %v8743 = vunpack.c.l.b16 %v8672
    %v8744 = vunpack.c.l.b16 %v8673
    %v8745 = vunpack.c.l.b16 %v8674
    %v8746 = vunpack.c.l.b16 %v8675
    %v8747 = vunpack.c.l.b16 %v8676
    %v8748 = vunpack.c.l.b16 %v8677
    %v8749 = vunpack.c.l.b16 %v8678
    %v8750 = vunpack.c.l.b16 %v8679
    %v8751 = vunpack.c.l.b16 %v8680
    %v8752 = vunpack.c.l.b16 %v8681
    %v8753 = vunpack.c.l.b16 %v8682
    %v8754 = vunpack.c.l.b16 %v8683
    %v8755 = vunpack.c.l.b16 %v8684
    %v8756 = vunpack.c.l.b16 %v8685
    %v8757 = vunpack.c.l.b16 %v8686
    %v8758 = vunpack.c.l.b16 %v8687
    %v8759 = vunpack.c.l.b16 %v8688
    %v8760 = vunpack.c.l.b16 %v8689
    %v8761 = vunpack.c.l.b16 %v8690
    %v8762 = vunpack.c.l.b16 %v8691
    %v8763 = vunpack.c.l.b16 %v8692
    %v8764 = vunpack.c.l.b16 %v8693
    %v8765 = vunpack.c.l.b16 %v8694
    %v8766 = vunpack.c.l.b16 %v8695
    %v8767 = vunpack.c.l.b16 %v8696
    %v8768 = vunpack.c.l.b16 %v8697
    %v8769 = vunpack.c.l.b16 %v8698
    %v8770 = vunpack.c.l.b16 %v8699
    %v8771 = vunpack.c.l.b16 %v8700
    %v8772 = vunpack.c.l.b16 %v8701
    %v8773 = vunpack.c.l.b16 %v8702
    %v8774 = vunpack.c.l.b16 %v8703
    %v8775 = vpack.c.b16 %v8744, %v8743
    %v8776 = vpack.c.b16 %v8746, %v8745
    %v8777 = vpack.c.b16 %v8748, %v8747
    %v8778 = vpack.c.b16 %v8750, %v8749
    %v8779 = vpack.c.b16 %v8752, %v8751
    %v8780 = vpack.c.b16 %v8754, %v8753
    %v8781 = vpack.c.b16 %v8756, %v8755
    %v8782 = vpack.c.b16 %v8758, %v8757
    %v8783 = vpack.c.b16 %v8760, %v8759
    %v8784 = vpack.c.b16 %v8762, %v8761
    %v8785 = vpack.c.b16 %v8764, %v8763
    %v8786 = vpack.c.b16 %v8766, %v8765
    %v8787 = vpack.c.b16 %v8768, %v8767
    %v8788 = vpack.c.b16 %v8770, %v8769
    %v8789 = vpack.c.b16 %v8772, %v8771
    %v8790 = vpack.c.b16 %v8774, %v8773
    %8807 = vmatprep.subr.bf16.mxu0 0
    %8808 = vmatpush1.bf16.msra.mxu0 %v8782
    %8809 = vmatprep.subr.bf16.mxu0 0
    %8810 = vmatpush1.bf16.msra.mxu0 %v8781
    %8811 = vmatprep.subr.bf16.mxu0 0
    %8812 = vmatpush1.bf16.msra.mxu0 %v8780
    %8813 = vmatprep.subr.bf16.mxu0 0
    %8814 = vmatpush1.bf16.msra.mxu0 %v8779
    %8815 = vmatprep.subr.bf16.mxu0 0
    %8816 = vmatpush1.bf16.msra.mxu0 %v8778
    %8817 = vmatprep.subr.bf16.mxu0 0
    %8818 = vmatpush1.bf16.msra.mxu0 %v8777
    %8819 = vmatprep.subr.bf16.mxu0 0
    %8820 = vmatpush1.bf16.msra.mxu0 %v8776
    %8821 = vmatprep.subr.bf16.mxu0 0
    %8822 = vmatpush1.bf16.msra.mxu0 %v8775
    %8823 = vmatprep.subr.bf16.mxu0 0
    %8824 = vmatpush2.bf16.msra.mxu0 %v8790
    %8825 = vmatprep.subr.bf16.mxu0 0
    %8826 = vmatpush2.bf16.msra.mxu0 %v8789
    %8827 = vmatprep.subr.bf16.mxu0 0
    %8828 = vmatpush2.bf16.msra.mxu0 %v8788
    %8829 = vmatprep.subr.bf16.mxu0 0
    %8830 = vmatpush2.bf16.msra.mxu0 %v8787
    %8831 = vmatprep.subr.bf16.mxu0 0
    %8832 = vmatpush2.bf16.msra.mxu0 %v8786
    %8833 = vmatprep.subr.bf16.mxu0 0
    %8834 = vmatpush2.bf16.msra.mxu0 %v8785
    %8835 = vmatprep.subr.bf16.mxu0 0
    %8836 = vmatpush2.bf16.msra.mxu0 %v8784
    %8837 = vmatprep.subr.bf16.mxu0 0
    %8838 = vmatpush2.bf16.msra.mxu0 %v8783
    %8839 = vmatprep.mubr.bf16.mxu0 %v8671
    %8840 = vmatmul.mubr.bf16.gmra.mxu0 %v8670
    %v8841 = vpop.f32.mrf.mxu0
    %v8842 = vadd.f32 %v8709, %v8841
    %v8843 = vpop.f32.mrf.mxu0
    %v8844 = vpop.f32.mrf.mxu0
    %v8845 = vpop.f32.mrf.mxu0
    %8846 = vdwg.mxu0
    %8847 = vst [vmem:[#allocation4] sm:$0x3] %v8842
    // Predicated region
    $region46: #{cnn_encoder_forward.1} parent=1 // pred_check
      _
    $region47: #{cnn_encoder_forward.1} parent=1 // pred_check_branch
      %8849 = sbr.rel (0) target = $region49
    $region48: #{cnn_encoder_forward.1} parent=1 // pred_region
      %s8851 = ssub.s32 32, 32
      %8852 = vsyncadd [#allocation5], %s8851
      %s8854 = sshll.u32 [#allocation4], 4
      %s8855 = int_to_ptr.vmem [resolvable:$true] %s8854
      %8857 = dma.vmem_to_hbm [thread:$0]  %s8855, 32, %s11, [#allocation5]
    $region49: #{cnn_encoder_forward.1} parent=1 // pred_fallthru
      _
    // Predicated region
    $region50: #{cnn_encoder_forward.1} parent=1 // pred_check
      _
    $region51: #{cnn_encoder_forward.1} parent=1 // pred_check_branch
      %8859 = sbr.rel (0) target = $region53
    $region52: #{cnn_encoder_forward.1} parent=1 // pred_region
      %8860 = dma.done [#allocation5], 32
    $region53: #{cnn_encoder_forward.1} parent=1 // pred_fallthru
      _
    %8861 = vsyncpa [#allocation5], 1

</llo_original>
